<compile_context>
chip_gen: v5e
topology: v5e:2x2
jax: 0.10.0
libtpu: 0.0.40
codegen_flags: <defaults>
</compile_context>

<pallas_src>
import functools

import jax
import jax.numpy as jnp
from jax.experimental import pallas as pl
from jax.experimental.pallas import tpu as pltpu

D_EMBEDDING = 512
D_FF = 2048
LN_EPS = 1e-5

# Valid on every generation (v5e/v6e: 128 MiB physical, v7x: 64 MiB); actual use ~16-18 MiB.
VMEM_LIMIT_BYTES = 48 << 20


def _round_up(n, m):
    return ((n + m - 1) // m) * m


def _make_kernel(valid_rows, row_tile, d_model, ff_chunk, n_chunks, needs_mask):
    inv_d = 1.0 / d_model

    def kernel(x_ref, w1_ref, b1_ref, w2_ref, b2_ref, gamma_ref, beta_ref, o_ref):
        x_bf = x_ref[...]                                      # (TR, D) bf16 (streamed)
        if needs_mask:
            # Ragged last tile: zero out-of-range rows so the row-wise LN stays finite.
            # (Those rows are discarded by the partial-block output writeback anyway.)
            row_ids = (pl.program_id(0) * row_tile
                       + jax.lax.broadcasted_iota(jnp.int32, (row_tile, 1), 0))
            x_bf = jnp.where(row_ids < valid_rows, x_bf, 0)

        x_f32 = x_bf.astype(jnp.float32)

        # conv2 bias + residual seed the f32 accumulator.
        acc = x_f32 + b2_ref[...]                              # (TR, D) f32

        # conv1 -> ReLU -> conv2, chunked over d_ff so the full (TR, d_ff) h never exists.
        for c in range(n_chunks):
            sl = pl.ds(c * ff_chunk, ff_chunk)
            # (TR, D) @ (D, chunk) on the MXU, f32 accumulation.
            h_c = jnp.dot(x_bf, w1_ref[:, sl], preferred_element_type=jnp.float32)
            # bias + ReLU in bf16 (2x VALU rate on v6e/v7x, half the h footprint).
            h_c = jnp.maximum(h_c.astype(jnp.bfloat16)
                              + b1_ref[:, sl].astype(jnp.bfloat16), 0)
            # (TR, chunk) @ (chunk, D) on the MXU, accumulate in f32.
            acc = acc + jnp.dot(h_c, w2_ref[sl, :], preferred_element_type=jnp.float32)

        # LayerNorm over D (biased variance, eps=1e-5), affine.  sum * (1/D) avoids a VALU
        # divide; reductions / rsqrt ride the XLU / EUP slots (free under MXU-bound).
        y = acc
        mean = jnp.sum(y, axis=-1, keepdims=True) * inv_d
        cent = y - mean
        var = jnp.sum(cent * cent, axis=-1, keepdims=True) * inv_d
        out = cent * jax.lax.rsqrt(var + LN_EPS) * gamma_ref[...] + beta_ref[...]
        o_ref[...] = out.astype(o_ref.dtype)

    return kernel


@functools.partial(jax.jit, static_argnames=("row_tile",))
def poswise_ffn(x, w1, b1, w2, b2, gamma, beta, *, row_tile=512):
    """x: [B, S, D] float32. w1: [D, d_ff], w2: [d_ff, D]. Returns [B, S, D] float32."""
    B, S, D = x.shape
    d_ff = w1.shape[1]
    rows = B * S

    # Tile selection: big MXU-aligned tiles, no wrapper-side padding (ragged last tile is
    # masked in-kernel).  For small inputs shrink the tile so the grid has >= 2 steps and
    # both v7x TensorCores get work under dimension_semantics=("parallel",).
    row_tile = min(row_tile, _round_up(rows, 8))
    if rows > 8 and pl.cdiv(rows, row_tile) < 2:
        row_tile = _round_up(pl.cdiv(rows, 2), 8)
    n_tiles = pl.cdiv(rows, row_tile)

    ff_chunk = 512 if d_ff % 512 == 0 else d_ff
    n_chunks = d_ff // ff_chunk

    # Activations streamed in bf16; weights pre-cast to bf16 (MXU inputs, f32 accumulation
    # in-kernel).  conv2 bias / LN params stay f32; b1 is cast per-chunk to bf16 in-kernel.
    x2 = x.reshape(rows, D).astype(jnp.bfloat16)
    w1b = w1.astype(jnp.bfloat16)
    w2b = w2.astype(jnp.bfloat16)
    b1_2 = b1.reshape(1, d_ff).astype(jnp.float32)
    b2_2 = b2.reshape(1, D).astype(jnp.float32)
    g_2 = gamma.reshape(1, D).astype(jnp.float32)
    be_2 = beta.reshape(1, D).astype(jnp.float32)

    kernel = _make_kernel(rows, row_tile, D, ff_chunk, n_chunks,
                          needs_mask=(rows % row_tile != 0))

    out2 = pl.pallas_call(
        kernel,
        out_shape=jax.ShapeDtypeStruct((rows, D), jnp.float32),
        grid_spec=pltpu.PrefetchScalarGridSpec(
            num_scalar_prefetch=0,
            grid=(n_tiles,),
            in_specs=[
                pl.BlockSpec((row_tile, D), lambda i: (i, 0)),   # x rows (streamed, bf16)
                pl.BlockSpec((D, d_ff), lambda i: (0, 0)),       # W1 (resident, bf16)
                pl.BlockSpec((1, d_ff), lambda i: (0, 0)),       # b1 (f32)
                pl.BlockSpec((d_ff, D), lambda i: (0, 0)),       # W2 (resident, bf16)
                pl.BlockSpec((1, D), lambda i: (0, 0)),          # b2 (f32)
                pl.BlockSpec((1, D), lambda i: (0, 0)),          # gamma
                pl.BlockSpec((1, D), lambda i: (0, 0)),          # beta
            ],
            out_specs=pl.BlockSpec((row_tile, D), lambda i: (i, 0)),
        ),
        compiler_params=pltpu.CompilerParams(
            dimension_semantics=("parallel",),
            vmem_limit_bytes=VMEM_LIMIT_BYTES,
        ),
    )(x2, w1b, b1_2, w2b, b2_2, g_2, be_2)

    return out2.reshape(B, S, D).astype(x.dtype)


def _reference(x, w1, b1, w2, b2, gamma, beta):
    # Pure-JAX f32 reference of the PyTorch forward (Conv1d k=1 == per-position Linear).
    h = jnp.maximum(jnp.einsum("bsd,df->bsf", x, w1) + b1, 0.0)
    y = jnp.einsum("bsf,fd->bsd", h, w2) + b2 + x
    mean = jnp.mean(y, axis=-1, keepdims=True)
    var = jnp.mean((y - mean) ** 2, axis=-1, keepdims=True)
    return (y - mean) * jax.lax.rsqrt(var + LN_EPS) * gamma + beta


if __name__ == "__main__":
    key = jax.random.PRNGKey(0)
    kx, k1, kb1, k2, kb2 = jax.random.split(key, 5)

    B, S, D, F = 2, 8, D_EMBEDDING, D_FF
    x = jax.random.normal(kx, (B, S, D), dtype=jnp.float32)

    # Conv1d(k=1) weights (out, in, 1) are stored pre-transposed as (in, out) matmul weights.
    w1 = jax.random.normal(k1, (D, F), dtype=jnp.float32) * 0.02
    b1 = jax.random.normal(kb1, (F,), dtype=jnp.float32) * 0.02
    w2 = jax.random.normal(k2, (F, D), dtype=jnp.float32) * 0.02
    b2 = jax.random.normal(kb2, (D,), dtype=jnp.float32) * 0.02
    gamma = jnp.ones((D,), dtype=jnp.float32)   # LayerNorm weight
    beta = jnp.zeros((D,), dtype=jnp.float32)   # LayerNorm bias

    out = jax.block_until_ready(poswise_ffn(x, w1, b1, w2, b2, gamma, beta))
    ref = _reference(x, w1, b1, w2, b2, gamma, beta)

    assert out.shape == (B, S, D)
    # bf16-streamed activations + bf16 MXU inputs (f32 accumulation) vs. the f32 reference.
    err = float(jnp.max(jnp.abs(out - ref)))
    assert jnp.allclose(out, ref, atol=3e-2, rtol=3e-2), err

    print("KERNEL_OK")
</pallas_src>

<mosaic_0001>
module attributes {stable_mosaic.version = 11 : i64} {
  func.func @kernel(%arg0: i32, %arg1: memref<8x512xbf16, #tpu.memory_space<vmem>>, %arg2: memref<512x2048xbf16, #tpu.memory_space<vmem>>, %arg3: memref<1x2048xf32, #tpu.memory_space<vmem>>, %arg4: memref<2048x512xbf16, #tpu.memory_space<vmem>>, %arg5: memref<1x512xf32, #tpu.memory_space<vmem>>, %arg6: memref<1x512xf32, #tpu.memory_space<vmem>>, %arg7: memref<1x512xf32, #tpu.memory_space<vmem>>, %arg8: memref<8x512xf32, #tpu.memory_space<vmem>>) attributes {dimension_semantics = [#tpu.dimension_semantics<parallel>], iteration_bounds = array<i64: 2>, scalar_prefetch = 0 : i64, scratch_operands = 0 : i64, tpu.core_type = #tpu.core_type<tc>, window_params = [{transform_indices = @transform_0, window_bounds = array<i64: 8, 512>}, {pipeline_mode = #tpu.pipeline_mode<synchronous>, transform_indices = @transform_1, window_bounds = array<i64: 512, 2048>}, {pipeline_mode = #tpu.pipeline_mode<synchronous>, transform_indices = @transform_2, window_bounds = array<i64: 1, 2048>}, {pipeline_mode = #tpu.pipeline_mode<synchronous>, transform_indices = @transform_3, window_bounds = array<i64: 2048, 512>}, {pipeline_mode = #tpu.pipeline_mode<synchronous>, transform_indices = @transform_4, window_bounds = array<i64: 1, 512>}, {pipeline_mode = #tpu.pipeline_mode<synchronous>, transform_indices = @transform_5, window_bounds = array<i64: 1, 512>}, {pipeline_mode = #tpu.pipeline_mode<synchronous>, transform_indices = @transform_6, window_bounds = array<i64: 1, 512>}, {transform_indices = @transform_7, window_bounds = array<i64: 8, 512>}]} {
    %c0 = arith.constant 0 : index
    %c0_0 = arith.constant 0 : index
    %0 = vector.load %arg1[%c0, %c0_0] : memref<8x512xbf16, #tpu.memory_space<vmem>>, vector<8x512xbf16>
    %1 = arith.extf %0 : vector<8x512xbf16> to vector<8x512xf32>
    %c0_1 = arith.constant 0 : index
    %c0_2 = arith.constant 0 : index
    %2 = vector.load %arg5[%c0_1, %c0_2] : memref<1x512xf32, #tpu.memory_space<vmem>>, vector<1x512xf32>
    %3 = vector.broadcast %2 : vector<1x512xf32> to vector<8x512xf32>
    %4 = arith.addf %1, %3 : vector<8x512xf32>
    %c0_3 = arith.constant 0 : index
    %c0_4 = arith.constant 0 : index
    %5 = vector.load %arg2[%c0_3, %c0_4] : memref<512x2048xbf16, #tpu.memory_space<vmem>>, vector<512x512xbf16>
    %cst = arith.constant dense<0.000000e+00> : vector<8x512xf32>
    %6 = tpu.matmul %0, %5, %cst {dimension_numbers = #tpu.dot_dimension_numbers<[1], [0], [0], [1], [0, 0, 1, 1], [], []>} : vector<8x512xbf16>, vector<512x512xbf16>, vector<8x512xf32> -> vector<8x512xf32>
    %7 = arith.truncf %6 : vector<8x512xf32> to vector<8x512xbf16>
    %c0_5 = arith.constant 0 : index
    %c0_6 = arith.constant 0 : index
    %8 = vector.load %arg3[%c0_5, %c0_6] : memref<1x2048xf32, #tpu.memory_space<vmem>>, vector<1x512xf32>
    %9 = arith.truncf %8 : vector<1x512xf32> to vector<1x512xbf16>
    %10 = vector.broadcast %9 : vector<1x512xbf16> to vector<8x512xbf16>
    %11 = arith.addf %7, %10 : vector<8x512xbf16>
    %cst_7 = arith.constant 0.000000e+00 : bf16
    %12 = vector.broadcast %cst_7 : bf16 to vector<8x512xbf16>
    %13 = arith.maximumf %11, %12 : vector<8x512xbf16>
    %c0_8 = arith.constant 0 : index
    %c0_9 = arith.constant 0 : index
    %14 = vector.load %arg4[%c0_8, %c0_9] : memref<2048x512xbf16, #tpu.memory_space<vmem>>, vector<512x512xbf16>
    %cst_10 = arith.constant dense<0.000000e+00> : vector<8x512xf32>
    %15 = tpu.matmul %13, %14, %cst_10 {dimension_numbers = #tpu.dot_dimension_numbers<[1], [0], [0], [1], [0, 0, 1, 1], [], []>} : vector<8x512xbf16>, vector<512x512xbf16>, vector<8x512xf32> -> vector<8x512xf32>
    %16 = arith.addf %4, %15 : vector<8x512xf32>
    %c0_11 = arith.constant 0 : index
    %c512 = arith.constant 512 : index
    %17 = vector.load %arg2[%c0_11, %c512] : memref<512x2048xbf16, #tpu.memory_space<vmem>>, vector<512x512xbf16>
    %cst_12 = arith.constant dense<0.000000e+00> : vector<8x512xf32>
    %18 = tpu.matmul %0, %17, %cst_12 {dimension_numbers = #tpu.dot_dimension_numbers<[1], [0], [0], [1], [0, 0, 1, 1], [], []>} : vector<8x512xbf16>, vector<512x512xbf16>, vector<8x512xf32> -> vector<8x512xf32>
    %19 = arith.truncf %18 : vector<8x512xf32> to vector<8x512xbf16>
    %c0_13 = arith.constant 0 : index
    %c512_14 = arith.constant 512 : index
    %20 = vector.load %arg3[%c0_13, %c512_14] : memref<1x2048xf32, #tpu.memory_space<vmem>>, vector<1x512xf32>
    %21 = arith.truncf %20 : vector<1x512xf32> to vector<1x512xbf16>
    %22 = vector.broadcast %21 : vector<1x512xbf16> to vector<8x512xbf16>
    %23 = arith.addf %19, %22 : vector<8x512xbf16>
    %cst_15 = arith.constant 0.000000e+00 : bf16
    %24 = vector.broadcast %cst_15 : bf16 to vector<8x512xbf16>
    %25 = arith.maximumf %23, %24 : vector<8x512xbf16>
    %c512_16 = arith.constant 512 : index
    %c0_17 = arith.constant 0 : index
    %26 = vector.load %arg4[%c512_16, %c0_17] : memref<2048x512xbf16, #tpu.memory_space<vmem>>, vector<512x512xbf16>
    %cst_18 = arith.constant dense<0.000000e+00> : vector<8x512xf32>
    %27 = tpu.matmul %25, %26, %cst_18 {dimension_numbers = #tpu.dot_dimension_numbers<[1], [0], [0], [1], [0, 0, 1, 1], [], []>} : vector<8x512xbf16>, vector<512x512xbf16>, vector<8x512xf32> -> vector<8x512xf32>
    %28 = arith.addf %16, %27 : vector<8x512xf32>
    %c0_19 = arith.constant 0 : index
    %c1024 = arith.constant 1024 : index
    %29 = vector.load %arg2[%c0_19, %c1024] : memref<512x2048xbf16, #tpu.memory_space<vmem>>, vector<512x512xbf16>
    %cst_20 = arith.constant dense<0.000000e+00> : vector<8x512xf32>
    %30 = tpu.matmul %0, %29, %cst_20 {dimension_numbers = #tpu.dot_dimension_numbers<[1], [0], [0], [1], [0, 0, 1, 1], [], []>} : vector<8x512xbf16>, vector<512x512xbf16>, vector<8x512xf32> -> vector<8x512xf32>
    %31 = arith.truncf %30 : vector<8x512xf32> to vector<8x512xbf16>
    %c0_21 = arith.constant 0 : index
    %c1024_22 = arith.constant 1024 : index
    %32 = vector.load %arg3[%c0_21, %c1024_22] : memref<1x2048xf32, #tpu.memory_space<vmem>>, vector<1x512xf32>
    %33 = arith.truncf %32 : vector<1x512xf32> to vector<1x512xbf16>
    %34 = vector.broadcast %33 : vector<1x512xbf16> to vector<8x512xbf16>
    %35 = arith.addf %31, %34 : vector<8x512xbf16>
    %cst_23 = arith.constant 0.000000e+00 : bf16
    %36 = vector.broadcast %cst_23 : bf16 to vector<8x512xbf16>
    %37 = arith.maximumf %35, %36 : vector<8x512xbf16>
    %c1024_24 = arith.constant 1024 : index
    %c0_25 = arith.constant 0 : index
    %38 = vector.load %arg4[%c1024_24, %c0_25] : memref<2048x512xbf16, #tpu.memory_space<vmem>>, vector<512x512xbf16>
    %cst_26 = arith.constant dense<0.000000e+00> : vector<8x512xf32>
    %39 = tpu.matmul %37, %38, %cst_26 {dimension_numbers = #tpu.dot_dimension_numbers<[1], [0], [0], [1], [0, 0, 1, 1], [], []>} : vector<8x512xbf16>, vector<512x512xbf16>, vector<8x512xf32> -> vector<8x512xf32>
    %40 = arith.addf %28, %39 : vector<8x512xf32>
    %c0_27 = arith.constant 0 : index
    %c1536 = arith.constant 1536 : index
    %41 = vector.load %arg2[%c0_27, %c1536] : memref<512x2048xbf16, #tpu.memory_space<vmem>>, vector<512x512xbf16>
    %cst_28 = arith.constant dense<0.000000e+00> : vector<8x512xf32>
    %42 = tpu.matmul %0, %41, %cst_28 {dimension_numbers = #tpu.dot_dimension_numbers<[1], [0], [0], [1], [0, 0, 1, 1], [], []>} : vector<8x512xbf16>, vector<512x512xbf16>, vector<8x512xf32> -> vector<8x512xf32>
    %43 = arith.truncf %42 : vector<8x512xf32> to vector<8x512xbf16>
    %c0_29 = arith.constant 0 : index
    %c1536_30 = arith.constant 1536 : index
    %44 = vector.load %arg3[%c0_29, %c1536_30] : memref<1x2048xf32, #tpu.memory_space<vmem>>, vector<1x512xf32>
    %45 = arith.truncf %44 : vector<1x512xf32> to vector<1x512xbf16>
    %46 = vector.broadcast %45 : vector<1x512xbf16> to vector<8x512xbf16>
    %47 = arith.addf %43, %46 : vector<8x512xbf16>
    %cst_31 = arith.constant 0.000000e+00 : bf16
    %48 = vector.broadcast %cst_31 : bf16 to vector<8x512xbf16>
    %49 = arith.maximumf %47, %48 : vector<8x512xbf16>
    %c1536_32 = arith.constant 1536 : index
    %c0_33 = arith.constant 0 : index
    %50 = vector.load %arg4[%c1536_32, %c0_33] : memref<2048x512xbf16, #tpu.memory_space<vmem>>, vector<512x512xbf16>
    %cst_34 = arith.constant dense<0.000000e+00> : vector<8x512xf32>
    %51 = tpu.matmul %49, %50, %cst_34 {dimension_numbers = #tpu.dot_dimension_numbers<[1], [0], [0], [1], [0, 0, 1, 1], [], []>} : vector<8x512xbf16>, vector<512x512xbf16>, vector<8x512xf32> -> vector<8x512xf32>
    %52 = arith.addf %40, %51 : vector<8x512xf32>
    %cst_35 = arith.constant dense<0.000000e+00> : vector<8xf32>
    %53 = vector.multi_reduction <add>, %52, %cst_35 [1] : vector<8x512xf32> to vector<8xf32>
    %54 = vector.shape_cast %53 : vector<8xf32> to vector<8x1xf32>
    %cst_36 = arith.constant 0.001953125 : f32
    %55 = vector.broadcast %cst_36 : f32 to vector<8x1xf32>
    %56 = arith.mulf %54, %55 : vector<8x1xf32>
    %57 = vector.broadcast %56 : vector<8x1xf32> to vector<8x512xf32>
    %58 = arith.subf %52, %57 : vector<8x512xf32>
    %59 = arith.mulf %58, %58 : vector<8x512xf32>
    %cst_37 = arith.constant dense<0.000000e+00> : vector<8xf32>
    %60 = vector.multi_reduction <add>, %59, %cst_37 [1] : vector<8x512xf32> to vector<8xf32>
    %61 = vector.shape_cast %60 : vector<8xf32> to vector<8x1xf32>
    %cst_38 = arith.constant 0.001953125 : f32
    %62 = vector.broadcast %cst_38 : f32 to vector<8x1xf32>
    %63 = arith.mulf %61, %62 : vector<8x1xf32>
    %cst_39 = arith.constant 9.99999974E-6 : f32
    %64 = vector.broadcast %cst_39 : f32 to vector<8x1xf32>
    %65 = arith.addf %63, %64 : vector<8x1xf32>
    %66 = math.rsqrt %65 : vector<8x1xf32>
    %67 = vector.broadcast %66 : vector<8x1xf32> to vector<8x512xf32>
    %68 = arith.mulf %58, %67 : vector<8x512xf32>
    %c0_40 = arith.constant 0 : index
    %c0_41 = arith.constant 0 : index
    %69 = vector.load %arg6[%c0_40, %c0_41] : memref<1x512xf32, #tpu.memory_space<vmem>>, vector<1x512xf32>
    %70 = vector.broadcast %69 : vector<1x512xf32> to vector<8x512xf32>
    %71 = arith.mulf %68, %70 : vector<8x512xf32>
    %c0_42 = arith.constant 0 : index
    %c0_43 = arith.constant 0 : index
    %72 = vector.load %arg7[%c0_42, %c0_43] : memref<1x512xf32, #tpu.memory_space<vmem>>, vector<1x512xf32>
    %73 = vector.broadcast %72 : vector<1x512xf32> to vector<8x512xf32>
    %74 = arith.addf %71, %73 : vector<8x512xf32>
    %c0_44 = arith.constant 0 : index
    %c0_45 = arith.constant 0 : index
    %75 = vector.load %arg8[%c0_44, %c0_45] : memref<8x512xf32, #tpu.memory_space<vmem>>, vector<8x512xf32>
    tpu.vector_store %arg8[%c0_44, %c0_45], %74 {strides = array<i32>} : memref<8x512xf32, #tpu.memory_space<vmem>>, vector<8x512xf32>,
    return
  }
  func.func @transform_0(%arg0: i32) -> (i32, i32) {
    %c0_i32 = arith.constant 0 : i32
    %c0_i32_0 = arith.constant 0 : i32
    return %arg0, %c0_i32 : i32, i32
  }
  func.func @transform_1(%arg0: i32) -> (i32, i32) {
    %c0_i32 = arith.constant 0 : i32
    %c0_i32_0 = arith.constant 0 : i32
    %c0_i32_1 = arith.constant 0 : i32
    return %c0_i32, %c0_i32_0 : i32, i32
  }
  func.func @transform_2(%arg0: i32) -> (i32, i32) {
    %c0_i32 = arith.constant 0 : i32
    %c0_i32_0 = arith.constant 0 : i32
    %c0_i32_1 = arith.constant 0 : i32
    return %c0_i32, %c0_i32_0 : i32, i32
  }
  func.func @transform_3(%arg0: i32) -> (i32, i32) {
    %c0_i32 = arith.constant 0 : i32
    %c0_i32_0 = arith.constant 0 : i32
    %c0_i32_1 = arith.constant 0 : i32
    return %c0_i32, %c0_i32_0 : i32, i32
  }
  func.func @transform_4(%arg0: i32) -> (i32, i32) {
    %c0_i32 = arith.constant 0 : i32
    %c0_i32_0 = arith.constant 0 : i32
    %c0_i32_1 = arith.constant 0 : i32
    return %c0_i32, %c0_i32_0 : i32, i32
  }
  func.func @transform_5(%arg0: i32) -> (i32, i32) {
    %c0_i32 = arith.constant 0 : i32
    %c0_i32_0 = arith.constant 0 : i32
    %c0_i32_1 = arith.constant 0 : i32
    return %c0_i32, %c0_i32_0 : i32, i32
  }
  func.func @transform_6(%arg0: i32) -> (i32, i32) {
    %c0_i32 = arith.constant 0 : i32
    %c0_i32_0 = arith.constant 0 : i32
    %c0_i32_1 = arith.constant 0 : i32
    return %c0_i32, %c0_i32_0 : i32, i32
  }
  func.func @transform_7(%arg0: i32) -> (i32, i32) {
    %c0_i32 = arith.constant 0 : i32
    %c0_i32_0 = arith.constant 0 : i32
    return %arg0, %c0_i32 : i32, i32
  }
}

</mosaic_0001>

<llo_original>
// kernel: poswise_ffn.1
$region0: #{poswise_ffn.1}
  #allocation0 [shape = 'u32[]', space=smem, size = 0x4, offset = 0x4, fixed_abs, tag = 'smem constant byte address 0x4 - core index']
  #allocation1 [shape = 'u32[72,128]{1,0:T(1,128)}', space=vmem, size = 0x9000, scoped, tag = 'internal scratch']
  %s0 = inlined_call_operand.vmem [shape: bf16[16,512], index: 0, kind: input, shape index: {}]
  %s1 = inlined_call_operand.vmem [shape: bf16[512,2048], index: 1, kind: input, shape index: {}]
  %s2 = inlined_call_operand.vmem [shape: f32[1,2048], index: 2, kind: input, shape index: {}]
  %s3 = inlined_call_operand.vmem [shape: bf16[2048,512], index: 3, kind: input, shape index: {}]
  %s4 = inlined_call_operand.vmem [shape: f32[1,512], index: 4, kind: input, shape index: {}]
  %s5 = inlined_call_operand.vmem [shape: f32[1,512], index: 5, kind: input, shape index: {}]
  %s6 = inlined_call_operand.vmem [shape: f32[1,512], index: 6, kind: input, shape index: {}]
  %s7 = inlined_call_operand.hbm [shape: f32[16,512], index: 7, kind: output, shape index: {}]
  %s8 = sld [smem:[#allocation0]]
  $region61: #{poswise_ffn.1} parent=0
    _
  %s10 = ssub.s32 1, %s8
  %s11 = scalar_select 0, %s10, %s8
  $region1: #{poswise_ffn.1} parent=0
    #allocation2 [shape = 'u8[32768]{0}', space=vmem, size = 0x8000, scoped, tag = 'output window, operand 0']
    #allocation3 [shape = 's32[2]{0}', space=sflag, size = 0x8, scoped, tag = 'scoped memory for poswise_ffn.1']
    %12 = vsyncpa [#allocation3], 0
    %s13 = scalar_lea.sflag [#allocation3], 1
    %14 = vsyncpa %s13, 0
    loop: start=0, step=1, limit=4
    $region2: #{poswise_ffn.1} parent=1 // loop_pre_header
      _
    $region3: #{poswise_ffn.1} parent=1 // loop_header
      %s16 = sphi 0, %s20
      %p17 = scmp.ge.s32.totalorder %s16, 4
      %s26 = sphi 0, %s28
      %s29 = sphi 0, %s26
      %s30 = sphi 0, %s29
      %s46 = sphi 0, %s30
      %s50 = sphi 0, %s50
      %s52 = sphi 0, %s50
      %s53 = sphi 0, %s52
      %s67 = sphi 0, %s53
      %s71 = sphi 0, %s71
      %s73 = sphi 0, %s71
      %s74 = sphi 0, %s73
      %s88 = sphi 0, %s74
      %s92 = sphi 0, %s92
      %s94 = sphi 0, %s92
      %s95 = sphi 0, %s94
      %s109 = sphi 0, %s95
      %s113 = sphi 0, %s113
      %s115 = sphi 0, %s113
      %s116 = sphi 0, %s115
      %s130 = sphi 0, %s116
      %s134 = sphi 0, %s134
      %s136 = sphi 0, %s134
      %s137 = sphi 0, %s136
      %s151 = sphi 0, %s137
      %s155 = sphi 0, %s155
      %s157 = sphi 0, %s155
      %s158 = sphi 0, %s157
      %s172 = sphi 0, %s158
      %s178 = sphi 0, %s180
      %s181 = sphi 0, %s178
      %s182 = sphi 0, %s181
      %s198 = sphi 0, %s182
    $region4: #{poswise_ffn.1} parent=1 // loop_header_branch
      %19 = sbr.rel (%p17) target = $region8
    $region5: #{poswise_ffn.1} parent=1 // loop_body
      %s21 = ssub.s32 %s16, 1
      %s22 = ssub.s32 %s16, 2
      %s23 = sadd.s32 %s16, 1
      %s24 = ssub.s32 %s16, %s23
      %p25 = scmp.eq.s32.totalorder %s24, 0
      %s27 = sadd.s32 %s26, 1
      %s28 = scalar_select %p25, %s26, %s27
      %p31 = pneg %p25
      %p32 = scmp.eq.s32.totalorder %s16, 1
      %p33 = por %p31, %p32
      %p34 = scmp.ne.s32.totalorder %s26, %s29
      %p35 = scmp.eq.s32.totalorder %s16, 0
      %p36 = por %p34, %p35
      %p37 = scmp.ne.s32.totalorder %s26, %s29
      %p38 = scmp.eq.s32.totalorder %s21, 1
      %p39 = por %p37, %p38
      %p40 = scmp.ne.s32.totalorder %s29, %s30
      %p41 = scmp.eq.s32.totalorder %s21, 0
      %p42 = por %p40, %p41
      %p43 = scmp.ne.s32.totalorder %s29, %s30
      %p44 = scmp.eq.s32.totalorder %s22, 1
      %p45 = por %p43, %p44
      %p47 = scmp.ne.s32.totalorder %s30, %s46
      %p48 = scmp.eq.s32.totalorder %s22, 0
      %p49 = por %p47, %p48
      %s51 = sadd.s32 %s50, 1
      %p54 = scmp.eq.s32.totalorder %s16, 1
      %p55 = scmp.ne.s32.totalorder %s50, %s52
      %p56 = scmp.eq.s32.totalorder %s16, 0
      %p57 = por %p55, %p56
      %p58 = scmp.ne.s32.totalorder %s50, %s52
      %p59 = scmp.eq.s32.totalorder %s21, 1
      %p60 = por %p58, %p59
      %p61 = scmp.ne.s32.totalorder %s52, %s53
      %p62 = scmp.eq.s32.totalorder %s21, 0
      %p63 = por %p61, %p62
      %p64 = scmp.ne.s32.totalorder %s52, %s53
      %p65 = scmp.eq.s32.totalorder %s22, 1
      %p66 = por %p64, %p65
      %p68 = scmp.ne.s32.totalorder %s53, %s67
      %p69 = scmp.eq.s32.totalorder %s22, 0
      %p70 = por %p68, %p69
      %s72 = sadd.s32 %s71, 1
      %p75 = scmp.eq.s32.totalorder %s16, 1
      %p76 = scmp.ne.s32.totalorder %s71, %s73
      %p77 = scmp.eq.s32.totalorder %s16, 0
      %p78 = por %p76, %p77
      %p79 = scmp.ne.s32.totalorder %s71, %s73
      %p80 = scmp.eq.s32.totalorder %s21, 1
      %p81 = por %p79, %p80
      %p82 = scmp.ne.s32.totalorder %s73, %s74
      %p83 = scmp.eq.s32.totalorder %s21, 0
      %p84 = por %p82, %p83
      %p85 = scmp.ne.s32.totalorder %s73, %s74
      %p86 = scmp.eq.s32.totalorder %s22, 1
      %p87 = por %p85, %p86
      %p89 = scmp.ne.s32.totalorder %s74, %s88
      %p90 = scmp.eq.s32.totalorder %s22, 0
      %p91 = por %p89, %p90
      %s93 = sadd.s32 %s92, 1
      %p96 = scmp.eq.s32.totalorder %s16, 1
      %p97 = scmp.ne.s32.totalorder %s92, %s94
      %p98 = scmp.eq.s32.totalorder %s16, 0
      %p99 = por %p97, %p98
      %p100 = scmp.ne.s32.totalorder %s92, %s94
      %p101 = scmp.eq.s32.totalorder %s21, 1
      %p102 = por %p100, %p101
      %p103 = scmp.ne.s32.totalorder %s94, %s95
      %p104 = scmp.eq.s32.totalorder %s21, 0
      %p105 = por %p103, %p104
      %p106 = scmp.ne.s32.totalorder %s94, %s95
      %p107 = scmp.eq.s32.totalorder %s22, 1
      %p108 = por %p106, %p107
      %p110 = scmp.ne.s32.totalorder %s95, %s109
      %p111 = scmp.eq.s32.totalorder %s22, 0
      %p112 = por %p110, %p111
      %s114 = sadd.s32 %s113, 1
      %p117 = scmp.eq.s32.totalorder %s16, 1
      %p118 = scmp.ne.s32.totalorder %s113, %s115
      %p119 = scmp.eq.s32.totalorder %s16, 0
      %p120 = por %p118, %p119
      %p121 = scmp.ne.s32.totalorder %s113, %s115
      %p122 = scmp.eq.s32.totalorder %s21, 1
      %p123 = por %p121, %p122
      %p124 = scmp.ne.s32.totalorder %s115, %s116
      %p125 = scmp.eq.s32.totalorder %s21, 0
      %p126 = por %p124, %p125
      %p127 = scmp.ne.s32.totalorder %s115, %s116
      %p128 = scmp.eq.s32.totalorder %s22, 1
      %p129 = por %p127, %p128
      %p131 = scmp.ne.s32.totalorder %s116, %s130
      %p132 = scmp.eq.s32.totalorder %s22, 0
      %p133 = por %p131, %p132
      %s135 = sadd.s32 %s134, 1
      %p138 = scmp.eq.s32.totalorder %s16, 1
      %p139 = scmp.ne.s32.totalorder %s134, %s136
      %p140 = scmp.eq.s32.totalorder %s16, 0
      %p141 = por %p139, %p140
      %p142 = scmp.ne.s32.totalorder %s134, %s136
      %p143 = scmp.eq.s32.totalorder %s21, 1
      %p144 = por %p142, %p143
      %p145 = scmp.ne.s32.totalorder %s136, %s137
      %p146 = scmp.eq.s32.totalorder %s21, 0
      %p147 = por %p145, %p146
      %p148 = scmp.ne.s32.totalorder %s136, %s137
      %p149 = scmp.eq.s32.totalorder %s22, 1
      %p150 = por %p148, %p149
      %p152 = scmp.ne.s32.totalorder %s137, %s151
      %p153 = scmp.eq.s32.totalorder %s22, 0
      %p154 = por %p152, %p153
      %s156 = sadd.s32 %s155, 1
      %p159 = scmp.eq.s32.totalorder %s16, 1
      %p160 = scmp.ne.s32.totalorder %s155, %s157
      %p161 = scmp.eq.s32.totalorder %s16, 0
      %p162 = por %p160, %p161
      %p163 = scmp.ne.s32.totalorder %s155, %s157
      %p164 = scmp.eq.s32.totalorder %s21, 1
      %p165 = por %p163, %p164
      %p166 = scmp.ne.s32.totalorder %s157, %s158
      %p167 = scmp.eq.s32.totalorder %s21, 0
      %p168 = por %p166, %p167
      %p169 = scmp.ne.s32.totalorder %s157, %s158
      %p170 = scmp.eq.s32.totalorder %s22, 1
      %p171 = por %p169, %p170
      %p173 = scmp.ne.s32.totalorder %s158, %s172
      %p174 = scmp.eq.s32.totalorder %s22, 0
      %p175 = por %p173, %p174
      %s176 = ssub.s32 %s16, %s23
      %p177 = scmp.eq.s32.totalorder %s176, 0
      %s179 = sadd.s32 %s178, 1
      %s180 = scalar_select %p177, %s178, %s179
      %p183 = pneg %p177
      %p184 = scmp.eq.s32.totalorder %s16, 1
      %p185 = por %p183, %p184
      %p186 = scmp.ne.s32.totalorder %s178, %s181
      %p187 = scmp.eq.s32.totalorder %s16, 0
      %p188 = por %p186, %p187
      %p189 = scmp.ne.s32.totalorder %s178, %s181
      %p190 = scmp.eq.s32.totalorder %s21, 1
      %p191 = por %p189, %p190
      %p192 = scmp.ne.s32.totalorder %s181, %s182
      %p193 = scmp.eq.s32.totalorder %s21, 0
      %p194 = por %p192, %p193
      %p195 = scmp.ne.s32.totalorder %s181, %s182
      %p196 = scmp.eq.s32.totalorder %s22, 1
      %p197 = por %p195, %p196
      %p199 = scmp.ne.s32.totalorder %s182, %s198
      %p200 = scmp.eq.s32.totalorder %s22, 0
      %p201 = por %p199, %p200
      %p202 = scmp.le.s32.totalorder 1, %s16
      %p203 = scmp.lt.s32.totalorder %s16, 3
      %p204 = pnand %p202, %p203
      %p205 = pneg %p204
      // Predicated region
      $region9: #{poswise_ffn.1} parent=5 // pred_check
        _
      $region10: #{poswise_ffn.1} parent=5 // pred_check_branch
        %207 = sbr.rel (%p204) target = $region12
      $region11: #{poswise_ffn.1} parent=5 // pred_region
        %s208 = ssub.s32 %s16, 1
        // Predicated region
        $region13: #{poswise_ffn.1} parent=11 // pred_check
          %p209 = pneg %p63
        $region14: #{poswise_ffn.1} parent=11 // pred_check_branch
          %211 = sbr.rel (%p209) target = $region16
        $region15: #{poswise_ffn.1} parent=11 // pred_region
          _
        $region16: #{poswise_ffn.1} parent=11 // pred_fallthru
          _
        // Predicated region
        $region17: #{poswise_ffn.1} parent=11 // pred_check
          %p212 = pneg %p84
        $region18: #{poswise_ffn.1} parent=11 // pred_check_branch
          %214 = sbr.rel (%p212) target = $region20
        $region19: #{poswise_ffn.1} parent=11 // pred_region
          _
        $region20: #{poswise_ffn.1} parent=11 // pred_fallthru
          _
        // Predicated region
        $region21: #{poswise_ffn.1} parent=11 // pred_check
          %p215 = pneg %p105
        $region22: #{poswise_ffn.1} parent=11 // pred_check_branch
          %217 = sbr.rel (%p215) target = $region24
        $region23: #{poswise_ffn.1} parent=11 // pred_region
          _
        $region24: #{poswise_ffn.1} parent=11 // pred_fallthru
          _
        // Predicated region
        $region25: #{poswise_ffn.1} parent=11 // pred_check
          %p218 = pneg %p126
        $region26: #{poswise_ffn.1} parent=11 // pred_check_branch
          %220 = sbr.rel (%p218) target = $region28
        $region27: #{poswise_ffn.1} parent=11 // pred_region
          _
        $region28: #{poswise_ffn.1} parent=11 // pred_fallthru
          _
        // Predicated region
        $region29: #{poswise_ffn.1} parent=11 // pred_check
          %p221 = pneg %p147
        $region30: #{poswise_ffn.1} parent=11 // pred_check_branch
          %223 = sbr.rel (%p221) target = $region32
        $region31: #{poswise_ffn.1} parent=11 // pred_region
          _
        $region32: #{poswise_ffn.1} parent=11 // pred_fallthru
          _
        // Predicated region
        $region33: #{poswise_ffn.1} parent=11 // pred_check
          %p224 = pneg %p168
        $region34: #{poswise_ffn.1} parent=11 // pred_check_branch
          %226 = sbr.rel (%p224) target = $region36
        $region35: #{poswise_ffn.1} parent=11 // pred_region
          _
        $region36: #{poswise_ffn.1} parent=11 // pred_fallthru
          _
      $region12: #{poswise_ffn.1} parent=5 // pred_fallthru
        _
      %p227 = scmp.lt.s32.totalorder %s16, 2
      // Predicated region
      $region37: #{poswise_ffn.1} parent=5 // pred_check
        %p228 = pneg %p227
      $region38: #{poswise_ffn.1} parent=5 // pred_check_branch
        %230 = sbr.rel (%p228) target = $region40
      $region39: #{poswise_ffn.1} parent=5 // pred_region
        // Predicated region
        $region41: #{poswise_ffn.1} parent=39 // pred_check
          %p231 = pneg %p36
        $region42: #{poswise_ffn.1} parent=39 // pred_check_branch
          %233 = sbr.rel (%p231) target = $region44
        $region43: #{poswise_ffn.1} parent=39 // pred_region
          %p234 = scmp.lt.s32.totalorder %s16, 1
          %s235 = scalar_select %p234, %s16, 1
          %s236 = smul.addr %s235, 4
          %s237 = smul.addr %s236, 4
          %s238 = scalar_lea.vmem %s0, %s237
        $region44: #{poswise_ffn.1} parent=39 // pred_fallthru
          _
      $region40: #{poswise_ffn.1} parent=5 // pred_fallthru
        _
      %p239 = scmp.le.s32.totalorder 1, %s16
      %p240 = scmp.lt.s32.totalorder %s16, 3
      %p241 = pnand %p239, %p240
      %p242 = pneg %p241
      // Predicated region
      $region45: #{poswise_ffn.1} parent=5 // pred_check
        _
      $region46: #{poswise_ffn.1} parent=5 // pred_check_branch
        %244 = sbr.rel (%p241) target = $region48
      $region47: #{poswise_ffn.1} parent=5 // pred_region
        %s245 = ssub.s32 %s16, 1
        %p246 = scmp.lt.s32.totalorder %s21, 1
        %s247 = scalar_select %p246, %s21, 1
        %s248 = smul.addr %s247, 4
        %s249 = smul.addr %s248, 4
        %s250 = scalar_lea.vmem %s0, %s249
        %p251 = pneg %p42
        %p252 = pneg %p39
        %p253 = pneg %p63
        %p254 = pneg %p60
        %p255 = pneg %p84
        %p256 = pneg %p81
        %p257 = pneg %p105
        %p258 = pneg %p102
        %p259 = pneg %p126
        %p260 = pneg %p123
        %p261 = pneg %p147
        %p262 = pneg %p144
        %p263 = pneg %p168
        %p264 = pneg %p165
        %p265 = pneg %p194
        %p266 = pneg %p191
        %s267 = sand.u32 %s181, 1
        %s268 = scalar_lea.sflag [#allocation3], %s267
        %s269 = sand.u32 %s181, 1
        %s270 = smul.addr %s269, 32
        %s271 = scalar_lea.vmem [#allocation2], %s270
        %p272 = scmp.lt.s32.totalorder %s21, 1
        %s273 = scalar_select %p272, %s21, 1
        %s274 = smul.addr %s273, 4
        %s275 = smul.addr %s274, 4
        %s276 = scalar_lea.vmem %s0, %s275
        %v277 = vld [vmem:[%s276] sm:$0xff]
        %v278 = vld [vmem:[%s276 + $0x8] sm:$0xff]
        %v279 = vunpack.c.l.bf16 %v277
        %v280 = vunpack.c.h.bf16 %v277
        %v281 = vunpack.c.l.bf16 %v278
        %v282 = vunpack.c.h.bf16 %v278
        %v283 = vld [vmem:[%s4] sm:$0xf]
        %v285 = vperm.slane %v283, 0
        %v286 = vperm.slane %v283, 1
        %v287 = vperm.slane %v283, 2
        %v288 = vperm.slane %v283, 3
        %v293 = vadd.f32 %v279, %v285
        %v294 = vadd.f32 %v280, %v286
        %v295 = vadd.f32 %v281, %v287
        %v296 = vadd.f32 %v282, %v288
        %v297 = vld [vmem:[%s1] sm:$0xff]
        %v298 = vld [vmem:[%s1 + $0x8] sm:$0xff]
        %v299 = vld [vmem:[%s1 + $0x40] sm:$0xff]
        %v300 = vld [vmem:[%s1 + $0x48] sm:$0xff]
        %v301 = vld [vmem:[%s1 + $0x80] sm:$0xff]
        %v302 = vld [vmem:[%s1 + $0x88] sm:$0xff]
        %v303 = vld [vmem:[%s1 + $0xc0] sm:$0xff]
        %v304 = vld [vmem:[%s1 + $0xc8] sm:$0xff]
        %v305 = vld [vmem:[%s1 + $0x100] sm:$0xff]
        %v306 = vld [vmem:[%s1 + $0x108] sm:$0xff]
        %v307 = vld [vmem:[%s1 + $0x140] sm:$0xff]
        %v308 = vld [vmem:[%s1 + $0x148] sm:$0xff]
        %v309 = vld [vmem:[%s1 + $0x180] sm:$0xff]
        %v310 = vld [vmem:[%s1 + $0x188] sm:$0xff]
        %v311 = vld [vmem:[%s1 + $0x1c0] sm:$0xff]
        %v312 = vld [vmem:[%s1 + $0x1c8] sm:$0xff]
        %v313 = vld [vmem:[%s1 + $0x200] sm:$0xff]
        %v314 = vld [vmem:[%s1 + $0x208] sm:$0xff]
        %v315 = vld [vmem:[%s1 + $0x240] sm:$0xff]
        %v316 = vld [vmem:[%s1 + $0x248] sm:$0xff]
        %v317 = vld [vmem:[%s1 + $0x280] sm:$0xff]
        %v318 = vld [vmem:[%s1 + $0x288] sm:$0xff]
        %v319 = vld [vmem:[%s1 + $0x2c0] sm:$0xff]
        %v320 = vld [vmem:[%s1 + $0x2c8] sm:$0xff]
        %v321 = vld [vmem:[%s1 + $0x300] sm:$0xff]
        %v322 = vld [vmem:[%s1 + $0x308] sm:$0xff]
        %v323 = vld [vmem:[%s1 + $0x340] sm:$0xff]
        %v324 = vld [vmem:[%s1 + $0x348] sm:$0xff]
        %v325 = vld [vmem:[%s1 + $0x380] sm:$0xff]
        %v326 = vld [vmem:[%s1 + $0x388] sm:$0xff]
        %v327 = vld [vmem:[%s1 + $0x3c0] sm:$0xff]
        %v328 = vld [vmem:[%s1 + $0x3c8] sm:$0xff]
        %v329 = vld [vmem:[%s1 + $0x400] sm:$0xff]
        %v330 = vld [vmem:[%s1 + $0x408] sm:$0xff]
        %v331 = vld [vmem:[%s1 + $0x440] sm:$0xff]
        %v332 = vld [vmem:[%s1 + $0x448] sm:$0xff]
        %v333 = vld [vmem:[%s1 + $0x480] sm:$0xff]
        %v334 = vld [vmem:[%s1 + $0x488] sm:$0xff]
        %v335 = vld [vmem:[%s1 + $0x4c0] sm:$0xff]
        %v336 = vld [vmem:[%s1 + $0x4c8] sm:$0xff]
        %v337 = vld [vmem:[%s1 + $0x500] sm:$0xff]
        %v338 = vld [vmem:[%s1 + $0x508] sm:$0xff]
        %v339 = vld [vmem:[%s1 + $0x540] sm:$0xff]
        %v340 = vld [vmem:[%s1 + $0x548] sm:$0xff]
        %v341 = vld [vmem:[%s1 + $0x580] sm:$0xff]
        %v342 = vld [vmem:[%s1 + $0x588] sm:$0xff]
        %v343 = vld [vmem:[%s1 + $0x5c0] sm:$0xff]
        %v344 = vld [vmem:[%s1 + $0x5c8] sm:$0xff]
        %v345 = vld [vmem:[%s1 + $0x600] sm:$0xff]
        %v346 = vld [vmem:[%s1 + $0x608] sm:$0xff]
        %v347 = vld [vmem:[%s1 + $0x640] sm:$0xff]
        %v348 = vld [vmem:[%s1 + $0x648] sm:$0xff]
        %v349 = vld [vmem:[%s1 + $0x680] sm:$0xff]
        %v350 = vld [vmem:[%s1 + $0x688] sm:$0xff]
        %v351 = vld [vmem:[%s1 + $0x6c0] sm:$0xff]
        %v352 = vld [vmem:[%s1 + $0x6c8] sm:$0xff]
        %v353 = vld [vmem:[%s1 + $0x700] sm:$0xff]
        %v354 = vld [vmem:[%s1 + $0x708] sm:$0xff]
        %v355 = vld [vmem:[%s1 + $0x740] sm:$0xff]
        %v356 = vld [vmem:[%s1 + $0x748] sm:$0xff]
        %v357 = vld [vmem:[%s1 + $0x780] sm:$0xff]
        %v358 = vld [vmem:[%s1 + $0x788] sm:$0xff]
        %v359 = vld [vmem:[%s1 + $0x7c0] sm:$0xff]
        %v360 = vld [vmem:[%s1 + $0x7c8] sm:$0xff]
        %v361 = vld [vmem:[%s1 + $0x800] sm:$0xff]
        %v362 = vld [vmem:[%s1 + $0x808] sm:$0xff]
        %v363 = vld [vmem:[%s1 + $0x840] sm:$0xff]
        %v364 = vld [vmem:[%s1 + $0x848] sm:$0xff]
        %v365 = vld [vmem:[%s1 + $0x880] sm:$0xff]
        %v366 = vld [vmem:[%s1 + $0x888] sm:$0xff]
        %v367 = vld [vmem:[%s1 + $0x8c0] sm:$0xff]
        %v368 = vld [vmem:[%s1 + $0x8c8] sm:$0xff]
        %v369 = vld [vmem:[%s1 + $0x900] sm:$0xff]
        %v370 = vld [vmem:[%s1 + $0x908] sm:$0xff]
        %v371 = vld [vmem:[%s1 + $0x940] sm:$0xff]
        %v372 = vld [vmem:[%s1 + $0x948] sm:$0xff]
        %v373 = vld [vmem:[%s1 + $0x980] sm:$0xff]
        %v374 = vld [vmem:[%s1 + $0x988] sm:$0xff]
        %v375 = vld [vmem:[%s1 + $0x9c0] sm:$0xff]
        %v376 = vld [vmem:[%s1 + $0x9c8] sm:$0xff]
        %v377 = vld [vmem:[%s1 + $0xa00] sm:$0xff]
        %v378 = vld [vmem:[%s1 + $0xa08] sm:$0xff]
        %v379 = vld [vmem:[%s1 + $0xa40] sm:$0xff]
        %v380 = vld [vmem:[%s1 + $0xa48] sm:$0xff]
        %v381 = vld [vmem:[%s1 + $0xa80] sm:$0xff]
        %v382 = vld [vmem:[%s1 + $0xa88] sm:$0xff]
        %v383 = vld [vmem:[%s1 + $0xac0] sm:$0xff]
        %v384 = vld [vmem:[%s1 + $0xac8] sm:$0xff]
        %v385 = vld [vmem:[%s1 + $0xb00] sm:$0xff]
        %v386 = vld [vmem:[%s1 + $0xb08] sm:$0xff]
        %v387 = vld [vmem:[%s1 + $0xb40] sm:$0xff]
        %v388 = vld [vmem:[%s1 + $0xb48] sm:$0xff]
        %v389 = vld [vmem:[%s1 + $0xb80] sm:$0xff]
        %v390 = vld [vmem:[%s1 + $0xb88] sm:$0xff]
        %v391 = vld [vmem:[%s1 + $0xbc0] sm:$0xff]
        %v392 = vld [vmem:[%s1 + $0xbc8] sm:$0xff]
        %v393 = vld [vmem:[%s1 + $0xc00] sm:$0xff]
        %v394 = vld [vmem:[%s1 + $0xc08] sm:$0xff]
        %v395 = vld [vmem:[%s1 + $0xc40] sm:$0xff]
        %v396 = vld [vmem:[%s1 + $0xc48] sm:$0xff]
        %v397 = vld [vmem:[%s1 + $0xc80] sm:$0xff]
        %v398 = vld [vmem:[%s1 + $0xc88] sm:$0xff]
        %v399 = vld [vmem:[%s1 + $0xcc0] sm:$0xff]
        %v400 = vld [vmem:[%s1 + $0xcc8] sm:$0xff]
        %v401 = vld [vmem:[%s1 + $0xd00] sm:$0xff]
        %v402 = vld [vmem:[%s1 + $0xd08] sm:$0xff]
        %v403 = vld [vmem:[%s1 + $0xd40] sm:$0xff]
        %v404 = vld [vmem:[%s1 + $0xd48] sm:$0xff]
        %v405 = vld [vmem:[%s1 + $0xd80] sm:$0xff]
        %v406 = vld [vmem:[%s1 + $0xd88] sm:$0xff]
        %v407 = vld [vmem:[%s1 + $0xdc0] sm:$0xff]
        %v408 = vld [vmem:[%s1 + $0xdc8] sm:$0xff]
        %v409 = vld [vmem:[%s1 + $0xe00] sm:$0xff]
        %v410 = vld [vmem:[%s1 + $0xe08] sm:$0xff]
        %v411 = vld [vmem:[%s1 + $0xe40] sm:$0xff]
        %v412 = vld [vmem:[%s1 + $0xe48] sm:$0xff]
        %v413 = vld [vmem:[%s1 + $0xe80] sm:$0xff]
        %v414 = vld [vmem:[%s1 + $0xe88] sm:$0xff]
        %v415 = vld [vmem:[%s1 + $0xec0] sm:$0xff]
        %v416 = vld [vmem:[%s1 + $0xec8] sm:$0xff]
        %v417 = vld [vmem:[%s1 + $0xf00] sm:$0xff]
        %v418 = vld [vmem:[%s1 + $0xf08] sm:$0xff]
        %v419 = vld [vmem:[%s1 + $0xf40] sm:$0xff]
        %v420 = vld [vmem:[%s1 + $0xf48] sm:$0xff]
        %v421 = vld [vmem:[%s1 + $0xf80] sm:$0xff]
        %v422 = vld [vmem:[%s1 + $0xf88] sm:$0xff]
        %v423 = vld [vmem:[%s1 + $0xfc0] sm:$0xff]
        %v424 = vld [vmem:[%s1 + $0xfc8] sm:$0xff]
        %v427 = vunpack.c.l.b16 %v277
        %v428 = vunpack.c.h.b16 %v277
        %v429 = vunpack.c.l.b16 %v278
        %v430 = vunpack.c.h.b16 %v278
        %v431 = vpack.c.b16 %v427, %v427
        %v432 = vpack.c.b16 %v428, %v428
        %v433 = vpack.c.b16 %v429, %v429
        %v434 = vpack.c.b16 %v430, %v430
        %v567 = vunpack.c.l.b16 %v297
        %v568 = vunpack.c.h.b16 %v297
        %v569 = vunpack.c.l.b16 %v298
        %v570 = vunpack.c.h.b16 %v298
        %v571 = vunpack.c.l.b16 %v299
        %v572 = vunpack.c.h.b16 %v299
        %v573 = vunpack.c.l.b16 %v300
        %v574 = vunpack.c.h.b16 %v300
        %v575 = vunpack.c.l.b16 %v301
        %v576 = vunpack.c.h.b16 %v301
        %v577 = vunpack.c.l.b16 %v302
        %v578 = vunpack.c.h.b16 %v302
        %v579 = vunpack.c.l.b16 %v303
        %v580 = vunpack.c.h.b16 %v303
        %v581 = vunpack.c.l.b16 %v304
        %v582 = vunpack.c.h.b16 %v304
        %v583 = vunpack.c.l.b16 %v305
        %v584 = vunpack.c.h.b16 %v305
        %v585 = vunpack.c.l.b16 %v306
        %v586 = vunpack.c.h.b16 %v306
        %v587 = vunpack.c.l.b16 %v307
        %v588 = vunpack.c.h.b16 %v307
        %v589 = vunpack.c.l.b16 %v308
        %v590 = vunpack.c.h.b16 %v308
        %v591 = vunpack.c.l.b16 %v309
        %v592 = vunpack.c.h.b16 %v309
        %v593 = vunpack.c.l.b16 %v310
        %v594 = vunpack.c.h.b16 %v310
        %v595 = vunpack.c.l.b16 %v311
        %v596 = vunpack.c.h.b16 %v311
        %v597 = vunpack.c.l.b16 %v312
        %v598 = vunpack.c.h.b16 %v312
        %v599 = vunpack.c.l.b16 %v313
        %v600 = vunpack.c.h.b16 %v313
        %v601 = vunpack.c.l.b16 %v314
        %v602 = vunpack.c.h.b16 %v314
        %v603 = vunpack.c.l.b16 %v315
        %v604 = vunpack.c.h.b16 %v315
        %v605 = vunpack.c.l.b16 %v316
        %v606 = vunpack.c.h.b16 %v316
        %v607 = vunpack.c.l.b16 %v317
        %v608 = vunpack.c.h.b16 %v317
        %v609 = vunpack.c.l.b16 %v318
        %v610 = vunpack.c.h.b16 %v318
        %v611 = vunpack.c.l.b16 %v319
        %v612 = vunpack.c.h.b16 %v319
        %v613 = vunpack.c.l.b16 %v320
        %v614 = vunpack.c.h.b16 %v320
        %v615 = vunpack.c.l.b16 %v321
        %v616 = vunpack.c.h.b16 %v321
        %v617 = vunpack.c.l.b16 %v322
        %v618 = vunpack.c.h.b16 %v322
        %v619 = vunpack.c.l.b16 %v323
        %v620 = vunpack.c.h.b16 %v323
        %v621 = vunpack.c.l.b16 %v324
        %v622 = vunpack.c.h.b16 %v324
        %v623 = vunpack.c.l.b16 %v325
        %v624 = vunpack.c.h.b16 %v325
        %v625 = vunpack.c.l.b16 %v326
        %v626 = vunpack.c.h.b16 %v326
        %v627 = vunpack.c.l.b16 %v327
        %v628 = vunpack.c.h.b16 %v327
        %v629 = vunpack.c.l.b16 %v328
        %v630 = vunpack.c.h.b16 %v328
        %v631 = vunpack.c.l.b16 %v329
        %v632 = vunpack.c.h.b16 %v329
        %v633 = vunpack.c.l.b16 %v330
        %v634 = vunpack.c.h.b16 %v330
        %v635 = vunpack.c.l.b16 %v331
        %v636 = vunpack.c.h.b16 %v331
        %v637 = vunpack.c.l.b16 %v332
        %v638 = vunpack.c.h.b16 %v332
        %v639 = vunpack.c.l.b16 %v333
        %v640 = vunpack.c.h.b16 %v333
        %v641 = vunpack.c.l.b16 %v334
        %v642 = vunpack.c.h.b16 %v334
        %v643 = vunpack.c.l.b16 %v335
        %v644 = vunpack.c.h.b16 %v335
        %v645 = vunpack.c.l.b16 %v336
        %v646 = vunpack.c.h.b16 %v336
        %v647 = vunpack.c.l.b16 %v337
        %v648 = vunpack.c.h.b16 %v337
        %v649 = vunpack.c.l.b16 %v338
        %v650 = vunpack.c.h.b16 %v338
        %v651 = vunpack.c.l.b16 %v339
        %v652 = vunpack.c.h.b16 %v339
        %v653 = vunpack.c.l.b16 %v340
        %v654 = vunpack.c.h.b16 %v340
        %v655 = vunpack.c.l.b16 %v341
        %v656 = vunpack.c.h.b16 %v341
        %v657 = vunpack.c.l.b16 %v342
        %v658 = vunpack.c.h.b16 %v342
        %v659 = vunpack.c.l.b16 %v343
        %v660 = vunpack.c.h.b16 %v343
        %v661 = vunpack.c.l.b16 %v344
        %v662 = vunpack.c.h.b16 %v344
        %v663 = vunpack.c.l.b16 %v345
        %v664 = vunpack.c.h.b16 %v345
        %v665 = vunpack.c.l.b16 %v346
        %v666 = vunpack.c.h.b16 %v346
        %v667 = vunpack.c.l.b16 %v347
        %v668 = vunpack.c.h.b16 %v347
        %v669 = vunpack.c.l.b16 %v348
        %v670 = vunpack.c.h.b16 %v348
        %v671 = vunpack.c.l.b16 %v349
        %v672 = vunpack.c.h.b16 %v349
        %v673 = vunpack.c.l.b16 %v350
        %v674 = vunpack.c.h.b16 %v350
        %v675 = vunpack.c.l.b16 %v351
        %v676 = vunpack.c.h.b16 %v351
        %v677 = vunpack.c.l.b16 %v352
        %v678 = vunpack.c.h.b16 %v352
        %v679 = vunpack.c.l.b16 %v353
        %v680 = vunpack.c.h.b16 %v353
        %v681 = vunpack.c.l.b16 %v354
        %v682 = vunpack.c.h.b16 %v354
        %v683 = vunpack.c.l.b16 %v355
        %v684 = vunpack.c.h.b16 %v355
        %v685 = vunpack.c.l.b16 %v356
        %v686 = vunpack.c.h.b16 %v356
        %v687 = vunpack.c.l.b16 %v357
        %v688 = vunpack.c.h.b16 %v357
        %v689 = vunpack.c.l.b16 %v358
        %v690 = vunpack.c.h.b16 %v358
        %v691 = vunpack.c.l.b16 %v359
        %v692 = vunpack.c.h.b16 %v359
        %v693 = vunpack.c.l.b16 %v360
        %v694 = vunpack.c.h.b16 %v360
        %v695 = vunpack.c.l.b16 %v361
        %v696 = vunpack.c.h.b16 %v361
        %v697 = vunpack.c.l.b16 %v362
        %v698 = vunpack.c.h.b16 %v362
        %v699 = vunpack.c.l.b16 %v363
        %v700 = vunpack.c.h.b16 %v363
        %v701 = vunpack.c.l.b16 %v364
        %v702 = vunpack.c.h.b16 %v364
        %v703 = vunpack.c.l.b16 %v365
        %v704 = vunpack.c.h.b16 %v365
        %v705 = vunpack.c.l.b16 %v366
        %v706 = vunpack.c.h.b16 %v366
        %v707 = vunpack.c.l.b16 %v367
        %v708 = vunpack.c.h.b16 %v367
        %v709 = vunpack.c.l.b16 %v368
        %v710 = vunpack.c.h.b16 %v368
        %v711 = vunpack.c.l.b16 %v369
        %v712 = vunpack.c.h.b16 %v369
        %v713 = vunpack.c.l.b16 %v370
        %v714 = vunpack.c.h.b16 %v370
        %v715 = vunpack.c.l.b16 %v371
        %v716 = vunpack.c.h.b16 %v371
        %v717 = vunpack.c.l.b16 %v372
        %v718 = vunpack.c.h.b16 %v372
        %v719 = vunpack.c.l.b16 %v373
        %v720 = vunpack.c.h.b16 %v373
        %v721 = vunpack.c.l.b16 %v374
        %v722 = vunpack.c.h.b16 %v374
        %v723 = vunpack.c.l.b16 %v375
        %v724 = vunpack.c.h.b16 %v375
        %v725 = vunpack.c.l.b16 %v376
        %v726 = vunpack.c.h.b16 %v376
        %v727 = vunpack.c.l.b16 %v377
        %v728 = vunpack.c.h.b16 %v377
        %v729 = vunpack.c.l.b16 %v378
        %v730 = vunpack.c.h.b16 %v378
        %v731 = vunpack.c.l.b16 %v379
        %v732 = vunpack.c.h.b16 %v379
        %v733 = vunpack.c.l.b16 %v380
        %v734 = vunpack.c.h.b16 %v380
        %v735 = vunpack.c.l.b16 %v381
        %v736 = vunpack.c.h.b16 %v381
        %v737 = vunpack.c.l.b16 %v382
        %v738 = vunpack.c.h.b16 %v382
        %v739 = vunpack.c.l.b16 %v383
        %v740 = vunpack.c.h.b16 %v383
        %v741 = vunpack.c.l.b16 %v384
        %v742 = vunpack.c.h.b16 %v384
        %v743 = vunpack.c.l.b16 %v385
        %v744 = vunpack.c.h.b16 %v385
        %v745 = vunpack.c.l.b16 %v386
        %v746 = vunpack.c.h.b16 %v386
        %v747 = vunpack.c.l.b16 %v387
        %v748 = vunpack.c.h.b16 %v387
        %v749 = vunpack.c.l.b16 %v388
        %v750 = vunpack.c.h.b16 %v388
        %v751 = vunpack.c.l.b16 %v389
        %v752 = vunpack.c.h.b16 %v389
        %v753 = vunpack.c.l.b16 %v390
        %v754 = vunpack.c.h.b16 %v390
        %v755 = vunpack.c.l.b16 %v391
        %v756 = vunpack.c.h.b16 %v391
        %v757 = vunpack.c.l.b16 %v392
        %v758 = vunpack.c.h.b16 %v392
        %v759 = vunpack.c.l.b16 %v393
        %v760 = vunpack.c.h.b16 %v393
        %v761 = vunpack.c.l.b16 %v394
        %v762 = vunpack.c.h.b16 %v394
        %v763 = vunpack.c.l.b16 %v395
        %v764 = vunpack.c.h.b16 %v395
        %v765 = vunpack.c.l.b16 %v396
        %v766 = vunpack.c.h.b16 %v396
        %v767 = vunpack.c.l.b16 %v397
        %v768 = vunpack.c.h.b16 %v397
        %v769 = vunpack.c.l.b16 %v398
        %v770 = vunpack.c.h.b16 %v398
        %v771 = vunpack.c.l.b16 %v399
        %v772 = vunpack.c.h.b16 %v399
        %v773 = vunpack.c.l.b16 %v400
        %v774 = vunpack.c.h.b16 %v400
        %v775 = vunpack.c.l.b16 %v401
        %v776 = vunpack.c.h.b16 %v401
        %v777 = vunpack.c.l.b16 %v402
        %v778 = vunpack.c.h.b16 %v402
        %v779 = vunpack.c.l.b16 %v403
        %v780 = vunpack.c.h.b16 %v403
        %v781 = vunpack.c.l.b16 %v404
        %v782 = vunpack.c.h.b16 %v404
        %v783 = vunpack.c.l.b16 %v405
        %v784 = vunpack.c.h.b16 %v405
        %v785 = vunpack.c.l.b16 %v406
        %v786 = vunpack.c.h.b16 %v406
        %v787 = vunpack.c.l.b16 %v407
        %v788 = vunpack.c.h.b16 %v407
        %v789 = vunpack.c.l.b16 %v408
        %v790 = vunpack.c.h.b16 %v408
        %v791 = vunpack.c.l.b16 %v409
        %v792 = vunpack.c.h.b16 %v409
        %v793 = vunpack.c.l.b16 %v410
        %v794 = vunpack.c.h.b16 %v410
        %v795 = vunpack.c.l.b16 %v411
        %v796 = vunpack.c.h.b16 %v411
        %v797 = vunpack.c.l.b16 %v412
        %v798 = vunpack.c.h.b16 %v412
        %v799 = vunpack.c.l.b16 %v413
        %v800 = vunpack.c.h.b16 %v413
        %v801 = vunpack.c.l.b16 %v414
        %v802 = vunpack.c.h.b16 %v414
        %v803 = vunpack.c.l.b16 %v415
        %v804 = vunpack.c.h.b16 %v415
        %v805 = vunpack.c.l.b16 %v416
        %v806 = vunpack.c.h.b16 %v416
        %v807 = vunpack.c.l.b16 %v417
        %v808 = vunpack.c.h.b16 %v417
        %v809 = vunpack.c.l.b16 %v418
        %v810 = vunpack.c.h.b16 %v418
        %v811 = vunpack.c.l.b16 %v419
        %v812 = vunpack.c.h.b16 %v419
        %v813 = vunpack.c.l.b16 %v420
        %v814 = vunpack.c.h.b16 %v420
        %v815 = vunpack.c.l.b16 %v421
        %v816 = vunpack.c.h.b16 %v421
        %v817 = vunpack.c.l.b16 %v422
        %v818 = vunpack.c.h.b16 %v422
        %v819 = vunpack.c.l.b16 %v423
        %v820 = vunpack.c.h.b16 %v423
        %v821 = vunpack.c.l.b16 %v424
        %v822 = vunpack.c.h.b16 %v424
        %v823 = vpack.c.b16 %v571, %v567
        %v824 = vpack.c.b16 %v572, %v568
        %v825 = vpack.c.b16 %v573, %v569
        %v826 = vpack.c.b16 %v574, %v570
        %v827 = vpack.c.b16 %v579, %v575
        %v828 = vpack.c.b16 %v580, %v576
        %v829 = vpack.c.b16 %v581, %v577
        %v830 = vpack.c.b16 %v582, %v578
        %v831 = vpack.c.b16 %v587, %v583
        %v832 = vpack.c.b16 %v588, %v584
        %v833 = vpack.c.b16 %v589, %v585
        %v834 = vpack.c.b16 %v590, %v586
        %v835 = vpack.c.b16 %v595, %v591
        %v836 = vpack.c.b16 %v596, %v592
        %v837 = vpack.c.b16 %v597, %v593
        %v838 = vpack.c.b16 %v598, %v594
        %v839 = vpack.c.b16 %v603, %v599
        %v840 = vpack.c.b16 %v604, %v600
        %v841 = vpack.c.b16 %v605, %v601
        %v842 = vpack.c.b16 %v606, %v602
        %v843 = vpack.c.b16 %v611, %v607
        %v844 = vpack.c.b16 %v612, %v608
        %v845 = vpack.c.b16 %v613, %v609
        %v846 = vpack.c.b16 %v614, %v610
        %v847 = vpack.c.b16 %v619, %v615
        %v848 = vpack.c.b16 %v620, %v616
        %v849 = vpack.c.b16 %v621, %v617
        %v850 = vpack.c.b16 %v622, %v618
        %v851 = vpack.c.b16 %v627, %v623
        %v852 = vpack.c.b16 %v628, %v624
        %v853 = vpack.c.b16 %v629, %v625
        %v854 = vpack.c.b16 %v630, %v626
        %v855 = vpack.c.b16 %v635, %v631
        %v856 = vpack.c.b16 %v636, %v632
        %v857 = vpack.c.b16 %v637, %v633
        %v858 = vpack.c.b16 %v638, %v634
        %v859 = vpack.c.b16 %v643, %v639
        %v860 = vpack.c.b16 %v644, %v640
        %v861 = vpack.c.b16 %v645, %v641
        %v862 = vpack.c.b16 %v646, %v642
        %v863 = vpack.c.b16 %v651, %v647
        %v864 = vpack.c.b16 %v652, %v648
        %v865 = vpack.c.b16 %v653, %v649
        %v866 = vpack.c.b16 %v654, %v650
        %v867 = vpack.c.b16 %v659, %v655
        %v868 = vpack.c.b16 %v660, %v656
        %v869 = vpack.c.b16 %v661, %v657
        %v870 = vpack.c.b16 %v662, %v658
        %v871 = vpack.c.b16 %v667, %v663
        %v872 = vpack.c.b16 %v668, %v664
        %v873 = vpack.c.b16 %v669, %v665
        %v874 = vpack.c.b16 %v670, %v666
        %v875 = vpack.c.b16 %v675, %v671
        %v876 = vpack.c.b16 %v676, %v672
        %v877 = vpack.c.b16 %v677, %v673
        %v878 = vpack.c.b16 %v678, %v674
        %v879 = vpack.c.b16 %v683, %v679
        %v880 = vpack.c.b16 %v684, %v680
        %v881 = vpack.c.b16 %v685, %v681
        %v882 = vpack.c.b16 %v686, %v682
        %v883 = vpack.c.b16 %v691, %v687
        %v884 = vpack.c.b16 %v692, %v688
        %v885 = vpack.c.b16 %v693, %v689
        %v886 = vpack.c.b16 %v694, %v690
        %v887 = vpack.c.b16 %v699, %v695
        %v888 = vpack.c.b16 %v700, %v696
        %v889 = vpack.c.b16 %v701, %v697
        %v890 = vpack.c.b16 %v702, %v698
        %v891 = vpack.c.b16 %v707, %v703
        %v892 = vpack.c.b16 %v708, %v704
        %v893 = vpack.c.b16 %v709, %v705
        %v894 = vpack.c.b16 %v710, %v706
        %v895 = vpack.c.b16 %v715, %v711
        %v896 = vpack.c.b16 %v716, %v712
        %v897 = vpack.c.b16 %v717, %v713
        %v898 = vpack.c.b16 %v718, %v714
        %v899 = vpack.c.b16 %v723, %v719
        %v900 = vpack.c.b16 %v724, %v720
        %v901 = vpack.c.b16 %v725, %v721
        %v902 = vpack.c.b16 %v726, %v722
        %v903 = vpack.c.b16 %v731, %v727
        %v904 = vpack.c.b16 %v732, %v728
        %v905 = vpack.c.b16 %v733, %v729
        %v906 = vpack.c.b16 %v734, %v730
        %v907 = vpack.c.b16 %v739, %v735
        %v908 = vpack.c.b16 %v740, %v736
        %v909 = vpack.c.b16 %v741, %v737
        %v910 = vpack.c.b16 %v742, %v738
        %v911 = vpack.c.b16 %v747, %v743
        %v912 = vpack.c.b16 %v748, %v744
        %v913 = vpack.c.b16 %v749, %v745
        %v914 = vpack.c.b16 %v750, %v746
        %v915 = vpack.c.b16 %v755, %v751
        %v916 = vpack.c.b16 %v756, %v752
        %v917 = vpack.c.b16 %v757, %v753
        %v918 = vpack.c.b16 %v758, %v754
        %v919 = vpack.c.b16 %v763, %v759
        %v920 = vpack.c.b16 %v764, %v760
        %v921 = vpack.c.b16 %v765, %v761
        %v922 = vpack.c.b16 %v766, %v762
        %v923 = vpack.c.b16 %v771, %v767
        %v924 = vpack.c.b16 %v772, %v768
        %v925 = vpack.c.b16 %v773, %v769
        %v926 = vpack.c.b16 %v774, %v770
        %v927 = vpack.c.b16 %v779, %v775
        %v928 = vpack.c.b16 %v780, %v776
        %v929 = vpack.c.b16 %v781, %v777
        %v930 = vpack.c.b16 %v782, %v778
        %v931 = vpack.c.b16 %v787, %v783
        %v932 = vpack.c.b16 %v788, %v784
        %v933 = vpack.c.b16 %v789, %v785
        %v934 = vpack.c.b16 %v790, %v786
        %v935 = vpack.c.b16 %v795, %v791
        %v936 = vpack.c.b16 %v796, %v792
        %v937 = vpack.c.b16 %v797, %v793
        %v938 = vpack.c.b16 %v798, %v794
        %v939 = vpack.c.b16 %v803, %v799
        %v940 = vpack.c.b16 %v804, %v800
        %v941 = vpack.c.b16 %v805, %v801
        %v942 = vpack.c.b16 %v806, %v802
        %v943 = vpack.c.b16 %v811, %v807
        %v944 = vpack.c.b16 %v812, %v808
        %v945 = vpack.c.b16 %v813, %v809
        %v946 = vpack.c.b16 %v814, %v810
        %v947 = vpack.c.b16 %v819, %v815
        %v948 = vpack.c.b16 %v820, %v816
        %v949 = vpack.c.b16 %v821, %v817
        %v950 = vpack.c.b16 %v822, %v818
        %1079 = vmatpush.bf16.msra.mxu0 %v851
        %1080 = vmatpush.bf16.msra.mxu0 %v847
        %1081 = vmatpush.bf16.msra.mxu0 %v843
        %1082 = vmatpush.bf16.msra.mxu0 %v839
        %1083 = vmatpush.bf16.msra.mxu0 %v835
        %1084 = vmatpush.bf16.msra.mxu0 %v831
        %1085 = vmatpush.bf16.msra.mxu0 %v827
        %1086 = vmatpush.bf16.msra.mxu0 %v823
        %1087 = vmatmul.bf16.gmra.mxu0 %v431
        %v1088 = vpop.f32.mrf.mxu0
        %v1089 = vadd.f32 0.0, %v1088
        %v1090 = vpop.f32.mrf.mxu0
        %1091 = vdwg.mxu0
        %1092 = vmatpush.bf16.msra.mxu0 %v883
        %1093 = vmatpush.bf16.msra.mxu0 %v879
        %1094 = vmatpush.bf16.msra.mxu0 %v875
        %1095 = vmatpush.bf16.msra.mxu0 %v871
        %1096 = vmatpush.bf16.msra.mxu0 %v867
        %1097 = vmatpush.bf16.msra.mxu0 %v863
        %1098 = vmatpush.bf16.msra.mxu0 %v859
        %1099 = vmatpush.bf16.msra.mxu0 %v855
        %1100 = vmatmul.bf16.gmra.mxu0 %v432
        %v1101 = vpop.f32.mrf.mxu0
        %v1102 = vadd.f32 %v1089, %v1101
        %v1103 = vpop.f32.mrf.mxu0
        %1104 = vdwg.mxu0
        %1105 = vmatpush.bf16.msra.mxu0 %v915
        %1106 = vmatpush.bf16.msra.mxu0 %v911
        %1107 = vmatpush.bf16.msra.mxu0 %v907
        %1108 = vmatpush.bf16.msra.mxu0 %v903
        %1109 = vmatpush.bf16.msra.mxu0 %v899
        %1110 = vmatpush.bf16.msra.mxu0 %v895
        %1111 = vmatpush.bf16.msra.mxu0 %v891
        %1112 = vmatpush.bf16.msra.mxu0 %v887
        %1113 = vmatmul.bf16.gmra.mxu0 %v433
        %v1114 = vpop.f32.mrf.mxu0
        %v1115 = vadd.f32 %v1102, %v1114
        %v1116 = vpop.f32.mrf.mxu0
        %1117 = vdwg.mxu0
        %1118 = vmatpush.bf16.msra.mxu0 %v947
        %1119 = vmatpush.bf16.msra.mxu0 %v943
        %1120 = vmatpush.bf16.msra.mxu0 %v939
        %1121 = vmatpush.bf16.msra.mxu0 %v935
        %1122 = vmatpush.bf16.msra.mxu0 %v931
        %1123 = vmatpush.bf16.msra.mxu0 %v927
        %1124 = vmatpush.bf16.msra.mxu0 %v923
        %1125 = vmatpush.bf16.msra.mxu0 %v919
        %1126 = vmatmul.bf16.gmra.mxu0 %v434
        %v1127 = vpop.f32.mrf.mxu0
        %v1128 = vadd.f32 %v1115, %v1127
        %v1129 = vpop.f32.mrf.mxu0
        %1130 = vdwg.mxu0
        %1131 = vmatpush.bf16.msra.mxu0 %v852
        %1132 = vmatpush.bf16.msra.mxu0 %v848
        %1133 = vmatpush.bf16.msra.mxu0 %v844
        %1134 = vmatpush.bf16.msra.mxu0 %v840
        %1135 = vmatpush.bf16.msra.mxu0 %v836
        %1136 = vmatpush.bf16.msra.mxu0 %v832
        %1137 = vmatpush.bf16.msra.mxu0 %v828
        %1138 = vmatpush.bf16.msra.mxu0 %v824
        %1139 = vmatmul.bf16.gmra.mxu0 %v431
        %v1140 = vpop.f32.mrf.mxu0
        %v1141 = vadd.f32 0.0, %v1140
        %v1142 = vpop.f32.mrf.mxu0
        %1143 = vdwg.mxu0
        %1144 = vmatpush.bf16.msra.mxu0 %v884
        %1145 = vmatpush.bf16.msra.mxu0 %v880
        %1146 = vmatpush.bf16.msra.mxu0 %v876
        %1147 = vmatpush.bf16.msra.mxu0 %v872
        %1148 = vmatpush.bf16.msra.mxu0 %v868
        %1149 = vmatpush.bf16.msra.mxu0 %v864
        %1150 = vmatpush.bf16.msra.mxu0 %v860
        %1151 = vmatpush.bf16.msra.mxu0 %v856
        %1152 = vmatmul.bf16.gmra.mxu0 %v432
        %v1153 = vpop.f32.mrf.mxu0
        %v1154 = vadd.f32 %v1141, %v1153
        %v1155 = vpop.f32.mrf.mxu0
        %1156 = vdwg.mxu0
        %1157 = vmatpush.bf16.msra.mxu0 %v916
        %1158 = vmatpush.bf16.msra.mxu0 %v912
        %1159 = vmatpush.bf16.msra.mxu0 %v908
        %1160 = vmatpush.bf16.msra.mxu0 %v904
        %1161 = vmatpush.bf16.msra.mxu0 %v900
        %1162 = vmatpush.bf16.msra.mxu0 %v896
        %1163 = vmatpush.bf16.msra.mxu0 %v892
        %1164 = vmatpush.bf16.msra.mxu0 %v888
        %1165 = vmatmul.bf16.gmra.mxu0 %v433
        %v1166 = vpop.f32.mrf.mxu0
        %v1167 = vadd.f32 %v1154, %v1166
        %v1168 = vpop.f32.mrf.mxu0
        %1169 = vdwg.mxu0
        %1170 = vmatpush.bf16.msra.mxu0 %v948
        %1171 = vmatpush.bf16.msra.mxu0 %v944
        %1172 = vmatpush.bf16.msra.mxu0 %v940
        %1173 = vmatpush.bf16.msra.mxu0 %v936
        %1174 = vmatpush.bf16.msra.mxu0 %v932
        %1175 = vmatpush.bf16.msra.mxu0 %v928
        %1176 = vmatpush.bf16.msra.mxu0 %v924
        %1177 = vmatpush.bf16.msra.mxu0 %v920
        %1178 = vmatmul.bf16.gmra.mxu0 %v434
        %v1179 = vpop.f32.mrf.mxu0
        %v1180 = vadd.f32 %v1167, %v1179
        %v1181 = vpop.f32.mrf.mxu0
        %1182 = vdwg.mxu0
        %1183 = vmatpush.bf16.msra.mxu0 %v853
        %1184 = vmatpush.bf16.msra.mxu0 %v849
        %1185 = vmatpush.bf16.msra.mxu0 %v845
        %1186 = vmatpush.bf16.msra.mxu0 %v841
        %1187 = vmatpush.bf16.msra.mxu0 %v837
        %1188 = vmatpush.bf16.msra.mxu0 %v833
        %1189 = vmatpush.bf16.msra.mxu0 %v829
        %1190 = vmatpush.bf16.msra.mxu0 %v825
        %1191 = vmatmul.bf16.gmra.mxu0 %v431
        %v1192 = vpop.f32.mrf.mxu0
        %v1193 = vadd.f32 0.0, %v1192
        %v1194 = vpop.f32.mrf.mxu0
        %1195 = vdwg.mxu0
        %1196 = vmatpush.bf16.msra.mxu0 %v885
        %1197 = vmatpush.bf16.msra.mxu0 %v881
        %1198 = vmatpush.bf16.msra.mxu0 %v877
        %1199 = vmatpush.bf16.msra.mxu0 %v873
        %1200 = vmatpush.bf16.msra.mxu0 %v869
        %1201 = vmatpush.bf16.msra.mxu0 %v865
        %1202 = vmatpush.bf16.msra.mxu0 %v861
        %1203 = vmatpush.bf16.msra.mxu0 %v857
        %1204 = vmatmul.bf16.gmra.mxu0 %v432
        %v1205 = vpop.f32.mrf.mxu0
        %v1206 = vadd.f32 %v1193, %v1205
        %v1207 = vpop.f32.mrf.mxu0
        %1208 = vdwg.mxu0
        %1209 = vmatpush.bf16.msra.mxu0 %v917
        %1210 = vmatpush.bf16.msra.mxu0 %v913
        %1211 = vmatpush.bf16.msra.mxu0 %v909
        %1212 = vmatpush.bf16.msra.mxu0 %v905
        %1213 = vmatpush.bf16.msra.mxu0 %v901
        %1214 = vmatpush.bf16.msra.mxu0 %v897
        %1215 = vmatpush.bf16.msra.mxu0 %v893
        %1216 = vmatpush.bf16.msra.mxu0 %v889
        %1217 = vmatmul.bf16.gmra.mxu0 %v433
        %v1218 = vpop.f32.mrf.mxu0
        %v1219 = vadd.f32 %v1206, %v1218
        %v1220 = vpop.f32.mrf.mxu0
        %1221 = vdwg.mxu0
        %1222 = vmatpush.bf16.msra.mxu0 %v949
        %1223 = vmatpush.bf16.msra.mxu0 %v945
        %1224 = vmatpush.bf16.msra.mxu0 %v941
        %1225 = vmatpush.bf16.msra.mxu0 %v937
        %1226 = vmatpush.bf16.msra.mxu0 %v933
        %1227 = vmatpush.bf16.msra.mxu0 %v929
        %1228 = vmatpush.bf16.msra.mxu0 %v925
        %1229 = vmatpush.bf16.msra.mxu0 %v921
        %1230 = vmatmul.bf16.gmra.mxu0 %v434
        %v1231 = vpop.f32.mrf.mxu0
        %v1232 = vadd.f32 %v1219, %v1231
        %v1233 = vpop.f32.mrf.mxu0
        %1234 = vdwg.mxu0
        %1235 = vmatpush.bf16.msra.mxu0 %v854
        %1236 = vmatpush.bf16.msra.mxu0 %v850
        %1237 = vmatpush.bf16.msra.mxu0 %v846
        %1238 = vmatpush.bf16.msra.mxu0 %v842
        %1239 = vmatpush.bf16.msra.mxu0 %v838
        %1240 = vmatpush.bf16.msra.mxu0 %v834
        %1241 = vmatpush.bf16.msra.mxu0 %v830
        %1242 = vmatpush.bf16.msra.mxu0 %v826
        %1243 = vmatmul.bf16.gmra.mxu0 %v431
        %v1244 = vpop.f32.mrf.mxu0
        %v1245 = vadd.f32 0.0, %v1244
        %v1246 = vpop.f32.mrf.mxu0
        %1247 = vdwg.mxu0
        %1248 = vmatpush.bf16.msra.mxu0 %v886
        %1249 = vmatpush.bf16.msra.mxu0 %v882
        %1250 = vmatpush.bf16.msra.mxu0 %v878
        %1251 = vmatpush.bf16.msra.mxu0 %v874
        %1252 = vmatpush.bf16.msra.mxu0 %v870
        %1253 = vmatpush.bf16.msra.mxu0 %v866
        %1254 = vmatpush.bf16.msra.mxu0 %v862
        %1255 = vmatpush.bf16.msra.mxu0 %v858
        %1256 = vmatmul.bf16.gmra.mxu0 %v432
        %v1257 = vpop.f32.mrf.mxu0
        %v1258 = vadd.f32 %v1245, %v1257
        %v1259 = vpop.f32.mrf.mxu0
        %1260 = vdwg.mxu0
        %1261 = vmatpush.bf16.msra.mxu0 %v918
        %1262 = vmatpush.bf16.msra.mxu0 %v914
        %1263 = vmatpush.bf16.msra.mxu0 %v910
        %1264 = vmatpush.bf16.msra.mxu0 %v906
        %1265 = vmatpush.bf16.msra.mxu0 %v902
        %1266 = vmatpush.bf16.msra.mxu0 %v898
        %1267 = vmatpush.bf16.msra.mxu0 %v894
        %1268 = vmatpush.bf16.msra.mxu0 %v890
        %1269 = vmatmul.bf16.gmra.mxu0 %v433
        %v1270 = vpop.f32.mrf.mxu0
        %v1271 = vadd.f32 %v1258, %v1270
        %v1272 = vpop.f32.mrf.mxu0
        %1273 = vdwg.mxu0
        %1274 = vmatpush.bf16.msra.mxu0 %v950
        %1275 = vmatpush.bf16.msra.mxu0 %v946
        %1276 = vmatpush.bf16.msra.mxu0 %v942
        %1277 = vmatpush.bf16.msra.mxu0 %v938
        %1278 = vmatpush.bf16.msra.mxu0 %v934
        %1279 = vmatpush.bf16.msra.mxu0 %v930
        %1280 = vmatpush.bf16.msra.mxu0 %v926
        %1281 = vmatpush.bf16.msra.mxu0 %v922
        %1282 = vmatmul.bf16.gmra.mxu0 %v434
        %v1283 = vpop.f32.mrf.mxu0
        %v1284 = vadd.f32 %v1271, %v1283
        %v1285 = vpop.f32.mrf.mxu0
        %1286 = vdwg.mxu0
        %v1287 = vpack.c.bf16 %v1180, %v1128
        %v1288 = vpack.c.bf16 %v1284, %v1232
        %v1289 = vld [vmem:[%s2] sm:$0xf]
        %v1291 = vperm.slane %v1289, 0
        %v1292 = vperm.slane %v1289, 1
        %v1293 = vperm.slane %v1289, 2
        %v1294 = vperm.slane %v1289, 3
        %v1299 = vpack.c.bf16 %v1292, %v1291
        %v1300 = vpack.c.bf16 %v1294, %v1293
        %v1303 = vunpack.c.l.b16 %v1299
        %v1304 = vunpack.c.h.b16 %v1299
        %v1305 = vunpack.c.l.b16 %v1300
        %v1306 = vunpack.c.h.b16 %v1300
        %v1307 = vpack.c.b16 %v1303, %v1303
        %v1308 = vpack.c.b16 %v1304, %v1304
        %v1309 = vpack.c.b16 %v1305, %v1305
        %v1310 = vpack.c.b16 %v1306, %v1306
        %v1312 = vpack.i.b16 %v1307, %v1307
        %v1314 = vperm.slane %v1312, 0
        %v1316 = vpack.i.b16 %v1308, %v1308
        %v1318 = vperm.slane %v1316, 0
        %v1320 = vpack.i.b16 %v1309, %v1309
        %v1322 = vperm.slane %v1320, 0
        %v1324 = vpack.i.b16 %v1310, %v1310
        %v1326 = vperm.slane %v1324, 0
        %v1327 = vunpack.c.l.bf16 %v1287
        %v1328 = vunpack.c.h.bf16 %v1287
        %v1329 = vunpack.c.l.bf16 %v1288
        %v1330 = vunpack.c.h.bf16 %v1288
        %v1331 = vunpack.c.l.bf16 %v1314
        %v1332 = vunpack.c.l.bf16 %v1318
        %v1333 = vunpack.c.l.bf16 %v1322
        %v1334 = vunpack.c.l.bf16 %v1326
        %v1335 = vadd.f32 %v1327, %v1331
        %v1336 = vadd.f32 %v1328, %v1332
        %v1337 = vadd.f32 %v1329, %v1333
        %v1338 = vadd.f32 %v1330, %v1334
        %v1339 = vpack.c.bf16 %v1336, %v1335
        %v1340 = vpack.c.bf16 %v1338, %v1337
        %v1341 = vunpack.c.l.bf16 %v1339
        %v1342 = vunpack.c.h.bf16 %v1339
        %v1343 = vunpack.c.l.bf16 %v1340
        %v1344 = vunpack.c.h.bf16 %v1340
        %v1345 = vmax.f32 %v1341, 0.0
        %v1346 = vmax.f32 %v1342, 0.0
        %v1347 = vmax.f32 %v1343, 0.0
        %v1348 = vmax.f32 %v1344, 0.0
        %v1349 = vpack.c.bf16 %v1345, %v1345
        %v1350 = vpack.c.bf16 %v1346, %v1346
        %v1351 = vpack.c.bf16 %v1347, %v1347
        %v1352 = vpack.c.bf16 %v1348, %v1348
        %v1353 = vld [vmem:[%s3] sm:$0xff]
        %v1354 = vld [vmem:[%s3 + $0x8] sm:$0xff]
        %v1355 = vld [vmem:[%s3 + $0x10] sm:$0xff]
        %v1356 = vld [vmem:[%s3 + $0x18] sm:$0xff]
        %v1357 = vld [vmem:[%s3 + $0x20] sm:$0xff]
        %v1358 = vld [vmem:[%s3 + $0x28] sm:$0xff]
        %v1359 = vld [vmem:[%s3 + $0x30] sm:$0xff]
        %v1360 = vld [vmem:[%s3 + $0x38] sm:$0xff]
        %v1361 = vld [vmem:[%s3 + $0x40] sm:$0xff]
        %v1362 = vld [vmem:[%s3 + $0x48] sm:$0xff]
        %v1363 = vld [vmem:[%s3 + $0x50] sm:$0xff]
        %v1364 = vld [vmem:[%s3 + $0x58] sm:$0xff]
        %v1365 = vld [vmem:[%s3 + $0x60] sm:$0xff]
        %v1366 = vld [vmem:[%s3 + $0x68] sm:$0xff]
        %v1367 = vld [vmem:[%s3 + $0x70] sm:$0xff]
        %v1368 = vld [vmem:[%s3 + $0x78] sm:$0xff]
        %v1369 = vld [vmem:[%s3 + $0x80] sm:$0xff]
        %v1370 = vld [vmem:[%s3 + $0x88] sm:$0xff]
        %v1371 = vld [vmem:[%s3 + $0x90] sm:$0xff]
        %v1372 = vld [vmem:[%s3 + $0x98] sm:$0xff]
        %v1373 = vld [vmem:[%s3 + $0xa0] sm:$0xff]
        %v1374 = vld [vmem:[%s3 + $0xa8] sm:$0xff]
        %v1375 = vld [vmem:[%s3 + $0xb0] sm:$0xff]
        %v1376 = vld [vmem:[%s3 + $0xb8] sm:$0xff]
        %v1377 = vld [vmem:[%s3 + $0xc0] sm:$0xff]
        %v1378 = vld [vmem:[%s3 + $0xc8] sm:$0xff]
        %v1379 = vld [vmem:[%s3 + $0xd0] sm:$0xff]
        %v1380 = vld [vmem:[%s3 + $0xd8] sm:$0xff]
        %v1381 = vld [vmem:[%s3 + $0xe0] sm:$0xff]
        %v1382 = vld [vmem:[%s3 + $0xe8] sm:$0xff]
        %v1383 = vld [vmem:[%s3 + $0xf0] sm:$0xff]
        %v1384 = vld [vmem:[%s3 + $0xf8] sm:$0xff]
        %v1385 = vld [vmem:[%s3 + $0x100] sm:$0xff]
        %v1386 = vld [vmem:[%s3 + $0x108] sm:$0xff]
        %v1387 = vld [vmem:[%s3 + $0x110] sm:$0xff]
        %v1388 = vld [vmem:[%s3 + $0x118] sm:$0xff]
        %v1389 = vld [vmem:[%s3 + $0x120] sm:$0xff]
        %v1390 = vld [vmem:[%s3 + $0x128] sm:$0xff]
        %v1391 = vld [vmem:[%s3 + $0x130] sm:$0xff]
        %v1392 = vld [vmem:[%s3 + $0x138] sm:$0xff]
        %v1393 = vld [vmem:[%s3 + $0x140] sm:$0xff]
        %v1394 = vld [vmem:[%s3 + $0x148] sm:$0xff]
        %v1395 = vld [vmem:[%s3 + $0x150] sm:$0xff]
        %v1396 = vld [vmem:[%s3 + $0x158] sm:$0xff]
        %v1397 = vld [vmem:[%s3 + $0x160] sm:$0xff]
        %v1398 = vld [vmem:[%s3 + $0x168] sm:$0xff]
        %v1399 = vld [vmem:[%s3 + $0x170] sm:$0xff]
        %v1400 = vld [vmem:[%s3 + $0x178] sm:$0xff]
        %v1401 = vld [vmem:[%s3 + $0x180] sm:$0xff]
        %v1402 = vld [vmem:[%s3 + $0x188] sm:$0xff]
        %v1403 = vld [vmem:[%s3 + $0x190] sm:$0xff]
        %v1404 = vld [vmem:[%s3 + $0x198] sm:$0xff]
        %v1405 = vld [vmem:[%s3 + $0x1a0] sm:$0xff]
        %v1406 = vld [vmem:[%s3 + $0x1a8] sm:$0xff]
        %v1407 = vld [vmem:[%s3 + $0x1b0] sm:$0xff]
        %v1408 = vld [vmem:[%s3 + $0x1b8] sm:$0xff]
        %v1409 = vld [vmem:[%s3 + $0x1c0] sm:$0xff]
        %v1410 = vld [vmem:[%s3 + $0x1c8] sm:$0xff]
        %v1411 = vld [vmem:[%s3 + $0x1d0] sm:$0xff]
        %v1412 = vld [vmem:[%s3 + $0x1d8] sm:$0xff]
        %v1413 = vld [vmem:[%s3 + $0x1e0] sm:$0xff]
        %v1414 = vld [vmem:[%s3 + $0x1e8] sm:$0xff]
        %v1415 = vld [vmem:[%s3 + $0x1f0] sm:$0xff]
        %v1416 = vld [vmem:[%s3 + $0x1f8] sm:$0xff]
        %v1417 = vld [vmem:[%s3 + $0x200] sm:$0xff]
        %v1418 = vld [vmem:[%s3 + $0x208] sm:$0xff]
        %v1419 = vld [vmem:[%s3 + $0x210] sm:$0xff]
        %v1420 = vld [vmem:[%s3 + $0x218] sm:$0xff]
        %v1421 = vld [vmem:[%s3 + $0x220] sm:$0xff]
        %v1422 = vld [vmem:[%s3 + $0x228] sm:$0xff]
        %v1423 = vld [vmem:[%s3 + $0x230] sm:$0xff]
        %v1424 = vld [vmem:[%s3 + $0x238] sm:$0xff]
        %v1425 = vld [vmem:[%s3 + $0x240] sm:$0xff]
        %v1426 = vld [vmem:[%s3 + $0x248] sm:$0xff]
        %v1427 = vld [vmem:[%s3 + $0x250] sm:$0xff]
        %v1428 = vld [vmem:[%s3 + $0x258] sm:$0xff]
        %v1429 = vld [vmem:[%s3 + $0x260] sm:$0xff]
        %v1430 = vld [vmem:[%s3 + $0x268] sm:$0xff]
        %v1431 = vld [vmem:[%s3 + $0x270] sm:$0xff]
        %v1432 = vld [vmem:[%s3 + $0x278] sm:$0xff]
        %v1433 = vld [vmem:[%s3 + $0x280] sm:$0xff]
        %v1434 = vld [vmem:[%s3 + $0x288] sm:$0xff]
        %v1435 = vld [vmem:[%s3 + $0x290] sm:$0xff]
        %v1436 = vld [vmem:[%s3 + $0x298] sm:$0xff]
        %v1437 = vld [vmem:[%s3 + $0x2a0] sm:$0xff]
        %v1438 = vld [vmem:[%s3 + $0x2a8] sm:$0xff]
        %v1439 = vld [vmem:[%s3 + $0x2b0] sm:$0xff]
        %v1440 = vld [vmem:[%s3 + $0x2b8] sm:$0xff]
        %v1441 = vld [vmem:[%s3 + $0x2c0] sm:$0xff]
        %v1442 = vld [vmem:[%s3 + $0x2c8] sm:$0xff]
        %v1443 = vld [vmem:[%s3 + $0x2d0] sm:$0xff]
        %v1444 = vld [vmem:[%s3 + $0x2d8] sm:$0xff]
        %v1445 = vld [vmem:[%s3 + $0x2e0] sm:$0xff]
        %v1446 = vld [vmem:[%s3 + $0x2e8] sm:$0xff]
        %v1447 = vld [vmem:[%s3 + $0x2f0] sm:$0xff]
        %v1448 = vld [vmem:[%s3 + $0x2f8] sm:$0xff]
        %v1449 = vld [vmem:[%s3 + $0x300] sm:$0xff]
        %v1450 = vld [vmem:[%s3 + $0x308] sm:$0xff]
        %v1451 = vld [vmem:[%s3 + $0x310] sm:$0xff]
        %v1452 = vld [vmem:[%s3 + $0x318] sm:$0xff]
        %v1453 = vld [vmem:[%s3 + $0x320] sm:$0xff]
        %v1454 = vld [vmem:[%s3 + $0x328] sm:$0xff]
        %v1455 = vld [vmem:[%s3 + $0x330] sm:$0xff]
        %v1456 = vld [vmem:[%s3 + $0x338] sm:$0xff]
        %v1457 = vld [vmem:[%s3 + $0x340] sm:$0xff]
        %v1458 = vld [vmem:[%s3 + $0x348] sm:$0xff]
        %v1459 = vld [vmem:[%s3 + $0x350] sm:$0xff]
        %v1460 = vld [vmem:[%s3 + $0x358] sm:$0xff]
        %v1461 = vld [vmem:[%s3 + $0x360] sm:$0xff]
        %v1462 = vld [vmem:[%s3 + $0x368] sm:$0xff]
        %v1463 = vld [vmem:[%s3 + $0x370] sm:$0xff]
        %v1464 = vld [vmem:[%s3 + $0x378] sm:$0xff]
        %v1465 = vld [vmem:[%s3 + $0x380] sm:$0xff]
        %v1466 = vld [vmem:[%s3 + $0x388] sm:$0xff]
        %v1467 = vld [vmem:[%s3 + $0x390] sm:$0xff]
        %v1468 = vld [vmem:[%s3 + $0x398] sm:$0xff]
        %v1469 = vld [vmem:[%s3 + $0x3a0] sm:$0xff]
        %v1470 = vld [vmem:[%s3 + $0x3a8] sm:$0xff]
        %v1471 = vld [vmem:[%s3 + $0x3b0] sm:$0xff]
        %v1472 = vld [vmem:[%s3 + $0x3b8] sm:$0xff]
        %v1473 = vld [vmem:[%s3 + $0x3c0] sm:$0xff]
        %v1474 = vld [vmem:[%s3 + $0x3c8] sm:$0xff]
        %v1475 = vld [vmem:[%s3 + $0x3d0] sm:$0xff]
        %v1476 = vld [vmem:[%s3 + $0x3d8] sm:$0xff]
        %v1477 = vld [vmem:[%s3 + $0x3e0] sm:$0xff]
        %v1478 = vld [vmem:[%s3 + $0x3e8] sm:$0xff]
        %v1479 = vld [vmem:[%s3 + $0x3f0] sm:$0xff]
        %v1480 = vld [vmem:[%s3 + $0x3f8] sm:$0xff]
        %v1609 = vunpack.c.l.b16 %v1353
        %v1610 = vunpack.c.h.b16 %v1353
        %v1611 = vunpack.c.l.b16 %v1354
        %v1612 = vunpack.c.h.b16 %v1354
        %v1613 = vunpack.c.l.b16 %v1355
        %v1614 = vunpack.c.h.b16 %v1355
        %v1615 = vunpack.c.l.b16 %v1356
        %v1616 = vunpack.c.h.b16 %v1356
        %v1617 = vunpack.c.l.b16 %v1357
        %v1618 = vunpack.c.h.b16 %v1357
        %v1619 = vunpack.c.l.b16 %v1358
        %v1620 = vunpack.c.h.b16 %v1358
        %v1621 = vunpack.c.l.b16 %v1359
        %v1622 = vunpack.c.h.b16 %v1359
        %v1623 = vunpack.c.l.b16 %v1360
        %v1624 = vunpack.c.h.b16 %v1360
        %v1625 = vunpack.c.l.b16 %v1361
        %v1626 = vunpack.c.h.b16 %v1361
        %v1627 = vunpack.c.l.b16 %v1362
        %v1628 = vunpack.c.h.b16 %v1362
        %v1629 = vunpack.c.l.b16 %v1363
        %v1630 = vunpack.c.h.b16 %v1363
        %v1631 = vunpack.c.l.b16 %v1364
        %v1632 = vunpack.c.h.b16 %v1364
        %v1633 = vunpack.c.l.b16 %v1365
        %v1634 = vunpack.c.h.b16 %v1365
        %v1635 = vunpack.c.l.b16 %v1366
        %v1636 = vunpack.c.h.b16 %v1366
        %v1637 = vunpack.c.l.b16 %v1367
        %v1638 = vunpack.c.h.b16 %v1367
        %v1639 = vunpack.c.l.b16 %v1368
        %v1640 = vunpack.c.h.b16 %v1368
        %v1641 = vunpack.c.l.b16 %v1369
        %v1642 = vunpack.c.h.b16 %v1369
        %v1643 = vunpack.c.l.b16 %v1370
        %v1644 = vunpack.c.h.b16 %v1370
        %v1645 = vunpack.c.l.b16 %v1371
        %v1646 = vunpack.c.h.b16 %v1371
        %v1647 = vunpack.c.l.b16 %v1372
        %v1648 = vunpack.c.h.b16 %v1372
        %v1649 = vunpack.c.l.b16 %v1373
        %v1650 = vunpack.c.h.b16 %v1373
        %v1651 = vunpack.c.l.b16 %v1374
        %v1652 = vunpack.c.h.b16 %v1374
        %v1653 = vunpack.c.l.b16 %v1375
        %v1654 = vunpack.c.h.b16 %v1375
        %v1655 = vunpack.c.l.b16 %v1376
        %v1656 = vunpack.c.h.b16 %v1376
        %v1657 = vunpack.c.l.b16 %v1377
        %v1658 = vunpack.c.h.b16 %v1377
        %v1659 = vunpack.c.l.b16 %v1378
        %v1660 = vunpack.c.h.b16 %v1378
        %v1661 = vunpack.c.l.b16 %v1379
        %v1662 = vunpack.c.h.b16 %v1379
        %v1663 = vunpack.c.l.b16 %v1380
        %v1664 = vunpack.c.h.b16 %v1380
        %v1665 = vunpack.c.l.b16 %v1381
        %v1666 = vunpack.c.h.b16 %v1381
        %v1667 = vunpack.c.l.b16 %v1382
        %v1668 = vunpack.c.h.b16 %v1382
        %v1669 = vunpack.c.l.b16 %v1383
        %v1670 = vunpack.c.h.b16 %v1383
        %v1671 = vunpack.c.l.b16 %v1384
        %v1672 = vunpack.c.h.b16 %v1384
        %v1673 = vunpack.c.l.b16 %v1385
        %v1674 = vunpack.c.h.b16 %v1385
        %v1675 = vunpack.c.l.b16 %v1386
        %v1676 = vunpack.c.h.b16 %v1386
        %v1677 = vunpack.c.l.b16 %v1387
        %v1678 = vunpack.c.h.b16 %v1387
        %v1679 = vunpack.c.l.b16 %v1388
        %v1680 = vunpack.c.h.b16 %v1388
        %v1681 = vunpack.c.l.b16 %v1389
        %v1682 = vunpack.c.h.b16 %v1389
        %v1683 = vunpack.c.l.b16 %v1390
        %v1684 = vunpack.c.h.b16 %v1390
        %v1685 = vunpack.c.l.b16 %v1391
        %v1686 = vunpack.c.h.b16 %v1391
        %v1687 = vunpack.c.l.b16 %v1392
        %v1688 = vunpack.c.h.b16 %v1392
        %v1689 = vunpack.c.l.b16 %v1393
        %v1690 = vunpack.c.h.b16 %v1393
        %v1691 = vunpack.c.l.b16 %v1394
        %v1692 = vunpack.c.h.b16 %v1394
        %v1693 = vunpack.c.l.b16 %v1395
        %v1694 = vunpack.c.h.b16 %v1395
        %v1695 = vunpack.c.l.b16 %v1396
        %v1696 = vunpack.c.h.b16 %v1396
        %v1697 = vunpack.c.l.b16 %v1397
        %v1698 = vunpack.c.h.b16 %v1397
        %v1699 = vunpack.c.l.b16 %v1398
        %v1700 = vunpack.c.h.b16 %v1398
        %v1701 = vunpack.c.l.b16 %v1399
        %v1702 = vunpack.c.h.b16 %v1399
        %v1703 = vunpack.c.l.b16 %v1400
        %v1704 = vunpack.c.h.b16 %v1400
        %v1705 = vunpack.c.l.b16 %v1401
        %v1706 = vunpack.c.h.b16 %v1401
        %v1707 = vunpack.c.l.b16 %v1402
        %v1708 = vunpack.c.h.b16 %v1402
        %v1709 = vunpack.c.l.b16 %v1403
        %v1710 = vunpack.c.h.b16 %v1403
        %v1711 = vunpack.c.l.b16 %v1404
        %v1712 = vunpack.c.h.b16 %v1404
        %v1713 = vunpack.c.l.b16 %v1405
        %v1714 = vunpack.c.h.b16 %v1405
        %v1715 = vunpack.c.l.b16 %v1406
        %v1716 = vunpack.c.h.b16 %v1406
        %v1717 = vunpack.c.l.b16 %v1407
        %v1718 = vunpack.c.h.b16 %v1407
        %v1719 = vunpack.c.l.b16 %v1408
        %v1720 = vunpack.c.h.b16 %v1408
        %v1721 = vunpack.c.l.b16 %v1409
        %v1722 = vunpack.c.h.b16 %v1409
        %v1723 = vunpack.c.l.b16 %v1410
        %v1724 = vunpack.c.h.b16 %v1410
        %v1725 = vunpack.c.l.b16 %v1411
        %v1726 = vunpack.c.h.b16 %v1411
        %v1727 = vunpack.c.l.b16 %v1412
        %v1728 = vunpack.c.h.b16 %v1412
        %v1729 = vunpack.c.l.b16 %v1413
        %v1730 = vunpack.c.h.b16 %v1413
        %v1731 = vunpack.c.l.b16 %v1414
        %v1732 = vunpack.c.h.b16 %v1414
        %v1733 = vunpack.c.l.b16 %v1415
        %v1734 = vunpack.c.h.b16 %v1415
        %v1735 = vunpack.c.l.b16 %v1416
        %v1736 = vunpack.c.h.b16 %v1416
        %v1737 = vunpack.c.l.b16 %v1417
        %v1738 = vunpack.c.h.b16 %v1417
        %v1739 = vunpack.c.l.b16 %v1418
        %v1740 = vunpack.c.h.b16 %v1418
        %v1741 = vunpack.c.l.b16 %v1419
        %v1742 = vunpack.c.h.b16 %v1419
        %v1743 = vunpack.c.l.b16 %v1420
        %v1744 = vunpack.c.h.b16 %v1420
        %v1745 = vunpack.c.l.b16 %v1421
        %v1746 = vunpack.c.h.b16 %v1421
        %v1747 = vunpack.c.l.b16 %v1422
        %v1748 = vunpack.c.h.b16 %v1422
        %v1749 = vunpack.c.l.b16 %v1423
        %v1750 = vunpack.c.h.b16 %v1423
        %v1751 = vunpack.c.l.b16 %v1424
        %v1752 = vunpack.c.h.b16 %v1424
        %v1753 = vunpack.c.l.b16 %v1425
        %v1754 = vunpack.c.h.b16 %v1425
        %v1755 = vunpack.c.l.b16 %v1426
        %v1756 = vunpack.c.h.b16 %v1426
        %v1757 = vunpack.c.l.b16 %v1427
        %v1758 = vunpack.c.h.b16 %v1427
        %v1759 = vunpack.c.l.b16 %v1428
        %v1760 = vunpack.c.h.b16 %v1428
        %v1761 = vunpack.c.l.b16 %v1429
        %v1762 = vunpack.c.h.b16 %v1429
        %v1763 = vunpack.c.l.b16 %v1430
        %v1764 = vunpack.c.h.b16 %v1430
        %v1765 = vunpack.c.l.b16 %v1431
        %v1766 = vunpack.c.h.b16 %v1431
        %v1767 = vunpack.c.l.b16 %v1432
        %v1768 = vunpack.c.h.b16 %v1432
        %v1769 = vunpack.c.l.b16 %v1433
        %v1770 = vunpack.c.h.b16 %v1433
        %v1771 = vunpack.c.l.b16 %v1434
        %v1772 = vunpack.c.h.b16 %v1434
        %v1773 = vunpack.c.l.b16 %v1435
        %v1774 = vunpack.c.h.b16 %v1435
        %v1775 = vunpack.c.l.b16 %v1436
        %v1776 = vunpack.c.h.b16 %v1436
        %v1777 = vunpack.c.l.b16 %v1437
        %v1778 = vunpack.c.h.b16 %v1437
        %v1779 = vunpack.c.l.b16 %v1438
        %v1780 = vunpack.c.h.b16 %v1438
        %v1781 = vunpack.c.l.b16 %v1439
        %v1782 = vunpack.c.h.b16 %v1439
        %v1783 = vunpack.c.l.b16 %v1440
        %v1784 = vunpack.c.h.b16 %v1440
        %v1785 = vunpack.c.l.b16 %v1441
        %v1786 = vunpack.c.h.b16 %v1441
        %v1787 = vunpack.c.l.b16 %v1442
        %v1788 = vunpack.c.h.b16 %v1442
        %v1789 = vunpack.c.l.b16 %v1443
        %v1790 = vunpack.c.h.b16 %v1443
        %v1791 = vunpack.c.l.b16 %v1444
        %v1792 = vunpack.c.h.b16 %v1444
        %v1793 = vunpack.c.l.b16 %v1445
        %v1794 = vunpack.c.h.b16 %v1445
        %v1795 = vunpack.c.l.b16 %v1446
        %v1796 = vunpack.c.h.b16 %v1446
        %v1797 = vunpack.c.l.b16 %v1447
        %v1798 = vunpack.c.h.b16 %v1447
        %v1799 = vunpack.c.l.b16 %v1448
        %v1800 = vunpack.c.h.b16 %v1448
        %v1801 = vunpack.c.l.b16 %v1449
        %v1802 = vunpack.c.h.b16 %v1449
        %v1803 = vunpack.c.l.b16 %v1450
        %v1804 = vunpack.c.h.b16 %v1450
        %v1805 = vunpack.c.l.b16 %v1451
        %v1806 = vunpack.c.h.b16 %v1451
        %v1807 = vunpack.c.l.b16 %v1452
        %v1808 = vunpack.c.h.b16 %v1452
        %v1809 = vunpack.c.l.b16 %v1453
        %v1810 = vunpack.c.h.b16 %v1453
        %v1811 = vunpack.c.l.b16 %v1454
        %v1812 = vunpack.c.h.b16 %v1454
        %v1813 = vunpack.c.l.b16 %v1455
        %v1814 = vunpack.c.h.b16 %v1455
        %v1815 = vunpack.c.l.b16 %v1456
        %v1816 = vunpack.c.h.b16 %v1456
        %v1817 = vunpack.c.l.b16 %v1457
        %v1818 = vunpack.c.h.b16 %v1457
        %v1819 = vunpack.c.l.b16 %v1458
        %v1820 = vunpack.c.h.b16 %v1458
        %v1821 = vunpack.c.l.b16 %v1459
        %v1822 = vunpack.c.h.b16 %v1459
        %v1823 = vunpack.c.l.b16 %v1460
        %v1824 = vunpack.c.h.b16 %v1460
        %v1825 = vunpack.c.l.b16 %v1461
        %v1826 = vunpack.c.h.b16 %v1461
        %v1827 = vunpack.c.l.b16 %v1462
        %v1828 = vunpack.c.h.b16 %v1462
        %v1829 = vunpack.c.l.b16 %v1463
        %v1830 = vunpack.c.h.b16 %v1463
        %v1831 = vunpack.c.l.b16 %v1464
        %v1832 = vunpack.c.h.b16 %v1464
        %v1833 = vunpack.c.l.b16 %v1465
        %v1834 = vunpack.c.h.b16 %v1465
        %v1835 = vunpack.c.l.b16 %v1466
        %v1836 = vunpack.c.h.b16 %v1466
        %v1837 = vunpack.c.l.b16 %v1467
        %v1838 = vunpack.c.h.b16 %v1467
        %v1839 = vunpack.c.l.b16 %v1468
        %v1840 = vunpack.c.h.b16 %v1468
        %v1841 = vunpack.c.l.b16 %v1469
        %v1842 = vunpack.c.h.b16 %v1469
        %v1843 = vunpack.c.l.b16 %v1470
        %v1844 = vunpack.c.h.b16 %v1470
        %v1845 = vunpack.c.l.b16 %v1471
        %v1846 = vunpack.c.h.b16 %v1471
        %v1847 = vunpack.c.l.b16 %v1472
        %v1848 = vunpack.c.h.b16 %v1472
        %v1849 = vunpack.c.l.b16 %v1473
        %v1850 = vunpack.c.h.b16 %v1473
        %v1851 = vunpack.c.l.b16 %v1474
        %v1852 = vunpack.c.h.b16 %v1474
        %v1853 = vunpack.c.l.b16 %v1475
        %v1854 = vunpack.c.h.b16 %v1475
        %v1855 = vunpack.c.l.b16 %v1476
        %v1856 = vunpack.c.h.b16 %v1476
        %v1857 = vunpack.c.l.b16 %v1477
        %v1858 = vunpack.c.h.b16 %v1477
        %v1859 = vunpack.c.l.b16 %v1478
        %v1860 = vunpack.c.h.b16 %v1478
        %v1861 = vunpack.c.l.b16 %v1479
        %v1862 = vunpack.c.h.b16 %v1479
        %v1863 = vunpack.c.l.b16 %v1480
        %v1864 = vunpack.c.h.b16 %v1480
        %v1865 = vpack.c.b16 %v1613, %v1609
        %v1866 = vpack.c.b16 %v1614, %v1610
        %v1867 = vpack.c.b16 %v1615, %v1611
        %v1868 = vpack.c.b16 %v1616, %v1612
        %v1869 = vpack.c.b16 %v1621, %v1617
        %v1870 = vpack.c.b16 %v1622, %v1618
        %v1871 = vpack.c.b16 %v1623, %v1619
        %v1872 = vpack.c.b16 %v1624, %v1620
        %v1873 = vpack.c.b16 %v1629, %v1625
        %v1874 = vpack.c.b16 %v1630, %v1626
        %v1875 = vpack.c.b16 %v1631, %v1627
        %v1876 = vpack.c.b16 %v1632, %v1628
        %v1877 = vpack.c.b16 %v1637, %v1633
        %v1878 = vpack.c.b16 %v1638, %v1634
        %v1879 = vpack.c.b16 %v1639, %v1635
        %v1880 = vpack.c.b16 %v1640, %v1636
        %v1881 = vpack.c.b16 %v1645, %v1641
        %v1882 = vpack.c.b16 %v1646, %v1642
        %v1883 = vpack.c.b16 %v1647, %v1643
        %v1884 = vpack.c.b16 %v1648, %v1644
        %v1885 = vpack.c.b16 %v1653, %v1649
        %v1886 = vpack.c.b16 %v1654, %v1650
        %v1887 = vpack.c.b16 %v1655, %v1651
        %v1888 = vpack.c.b16 %v1656, %v1652
        %v1889 = vpack.c.b16 %v1661, %v1657
        %v1890 = vpack.c.b16 %v1662, %v1658
        %v1891 = vpack.c.b16 %v1663, %v1659
        %v1892 = vpack.c.b16 %v1664, %v1660
        %v1893 = vpack.c.b16 %v1669, %v1665
        %v1894 = vpack.c.b16 %v1670, %v1666
        %v1895 = vpack.c.b16 %v1671, %v1667
        %v1896 = vpack.c.b16 %v1672, %v1668
        %v1897 = vpack.c.b16 %v1677, %v1673
        %v1898 = vpack.c.b16 %v1678, %v1674
        %v1899 = vpack.c.b16 %v1679, %v1675
        %v1900 = vpack.c.b16 %v1680, %v1676
        %v1901 = vpack.c.b16 %v1685, %v1681
        %v1902 = vpack.c.b16 %v1686, %v1682
        %v1903 = vpack.c.b16 %v1687, %v1683
        %v1904 = vpack.c.b16 %v1688, %v1684
        %v1905 = vpack.c.b16 %v1693, %v1689
        %v1906 = vpack.c.b16 %v1694, %v1690
        %v1907 = vpack.c.b16 %v1695, %v1691
        %v1908 = vpack.c.b16 %v1696, %v1692
        %v1909 = vpack.c.b16 %v1701, %v1697
        %v1910 = vpack.c.b16 %v1702, %v1698
        %v1911 = vpack.c.b16 %v1703, %v1699
        %v1912 = vpack.c.b16 %v1704, %v1700
        %v1913 = vpack.c.b16 %v1709, %v1705
        %v1914 = vpack.c.b16 %v1710, %v1706
        %v1915 = vpack.c.b16 %v1711, %v1707
        %v1916 = vpack.c.b16 %v1712, %v1708
        %v1917 = vpack.c.b16 %v1717, %v1713
        %v1918 = vpack.c.b16 %v1718, %v1714
        %v1919 = vpack.c.b16 %v1719, %v1715
        %v1920 = vpack.c.b16 %v1720, %v1716
        %v1921 = vpack.c.b16 %v1725, %v1721
        %v1922 = vpack.c.b16 %v1726, %v1722
        %v1923 = vpack.c.b16 %v1727, %v1723
        %v1924 = vpack.c.b16 %v1728, %v1724
        %v1925 = vpack.c.b16 %v1733, %v1729
        %v1926 = vpack.c.b16 %v1734, %v1730
        %v1927 = vpack.c.b16 %v1735, %v1731
        %v1928 = vpack.c.b16 %v1736, %v1732
        %v1929 = vpack.c.b16 %v1741, %v1737
        %v1930 = vpack.c.b16 %v1742, %v1738
        %v1931 = vpack.c.b16 %v1743, %v1739
        %v1932 = vpack.c.b16 %v1744, %v1740
        %v1933 = vpack.c.b16 %v1749, %v1745
        %v1934 = vpack.c.b16 %v1750, %v1746
        %v1935 = vpack.c.b16 %v1751, %v1747
        %v1936 = vpack.c.b16 %v1752, %v1748
        %v1937 = vpack.c.b16 %v1757, %v1753
        %v1938 = vpack.c.b16 %v1758, %v1754
        %v1939 = vpack.c.b16 %v1759, %v1755
        %v1940 = vpack.c.b16 %v1760, %v1756
        %v1941 = vpack.c.b16 %v1765, %v1761
        %v1942 = vpack.c.b16 %v1766, %v1762
        %v1943 = vpack.c.b16 %v1767, %v1763
        %v1944 = vpack.c.b16 %v1768, %v1764
        %v1945 = vpack.c.b16 %v1773, %v1769
        %v1946 = vpack.c.b16 %v1774, %v1770
        %v1947 = vpack.c.b16 %v1775, %v1771
        %v1948 = vpack.c.b16 %v1776, %v1772
        %v1949 = vpack.c.b16 %v1781, %v1777
        %v1950 = vpack.c.b16 %v1782, %v1778
        %v1951 = vpack.c.b16 %v1783, %v1779
        %v1952 = vpack.c.b16 %v1784, %v1780
        %v1953 = vpack.c.b16 %v1789, %v1785
        %v1954 = vpack.c.b16 %v1790, %v1786
        %v1955 = vpack.c.b16 %v1791, %v1787
        %v1956 = vpack.c.b16 %v1792, %v1788
        %v1957 = vpack.c.b16 %v1797, %v1793
        %v1958 = vpack.c.b16 %v1798, %v1794
        %v1959 = vpack.c.b16 %v1799, %v1795
        %v1960 = vpack.c.b16 %v1800, %v1796
        %v1961 = vpack.c.b16 %v1805, %v1801
        %v1962 = vpack.c.b16 %v1806, %v1802
        %v1963 = vpack.c.b16 %v1807, %v1803
        %v1964 = vpack.c.b16 %v1808, %v1804
        %v1965 = vpack.c.b16 %v1813, %v1809
        %v1966 = vpack.c.b16 %v1814, %v1810
        %v1967 = vpack.c.b16 %v1815, %v1811
        %v1968 = vpack.c.b16 %v1816, %v1812
        %v1969 = vpack.c.b16 %v1821, %v1817
        %v1970 = vpack.c.b16 %v1822, %v1818
        %v1971 = vpack.c.b16 %v1823, %v1819
        %v1972 = vpack.c.b16 %v1824, %v1820
        %v1973 = vpack.c.b16 %v1829, %v1825
        %v1974 = vpack.c.b16 %v1830, %v1826
        %v1975 = vpack.c.b16 %v1831, %v1827
        %v1976 = vpack.c.b16 %v1832, %v1828
        %v1977 = vpack.c.b16 %v1837, %v1833
        %v1978 = vpack.c.b16 %v1838, %v1834
        %v1979 = vpack.c.b16 %v1839, %v1835
        %v1980 = vpack.c.b16 %v1840, %v1836
        %v1981 = vpack.c.b16 %v1845, %v1841
        %v1982 = vpack.c.b16 %v1846, %v1842
        %v1983 = vpack.c.b16 %v1847, %v1843
        %v1984 = vpack.c.b16 %v1848, %v1844
        %v1985 = vpack.c.b16 %v1853, %v1849
        %v1986 = vpack.c.b16 %v1854, %v1850
        %v1987 = vpack.c.b16 %v1855, %v1851
        %v1988 = vpack.c.b16 %v1856, %v1852
        %v1989 = vpack.c.b16 %v1861, %v1857
        %v1990 = vpack.c.b16 %v1862, %v1858
        %v1991 = vpack.c.b16 %v1863, %v1859
        %v1992 = vpack.c.b16 %v1864, %v1860
        %2121 = vmatpush.bf16.msra.mxu0 %v1893
        %2122 = vmatpush.bf16.msra.mxu0 %v1889
        %2123 = vmatpush.bf16.msra.mxu0 %v1885
        %2124 = vmatpush.bf16.msra.mxu0 %v1881
        %2125 = vmatpush.bf16.msra.mxu0 %v1877
        %2126 = vmatpush.bf16.msra.mxu0 %v1873
        %2127 = vmatpush.bf16.msra.mxu0 %v1869
        %2128 = vmatpush.bf16.msra.mxu0 %v1865
        %2129 = vmatmul.bf16.gmra.mxu0 %v1349
        %v2130 = vpop.f32.mrf.mxu0
        %v2131 = vadd.f32 0.0, %v2130
        %v2132 = vpop.f32.mrf.mxu0
        %2133 = vdwg.mxu0
        %2134 = vmatpush.bf16.msra.mxu0 %v1925
        %2135 = vmatpush.bf16.msra.mxu0 %v1921
        %2136 = vmatpush.bf16.msra.mxu0 %v1917
        %2137 = vmatpush.bf16.msra.mxu0 %v1913
        %2138 = vmatpush.bf16.msra.mxu0 %v1909
        %2139 = vmatpush.bf16.msra.mxu0 %v1905
        %2140 = vmatpush.bf16.msra.mxu0 %v1901
        %2141 = vmatpush.bf16.msra.mxu0 %v1897
        %2142 = vmatmul.bf16.gmra.mxu0 %v1350
        %v2143 = vpop.f32.mrf.mxu0
        %v2144 = vadd.f32 %v2131, %v2143
        %v2145 = vpop.f32.mrf.mxu0
        %2146 = vdwg.mxu0
        %2147 = vmatpush.bf16.msra.mxu0 %v1957
        %2148 = vmatpush.bf16.msra.mxu0 %v1953
        %2149 = vmatpush.bf16.msra.mxu0 %v1949
        %2150 = vmatpush.bf16.msra.mxu0 %v1945
        %2151 = vmatpush.bf16.msra.mxu0 %v1941
        %2152 = vmatpush.bf16.msra.mxu0 %v1937
        %2153 = vmatpush.bf16.msra.mxu0 %v1933
        %2154 = vmatpush.bf16.msra.mxu0 %v1929
        %2155 = vmatmul.bf16.gmra.mxu0 %v1351
        %v2156 = vpop.f32.mrf.mxu0
        %v2157 = vadd.f32 %v2144, %v2156
        %v2158 = vpop.f32.mrf.mxu0
        %2159 = vdwg.mxu0
        %2160 = vmatpush.bf16.msra.mxu0 %v1989
        %2161 = vmatpush.bf16.msra.mxu0 %v1985
        %2162 = vmatpush.bf16.msra.mxu0 %v1981
        %2163 = vmatpush.bf16.msra.mxu0 %v1977
        %2164 = vmatpush.bf16.msra.mxu0 %v1973
        %2165 = vmatpush.bf16.msra.mxu0 %v1969
        %2166 = vmatpush.bf16.msra.mxu0 %v1965
        %2167 = vmatpush.bf16.msra.mxu0 %v1961
        %2168 = vmatmul.bf16.gmra.mxu0 %v1352
        %v2169 = vpop.f32.mrf.mxu0
        %v2170 = vadd.f32 %v2157, %v2169
        %v2171 = vpop.f32.mrf.mxu0
        %2172 = vdwg.mxu0
        %2173 = vmatpush.bf16.msra.mxu0 %v1894
        %2174 = vmatpush.bf16.msra.mxu0 %v1890
        %2175 = vmatpush.bf16.msra.mxu0 %v1886
        %2176 = vmatpush.bf16.msra.mxu0 %v1882
        %2177 = vmatpush.bf16.msra.mxu0 %v1878
        %2178 = vmatpush.bf16.msra.mxu0 %v1874
        %2179 = vmatpush.bf16.msra.mxu0 %v1870
        %2180 = vmatpush.bf16.msra.mxu0 %v1866
        %2181 = vmatmul.bf16.gmra.mxu0 %v1349
        %v2182 = vpop.f32.mrf.mxu0
        %v2183 = vadd.f32 0.0, %v2182
        %v2184 = vpop.f32.mrf.mxu0
        %2185 = vdwg.mxu0
        %2186 = vmatpush.bf16.msra.mxu0 %v1926
        %2187 = vmatpush.bf16.msra.mxu0 %v1922
        %2188 = vmatpush.bf16.msra.mxu0 %v1918
        %2189 = vmatpush.bf16.msra.mxu0 %v1914
        %2190 = vmatpush.bf16.msra.mxu0 %v1910
        %2191 = vmatpush.bf16.msra.mxu0 %v1906
        %2192 = vmatpush.bf16.msra.mxu0 %v1902
        %2193 = vmatpush.bf16.msra.mxu0 %v1898
        %2194 = vmatmul.bf16.gmra.mxu0 %v1350
        %v2195 = vpop.f32.mrf.mxu0
        %v2196 = vadd.f32 %v2183, %v2195
        %v2197 = vpop.f32.mrf.mxu0
        %2198 = vdwg.mxu0
        %2199 = vmatpush.bf16.msra.mxu0 %v1958
        %2200 = vmatpush.bf16.msra.mxu0 %v1954
        %2201 = vmatpush.bf16.msra.mxu0 %v1950
        %2202 = vmatpush.bf16.msra.mxu0 %v1946
        %2203 = vmatpush.bf16.msra.mxu0 %v1942
        %2204 = vmatpush.bf16.msra.mxu0 %v1938
        %2205 = vmatpush.bf16.msra.mxu0 %v1934
        %2206 = vmatpush.bf16.msra.mxu0 %v1930
        %2207 = vmatmul.bf16.gmra.mxu0 %v1351
        %v2208 = vpop.f32.mrf.mxu0
        %v2209 = vadd.f32 %v2196, %v2208
        %v2210 = vpop.f32.mrf.mxu0
        %2211 = vdwg.mxu0
        %2212 = vmatpush.bf16.msra.mxu0 %v1990
        %2213 = vmatpush.bf16.msra.mxu0 %v1986
        %2214 = vmatpush.bf16.msra.mxu0 %v1982
        %2215 = vmatpush.bf16.msra.mxu0 %v1978
        %2216 = vmatpush.bf16.msra.mxu0 %v1974
        %2217 = vmatpush.bf16.msra.mxu0 %v1970
        %2218 = vmatpush.bf16.msra.mxu0 %v1966
        %2219 = vmatpush.bf16.msra.mxu0 %v1962
        %2220 = vmatmul.bf16.gmra.mxu0 %v1352
        %v2221 = vpop.f32.mrf.mxu0
        %v2222 = vadd.f32 %v2209, %v2221
        %v2223 = vpop.f32.mrf.mxu0
        %2224 = vdwg.mxu0
        %2225 = vmatpush.bf16.msra.mxu0 %v1895
        %2226 = vmatpush.bf16.msra.mxu0 %v1891
        %2227 = vmatpush.bf16.msra.mxu0 %v1887
        %2228 = vmatpush.bf16.msra.mxu0 %v1883
        %2229 = vmatpush.bf16.msra.mxu0 %v1879
        %2230 = vmatpush.bf16.msra.mxu0 %v1875
        %2231 = vmatpush.bf16.msra.mxu0 %v1871
        %2232 = vmatpush.bf16.msra.mxu0 %v1867
        %2233 = vmatmul.bf16.gmra.mxu0 %v1349
        %v2234 = vpop.f32.mrf.mxu0
        %v2235 = vadd.f32 0.0, %v2234
        %v2236 = vpop.f32.mrf.mxu0
        %2237 = vdwg.mxu0
        %2238 = vmatpush.bf16.msra.mxu0 %v1927
        %2239 = vmatpush.bf16.msra.mxu0 %v1923
        %2240 = vmatpush.bf16.msra.mxu0 %v1919
        %2241 = vmatpush.bf16.msra.mxu0 %v1915
        %2242 = vmatpush.bf16.msra.mxu0 %v1911
        %2243 = vmatpush.bf16.msra.mxu0 %v1907
        %2244 = vmatpush.bf16.msra.mxu0 %v1903
        %2245 = vmatpush.bf16.msra.mxu0 %v1899
        %2246 = vmatmul.bf16.gmra.mxu0 %v1350
        %v2247 = vpop.f32.mrf.mxu0
        %v2248 = vadd.f32 %v2235, %v2247
        %v2249 = vpop.f32.mrf.mxu0
        %2250 = vdwg.mxu0
        %2251 = vmatpush.bf16.msra.mxu0 %v1959
        %2252 = vmatpush.bf16.msra.mxu0 %v1955
        %2253 = vmatpush.bf16.msra.mxu0 %v1951
        %2254 = vmatpush.bf16.msra.mxu0 %v1947
        %2255 = vmatpush.bf16.msra.mxu0 %v1943
        %2256 = vmatpush.bf16.msra.mxu0 %v1939
        %2257 = vmatpush.bf16.msra.mxu0 %v1935
        %2258 = vmatpush.bf16.msra.mxu0 %v1931
        %2259 = vmatmul.bf16.gmra.mxu0 %v1351
        %v2260 = vpop.f32.mrf.mxu0
        %v2261 = vadd.f32 %v2248, %v2260
        %v2262 = vpop.f32.mrf.mxu0
        %2263 = vdwg.mxu0
        %2264 = vmatpush.bf16.msra.mxu0 %v1991
        %2265 = vmatpush.bf16.msra.mxu0 %v1987
        %2266 = vmatpush.bf16.msra.mxu0 %v1983
        %2267 = vmatpush.bf16.msra.mxu0 %v1979
        %2268 = vmatpush.bf16.msra.mxu0 %v1975
        %2269 = vmatpush.bf16.msra.mxu0 %v1971
        %2270 = vmatpush.bf16.msra.mxu0 %v1967
        %2271 = vmatpush.bf16.msra.mxu0 %v1963
        %2272 = vmatmul.bf16.gmra.mxu0 %v1352
        %v2273 = vpop.f32.mrf.mxu0
        %v2274 = vadd.f32 %v2261, %v2273
        %v2275 = vpop.f32.mrf.mxu0
        %2276 = vdwg.mxu0
        %2277 = vmatpush.bf16.msra.mxu0 %v1896
        %2278 = vmatpush.bf16.msra.mxu0 %v1892
        %2279 = vmatpush.bf16.msra.mxu0 %v1888
        %2280 = vmatpush.bf16.msra.mxu0 %v1884
        %2281 = vmatpush.bf16.msra.mxu0 %v1880
        %2282 = vmatpush.bf16.msra.mxu0 %v1876
        %2283 = vmatpush.bf16.msra.mxu0 %v1872
        %2284 = vmatpush.bf16.msra.mxu0 %v1868
        %2285 = vmatmul.bf16.gmra.mxu0 %v1349
        %v2286 = vpop.f32.mrf.mxu0
        %v2287 = vadd.f32 0.0, %v2286
        %v2288 = vpop.f32.mrf.mxu0
        %2289 = vdwg.mxu0
        %2290 = vmatpush.bf16.msra.mxu0 %v1928
        %2291 = vmatpush.bf16.msra.mxu0 %v1924
        %2292 = vmatpush.bf16.msra.mxu0 %v1920
        %2293 = vmatpush.bf16.msra.mxu0 %v1916
        %2294 = vmatpush.bf16.msra.mxu0 %v1912
        %2295 = vmatpush.bf16.msra.mxu0 %v1908
        %2296 = vmatpush.bf16.msra.mxu0 %v1904
        %2297 = vmatpush.bf16.msra.mxu0 %v1900
        %2298 = vmatmul.bf16.gmra.mxu0 %v1350
        %v2299 = vpop.f32.mrf.mxu0
        %v2300 = vadd.f32 %v2287, %v2299
        %v2301 = vpop.f32.mrf.mxu0
        %2302 = vdwg.mxu0
        %2303 = vmatpush.bf16.msra.mxu0 %v1960
        %2304 = vmatpush.bf16.msra.mxu0 %v1956
        %2305 = vmatpush.bf16.msra.mxu0 %v1952
        %2306 = vmatpush.bf16.msra.mxu0 %v1948
        %2307 = vmatpush.bf16.msra.mxu0 %v1944
        %2308 = vmatpush.bf16.msra.mxu0 %v1940
        %2309 = vmatpush.bf16.msra.mxu0 %v1936
        %2310 = vmatpush.bf16.msra.mxu0 %v1932
        %2311 = vmatmul.bf16.gmra.mxu0 %v1351
        %v2312 = vpop.f32.mrf.mxu0
        %v2313 = vadd.f32 %v2300, %v2312
        %v2314 = vpop.f32.mrf.mxu0
        %2315 = vdwg.mxu0
        %2316 = vmatpush.bf16.msra.mxu0 %v1992
        %2317 = vmatpush.bf16.msra.mxu0 %v1988
        %2318 = vmatpush.bf16.msra.mxu0 %v1984
        %2319 = vmatpush.bf16.msra.mxu0 %v1980
        %2320 = vmatpush.bf16.msra.mxu0 %v1976
        %2321 = vmatpush.bf16.msra.mxu0 %v1972
        %2322 = vmatpush.bf16.msra.mxu0 %v1968
        %2323 = vmatpush.bf16.msra.mxu0 %v1964
        %2324 = vmatmul.bf16.gmra.mxu0 %v1352
        %v2325 = vpop.f32.mrf.mxu0
        %v2326 = vadd.f32 %v2313, %v2325
        %v2327 = vpop.f32.mrf.mxu0
        %2328 = vdwg.mxu0
        %v2329 = vadd.f32 %v293, %v2170
        %v2330 = vadd.f32 %v294, %v2222
        %v2331 = vadd.f32 %v295, %v2274
        %v2332 = vadd.f32 %v296, %v2326
        %v2333 = vld [vmem:[%s1 + $0x10] sm:$0xff]
        %v2334 = vld [vmem:[%s1 + $0x18] sm:$0xff]
        %v2335 = vld [vmem:[%s1 + $0x50] sm:$0xff]
        %v2336 = vld [vmem:[%s1 + $0x58] sm:$0xff]
        %v2337 = vld [vmem:[%s1 + $0x90] sm:$0xff]
        %v2338 = vld [vmem:[%s1 + $0x98] sm:$0xff]
        %v2339 = vld [vmem:[%s1 + $0xd0] sm:$0xff]
        %v2340 = vld [vmem:[%s1 + $0xd8] sm:$0xff]
        %v2341 = vld [vmem:[%s1 + $0x110] sm:$0xff]
        %v2342 = vld [vmem:[%s1 + $0x118] sm:$0xff]
        %v2343 = vld [vmem:[%s1 + $0x150] sm:$0xff]
        %v2344 = vld [vmem:[%s1 + $0x158] sm:$0xff]
        %v2345 = vld [vmem:[%s1 + $0x190] sm:$0xff]
        %v2346 = vld [vmem:[%s1 + $0x198] sm:$0xff]
        %v2347 = vld [vmem:[%s1 + $0x1d0] sm:$0xff]
        %v2348 = vld [vmem:[%s1 + $0x1d8] sm:$0xff]
        %v2349 = vld [vmem:[%s1 + $0x210] sm:$0xff]
        %v2350 = vld [vmem:[%s1 + $0x218] sm:$0xff]
        %v2351 = vld [vmem:[%s1 + $0x250] sm:$0xff]
        %v2352 = vld [vmem:[%s1 + $0x258] sm:$0xff]
        %v2353 = vld [vmem:[%s1 + $0x290] sm:$0xff]
        %v2354 = vld [vmem:[%s1 + $0x298] sm:$0xff]
        %v2355 = vld [vmem:[%s1 + $0x2d0] sm:$0xff]
        %v2356 = vld [vmem:[%s1 + $0x2d8] sm:$0xff]
        %v2357 = vld [vmem:[%s1 + $0x310] sm:$0xff]
        %v2358 = vld [vmem:[%s1 + $0x318] sm:$0xff]
        %v2359 = vld [vmem:[%s1 + $0x350] sm:$0xff]
        %v2360 = vld [vmem:[%s1 + $0x358] sm:$0xff]
        %v2361 = vld [vmem:[%s1 + $0x390] sm:$0xff]
        %v2362 = vld [vmem:[%s1 + $0x398] sm:$0xff]
        %v2363 = vld [vmem:[%s1 + $0x3d0] sm:$0xff]
        %v2364 = vld [vmem:[%s1 + $0x3d8] sm:$0xff]
        %v2365 = vld [vmem:[%s1 + $0x410] sm:$0xff]
        %v2366 = vld [vmem:[%s1 + $0x418] sm:$0xff]
        %v2367 = vld [vmem:[%s1 + $0x450] sm:$0xff]
        %v2368 = vld [vmem:[%s1 + $0x458] sm:$0xff]
        %v2369 = vld [vmem:[%s1 + $0x490] sm:$0xff]
        %v2370 = vld [vmem:[%s1 + $0x498] sm:$0xff]
        %v2371 = vld [vmem:[%s1 + $0x4d0] sm:$0xff]
        %v2372 = vld [vmem:[%s1 + $0x4d8] sm:$0xff]
        %v2373 = vld [vmem:[%s1 + $0x510] sm:$0xff]
        %v2374 = vld [vmem:[%s1 + $0x518] sm:$0xff]
        %v2375 = vld [vmem:[%s1 + $0x550] sm:$0xff]
        %v2376 = vld [vmem:[%s1 + $0x558] sm:$0xff]
        %v2377 = vld [vmem:[%s1 + $0x590] sm:$0xff]
        %v2378 = vld [vmem:[%s1 + $0x598] sm:$0xff]
        %v2379 = vld [vmem:[%s1 + $0x5d0] sm:$0xff]
        %v2380 = vld [vmem:[%s1 + $0x5d8] sm:$0xff]
        %v2381 = vld [vmem:[%s1 + $0x610] sm:$0xff]
        %v2382 = vld [vmem:[%s1 + $0x618] sm:$0xff]
        %v2383 = vld [vmem:[%s1 + $0x650] sm:$0xff]
        %v2384 = vld [vmem:[%s1 + $0x658] sm:$0xff]
        %v2385 = vld [vmem:[%s1 + $0x690] sm:$0xff]
        %v2386 = vld [vmem:[%s1 + $0x698] sm:$0xff]
        %v2387 = vld [vmem:[%s1 + $0x6d0] sm:$0xff]
        %v2388 = vld [vmem:[%s1 + $0x6d8] sm:$0xff]
        %v2389 = vld [vmem:[%s1 + $0x710] sm:$0xff]
        %v2390 = vld [vmem:[%s1 + $0x718] sm:$0xff]
        %v2391 = vld [vmem:[%s1 + $0x750] sm:$0xff]
        %v2392 = vld [vmem:[%s1 + $0x758] sm:$0xff]
        %v2393 = vld [vmem:[%s1 + $0x790] sm:$0xff]
        %v2394 = vld [vmem:[%s1 + $0x798] sm:$0xff]
        %v2395 = vld [vmem:[%s1 + $0x7d0] sm:$0xff]
        %v2396 = vld [vmem:[%s1 + $0x7d8] sm:$0xff]
        %v2397 = vld [vmem:[%s1 + $0x810] sm:$0xff]
        %v2398 = vld [vmem:[%s1 + $0x818] sm:$0xff]
        %v2399 = vld [vmem:[%s1 + $0x850] sm:$0xff]
        %v2400 = vld [vmem:[%s1 + $0x858] sm:$0xff]
        %v2401 = vld [vmem:[%s1 + $0x890] sm:$0xff]
        %v2402 = vld [vmem:[%s1 + $0x898] sm:$0xff]
        %v2403 = vld [vmem:[%s1 + $0x8d0] sm:$0xff]
        %v2404 = vld [vmem:[%s1 + $0x8d8] sm:$0xff]
        %v2405 = vld [vmem:[%s1 + $0x910] sm:$0xff]
        %v2406 = vld [vmem:[%s1 + $0x918] sm:$0xff]
        %v2407 = vld [vmem:[%s1 + $0x950] sm:$0xff]
        %v2408 = vld [vmem:[%s1 + $0x958] sm:$0xff]
        %v2409 = vld [vmem:[%s1 + $0x990] sm:$0xff]
        %v2410 = vld [vmem:[%s1 + $0x998] sm:$0xff]
        %v2411 = vld [vmem:[%s1 + $0x9d0] sm:$0xff]
        %v2412 = vld [vmem:[%s1 + $0x9d8] sm:$0xff]
        %v2413 = vld [vmem:[%s1 + $0xa10] sm:$0xff]
        %v2414 = vld [vmem:[%s1 + $0xa18] sm:$0xff]
        %v2415 = vld [vmem:[%s1 + $0xa50] sm:$0xff]
        %v2416 = vld [vmem:[%s1 + $0xa58] sm:$0xff]
        %v2417 = vld [vmem:[%s1 + $0xa90] sm:$0xff]
        %v2418 = vld [vmem:[%s1 + $0xa98] sm:$0xff]
        %v2419 = vld [vmem:[%s1 + $0xad0] sm:$0xff]
        %v2420 = vld [vmem:[%s1 + $0xad8] sm:$0xff]
        %v2421 = vld [vmem:[%s1 + $0xb10] sm:$0xff]
        %v2422 = vld [vmem:[%s1 + $0xb18] sm:$0xff]
        %v2423 = vld [vmem:[%s1 + $0xb50] sm:$0xff]
        %v2424 = vld [vmem:[%s1 + $0xb58] sm:$0xff]
        %v2425 = vld [vmem:[%s1 + $0xb90] sm:$0xff]
        %v2426 = vld [vmem:[%s1 + $0xb98] sm:$0xff]
        %v2427 = vld [vmem:[%s1 + $0xbd0] sm:$0xff]
        %v2428 = vld [vmem:[%s1 + $0xbd8] sm:$0xff]
        %v2429 = vld [vmem:[%s1 + $0xc10] sm:$0xff]
        %v2430 = vld [vmem:[%s1 + $0xc18] sm:$0xff]
        %v2431 = vld [vmem:[%s1 + $0xc50] sm:$0xff]
        %v2432 = vld [vmem:[%s1 + $0xc58] sm:$0xff]
        %v2433 = vld [vmem:[%s1 + $0xc90] sm:$0xff]
        %v2434 = vld [vmem:[%s1 + $0xc98] sm:$0xff]
        %v2435 = vld [vmem:[%s1 + $0xcd0] sm:$0xff]
        %v2436 = vld [vmem:[%s1 + $0xcd8] sm:$0xff]
        %v2437 = vld [vmem:[%s1 + $0xd10] sm:$0xff]
        %v2438 = vld [vmem:[%s1 + $0xd18] sm:$0xff]
        %v2439 = vld [vmem:[%s1 + $0xd50] sm:$0xff]
        %v2440 = vld [vmem:[%s1 + $0xd58] sm:$0xff]
        %v2441 = vld [vmem:[%s1 + $0xd90] sm:$0xff]
        %v2442 = vld [vmem:[%s1 + $0xd98] sm:$0xff]
        %v2443 = vld [vmem:[%s1 + $0xdd0] sm:$0xff]
        %v2444 = vld [vmem:[%s1 + $0xdd8] sm:$0xff]
        %v2445 = vld [vmem:[%s1 + $0xe10] sm:$0xff]
        %v2446 = vld [vmem:[%s1 + $0xe18] sm:$0xff]
        %v2447 = vld [vmem:[%s1 + $0xe50] sm:$0xff]
        %v2448 = vld [vmem:[%s1 + $0xe58] sm:$0xff]
        %v2449 = vld [vmem:[%s1 + $0xe90] sm:$0xff]
        %v2450 = vld [vmem:[%s1 + $0xe98] sm:$0xff]
        %v2451 = vld [vmem:[%s1 + $0xed0] sm:$0xff]
        %v2452 = vld [vmem:[%s1 + $0xed8] sm:$0xff]
        %v2453 = vld [vmem:[%s1 + $0xf10] sm:$0xff]
        %v2454 = vld [vmem:[%s1 + $0xf18] sm:$0xff]
        %v2455 = vld [vmem:[%s1 + $0xf50] sm:$0xff]
        %v2456 = vld [vmem:[%s1 + $0xf58] sm:$0xff]
        %v2457 = vld [vmem:[%s1 + $0xf90] sm:$0xff]
        %v2458 = vld [vmem:[%s1 + $0xf98] sm:$0xff]
        %v2459 = vld [vmem:[%s1 + $0xfd0] sm:$0xff]
        %v2460 = vld [vmem:[%s1 + $0xfd8] sm:$0xff]
        %v2589 = vunpack.c.l.b16 %v2333
        %v2590 = vunpack.c.h.b16 %v2333
        %v2591 = vunpack.c.l.b16 %v2334
        %v2592 = vunpack.c.h.b16 %v2334
        %v2593 = vunpack.c.l.b16 %v2335
        %v2594 = vunpack.c.h.b16 %v2335
        %v2595 = vunpack.c.l.b16 %v2336
        %v2596 = vunpack.c.h.b16 %v2336
        %v2597 = vunpack.c.l.b16 %v2337
        %v2598 = vunpack.c.h.b16 %v2337
        %v2599 = vunpack.c.l.b16 %v2338
        %v2600 = vunpack.c.h.b16 %v2338
        %v2601 = vunpack.c.l.b16 %v2339
        %v2602 = vunpack.c.h.b16 %v2339
        %v2603 = vunpack.c.l.b16 %v2340
        %v2604 = vunpack.c.h.b16 %v2340
        %v2605 = vunpack.c.l.b16 %v2341
        %v2606 = vunpack.c.h.b16 %v2341
        %v2607 = vunpack.c.l.b16 %v2342
        %v2608 = vunpack.c.h.b16 %v2342
        %v2609 = vunpack.c.l.b16 %v2343
        %v2610 = vunpack.c.h.b16 %v2343
        %v2611 = vunpack.c.l.b16 %v2344
        %v2612 = vunpack.c.h.b16 %v2344
        %v2613 = vunpack.c.l.b16 %v2345
        %v2614 = vunpack.c.h.b16 %v2345
        %v2615 = vunpack.c.l.b16 %v2346
        %v2616 = vunpack.c.h.b16 %v2346
        %v2617 = vunpack.c.l.b16 %v2347
        %v2618 = vunpack.c.h.b16 %v2347
        %v2619 = vunpack.c.l.b16 %v2348
        %v2620 = vunpack.c.h.b16 %v2348
        %v2621 = vunpack.c.l.b16 %v2349
        %v2622 = vunpack.c.h.b16 %v2349
        %v2623 = vunpack.c.l.b16 %v2350
        %v2624 = vunpack.c.h.b16 %v2350
        %v2625 = vunpack.c.l.b16 %v2351
        %v2626 = vunpack.c.h.b16 %v2351
        %v2627 = vunpack.c.l.b16 %v2352
        %v2628 = vunpack.c.h.b16 %v2352
        %v2629 = vunpack.c.l.b16 %v2353
        %v2630 = vunpack.c.h.b16 %v2353
        %v2631 = vunpack.c.l.b16 %v2354
        %v2632 = vunpack.c.h.b16 %v2354
        %v2633 = vunpack.c.l.b16 %v2355
        %v2634 = vunpack.c.h.b16 %v2355
        %v2635 = vunpack.c.l.b16 %v2356
        %v2636 = vunpack.c.h.b16 %v2356
        %v2637 = vunpack.c.l.b16 %v2357
        %v2638 = vunpack.c.h.b16 %v2357
        %v2639 = vunpack.c.l.b16 %v2358
        %v2640 = vunpack.c.h.b16 %v2358
        %v2641 = vunpack.c.l.b16 %v2359
        %v2642 = vunpack.c.h.b16 %v2359
        %v2643 = vunpack.c.l.b16 %v2360
        %v2644 = vunpack.c.h.b16 %v2360
        %v2645 = vunpack.c.l.b16 %v2361
        %v2646 = vunpack.c.h.b16 %v2361
        %v2647 = vunpack.c.l.b16 %v2362
        %v2648 = vunpack.c.h.b16 %v2362
        %v2649 = vunpack.c.l.b16 %v2363
        %v2650 = vunpack.c.h.b16 %v2363
        %v2651 = vunpack.c.l.b16 %v2364
        %v2652 = vunpack.c.h.b16 %v2364
        %v2653 = vunpack.c.l.b16 %v2365
        %v2654 = vunpack.c.h.b16 %v2365
        %v2655 = vunpack.c.l.b16 %v2366
        %v2656 = vunpack.c.h.b16 %v2366
        %v2657 = vunpack.c.l.b16 %v2367
        %v2658 = vunpack.c.h.b16 %v2367
        %v2659 = vunpack.c.l.b16 %v2368
        %v2660 = vunpack.c.h.b16 %v2368
        %v2661 = vunpack.c.l.b16 %v2369
        %v2662 = vunpack.c.h.b16 %v2369
        %v2663 = vunpack.c.l.b16 %v2370
        %v2664 = vunpack.c.h.b16 %v2370
        %v2665 = vunpack.c.l.b16 %v2371
        %v2666 = vunpack.c.h.b16 %v2371
        %v2667 = vunpack.c.l.b16 %v2372
        %v2668 = vunpack.c.h.b16 %v2372
        %v2669 = vunpack.c.l.b16 %v2373
        %v2670 = vunpack.c.h.b16 %v2373
        %v2671 = vunpack.c.l.b16 %v2374
        %v2672 = vunpack.c.h.b16 %v2374
        %v2673 = vunpack.c.l.b16 %v2375
        %v2674 = vunpack.c.h.b16 %v2375
        %v2675 = vunpack.c.l.b16 %v2376
        %v2676 = vunpack.c.h.b16 %v2376
        %v2677 = vunpack.c.l.b16 %v2377
        %v2678 = vunpack.c.h.b16 %v2377
        %v2679 = vunpack.c.l.b16 %v2378
        %v2680 = vunpack.c.h.b16 %v2378
        %v2681 = vunpack.c.l.b16 %v2379
        %v2682 = vunpack.c.h.b16 %v2379
        %v2683 = vunpack.c.l.b16 %v2380
        %v2684 = vunpack.c.h.b16 %v2380
        %v2685 = vunpack.c.l.b16 %v2381
        %v2686 = vunpack.c.h.b16 %v2381
        %v2687 = vunpack.c.l.b16 %v2382
        %v2688 = vunpack.c.h.b16 %v2382
        %v2689 = vunpack.c.l.b16 %v2383
        %v2690 = vunpack.c.h.b16 %v2383
        %v2691 = vunpack.c.l.b16 %v2384
        %v2692 = vunpack.c.h.b16 %v2384
        %v2693 = vunpack.c.l.b16 %v2385
        %v2694 = vunpack.c.h.b16 %v2385
        %v2695 = vunpack.c.l.b16 %v2386
        %v2696 = vunpack.c.h.b16 %v2386
        %v2697 = vunpack.c.l.b16 %v2387
        %v2698 = vunpack.c.h.b16 %v2387
        %v2699 = vunpack.c.l.b16 %v2388
        %v2700 = vunpack.c.h.b16 %v2388
        %v2701 = vunpack.c.l.b16 %v2389
        %v2702 = vunpack.c.h.b16 %v2389
        %v2703 = vunpack.c.l.b16 %v2390
        %v2704 = vunpack.c.h.b16 %v2390
        %v2705 = vunpack.c.l.b16 %v2391
        %v2706 = vunpack.c.h.b16 %v2391
        %v2707 = vunpack.c.l.b16 %v2392
        %v2708 = vunpack.c.h.b16 %v2392
        %v2709 = vunpack.c.l.b16 %v2393
        %v2710 = vunpack.c.h.b16 %v2393
        %v2711 = vunpack.c.l.b16 %v2394
        %v2712 = vunpack.c.h.b16 %v2394
        %v2713 = vunpack.c.l.b16 %v2395
        %v2714 = vunpack.c.h.b16 %v2395
        %v2715 = vunpack.c.l.b16 %v2396
        %v2716 = vunpack.c.h.b16 %v2396
        %v2717 = vunpack.c.l.b16 %v2397
        %v2718 = vunpack.c.h.b16 %v2397
        %v2719 = vunpack.c.l.b16 %v2398
        %v2720 = vunpack.c.h.b16 %v2398
        %v2721 = vunpack.c.l.b16 %v2399
        %v2722 = vunpack.c.h.b16 %v2399
        %v2723 = vunpack.c.l.b16 %v2400
        %v2724 = vunpack.c.h.b16 %v2400
        %v2725 = vunpack.c.l.b16 %v2401
        %v2726 = vunpack.c.h.b16 %v2401
        %v2727 = vunpack.c.l.b16 %v2402
        %v2728 = vunpack.c.h.b16 %v2402
        %v2729 = vunpack.c.l.b16 %v2403
        %v2730 = vunpack.c.h.b16 %v2403
        %v2731 = vunpack.c.l.b16 %v2404
        %v2732 = vunpack.c.h.b16 %v2404
        %v2733 = vunpack.c.l.b16 %v2405
        %v2734 = vunpack.c.h.b16 %v2405
        %v2735 = vunpack.c.l.b16 %v2406
        %v2736 = vunpack.c.h.b16 %v2406
        %v2737 = vunpack.c.l.b16 %v2407
        %v2738 = vunpack.c.h.b16 %v2407
        %v2739 = vunpack.c.l.b16 %v2408
        %v2740 = vunpack.c.h.b16 %v2408
        %v2741 = vunpack.c.l.b16 %v2409
        %v2742 = vunpack.c.h.b16 %v2409
        %v2743 = vunpack.c.l.b16 %v2410
        %v2744 = vunpack.c.h.b16 %v2410
        %v2745 = vunpack.c.l.b16 %v2411
        %v2746 = vunpack.c.h.b16 %v2411
        %v2747 = vunpack.c.l.b16 %v2412
        %v2748 = vunpack.c.h.b16 %v2412
        %v2749 = vunpack.c.l.b16 %v2413
        %v2750 = vunpack.c.h.b16 %v2413
        %v2751 = vunpack.c.l.b16 %v2414
        %v2752 = vunpack.c.h.b16 %v2414
        %v2753 = vunpack.c.l.b16 %v2415
        %v2754 = vunpack.c.h.b16 %v2415
        %v2755 = vunpack.c.l.b16 %v2416
        %v2756 = vunpack.c.h.b16 %v2416
        %v2757 = vunpack.c.l.b16 %v2417
        %v2758 = vunpack.c.h.b16 %v2417
        %v2759 = vunpack.c.l.b16 %v2418
        %v2760 = vunpack.c.h.b16 %v2418
        %v2761 = vunpack.c.l.b16 %v2419
        %v2762 = vunpack.c.h.b16 %v2419
        %v2763 = vunpack.c.l.b16 %v2420
        %v2764 = vunpack.c.h.b16 %v2420
        %v2765 = vunpack.c.l.b16 %v2421
        %v2766 = vunpack.c.h.b16 %v2421
        %v2767 = vunpack.c.l.b16 %v2422
        %v2768 = vunpack.c.h.b16 %v2422
        %v2769 = vunpack.c.l.b16 %v2423
        %v2770 = vunpack.c.h.b16 %v2423
        %v2771 = vunpack.c.l.b16 %v2424
        %v2772 = vunpack.c.h.b16 %v2424
        %v2773 = vunpack.c.l.b16 %v2425
        %v2774 = vunpack.c.h.b16 %v2425
        %v2775 = vunpack.c.l.b16 %v2426
        %v2776 = vunpack.c.h.b16 %v2426
        %v2777 = vunpack.c.l.b16 %v2427
        %v2778 = vunpack.c.h.b16 %v2427
        %v2779 = vunpack.c.l.b16 %v2428
        %v2780 = vunpack.c.h.b16 %v2428
        %v2781 = vunpack.c.l.b16 %v2429
        %v2782 = vunpack.c.h.b16 %v2429
        %v2783 = vunpack.c.l.b16 %v2430
        %v2784 = vunpack.c.h.b16 %v2430
        %v2785 = vunpack.c.l.b16 %v2431
        %v2786 = vunpack.c.h.b16 %v2431
        %v2787 = vunpack.c.l.b16 %v2432
        %v2788 = vunpack.c.h.b16 %v2432
        %v2789 = vunpack.c.l.b16 %v2433
        %v2790 = vunpack.c.h.b16 %v2433
        %v2791 = vunpack.c.l.b16 %v2434
        %v2792 = vunpack.c.h.b16 %v2434
        %v2793 = vunpack.c.l.b16 %v2435
        %v2794 = vunpack.c.h.b16 %v2435
        %v2795 = vunpack.c.l.b16 %v2436
        %v2796 = vunpack.c.h.b16 %v2436
        %v2797 = vunpack.c.l.b16 %v2437
        %v2798 = vunpack.c.h.b16 %v2437
        %v2799 = vunpack.c.l.b16 %v2438
        %v2800 = vunpack.c.h.b16 %v2438
        %v2801 = vunpack.c.l.b16 %v2439
        %v2802 = vunpack.c.h.b16 %v2439
        %v2803 = vunpack.c.l.b16 %v2440
        %v2804 = vunpack.c.h.b16 %v2440
        %v2805 = vunpack.c.l.b16 %v2441
        %v2806 = vunpack.c.h.b16 %v2441
        %v2807 = vunpack.c.l.b16 %v2442
        %v2808 = vunpack.c.h.b16 %v2442
        %v2809 = vunpack.c.l.b16 %v2443
        %v2810 = vunpack.c.h.b16 %v2443
        %v2811 = vunpack.c.l.b16 %v2444
        %v2812 = vunpack.c.h.b16 %v2444
        %v2813 = vunpack.c.l.b16 %v2445
        %v2814 = vunpack.c.h.b16 %v2445
        %v2815 = vunpack.c.l.b16 %v2446
        %v2816 = vunpack.c.h.b16 %v2446
        %v2817 = vunpack.c.l.b16 %v2447
        %v2818 = vunpack.c.h.b16 %v2447
        %v2819 = vunpack.c.l.b16 %v2448
        %v2820 = vunpack.c.h.b16 %v2448
        %v2821 = vunpack.c.l.b16 %v2449
        %v2822 = vunpack.c.h.b16 %v2449
        %v2823 = vunpack.c.l.b16 %v2450
        %v2824 = vunpack.c.h.b16 %v2450
        %v2825 = vunpack.c.l.b16 %v2451
        %v2826 = vunpack.c.h.b16 %v2451
        %v2827 = vunpack.c.l.b16 %v2452
        %v2828 = vunpack.c.h.b16 %v2452
        %v2829 = vunpack.c.l.b16 %v2453
        %v2830 = vunpack.c.h.b16 %v2453
        %v2831 = vunpack.c.l.b16 %v2454
        %v2832 = vunpack.c.h.b16 %v2454
        %v2833 = vunpack.c.l.b16 %v2455
        %v2834 = vunpack.c.h.b16 %v2455
        %v2835 = vunpack.c.l.b16 %v2456
        %v2836 = vunpack.c.h.b16 %v2456
        %v2837 = vunpack.c.l.b16 %v2457
        %v2838 = vunpack.c.h.b16 %v2457
        %v2839 = vunpack.c.l.b16 %v2458
        %v2840 = vunpack.c.h.b16 %v2458
        %v2841 = vunpack.c.l.b16 %v2459
        %v2842 = vunpack.c.h.b16 %v2459
        %v2843 = vunpack.c.l.b16 %v2460
        %v2844 = vunpack.c.h.b16 %v2460
        %v2845 = vpack.c.b16 %v2593, %v2589
        %v2846 = vpack.c.b16 %v2594, %v2590
        %v2847 = vpack.c.b16 %v2595, %v2591
        %v2848 = vpack.c.b16 %v2596, %v2592
        %v2849 = vpack.c.b16 %v2601, %v2597
        %v2850 = vpack.c.b16 %v2602, %v2598
        %v2851 = vpack.c.b16 %v2603, %v2599
        %v2852 = vpack.c.b16 %v2604, %v2600
        %v2853 = vpack.c.b16 %v2609, %v2605
        %v2854 = vpack.c.b16 %v2610, %v2606
        %v2855 = vpack.c.b16 %v2611, %v2607
        %v2856 = vpack.c.b16 %v2612, %v2608
        %v2857 = vpack.c.b16 %v2617, %v2613
        %v2858 = vpack.c.b16 %v2618, %v2614
        %v2859 = vpack.c.b16 %v2619, %v2615
        %v2860 = vpack.c.b16 %v2620, %v2616
        %v2861 = vpack.c.b16 %v2625, %v2621
        %v2862 = vpack.c.b16 %v2626, %v2622
        %v2863 = vpack.c.b16 %v2627, %v2623
        %v2864 = vpack.c.b16 %v2628, %v2624
        %v2865 = vpack.c.b16 %v2633, %v2629
        %v2866 = vpack.c.b16 %v2634, %v2630
        %v2867 = vpack.c.b16 %v2635, %v2631
        %v2868 = vpack.c.b16 %v2636, %v2632
        %v2869 = vpack.c.b16 %v2641, %v2637
        %v2870 = vpack.c.b16 %v2642, %v2638
        %v2871 = vpack.c.b16 %v2643, %v2639
        %v2872 = vpack.c.b16 %v2644, %v2640
        %v2873 = vpack.c.b16 %v2649, %v2645
        %v2874 = vpack.c.b16 %v2650, %v2646
        %v2875 = vpack.c.b16 %v2651, %v2647
        %v2876 = vpack.c.b16 %v2652, %v2648
        %v2877 = vpack.c.b16 %v2657, %v2653
        %v2878 = vpack.c.b16 %v2658, %v2654
        %v2879 = vpack.c.b16 %v2659, %v2655
        %v2880 = vpack.c.b16 %v2660, %v2656
        %v2881 = vpack.c.b16 %v2665, %v2661
        %v2882 = vpack.c.b16 %v2666, %v2662
        %v2883 = vpack.c.b16 %v2667, %v2663
        %v2884 = vpack.c.b16 %v2668, %v2664
        %v2885 = vpack.c.b16 %v2673, %v2669
        %v2886 = vpack.c.b16 %v2674, %v2670
        %v2887 = vpack.c.b16 %v2675, %v2671
        %v2888 = vpack.c.b16 %v2676, %v2672
        %v2889 = vpack.c.b16 %v2681, %v2677
        %v2890 = vpack.c.b16 %v2682, %v2678
        %v2891 = vpack.c.b16 %v2683, %v2679
        %v2892 = vpack.c.b16 %v2684, %v2680
        %v2893 = vpack.c.b16 %v2689, %v2685
        %v2894 = vpack.c.b16 %v2690, %v2686
        %v2895 = vpack.c.b16 %v2691, %v2687
        %v2896 = vpack.c.b16 %v2692, %v2688
        %v2897 = vpack.c.b16 %v2697, %v2693
        %v2898 = vpack.c.b16 %v2698, %v2694
        %v2899 = vpack.c.b16 %v2699, %v2695
        %v2900 = vpack.c.b16 %v2700, %v2696
        %v2901 = vpack.c.b16 %v2705, %v2701
        %v2902 = vpack.c.b16 %v2706, %v2702
        %v2903 = vpack.c.b16 %v2707, %v2703
        %v2904 = vpack.c.b16 %v2708, %v2704
        %v2905 = vpack.c.b16 %v2713, %v2709
        %v2906 = vpack.c.b16 %v2714, %v2710
        %v2907 = vpack.c.b16 %v2715, %v2711
        %v2908 = vpack.c.b16 %v2716, %v2712
        %v2909 = vpack.c.b16 %v2721, %v2717
        %v2910 = vpack.c.b16 %v2722, %v2718
        %v2911 = vpack.c.b16 %v2723, %v2719
        %v2912 = vpack.c.b16 %v2724, %v2720
        %v2913 = vpack.c.b16 %v2729, %v2725
        %v2914 = vpack.c.b16 %v2730, %v2726
        %v2915 = vpack.c.b16 %v2731, %v2727
        %v2916 = vpack.c.b16 %v2732, %v2728
        %v2917 = vpack.c.b16 %v2737, %v2733
        %v2918 = vpack.c.b16 %v2738, %v2734
        %v2919 = vpack.c.b16 %v2739, %v2735
        %v2920 = vpack.c.b16 %v2740, %v2736
        %v2921 = vpack.c.b16 %v2745, %v2741
        %v2922 = vpack.c.b16 %v2746, %v2742
        %v2923 = vpack.c.b16 %v2747, %v2743
        %v2924 = vpack.c.b16 %v2748, %v2744
        %v2925 = vpack.c.b16 %v2753, %v2749
        %v2926 = vpack.c.b16 %v2754, %v2750
        %v2927 = vpack.c.b16 %v2755, %v2751
        %v2928 = vpack.c.b16 %v2756, %v2752
        %v2929 = vpack.c.b16 %v2761, %v2757
        %v2930 = vpack.c.b16 %v2762, %v2758
        %v2931 = vpack.c.b16 %v2763, %v2759
        %v2932 = vpack.c.b16 %v2764, %v2760
        %v2933 = vpack.c.b16 %v2769, %v2765
        %v2934 = vpack.c.b16 %v2770, %v2766
        %v2935 = vpack.c.b16 %v2771, %v2767
        %v2936 = vpack.c.b16 %v2772, %v2768
        %v2937 = vpack.c.b16 %v2777, %v2773
        %v2938 = vpack.c.b16 %v2778, %v2774
        %v2939 = vpack.c.b16 %v2779, %v2775
        %v2940 = vpack.c.b16 %v2780, %v2776
        %v2941 = vpack.c.b16 %v2785, %v2781
        %v2942 = vpack.c.b16 %v2786, %v2782
        %v2943 = vpack.c.b16 %v2787, %v2783
        %v2944 = vpack.c.b16 %v2788, %v2784
        %v2945 = vpack.c.b16 %v2793, %v2789
        %v2946 = vpack.c.b16 %v2794, %v2790
        %v2947 = vpack.c.b16 %v2795, %v2791
        %v2948 = vpack.c.b16 %v2796, %v2792
        %v2949 = vpack.c.b16 %v2801, %v2797
        %v2950 = vpack.c.b16 %v2802, %v2798
        %v2951 = vpack.c.b16 %v2803, %v2799
        %v2952 = vpack.c.b16 %v2804, %v2800
        %v2953 = vpack.c.b16 %v2809, %v2805
        %v2954 = vpack.c.b16 %v2810, %v2806
        %v2955 = vpack.c.b16 %v2811, %v2807
        %v2956 = vpack.c.b16 %v2812, %v2808
        %v2957 = vpack.c.b16 %v2817, %v2813
        %v2958 = vpack.c.b16 %v2818, %v2814
        %v2959 = vpack.c.b16 %v2819, %v2815
        %v2960 = vpack.c.b16 %v2820, %v2816
        %v2961 = vpack.c.b16 %v2825, %v2821
        %v2962 = vpack.c.b16 %v2826, %v2822
        %v2963 = vpack.c.b16 %v2827, %v2823
        %v2964 = vpack.c.b16 %v2828, %v2824
        %v2965 = vpack.c.b16 %v2833, %v2829
        %v2966 = vpack.c.b16 %v2834, %v2830
        %v2967 = vpack.c.b16 %v2835, %v2831
        %v2968 = vpack.c.b16 %v2836, %v2832
        %v2969 = vpack.c.b16 %v2841, %v2837
        %v2970 = vpack.c.b16 %v2842, %v2838
        %v2971 = vpack.c.b16 %v2843, %v2839
        %v2972 = vpack.c.b16 %v2844, %v2840
        %3101 = vmatpush.bf16.msra.mxu0 %v2873
        %3102 = vmatpush.bf16.msra.mxu0 %v2869
        %3103 = vmatpush.bf16.msra.mxu0 %v2865
        %3104 = vmatpush.bf16.msra.mxu0 %v2861
        %3105 = vmatpush.bf16.msra.mxu0 %v2857
        %3106 = vmatpush.bf16.msra.mxu0 %v2853
        %3107 = vmatpush.bf16.msra.mxu0 %v2849
        %3108 = vmatpush.bf16.msra.mxu0 %v2845
        %3109 = vmatmul.bf16.gmra.mxu0 %v431
        %v3110 = vpop.f32.mrf.mxu0
        %v3111 = vadd.f32 0.0, %v3110
        %v3112 = vpop.f32.mrf.mxu0
        %3113 = vdwg.mxu0
        %3114 = vmatpush.bf16.msra.mxu0 %v2905
        %3115 = vmatpush.bf16.msra.mxu0 %v2901
        %3116 = vmatpush.bf16.msra.mxu0 %v2897
        %3117 = vmatpush.bf16.msra.mxu0 %v2893
        %3118 = vmatpush.bf16.msra.mxu0 %v2889
        %3119 = vmatpush.bf16.msra.mxu0 %v2885
        %3120 = vmatpush.bf16.msra.mxu0 %v2881
        %3121 = vmatpush.bf16.msra.mxu0 %v2877
        %3122 = vmatmul.bf16.gmra.mxu0 %v432
        %v3123 = vpop.f32.mrf.mxu0
        %v3124 = vadd.f32 %v3111, %v3123
        %v3125 = vpop.f32.mrf.mxu0
        %3126 = vdwg.mxu0
        %3127 = vmatpush.bf16.msra.mxu0 %v2937
        %3128 = vmatpush.bf16.msra.mxu0 %v2933
        %3129 = vmatpush.bf16.msra.mxu0 %v2929
        %3130 = vmatpush.bf16.msra.mxu0 %v2925
        %3131 = vmatpush.bf16.msra.mxu0 %v2921
        %3132 = vmatpush.bf16.msra.mxu0 %v2917
        %3133 = vmatpush.bf16.msra.mxu0 %v2913
        %3134 = vmatpush.bf16.msra.mxu0 %v2909
        %3135 = vmatmul.bf16.gmra.mxu0 %v433
        %v3136 = vpop.f32.mrf.mxu0
        %v3137 = vadd.f32 %v3124, %v3136
        %v3138 = vpop.f32.mrf.mxu0
        %3139 = vdwg.mxu0
        %3140 = vmatpush.bf16.msra.mxu0 %v2969
        %3141 = vmatpush.bf16.msra.mxu0 %v2965
        %3142 = vmatpush.bf16.msra.mxu0 %v2961
        %3143 = vmatpush.bf16.msra.mxu0 %v2957
        %3144 = vmatpush.bf16.msra.mxu0 %v2953
        %3145 = vmatpush.bf16.msra.mxu0 %v2949
        %3146 = vmatpush.bf16.msra.mxu0 %v2945
        %3147 = vmatpush.bf16.msra.mxu0 %v2941
        %3148 = vmatmul.bf16.gmra.mxu0 %v434
        %v3149 = vpop.f32.mrf.mxu0
        %v3150 = vadd.f32 %v3137, %v3149
        %v3151 = vpop.f32.mrf.mxu0
        %3152 = vdwg.mxu0
        %3153 = vmatpush.bf16.msra.mxu0 %v2874
        %3154 = vmatpush.bf16.msra.mxu0 %v2870
        %3155 = vmatpush.bf16.msra.mxu0 %v2866
        %3156 = vmatpush.bf16.msra.mxu0 %v2862
        %3157 = vmatpush.bf16.msra.mxu0 %v2858
        %3158 = vmatpush.bf16.msra.mxu0 %v2854
        %3159 = vmatpush.bf16.msra.mxu0 %v2850
        %3160 = vmatpush.bf16.msra.mxu0 %v2846
        %3161 = vmatmul.bf16.gmra.mxu0 %v431
        %v3162 = vpop.f32.mrf.mxu0
        %v3163 = vadd.f32 0.0, %v3162
        %v3164 = vpop.f32.mrf.mxu0
        %3165 = vdwg.mxu0
        %3166 = vmatpush.bf16.msra.mxu0 %v2906
        %3167 = vmatpush.bf16.msra.mxu0 %v2902
        %3168 = vmatpush.bf16.msra.mxu0 %v2898
        %3169 = vmatpush.bf16.msra.mxu0 %v2894
        %3170 = vmatpush.bf16.msra.mxu0 %v2890
        %3171 = vmatpush.bf16.msra.mxu0 %v2886
        %3172 = vmatpush.bf16.msra.mxu0 %v2882
        %3173 = vmatpush.bf16.msra.mxu0 %v2878
        %3174 = vmatmul.bf16.gmra.mxu0 %v432
        %v3175 = vpop.f32.mrf.mxu0
        %v3176 = vadd.f32 %v3163, %v3175
        %v3177 = vpop.f32.mrf.mxu0
        %3178 = vdwg.mxu0
        %3179 = vmatpush.bf16.msra.mxu0 %v2938
        %3180 = vmatpush.bf16.msra.mxu0 %v2934
        %3181 = vmatpush.bf16.msra.mxu0 %v2930
        %3182 = vmatpush.bf16.msra.mxu0 %v2926
        %3183 = vmatpush.bf16.msra.mxu0 %v2922
        %3184 = vmatpush.bf16.msra.mxu0 %v2918
        %3185 = vmatpush.bf16.msra.mxu0 %v2914
        %3186 = vmatpush.bf16.msra.mxu0 %v2910
        %3187 = vmatmul.bf16.gmra.mxu0 %v433
        %v3188 = vpop.f32.mrf.mxu0
        %v3189 = vadd.f32 %v3176, %v3188
        %v3190 = vpop.f32.mrf.mxu0
        %3191 = vdwg.mxu0
        %3192 = vmatpush.bf16.msra.mxu0 %v2970
        %3193 = vmatpush.bf16.msra.mxu0 %v2966
        %3194 = vmatpush.bf16.msra.mxu0 %v2962
        %3195 = vmatpush.bf16.msra.mxu0 %v2958
        %3196 = vmatpush.bf16.msra.mxu0 %v2954
        %3197 = vmatpush.bf16.msra.mxu0 %v2950
        %3198 = vmatpush.bf16.msra.mxu0 %v2946
        %3199 = vmatpush.bf16.msra.mxu0 %v2942
        %3200 = vmatmul.bf16.gmra.mxu0 %v434
        %v3201 = vpop.f32.mrf.mxu0
        %v3202 = vadd.f32 %v3189, %v3201
        %v3203 = vpop.f32.mrf.mxu0
        %3204 = vdwg.mxu0
        %3205 = vmatpush.bf16.msra.mxu0 %v2875
        %3206 = vmatpush.bf16.msra.mxu0 %v2871
        %3207 = vmatpush.bf16.msra.mxu0 %v2867
        %3208 = vmatpush.bf16.msra.mxu0 %v2863
        %3209 = vmatpush.bf16.msra.mxu0 %v2859
        %3210 = vmatpush.bf16.msra.mxu0 %v2855
        %3211 = vmatpush.bf16.msra.mxu0 %v2851
        %3212 = vmatpush.bf16.msra.mxu0 %v2847
        %3213 = vmatmul.bf16.gmra.mxu0 %v431
        %v3214 = vpop.f32.mrf.mxu0
        %v3215 = vadd.f32 0.0, %v3214
        %v3216 = vpop.f32.mrf.mxu0
        %3217 = vdwg.mxu0
        %3218 = vmatpush.bf16.msra.mxu0 %v2907
        %3219 = vmatpush.bf16.msra.mxu0 %v2903
        %3220 = vmatpush.bf16.msra.mxu0 %v2899
        %3221 = vmatpush.bf16.msra.mxu0 %v2895
        %3222 = vmatpush.bf16.msra.mxu0 %v2891
        %3223 = vmatpush.bf16.msra.mxu0 %v2887
        %3224 = vmatpush.bf16.msra.mxu0 %v2883
        %3225 = vmatpush.bf16.msra.mxu0 %v2879
        %3226 = vmatmul.bf16.gmra.mxu0 %v432
        %v3227 = vpop.f32.mrf.mxu0
        %v3228 = vadd.f32 %v3215, %v3227
        %v3229 = vpop.f32.mrf.mxu0
        %3230 = vdwg.mxu0
        %3231 = vmatpush.bf16.msra.mxu0 %v2939
        %3232 = vmatpush.bf16.msra.mxu0 %v2935
        %3233 = vmatpush.bf16.msra.mxu0 %v2931
        %3234 = vmatpush.bf16.msra.mxu0 %v2927
        %3235 = vmatpush.bf16.msra.mxu0 %v2923
        %3236 = vmatpush.bf16.msra.mxu0 %v2919
        %3237 = vmatpush.bf16.msra.mxu0 %v2915
        %3238 = vmatpush.bf16.msra.mxu0 %v2911
        %3239 = vmatmul.bf16.gmra.mxu0 %v433
        %v3240 = vpop.f32.mrf.mxu0
        %v3241 = vadd.f32 %v3228, %v3240
        %v3242 = vpop.f32.mrf.mxu0
        %3243 = vdwg.mxu0
        %3244 = vmatpush.bf16.msra.mxu0 %v2971
        %3245 = vmatpush.bf16.msra.mxu0 %v2967
        %3246 = vmatpush.bf16.msra.mxu0 %v2963
        %3247 = vmatpush.bf16.msra.mxu0 %v2959
        %3248 = vmatpush.bf16.msra.mxu0 %v2955
        %3249 = vmatpush.bf16.msra.mxu0 %v2951
        %3250 = vmatpush.bf16.msra.mxu0 %v2947
        %3251 = vmatpush.bf16.msra.mxu0 %v2943
        %3252 = vmatmul.bf16.gmra.mxu0 %v434
        %v3253 = vpop.f32.mrf.mxu0
        %v3254 = vadd.f32 %v3241, %v3253
        %v3255 = vpop.f32.mrf.mxu0
        %3256 = vdwg.mxu0
        %3257 = vmatpush.bf16.msra.mxu0 %v2876
        %3258 = vmatpush.bf16.msra.mxu0 %v2872
        %3259 = vmatpush.bf16.msra.mxu0 %v2868
        %3260 = vmatpush.bf16.msra.mxu0 %v2864
        %3261 = vmatpush.bf16.msra.mxu0 %v2860
        %3262 = vmatpush.bf16.msra.mxu0 %v2856
        %3263 = vmatpush.bf16.msra.mxu0 %v2852
        %3264 = vmatpush.bf16.msra.mxu0 %v2848
        %3265 = vmatmul.bf16.gmra.mxu0 %v431
        %v3266 = vpop.f32.mrf.mxu0
        %v3267 = vadd.f32 0.0, %v3266
        %v3268 = vpop.f32.mrf.mxu0
        %3269 = vdwg.mxu0
        %3270 = vmatpush.bf16.msra.mxu0 %v2908
        %3271 = vmatpush.bf16.msra.mxu0 %v2904
        %3272 = vmatpush.bf16.msra.mxu0 %v2900
        %3273 = vmatpush.bf16.msra.mxu0 %v2896
        %3274 = vmatpush.bf16.msra.mxu0 %v2892
        %3275 = vmatpush.bf16.msra.mxu0 %v2888
        %3276 = vmatpush.bf16.msra.mxu0 %v2884
        %3277 = vmatpush.bf16.msra.mxu0 %v2880
        %3278 = vmatmul.bf16.gmra.mxu0 %v432
        %v3279 = vpop.f32.mrf.mxu0
        %v3280 = vadd.f32 %v3267, %v3279
        %v3281 = vpop.f32.mrf.mxu0
        %3282 = vdwg.mxu0
        %3283 = vmatpush.bf16.msra.mxu0 %v2940
        %3284 = vmatpush.bf16.msra.mxu0 %v2936
        %3285 = vmatpush.bf16.msra.mxu0 %v2932
        %3286 = vmatpush.bf16.msra.mxu0 %v2928
        %3287 = vmatpush.bf16.msra.mxu0 %v2924
        %3288 = vmatpush.bf16.msra.mxu0 %v2920
        %3289 = vmatpush.bf16.msra.mxu0 %v2916
        %3290 = vmatpush.bf16.msra.mxu0 %v2912
        %3291 = vmatmul.bf16.gmra.mxu0 %v433
        %v3292 = vpop.f32.mrf.mxu0
        %v3293 = vadd.f32 %v3280, %v3292
        %v3294 = vpop.f32.mrf.mxu0
        %3295 = vdwg.mxu0
        %3296 = vmatpush.bf16.msra.mxu0 %v2972
        %3297 = vmatpush.bf16.msra.mxu0 %v2968
        %3298 = vmatpush.bf16.msra.mxu0 %v2964
        %3299 = vmatpush.bf16.msra.mxu0 %v2960
        %3300 = vmatpush.bf16.msra.mxu0 %v2956
        %3301 = vmatpush.bf16.msra.mxu0 %v2952
        %3302 = vmatpush.bf16.msra.mxu0 %v2948
        %3303 = vmatpush.bf16.msra.mxu0 %v2944
        %3304 = vmatmul.bf16.gmra.mxu0 %v434
        %v3305 = vpop.f32.mrf.mxu0
        %v3306 = vadd.f32 %v3293, %v3305
        %v3307 = vpop.f32.mrf.mxu0
        %3308 = vdwg.mxu0
        %v3309 = vpack.c.bf16 %v3202, %v3150
        %v3310 = vpack.c.bf16 %v3306, %v3254
        %v3311 = vld [vmem:[%s2 + $0x4] sm:$0xf]
        %v3313 = vperm.slane %v3311, 0
        %v3314 = vperm.slane %v3311, 1
        %v3315 = vperm.slane %v3311, 2
        %v3316 = vperm.slane %v3311, 3
        %v3321 = vpack.c.bf16 %v3314, %v3313
        %v3322 = vpack.c.bf16 %v3316, %v3315
        %v3325 = vunpack.c.l.b16 %v3321
        %v3326 = vunpack.c.h.b16 %v3321
        %v3327 = vunpack.c.l.b16 %v3322
        %v3328 = vunpack.c.h.b16 %v3322
        %v3329 = vpack.c.b16 %v3325, %v3325
        %v3330 = vpack.c.b16 %v3326, %v3326
        %v3331 = vpack.c.b16 %v3327, %v3327
        %v3332 = vpack.c.b16 %v3328, %v3328
        %v3334 = vpack.i.b16 %v3329, %v3329
        %v3336 = vperm.slane %v3334, 0
        %v3338 = vpack.i.b16 %v3330, %v3330
        %v3340 = vperm.slane %v3338, 0
        %v3342 = vpack.i.b16 %v3331, %v3331
        %v3344 = vperm.slane %v3342, 0
        %v3346 = vpack.i.b16 %v3332, %v3332
        %v3348 = vperm.slane %v3346, 0
        %v3349 = vunpack.c.l.bf16 %v3309
        %v3350 = vunpack.c.h.bf16 %v3309
        %v3351 = vunpack.c.l.bf16 %v3310
        %v3352 = vunpack.c.h.bf16 %v3310
        %v3353 = vunpack.c.l.bf16 %v3336
        %v3354 = vunpack.c.l.bf16 %v3340
        %v3355 = vunpack.c.l.bf16 %v3344
        %v3356 = vunpack.c.l.bf16 %v3348
        %v3357 = vadd.f32 %v3349, %v3353
        %v3358 = vadd.f32 %v3350, %v3354
        %v3359 = vadd.f32 %v3351, %v3355
        %v3360 = vadd.f32 %v3352, %v3356
        %v3361 = vpack.c.bf16 %v3358, %v3357
        %v3362 = vpack.c.bf16 %v3360, %v3359
        %v3363 = vunpack.c.l.bf16 %v3361
        %v3364 = vunpack.c.h.bf16 %v3361
        %v3365 = vunpack.c.l.bf16 %v3362
        %v3366 = vunpack.c.h.bf16 %v3362
        %v3367 = vmax.f32 %v3363, 0.0
        %v3368 = vmax.f32 %v3364, 0.0
        %v3369 = vmax.f32 %v3365, 0.0
        %v3370 = vmax.f32 %v3366, 0.0
        %v3371 = vpack.c.bf16 %v3367, %v3367
        %v3372 = vpack.c.bf16 %v3368, %v3368
        %v3373 = vpack.c.bf16 %v3369, %v3369
        %v3374 = vpack.c.bf16 %v3370, %v3370
        %v3375 = vld [vmem:[%s3 + $0x400] sm:$0xff]
        %v3376 = vld [vmem:[%s3 + $0x408] sm:$0xff]
        %v3377 = vld [vmem:[%s3 + $0x410] sm:$0xff]
        %v3378 = vld [vmem:[%s3 + $0x418] sm:$0xff]
        %v3379 = vld [vmem:[%s3 + $0x420] sm:$0xff]
        %v3380 = vld [vmem:[%s3 + $0x428] sm:$0xff]
        %v3381 = vld [vmem:[%s3 + $0x430] sm:$0xff]
        %v3382 = vld [vmem:[%s3 + $0x438] sm:$0xff]
        %v3383 = vld [vmem:[%s3 + $0x440] sm:$0xff]
        %v3384 = vld [vmem:[%s3 + $0x448] sm:$0xff]
        %v3385 = vld [vmem:[%s3 + $0x450] sm:$0xff]
        %v3386 = vld [vmem:[%s3 + $0x458] sm:$0xff]
        %v3387 = vld [vmem:[%s3 + $0x460] sm:$0xff]
        %v3388 = vld [vmem:[%s3 + $0x468] sm:$0xff]
        %v3389 = vld [vmem:[%s3 + $0x470] sm:$0xff]
        %v3390 = vld [vmem:[%s3 + $0x478] sm:$0xff]
        %v3391 = vld [vmem:[%s3 + $0x480] sm:$0xff]
        %v3392 = vld [vmem:[%s3 + $0x488] sm:$0xff]
        %v3393 = vld [vmem:[%s3 + $0x490] sm:$0xff]
        %v3394 = vld [vmem:[%s3 + $0x498] sm:$0xff]
        %v3395 = vld [vmem:[%s3 + $0x4a0] sm:$0xff]
        %v3396 = vld [vmem:[%s3 + $0x4a8] sm:$0xff]
        %v3397 = vld [vmem:[%s3 + $0x4b0] sm:$0xff]
        %v3398 = vld [vmem:[%s3 + $0x4b8] sm:$0xff]
        %v3399 = vld [vmem:[%s3 + $0x4c0] sm:$0xff]
        %v3400 = vld [vmem:[%s3 + $0x4c8] sm:$0xff]
        %v3401 = vld [vmem:[%s3 + $0x4d0] sm:$0xff]
        %v3402 = vld [vmem:[%s3 + $0x4d8] sm:$0xff]
        %v3403 = vld [vmem:[%s3 + $0x4e0] sm:$0xff]
        %v3404 = vld [vmem:[%s3 + $0x4e8] sm:$0xff]
        %v3405 = vld [vmem:[%s3 + $0x4f0] sm:$0xff]
        %v3406 = vld [vmem:[%s3 + $0x4f8] sm:$0xff]
        %v3407 = vld [vmem:[%s3 + $0x500] sm:$0xff]
        %v3408 = vld [vmem:[%s3 + $0x508] sm:$0xff]
        %v3409 = vld [vmem:[%s3 + $0x510] sm:$0xff]
        %v3410 = vld [vmem:[%s3 + $0x518] sm:$0xff]
        %v3411 = vld [vmem:[%s3 + $0x520] sm:$0xff]
        %v3412 = vld [vmem:[%s3 + $0x528] sm:$0xff]
        %v3413 = vld [vmem:[%s3 + $0x530] sm:$0xff]
        %v3414 = vld [vmem:[%s3 + $0x538] sm:$0xff]
        %v3415 = vld [vmem:[%s3 + $0x540] sm:$0xff]
        %v3416 = vld [vmem:[%s3 + $0x548] sm:$0xff]
        %v3417 = vld [vmem:[%s3 + $0x550] sm:$0xff]
        %v3418 = vld [vmem:[%s3 + $0x558] sm:$0xff]
        %v3419 = vld [vmem:[%s3 + $0x560] sm:$0xff]
        %v3420 = vld [vmem:[%s3 + $0x568] sm:$0xff]
        %v3421 = vld [vmem:[%s3 + $0x570] sm:$0xff]
        %v3422 = vld [vmem:[%s3 + $0x578] sm:$0xff]
        %v3423 = vld [vmem:[%s3 + $0x580] sm:$0xff]
        %v3424 = vld [vmem:[%s3 + $0x588] sm:$0xff]
        %v3425 = vld [vmem:[%s3 + $0x590] sm:$0xff]
        %v3426 = vld [vmem:[%s3 + $0x598] sm:$0xff]
        %v3427 = vld [vmem:[%s3 + $0x5a0] sm:$0xff]
        %v3428 = vld [vmem:[%s3 + $0x5a8] sm:$0xff]
        %v3429 = vld [vmem:[%s3 + $0x5b0] sm:$0xff]
        %v3430 = vld [vmem:[%s3 + $0x5b8] sm:$0xff]
        %v3431 = vld [vmem:[%s3 + $0x5c0] sm:$0xff]
        %v3432 = vld [vmem:[%s3 + $0x5c8] sm:$0xff]
        %v3433 = vld [vmem:[%s3 + $0x5d0] sm:$0xff]
        %v3434 = vld [vmem:[%s3 + $0x5d8] sm:$0xff]
        %v3435 = vld [vmem:[%s3 + $0x5e0] sm:$0xff]
        %v3436 = vld [vmem:[%s3 + $0x5e8] sm:$0xff]
        %v3437 = vld [vmem:[%s3 + $0x5f0] sm:$0xff]
        %v3438 = vld [vmem:[%s3 + $0x5f8] sm:$0xff]
        %v3439 = vld [vmem:[%s3 + $0x600] sm:$0xff]
        %v3440 = vld [vmem:[%s3 + $0x608] sm:$0xff]
        %v3441 = vld [vmem:[%s3 + $0x610] sm:$0xff]
        %v3442 = vld [vmem:[%s3 + $0x618] sm:$0xff]
        %v3443 = vld [vmem:[%s3 + $0x620] sm:$0xff]
        %v3444 = vld [vmem:[%s3 + $0x628] sm:$0xff]
        %v3445 = vld [vmem:[%s3 + $0x630] sm:$0xff]
        %v3446 = vld [vmem:[%s3 + $0x638] sm:$0xff]
        %v3447 = vld [vmem:[%s3 + $0x640] sm:$0xff]
        %v3448 = vld [vmem:[%s3 + $0x648] sm:$0xff]
        %v3449 = vld [vmem:[%s3 + $0x650] sm:$0xff]
        %v3450 = vld [vmem:[%s3 + $0x658] sm:$0xff]
        %v3451 = vld [vmem:[%s3 + $0x660] sm:$0xff]
        %v3452 = vld [vmem:[%s3 + $0x668] sm:$0xff]
        %v3453 = vld [vmem:[%s3 + $0x670] sm:$0xff]
        %v3454 = vld [vmem:[%s3 + $0x678] sm:$0xff]
        %v3455 = vld [vmem:[%s3 + $0x680] sm:$0xff]
        %v3456 = vld [vmem:[%s3 + $0x688] sm:$0xff]
        %v3457 = vld [vmem:[%s3 + $0x690] sm:$0xff]
        %v3458 = vld [vmem:[%s3 + $0x698] sm:$0xff]
        %v3459 = vld [vmem:[%s3 + $0x6a0] sm:$0xff]
        %v3460 = vld [vmem:[%s3 + $0x6a8] sm:$0xff]
        %v3461 = vld [vmem:[%s3 + $0x6b0] sm:$0xff]
        %v3462 = vld [vmem:[%s3 + $0x6b8] sm:$0xff]
        %v3463 = vld [vmem:[%s3 + $0x6c0] sm:$0xff]
        %v3464 = vld [vmem:[%s3 + $0x6c8] sm:$0xff]
        %v3465 = vld [vmem:[%s3 + $0x6d0] sm:$0xff]
        %v3466 = vld [vmem:[%s3 + $0x6d8] sm:$0xff]
        %v3467 = vld [vmem:[%s3 + $0x6e0] sm:$0xff]
        %v3468 = vld [vmem:[%s3 + $0x6e8] sm:$0xff]
        %v3469 = vld [vmem:[%s3 + $0x6f0] sm:$0xff]
        %v3470 = vld [vmem:[%s3 + $0x6f8] sm:$0xff]
        %v3471 = vld [vmem:[%s3 + $0x700] sm:$0xff]
        %v3472 = vld [vmem:[%s3 + $0x708] sm:$0xff]
        %v3473 = vld [vmem:[%s3 + $0x710] sm:$0xff]
        %v3474 = vld [vmem:[%s3 + $0x718] sm:$0xff]
        %v3475 = vld [vmem:[%s3 + $0x720] sm:$0xff]
        %v3476 = vld [vmem:[%s3 + $0x728] sm:$0xff]
        %v3477 = vld [vmem:[%s3 + $0x730] sm:$0xff]
        %v3478 = vld [vmem:[%s3 + $0x738] sm:$0xff]
        %v3479 = vld [vmem:[%s3 + $0x740] sm:$0xff]
        %v3480 = vld [vmem:[%s3 + $0x748] sm:$0xff]
        %v3481 = vld [vmem:[%s3 + $0x750] sm:$0xff]
        %v3482 = vld [vmem:[%s3 + $0x758] sm:$0xff]
        %v3483 = vld [vmem:[%s3 + $0x760] sm:$0xff]
        %v3484 = vld [vmem:[%s3 + $0x768] sm:$0xff]
        %v3485 = vld [vmem:[%s3 + $0x770] sm:$0xff]
        %v3486 = vld [vmem:[%s3 + $0x778] sm:$0xff]
        %v3487 = vld [vmem:[%s3 + $0x780] sm:$0xff]
        %v3488 = vld [vmem:[%s3 + $0x788] sm:$0xff]
        %v3489 = vld [vmem:[%s3 + $0x790] sm:$0xff]
        %v3490 = vld [vmem:[%s3 + $0x798] sm:$0xff]
        %v3491 = vld [vmem:[%s3 + $0x7a0] sm:$0xff]
        %v3492 = vld [vmem:[%s3 + $0x7a8] sm:$0xff]
        %v3493 = vld [vmem:[%s3 + $0x7b0] sm:$0xff]
        %v3494 = vld [vmem:[%s3 + $0x7b8] sm:$0xff]
        %v3495 = vld [vmem:[%s3 + $0x7c0] sm:$0xff]
        %v3496 = vld [vmem:[%s3 + $0x7c8] sm:$0xff]
        %v3497 = vld [vmem:[%s3 + $0x7d0] sm:$0xff]
        %v3498 = vld [vmem:[%s3 + $0x7d8] sm:$0xff]
        %v3499 = vld [vmem:[%s3 + $0x7e0] sm:$0xff]
        %v3500 = vld [vmem:[%s3 + $0x7e8] sm:$0xff]
        %v3501 = vld [vmem:[%s3 + $0x7f0] sm:$0xff]
        %v3502 = vld [vmem:[%s3 + $0x7f8] sm:$0xff]
        %v3631 = vunpack.c.l.b16 %v3375
        %v3632 = vunpack.c.h.b16 %v3375
        %v3633 = vunpack.c.l.b16 %v3376
        %v3634 = vunpack.c.h.b16 %v3376
        %v3635 = vunpack.c.l.b16 %v3377
        %v3636 = vunpack.c.h.b16 %v3377
        %v3637 = vunpack.c.l.b16 %v3378
        %v3638 = vunpack.c.h.b16 %v3378
        %v3639 = vunpack.c.l.b16 %v3379
        %v3640 = vunpack.c.h.b16 %v3379
        %v3641 = vunpack.c.l.b16 %v3380
        %v3642 = vunpack.c.h.b16 %v3380
        %v3643 = vunpack.c.l.b16 %v3381
        %v3644 = vunpack.c.h.b16 %v3381
        %v3645 = vunpack.c.l.b16 %v3382
        %v3646 = vunpack.c.h.b16 %v3382
        %v3647 = vunpack.c.l.b16 %v3383
        %v3648 = vunpack.c.h.b16 %v3383
        %v3649 = vunpack.c.l.b16 %v3384
        %v3650 = vunpack.c.h.b16 %v3384
        %v3651 = vunpack.c.l.b16 %v3385
        %v3652 = vunpack.c.h.b16 %v3385
        %v3653 = vunpack.c.l.b16 %v3386
        %v3654 = vunpack.c.h.b16 %v3386
        %v3655 = vunpack.c.l.b16 %v3387
        %v3656 = vunpack.c.h.b16 %v3387
        %v3657 = vunpack.c.l.b16 %v3388
        %v3658 = vunpack.c.h.b16 %v3388
        %v3659 = vunpack.c.l.b16 %v3389
        %v3660 = vunpack.c.h.b16 %v3389
        %v3661 = vunpack.c.l.b16 %v3390
        %v3662 = vunpack.c.h.b16 %v3390
        %v3663 = vunpack.c.l.b16 %v3391
        %v3664 = vunpack.c.h.b16 %v3391
        %v3665 = vunpack.c.l.b16 %v3392
        %v3666 = vunpack.c.h.b16 %v3392
        %v3667 = vunpack.c.l.b16 %v3393
        %v3668 = vunpack.c.h.b16 %v3393
        %v3669 = vunpack.c.l.b16 %v3394
        %v3670 = vunpack.c.h.b16 %v3394
        %v3671 = vunpack.c.l.b16 %v3395
        %v3672 = vunpack.c.h.b16 %v3395
        %v3673 = vunpack.c.l.b16 %v3396
        %v3674 = vunpack.c.h.b16 %v3396
        %v3675 = vunpack.c.l.b16 %v3397
        %v3676 = vunpack.c.h.b16 %v3397
        %v3677 = vunpack.c.l.b16 %v3398
        %v3678 = vunpack.c.h.b16 %v3398
        %v3679 = vunpack.c.l.b16 %v3399
        %v3680 = vunpack.c.h.b16 %v3399
        %v3681 = vunpack.c.l.b16 %v3400
        %v3682 = vunpack.c.h.b16 %v3400
        %v3683 = vunpack.c.l.b16 %v3401
        %v3684 = vunpack.c.h.b16 %v3401
        %v3685 = vunpack.c.l.b16 %v3402
        %v3686 = vunpack.c.h.b16 %v3402
        %v3687 = vunpack.c.l.b16 %v3403
        %v3688 = vunpack.c.h.b16 %v3403
        %v3689 = vunpack.c.l.b16 %v3404
        %v3690 = vunpack.c.h.b16 %v3404
        %v3691 = vunpack.c.l.b16 %v3405
        %v3692 = vunpack.c.h.b16 %v3405
        %v3693 = vunpack.c.l.b16 %v3406
        %v3694 = vunpack.c.h.b16 %v3406
        %v3695 = vunpack.c.l.b16 %v3407
        %v3696 = vunpack.c.h.b16 %v3407
        %v3697 = vunpack.c.l.b16 %v3408
        %v3698 = vunpack.c.h.b16 %v3408
        %v3699 = vunpack.c.l.b16 %v3409
        %v3700 = vunpack.c.h.b16 %v3409
        %v3701 = vunpack.c.l.b16 %v3410
        %v3702 = vunpack.c.h.b16 %v3410
        %v3703 = vunpack.c.l.b16 %v3411
        %v3704 = vunpack.c.h.b16 %v3411
        %v3705 = vunpack.c.l.b16 %v3412
        %v3706 = vunpack.c.h.b16 %v3412
        %v3707 = vunpack.c.l.b16 %v3413
        %v3708 = vunpack.c.h.b16 %v3413
        %v3709 = vunpack.c.l.b16 %v3414
        %v3710 = vunpack.c.h.b16 %v3414
        %v3711 = vunpack.c.l.b16 %v3415
        %v3712 = vunpack.c.h.b16 %v3415
        %v3713 = vunpack.c.l.b16 %v3416
        %v3714 = vunpack.c.h.b16 %v3416
        %v3715 = vunpack.c.l.b16 %v3417
        %v3716 = vunpack.c.h.b16 %v3417
        %v3717 = vunpack.c.l.b16 %v3418
        %v3718 = vunpack.c.h.b16 %v3418
        %v3719 = vunpack.c.l.b16 %v3419
        %v3720 = vunpack.c.h.b16 %v3419
        %v3721 = vunpack.c.l.b16 %v3420
        %v3722 = vunpack.c.h.b16 %v3420
        %v3723 = vunpack.c.l.b16 %v3421
        %v3724 = vunpack.c.h.b16 %v3421
        %v3725 = vunpack.c.l.b16 %v3422
        %v3726 = vunpack.c.h.b16 %v3422
        %v3727 = vunpack.c.l.b16 %v3423
        %v3728 = vunpack.c.h.b16 %v3423
        %v3729 = vunpack.c.l.b16 %v3424
        %v3730 = vunpack.c.h.b16 %v3424
        %v3731 = vunpack.c.l.b16 %v3425
        %v3732 = vunpack.c.h.b16 %v3425
        %v3733 = vunpack.c.l.b16 %v3426
        %v3734 = vunpack.c.h.b16 %v3426
        %v3735 = vunpack.c.l.b16 %v3427
        %v3736 = vunpack.c.h.b16 %v3427
        %v3737 = vunpack.c.l.b16 %v3428
        %v3738 = vunpack.c.h.b16 %v3428
        %v3739 = vunpack.c.l.b16 %v3429
        %v3740 = vunpack.c.h.b16 %v3429
        %v3741 = vunpack.c.l.b16 %v3430
        %v3742 = vunpack.c.h.b16 %v3430
        %v3743 = vunpack.c.l.b16 %v3431
        %v3744 = vunpack.c.h.b16 %v3431
        %v3745 = vunpack.c.l.b16 %v3432
        %v3746 = vunpack.c.h.b16 %v3432
        %v3747 = vunpack.c.l.b16 %v3433
        %v3748 = vunpack.c.h.b16 %v3433
        %v3749 = vunpack.c.l.b16 %v3434
        %v3750 = vunpack.c.h.b16 %v3434
        %v3751 = vunpack.c.l.b16 %v3435
        %v3752 = vunpack.c.h.b16 %v3435
        %v3753 = vunpack.c.l.b16 %v3436
        %v3754 = vunpack.c.h.b16 %v3436
        %v3755 = vunpack.c.l.b16 %v3437
        %v3756 = vunpack.c.h.b16 %v3437
        %v3757 = vunpack.c.l.b16 %v3438
        %v3758 = vunpack.c.h.b16 %v3438
        %v3759 = vunpack.c.l.b16 %v3439
        %v3760 = vunpack.c.h.b16 %v3439
        %v3761 = vunpack.c.l.b16 %v3440
        %v3762 = vunpack.c.h.b16 %v3440
        %v3763 = vunpack.c.l.b16 %v3441
        %v3764 = vunpack.c.h.b16 %v3441
        %v3765 = vunpack.c.l.b16 %v3442
        %v3766 = vunpack.c.h.b16 %v3442
        %v3767 = vunpack.c.l.b16 %v3443
        %v3768 = vunpack.c.h.b16 %v3443
        %v3769 = vunpack.c.l.b16 %v3444
        %v3770 = vunpack.c.h.b16 %v3444
        %v3771 = vunpack.c.l.b16 %v3445
        %v3772 = vunpack.c.h.b16 %v3445
        %v3773 = vunpack.c.l.b16 %v3446
        %v3774 = vunpack.c.h.b16 %v3446
        %v3775 = vunpack.c.l.b16 %v3447
        %v3776 = vunpack.c.h.b16 %v3447
        %v3777 = vunpack.c.l.b16 %v3448
        %v3778 = vunpack.c.h.b16 %v3448
        %v3779 = vunpack.c.l.b16 %v3449
        %v3780 = vunpack.c.h.b16 %v3449
        %v3781 = vunpack.c.l.b16 %v3450
        %v3782 = vunpack.c.h.b16 %v3450
        %v3783 = vunpack.c.l.b16 %v3451
        %v3784 = vunpack.c.h.b16 %v3451
        %v3785 = vunpack.c.l.b16 %v3452
        %v3786 = vunpack.c.h.b16 %v3452
        %v3787 = vunpack.c.l.b16 %v3453
        %v3788 = vunpack.c.h.b16 %v3453
        %v3789 = vunpack.c.l.b16 %v3454
        %v3790 = vunpack.c.h.b16 %v3454
        %v3791 = vunpack.c.l.b16 %v3455
        %v3792 = vunpack.c.h.b16 %v3455
        %v3793 = vunpack.c.l.b16 %v3456
        %v3794 = vunpack.c.h.b16 %v3456
        %v3795 = vunpack.c.l.b16 %v3457
        %v3796 = vunpack.c.h.b16 %v3457
        %v3797 = vunpack.c.l.b16 %v3458
        %v3798 = vunpack.c.h.b16 %v3458
        %v3799 = vunpack.c.l.b16 %v3459
        %v3800 = vunpack.c.h.b16 %v3459
        %v3801 = vunpack.c.l.b16 %v3460
        %v3802 = vunpack.c.h.b16 %v3460
        %v3803 = vunpack.c.l.b16 %v3461
        %v3804 = vunpack.c.h.b16 %v3461
        %v3805 = vunpack.c.l.b16 %v3462
        %v3806 = vunpack.c.h.b16 %v3462
        %v3807 = vunpack.c.l.b16 %v3463
        %v3808 = vunpack.c.h.b16 %v3463
        %v3809 = vunpack.c.l.b16 %v3464
        %v3810 = vunpack.c.h.b16 %v3464
        %v3811 = vunpack.c.l.b16 %v3465
        %v3812 = vunpack.c.h.b16 %v3465
        %v3813 = vunpack.c.l.b16 %v3466
        %v3814 = vunpack.c.h.b16 %v3466
        %v3815 = vunpack.c.l.b16 %v3467
        %v3816 = vunpack.c.h.b16 %v3467
        %v3817 = vunpack.c.l.b16 %v3468
        %v3818 = vunpack.c.h.b16 %v3468
        %v3819 = vunpack.c.l.b16 %v3469
        %v3820 = vunpack.c.h.b16 %v3469
        %v3821 = vunpack.c.l.b16 %v3470
        %v3822 = vunpack.c.h.b16 %v3470
        %v3823 = vunpack.c.l.b16 %v3471
        %v3824 = vunpack.c.h.b16 %v3471
        %v3825 = vunpack.c.l.b16 %v3472
        %v3826 = vunpack.c.h.b16 %v3472
        %v3827 = vunpack.c.l.b16 %v3473
        %v3828 = vunpack.c.h.b16 %v3473
        %v3829 = vunpack.c.l.b16 %v3474
        %v3830 = vunpack.c.h.b16 %v3474
        %v3831 = vunpack.c.l.b16 %v3475
        %v3832 = vunpack.c.h.b16 %v3475
        %v3833 = vunpack.c.l.b16 %v3476
        %v3834 = vunpack.c.h.b16 %v3476
        %v3835 = vunpack.c.l.b16 %v3477
        %v3836 = vunpack.c.h.b16 %v3477
        %v3837 = vunpack.c.l.b16 %v3478
        %v3838 = vunpack.c.h.b16 %v3478
        %v3839 = vunpack.c.l.b16 %v3479
        %v3840 = vunpack.c.h.b16 %v3479
        %v3841 = vunpack.c.l.b16 %v3480
        %v3842 = vunpack.c.h.b16 %v3480
        %v3843 = vunpack.c.l.b16 %v3481
        %v3844 = vunpack.c.h.b16 %v3481
        %v3845 = vunpack.c.l.b16 %v3482
        %v3846 = vunpack.c.h.b16 %v3482
        %v3847 = vunpack.c.l.b16 %v3483
        %v3848 = vunpack.c.h.b16 %v3483
        %v3849 = vunpack.c.l.b16 %v3484
        %v3850 = vunpack.c.h.b16 %v3484
        %v3851 = vunpack.c.l.b16 %v3485
        %v3852 = vunpack.c.h.b16 %v3485
        %v3853 = vunpack.c.l.b16 %v3486
        %v3854 = vunpack.c.h.b16 %v3486
        %v3855 = vunpack.c.l.b16 %v3487
        %v3856 = vunpack.c.h.b16 %v3487
        %v3857 = vunpack.c.l.b16 %v3488
        %v3858 = vunpack.c.h.b16 %v3488
        %v3859 = vunpack.c.l.b16 %v3489
        %v3860 = vunpack.c.h.b16 %v3489
        %v3861 = vunpack.c.l.b16 %v3490
        %v3862 = vunpack.c.h.b16 %v3490
        %v3863 = vunpack.c.l.b16 %v3491
        %v3864 = vunpack.c.h.b16 %v3491
        %v3865 = vunpack.c.l.b16 %v3492
        %v3866 = vunpack.c.h.b16 %v3492
        %v3867 = vunpack.c.l.b16 %v3493
        %v3868 = vunpack.c.h.b16 %v3493
        %v3869 = vunpack.c.l.b16 %v3494
        %v3870 = vunpack.c.h.b16 %v3494
        %v3871 = vunpack.c.l.b16 %v3495
        %v3872 = vunpack.c.h.b16 %v3495
        %v3873 = vunpack.c.l.b16 %v3496
        %v3874 = vunpack.c.h.b16 %v3496
        %v3875 = vunpack.c.l.b16 %v3497
        %v3876 = vunpack.c.h.b16 %v3497
        %v3877 = vunpack.c.l.b16 %v3498
        %v3878 = vunpack.c.h.b16 %v3498
        %v3879 = vunpack.c.l.b16 %v3499
        %v3880 = vunpack.c.h.b16 %v3499
        %v3881 = vunpack.c.l.b16 %v3500
        %v3882 = vunpack.c.h.b16 %v3500
        %v3883 = vunpack.c.l.b16 %v3501
        %v3884 = vunpack.c.h.b16 %v3501
        %v3885 = vunpack.c.l.b16 %v3502
        %v3886 = vunpack.c.h.b16 %v3502
        %v3887 = vpack.c.b16 %v3635, %v3631
        %v3888 = vpack.c.b16 %v3636, %v3632
        %v3889 = vpack.c.b16 %v3637, %v3633
        %v3890 = vpack.c.b16 %v3638, %v3634
        %v3891 = vpack.c.b16 %v3643, %v3639
        %v3892 = vpack.c.b16 %v3644, %v3640
        %v3893 = vpack.c.b16 %v3645, %v3641
        %v3894 = vpack.c.b16 %v3646, %v3642
        %v3895 = vpack.c.b16 %v3651, %v3647
        %v3896 = vpack.c.b16 %v3652, %v3648
        %v3897 = vpack.c.b16 %v3653, %v3649
        %v3898 = vpack.c.b16 %v3654, %v3650
        %v3899 = vpack.c.b16 %v3659, %v3655
        %v3900 = vpack.c.b16 %v3660, %v3656
        %v3901 = vpack.c.b16 %v3661, %v3657
        %v3902 = vpack.c.b16 %v3662, %v3658
        %v3903 = vpack.c.b16 %v3667, %v3663
        %v3904 = vpack.c.b16 %v3668, %v3664
        %v3905 = vpack.c.b16 %v3669, %v3665
        %v3906 = vpack.c.b16 %v3670, %v3666
        %v3907 = vpack.c.b16 %v3675, %v3671
        %v3908 = vpack.c.b16 %v3676, %v3672
        %v3909 = vpack.c.b16 %v3677, %v3673
        %v3910 = vpack.c.b16 %v3678, %v3674
        %v3911 = vpack.c.b16 %v3683, %v3679
        %v3912 = vpack.c.b16 %v3684, %v3680
        %v3913 = vpack.c.b16 %v3685, %v3681
        %v3914 = vpack.c.b16 %v3686, %v3682
        %v3915 = vpack.c.b16 %v3691, %v3687
        %v3916 = vpack.c.b16 %v3692, %v3688
        %v3917 = vpack.c.b16 %v3693, %v3689
        %v3918 = vpack.c.b16 %v3694, %v3690
        %v3919 = vpack.c.b16 %v3699, %v3695
        %v3920 = vpack.c.b16 %v3700, %v3696
        %v3921 = vpack.c.b16 %v3701, %v3697
        %v3922 = vpack.c.b16 %v3702, %v3698
        %v3923 = vpack.c.b16 %v3707, %v3703
        %v3924 = vpack.c.b16 %v3708, %v3704
        %v3925 = vpack.c.b16 %v3709, %v3705
        %v3926 = vpack.c.b16 %v3710, %v3706
        %v3927 = vpack.c.b16 %v3715, %v3711
        %v3928 = vpack.c.b16 %v3716, %v3712
        %v3929 = vpack.c.b16 %v3717, %v3713
        %v3930 = vpack.c.b16 %v3718, %v3714
        %v3931 = vpack.c.b16 %v3723, %v3719
        %v3932 = vpack.c.b16 %v3724, %v3720
        %v3933 = vpack.c.b16 %v3725, %v3721
        %v3934 = vpack.c.b16 %v3726, %v3722
        %v3935 = vpack.c.b16 %v3731, %v3727
        %v3936 = vpack.c.b16 %v3732, %v3728
        %v3937 = vpack.c.b16 %v3733, %v3729
        %v3938 = vpack.c.b16 %v3734, %v3730
        %v3939 = vpack.c.b16 %v3739, %v3735
        %v3940 = vpack.c.b16 %v3740, %v3736
        %v3941 = vpack.c.b16 %v3741, %v3737
        %v3942 = vpack.c.b16 %v3742, %v3738
        %v3943 = vpack.c.b16 %v3747, %v3743
        %v3944 = vpack.c.b16 %v3748, %v3744
        %v3945 = vpack.c.b16 %v3749, %v3745
        %v3946 = vpack.c.b16 %v3750, %v3746
        %v3947 = vpack.c.b16 %v3755, %v3751
        %v3948 = vpack.c.b16 %v3756, %v3752
        %v3949 = vpack.c.b16 %v3757, %v3753
        %v3950 = vpack.c.b16 %v3758, %v3754
        %v3951 = vpack.c.b16 %v3763, %v3759
        %v3952 = vpack.c.b16 %v3764, %v3760
        %v3953 = vpack.c.b16 %v3765, %v3761
        %v3954 = vpack.c.b16 %v3766, %v3762
        %v3955 = vpack.c.b16 %v3771, %v3767
        %v3956 = vpack.c.b16 %v3772, %v3768
        %v3957 = vpack.c.b16 %v3773, %v3769
        %v3958 = vpack.c.b16 %v3774, %v3770
        %v3959 = vpack.c.b16 %v3779, %v3775
        %v3960 = vpack.c.b16 %v3780, %v3776
        %v3961 = vpack.c.b16 %v3781, %v3777
        %v3962 = vpack.c.b16 %v3782, %v3778
        %v3963 = vpack.c.b16 %v3787, %v3783
        %v3964 = vpack.c.b16 %v3788, %v3784
        %v3965 = vpack.c.b16 %v3789, %v3785
        %v3966 = vpack.c.b16 %v3790, %v3786
        %v3967 = vpack.c.b16 %v3795, %v3791
        %v3968 = vpack.c.b16 %v3796, %v3792
        %v3969 = vpack.c.b16 %v3797, %v3793
        %v3970 = vpack.c.b16 %v3798, %v3794
        %v3971 = vpack.c.b16 %v3803, %v3799
        %v3972 = vpack.c.b16 %v3804, %v3800
        %v3973 = vpack.c.b16 %v3805, %v3801
        %v3974 = vpack.c.b16 %v3806, %v3802
        %v3975 = vpack.c.b16 %v3811, %v3807
        %v3976 = vpack.c.b16 %v3812, %v3808
        %v3977 = vpack.c.b16 %v3813, %v3809
        %v3978 = vpack.c.b16 %v3814, %v3810
        %v3979 = vpack.c.b16 %v3819, %v3815
        %v3980 = vpack.c.b16 %v3820, %v3816
        %v3981 = vpack.c.b16 %v3821, %v3817
        %v3982 = vpack.c.b16 %v3822, %v3818
        %v3983 = vpack.c.b16 %v3827, %v3823
        %v3984 = vpack.c.b16 %v3828, %v3824
        %v3985 = vpack.c.b16 %v3829, %v3825
        %v3986 = vpack.c.b16 %v3830, %v3826
        %v3987 = vpack.c.b16 %v3835, %v3831
        %v3988 = vpack.c.b16 %v3836, %v3832
        %v3989 = vpack.c.b16 %v3837, %v3833
        %v3990 = vpack.c.b16 %v3838, %v3834
        %v3991 = vpack.c.b16 %v3843, %v3839
        %v3992 = vpack.c.b16 %v3844, %v3840
        %v3993 = vpack.c.b16 %v3845, %v3841
        %v3994 = vpack.c.b16 %v3846, %v3842
        %v3995 = vpack.c.b16 %v3851, %v3847
        %v3996 = vpack.c.b16 %v3852, %v3848
        %v3997 = vpack.c.b16 %v3853, %v3849
        %v3998 = vpack.c.b16 %v3854, %v3850
        %v3999 = vpack.c.b16 %v3859, %v3855
        %v4000 = vpack.c.b16 %v3860, %v3856
        %v4001 = vpack.c.b16 %v3861, %v3857
        %v4002 = vpack.c.b16 %v3862, %v3858
        %v4003 = vpack.c.b16 %v3867, %v3863
        %v4004 = vpack.c.b16 %v3868, %v3864
        %v4005 = vpack.c.b16 %v3869, %v3865
        %v4006 = vpack.c.b16 %v3870, %v3866
        %v4007 = vpack.c.b16 %v3875, %v3871
        %v4008 = vpack.c.b16 %v3876, %v3872
        %v4009 = vpack.c.b16 %v3877, %v3873
        %v4010 = vpack.c.b16 %v3878, %v3874
        %v4011 = vpack.c.b16 %v3883, %v3879
        %v4012 = vpack.c.b16 %v3884, %v3880
        %v4013 = vpack.c.b16 %v3885, %v3881
        %v4014 = vpack.c.b16 %v3886, %v3882
        %4143 = vmatpush.bf16.msra.mxu0 %v3915
        %4144 = vmatpush.bf16.msra.mxu0 %v3911
        %4145 = vmatpush.bf16.msra.mxu0 %v3907
        %4146 = vmatpush.bf16.msra.mxu0 %v3903
        %4147 = vmatpush.bf16.msra.mxu0 %v3899
        %4148 = vmatpush.bf16.msra.mxu0 %v3895
        %4149 = vmatpush.bf16.msra.mxu0 %v3891
        %4150 = vmatpush.bf16.msra.mxu0 %v3887
        %4151 = vmatmul.bf16.gmra.mxu0 %v3371
        %v4152 = vpop.f32.mrf.mxu0
        %v4153 = vadd.f32 0.0, %v4152
        %v4154 = vpop.f32.mrf.mxu0
        %4155 = vdwg.mxu0
        %4156 = vmatpush.bf16.msra.mxu0 %v3947
        %4157 = vmatpush.bf16.msra.mxu0 %v3943
        %4158 = vmatpush.bf16.msra.mxu0 %v3939
        %4159 = vmatpush.bf16.msra.mxu0 %v3935
        %4160 = vmatpush.bf16.msra.mxu0 %v3931
        %4161 = vmatpush.bf16.msra.mxu0 %v3927
        %4162 = vmatpush.bf16.msra.mxu0 %v3923
        %4163 = vmatpush.bf16.msra.mxu0 %v3919
        %4164 = vmatmul.bf16.gmra.mxu0 %v3372
        %v4165 = vpop.f32.mrf.mxu0
        %v4166 = vadd.f32 %v4153, %v4165
        %v4167 = vpop.f32.mrf.mxu0
        %4168 = vdwg.mxu0
        %4169 = vmatpush.bf16.msra.mxu0 %v3979
        %4170 = vmatpush.bf16.msra.mxu0 %v3975
        %4171 = vmatpush.bf16.msra.mxu0 %v3971
        %4172 = vmatpush.bf16.msra.mxu0 %v3967
        %4173 = vmatpush.bf16.msra.mxu0 %v3963
        %4174 = vmatpush.bf16.msra.mxu0 %v3959
        %4175 = vmatpush.bf16.msra.mxu0 %v3955
        %4176 = vmatpush.bf16.msra.mxu0 %v3951
        %4177 = vmatmul.bf16.gmra.mxu0 %v3373
        %v4178 = vpop.f32.mrf.mxu0
        %v4179 = vadd.f32 %v4166, %v4178
        %v4180 = vpop.f32.mrf.mxu0
        %4181 = vdwg.mxu0
        %4182 = vmatpush.bf16.msra.mxu0 %v4011
        %4183 = vmatpush.bf16.msra.mxu0 %v4007
        %4184 = vmatpush.bf16.msra.mxu0 %v4003
        %4185 = vmatpush.bf16.msra.mxu0 %v3999
        %4186 = vmatpush.bf16.msra.mxu0 %v3995
        %4187 = vmatpush.bf16.msra.mxu0 %v3991
        %4188 = vmatpush.bf16.msra.mxu0 %v3987
        %4189 = vmatpush.bf16.msra.mxu0 %v3983
        %4190 = vmatmul.bf16.gmra.mxu0 %v3374
        %v4191 = vpop.f32.mrf.mxu0
        %v4192 = vadd.f32 %v4179, %v4191
        %v4193 = vpop.f32.mrf.mxu0
        %4194 = vdwg.mxu0
        %4195 = vmatpush.bf16.msra.mxu0 %v3916
        %4196 = vmatpush.bf16.msra.mxu0 %v3912
        %4197 = vmatpush.bf16.msra.mxu0 %v3908
        %4198 = vmatpush.bf16.msra.mxu0 %v3904
        %4199 = vmatpush.bf16.msra.mxu0 %v3900
        %4200 = vmatpush.bf16.msra.mxu0 %v3896
        %4201 = vmatpush.bf16.msra.mxu0 %v3892
        %4202 = vmatpush.bf16.msra.mxu0 %v3888
        %4203 = vmatmul.bf16.gmra.mxu0 %v3371
        %v4204 = vpop.f32.mrf.mxu0
        %v4205 = vadd.f32 0.0, %v4204
        %v4206 = vpop.f32.mrf.mxu0
        %4207 = vdwg.mxu0
        %4208 = vmatpush.bf16.msra.mxu0 %v3948
        %4209 = vmatpush.bf16.msra.mxu0 %v3944
        %4210 = vmatpush.bf16.msra.mxu0 %v3940
        %4211 = vmatpush.bf16.msra.mxu0 %v3936
        %4212 = vmatpush.bf16.msra.mxu0 %v3932
        %4213 = vmatpush.bf16.msra.mxu0 %v3928
        %4214 = vmatpush.bf16.msra.mxu0 %v3924
        %4215 = vmatpush.bf16.msra.mxu0 %v3920
        %4216 = vmatmul.bf16.gmra.mxu0 %v3372
        %v4217 = vpop.f32.mrf.mxu0
        %v4218 = vadd.f32 %v4205, %v4217
        %v4219 = vpop.f32.mrf.mxu0
        %4220 = vdwg.mxu0
        %4221 = vmatpush.bf16.msra.mxu0 %v3980
        %4222 = vmatpush.bf16.msra.mxu0 %v3976
        %4223 = vmatpush.bf16.msra.mxu0 %v3972
        %4224 = vmatpush.bf16.msra.mxu0 %v3968
        %4225 = vmatpush.bf16.msra.mxu0 %v3964
        %4226 = vmatpush.bf16.msra.mxu0 %v3960
        %4227 = vmatpush.bf16.msra.mxu0 %v3956
        %4228 = vmatpush.bf16.msra.mxu0 %v3952
        %4229 = vmatmul.bf16.gmra.mxu0 %v3373
        %v4230 = vpop.f32.mrf.mxu0
        %v4231 = vadd.f32 %v4218, %v4230
        %v4232 = vpop.f32.mrf.mxu0
        %4233 = vdwg.mxu0
        %4234 = vmatpush.bf16.msra.mxu0 %v4012
        %4235 = vmatpush.bf16.msra.mxu0 %v4008
        %4236 = vmatpush.bf16.msra.mxu0 %v4004
        %4237 = vmatpush.bf16.msra.mxu0 %v4000
        %4238 = vmatpush.bf16.msra.mxu0 %v3996
        %4239 = vmatpush.bf16.msra.mxu0 %v3992
        %4240 = vmatpush.bf16.msra.mxu0 %v3988
        %4241 = vmatpush.bf16.msra.mxu0 %v3984
        %4242 = vmatmul.bf16.gmra.mxu0 %v3374
        %v4243 = vpop.f32.mrf.mxu0
        %v4244 = vadd.f32 %v4231, %v4243
        %v4245 = vpop.f32.mrf.mxu0
        %4246 = vdwg.mxu0
        %4247 = vmatpush.bf16.msra.mxu0 %v3917
        %4248 = vmatpush.bf16.msra.mxu0 %v3913
        %4249 = vmatpush.bf16.msra.mxu0 %v3909
        %4250 = vmatpush.bf16.msra.mxu0 %v3905
        %4251 = vmatpush.bf16.msra.mxu0 %v3901
        %4252 = vmatpush.bf16.msra.mxu0 %v3897
        %4253 = vmatpush.bf16.msra.mxu0 %v3893
        %4254 = vmatpush.bf16.msra.mxu0 %v3889
        %4255 = vmatmul.bf16.gmra.mxu0 %v3371
        %v4256 = vpop.f32.mrf.mxu0
        %v4257 = vadd.f32 0.0, %v4256
        %v4258 = vpop.f32.mrf.mxu0
        %4259 = vdwg.mxu0
        %4260 = vmatpush.bf16.msra.mxu0 %v3949
        %4261 = vmatpush.bf16.msra.mxu0 %v3945
        %4262 = vmatpush.bf16.msra.mxu0 %v3941
        %4263 = vmatpush.bf16.msra.mxu0 %v3937
        %4264 = vmatpush.bf16.msra.mxu0 %v3933
        %4265 = vmatpush.bf16.msra.mxu0 %v3929
        %4266 = vmatpush.bf16.msra.mxu0 %v3925
        %4267 = vmatpush.bf16.msra.mxu0 %v3921
        %4268 = vmatmul.bf16.gmra.mxu0 %v3372
        %v4269 = vpop.f32.mrf.mxu0
        %v4270 = vadd.f32 %v4257, %v4269
        %v4271 = vpop.f32.mrf.mxu0
        %4272 = vdwg.mxu0
        %4273 = vmatpush.bf16.msra.mxu0 %v3981
        %4274 = vmatpush.bf16.msra.mxu0 %v3977
        %4275 = vmatpush.bf16.msra.mxu0 %v3973
        %4276 = vmatpush.bf16.msra.mxu0 %v3969
        %4277 = vmatpush.bf16.msra.mxu0 %v3965
        %4278 = vmatpush.bf16.msra.mxu0 %v3961
        %4279 = vmatpush.bf16.msra.mxu0 %v3957
        %4280 = vmatpush.bf16.msra.mxu0 %v3953
        %4281 = vmatmul.bf16.gmra.mxu0 %v3373
        %v4282 = vpop.f32.mrf.mxu0
        %v4283 = vadd.f32 %v4270, %v4282
        %v4284 = vpop.f32.mrf.mxu0
        %4285 = vdwg.mxu0
        %4286 = vmatpush.bf16.msra.mxu0 %v4013
        %4287 = vmatpush.bf16.msra.mxu0 %v4009
        %4288 = vmatpush.bf16.msra.mxu0 %v4005
        %4289 = vmatpush.bf16.msra.mxu0 %v4001
        %4290 = vmatpush.bf16.msra.mxu0 %v3997
        %4291 = vmatpush.bf16.msra.mxu0 %v3993
        %4292 = vmatpush.bf16.msra.mxu0 %v3989
        %4293 = vmatpush.bf16.msra.mxu0 %v3985
        %4294 = vmatmul.bf16.gmra.mxu0 %v3374
        %v4295 = vpop.f32.mrf.mxu0
        %v4296 = vadd.f32 %v4283, %v4295
        %v4297 = vpop.f32.mrf.mxu0
        %4298 = vdwg.mxu0
        %4299 = vmatpush.bf16.msra.mxu0 %v3918
        %4300 = vmatpush.bf16.msra.mxu0 %v3914
        %4301 = vmatpush.bf16.msra.mxu0 %v3910
        %4302 = vmatpush.bf16.msra.mxu0 %v3906
        %4303 = vmatpush.bf16.msra.mxu0 %v3902
        %4304 = vmatpush.bf16.msra.mxu0 %v3898
        %4305 = vmatpush.bf16.msra.mxu0 %v3894
        %4306 = vmatpush.bf16.msra.mxu0 %v3890
        %4307 = vmatmul.bf16.gmra.mxu0 %v3371
        %v4308 = vpop.f32.mrf.mxu0
        %v4309 = vadd.f32 0.0, %v4308
        %v4310 = vpop.f32.mrf.mxu0
        %4311 = vdwg.mxu0
        %4312 = vmatpush.bf16.msra.mxu0 %v3950
        %4313 = vmatpush.bf16.msra.mxu0 %v3946
        %4314 = vmatpush.bf16.msra.mxu0 %v3942
        %4315 = vmatpush.bf16.msra.mxu0 %v3938
        %4316 = vmatpush.bf16.msra.mxu0 %v3934
        %4317 = vmatpush.bf16.msra.mxu0 %v3930
        %4318 = vmatpush.bf16.msra.mxu0 %v3926
        %4319 = vmatpush.bf16.msra.mxu0 %v3922
        %4320 = vmatmul.bf16.gmra.mxu0 %v3372
        %v4321 = vpop.f32.mrf.mxu0
        %v4322 = vadd.f32 %v4309, %v4321
        %v4323 = vpop.f32.mrf.mxu0
        %4324 = vdwg.mxu0
        %4325 = vmatpush.bf16.msra.mxu0 %v3982
        %4326 = vmatpush.bf16.msra.mxu0 %v3978
        %4327 = vmatpush.bf16.msra.mxu0 %v3974
        %4328 = vmatpush.bf16.msra.mxu0 %v3970
        %4329 = vmatpush.bf16.msra.mxu0 %v3966
        %4330 = vmatpush.bf16.msra.mxu0 %v3962
        %4331 = vmatpush.bf16.msra.mxu0 %v3958
        %4332 = vmatpush.bf16.msra.mxu0 %v3954
        %4333 = vmatmul.bf16.gmra.mxu0 %v3373
        %v4334 = vpop.f32.mrf.mxu0
        %v4335 = vadd.f32 %v4322, %v4334
        %v4336 = vpop.f32.mrf.mxu0
        %4337 = vdwg.mxu0
        %4338 = vmatpush.bf16.msra.mxu0 %v4014
        %4339 = vmatpush.bf16.msra.mxu0 %v4010
        %4340 = vmatpush.bf16.msra.mxu0 %v4006
        %4341 = vmatpush.bf16.msra.mxu0 %v4002
        %4342 = vmatpush.bf16.msra.mxu0 %v3998
        %4343 = vmatpush.bf16.msra.mxu0 %v3994
        %4344 = vmatpush.bf16.msra.mxu0 %v3990
        %4345 = vmatpush.bf16.msra.mxu0 %v3986
        %4346 = vmatmul.bf16.gmra.mxu0 %v3374
        %v4347 = vpop.f32.mrf.mxu0
        %v4348 = vadd.f32 %v4335, %v4347
        %v4349 = vpop.f32.mrf.mxu0
        %4350 = vdwg.mxu0
        %v4351 = vadd.f32 %v2329, %v4192
        %v4352 = vadd.f32 %v2330, %v4244
        %v4353 = vadd.f32 %v2331, %v4296
        %v4354 = vadd.f32 %v2332, %v4348
        %v4355 = vld [vmem:[%s1 + $0x20] sm:$0xff]
        %v4356 = vld [vmem:[%s1 + $0x28] sm:$0xff]
        %v4357 = vld [vmem:[%s1 + $0x60] sm:$0xff]
        %v4358 = vld [vmem:[%s1 + $0x68] sm:$0xff]
        %v4359 = vld [vmem:[%s1 + $0xa0] sm:$0xff]
        %v4360 = vld [vmem:[%s1 + $0xa8] sm:$0xff]
        %v4361 = vld [vmem:[%s1 + $0xe0] sm:$0xff]
        %v4362 = vld [vmem:[%s1 + $0xe8] sm:$0xff]
        %v4363 = vld [vmem:[%s1 + $0x120] sm:$0xff]
        %v4364 = vld [vmem:[%s1 + $0x128] sm:$0xff]
        %v4365 = vld [vmem:[%s1 + $0x160] sm:$0xff]
        %v4366 = vld [vmem:[%s1 + $0x168] sm:$0xff]
        %v4367 = vld [vmem:[%s1 + $0x1a0] sm:$0xff]
        %v4368 = vld [vmem:[%s1 + $0x1a8] sm:$0xff]
        %v4369 = vld [vmem:[%s1 + $0x1e0] sm:$0xff]
        %v4370 = vld [vmem:[%s1 + $0x1e8] sm:$0xff]
        %v4371 = vld [vmem:[%s1 + $0x220] sm:$0xff]
        %v4372 = vld [vmem:[%s1 + $0x228] sm:$0xff]
        %v4373 = vld [vmem:[%s1 + $0x260] sm:$0xff]
        %v4374 = vld [vmem:[%s1 + $0x268] sm:$0xff]
        %v4375 = vld [vmem:[%s1 + $0x2a0] sm:$0xff]
        %v4376 = vld [vmem:[%s1 + $0x2a8] sm:$0xff]
        %v4377 = vld [vmem:[%s1 + $0x2e0] sm:$0xff]
        %v4378 = vld [vmem:[%s1 + $0x2e8] sm:$0xff]
        %v4379 = vld [vmem:[%s1 + $0x320] sm:$0xff]
        %v4380 = vld [vmem:[%s1 + $0x328] sm:$0xff]
        %v4381 = vld [vmem:[%s1 + $0x360] sm:$0xff]
        %v4382 = vld [vmem:[%s1 + $0x368] sm:$0xff]
        %v4383 = vld [vmem:[%s1 + $0x3a0] sm:$0xff]
        %v4384 = vld [vmem:[%s1 + $0x3a8] sm:$0xff]
        %v4385 = vld [vmem:[%s1 + $0x3e0] sm:$0xff]
        %v4386 = vld [vmem:[%s1 + $0x3e8] sm:$0xff]
        %v4387 = vld [vmem:[%s1 + $0x420] sm:$0xff]
        %v4388 = vld [vmem:[%s1 + $0x428] sm:$0xff]
        %v4389 = vld [vmem:[%s1 + $0x460] sm:$0xff]
        %v4390 = vld [vmem:[%s1 + $0x468] sm:$0xff]
        %v4391 = vld [vmem:[%s1 + $0x4a0] sm:$0xff]
        %v4392 = vld [vmem:[%s1 + $0x4a8] sm:$0xff]
        %v4393 = vld [vmem:[%s1 + $0x4e0] sm:$0xff]
        %v4394 = vld [vmem:[%s1 + $0x4e8] sm:$0xff]
        %v4395 = vld [vmem:[%s1 + $0x520] sm:$0xff]
        %v4396 = vld [vmem:[%s1 + $0x528] sm:$0xff]
        %v4397 = vld [vmem:[%s1 + $0x560] sm:$0xff]
        %v4398 = vld [vmem:[%s1 + $0x568] sm:$0xff]
        %v4399 = vld [vmem:[%s1 + $0x5a0] sm:$0xff]
        %v4400 = vld [vmem:[%s1 + $0x5a8] sm:$0xff]
        %v4401 = vld [vmem:[%s1 + $0x5e0] sm:$0xff]
        %v4402 = vld [vmem:[%s1 + $0x5e8] sm:$0xff]
        %v4403 = vld [vmem:[%s1 + $0x620] sm:$0xff]
        %v4404 = vld [vmem:[%s1 + $0x628] sm:$0xff]
        %v4405 = vld [vmem:[%s1 + $0x660] sm:$0xff]
        %v4406 = vld [vmem:[%s1 + $0x668] sm:$0xff]
        %v4407 = vld [vmem:[%s1 + $0x6a0] sm:$0xff]
        %v4408 = vld [vmem:[%s1 + $0x6a8] sm:$0xff]
        %v4409 = vld [vmem:[%s1 + $0x6e0] sm:$0xff]
        %v4410 = vld [vmem:[%s1 + $0x6e8] sm:$0xff]
        %v4411 = vld [vmem:[%s1 + $0x720] sm:$0xff]
        %v4412 = vld [vmem:[%s1 + $0x728] sm:$0xff]
        %v4413 = vld [vmem:[%s1 + $0x760] sm:$0xff]
        %v4414 = vld [vmem:[%s1 + $0x768] sm:$0xff]
        %v4415 = vld [vmem:[%s1 + $0x7a0] sm:$0xff]
        %v4416 = vld [vmem:[%s1 + $0x7a8] sm:$0xff]
        %v4417 = vld [vmem:[%s1 + $0x7e0] sm:$0xff]
        %v4418 = vld [vmem:[%s1 + $0x7e8] sm:$0xff]
        %v4419 = vld [vmem:[%s1 + $0x820] sm:$0xff]
        %v4420 = vld [vmem:[%s1 + $0x828] sm:$0xff]
        %v4421 = vld [vmem:[%s1 + $0x860] sm:$0xff]
        %v4422 = vld [vmem:[%s1 + $0x868] sm:$0xff]
        %v4423 = vld [vmem:[%s1 + $0x8a0] sm:$0xff]
        %v4424 = vld [vmem:[%s1 + $0x8a8] sm:$0xff]
        %v4425 = vld [vmem:[%s1 + $0x8e0] sm:$0xff]
        %v4426 = vld [vmem:[%s1 + $0x8e8] sm:$0xff]
        %v4427 = vld [vmem:[%s1 + $0x920] sm:$0xff]
        %v4428 = vld [vmem:[%s1 + $0x928] sm:$0xff]
        %v4429 = vld [vmem:[%s1 + $0x960] sm:$0xff]
        %v4430 = vld [vmem:[%s1 + $0x968] sm:$0xff]
        %v4431 = vld [vmem:[%s1 + $0x9a0] sm:$0xff]
        %v4432 = vld [vmem:[%s1 + $0x9a8] sm:$0xff]
        %v4433 = vld [vmem:[%s1 + $0x9e0] sm:$0xff]
        %v4434 = vld [vmem:[%s1 + $0x9e8] sm:$0xff]
        %v4435 = vld [vmem:[%s1 + $0xa20] sm:$0xff]
        %v4436 = vld [vmem:[%s1 + $0xa28] sm:$0xff]
        %v4437 = vld [vmem:[%s1 + $0xa60] sm:$0xff]
        %v4438 = vld [vmem:[%s1 + $0xa68] sm:$0xff]
        %v4439 = vld [vmem:[%s1 + $0xaa0] sm:$0xff]
        %v4440 = vld [vmem:[%s1 + $0xaa8] sm:$0xff]
        %v4441 = vld [vmem:[%s1 + $0xae0] sm:$0xff]
        %v4442 = vld [vmem:[%s1 + $0xae8] sm:$0xff]
        %v4443 = vld [vmem:[%s1 + $0xb20] sm:$0xff]
        %v4444 = vld [vmem:[%s1 + $0xb28] sm:$0xff]
        %v4445 = vld [vmem:[%s1 + $0xb60] sm:$0xff]
        %v4446 = vld [vmem:[%s1 + $0xb68] sm:$0xff]
        %v4447 = vld [vmem:[%s1 + $0xba0] sm:$0xff]
        %v4448 = vld [vmem:[%s1 + $0xba8] sm:$0xff]
        %v4449 = vld [vmem:[%s1 + $0xbe0] sm:$0xff]
        %v4450 = vld [vmem:[%s1 + $0xbe8] sm:$0xff]
        %v4451 = vld [vmem:[%s1 + $0xc20] sm:$0xff]
        %v4452 = vld [vmem:[%s1 + $0xc28] sm:$0xff]
        %v4453 = vld [vmem:[%s1 + $0xc60] sm:$0xff]
        %v4454 = vld [vmem:[%s1 + $0xc68] sm:$0xff]
        %v4455 = vld [vmem:[%s1 + $0xca0] sm:$0xff]
        %v4456 = vld [vmem:[%s1 + $0xca8] sm:$0xff]
        %v4457 = vld [vmem:[%s1 + $0xce0] sm:$0xff]
        %v4458 = vld [vmem:[%s1 + $0xce8] sm:$0xff]
        %v4459 = vld [vmem:[%s1 + $0xd20] sm:$0xff]
        %v4460 = vld [vmem:[%s1 + $0xd28] sm:$0xff]
        %v4461 = vld [vmem:[%s1 + $0xd60] sm:$0xff]
        %v4462 = vld [vmem:[%s1 + $0xd68] sm:$0xff]
        %v4463 = vld [vmem:[%s1 + $0xda0] sm:$0xff]
        %v4464 = vld [vmem:[%s1 + $0xda8] sm:$0xff]
        %v4465 = vld [vmem:[%s1 + $0xde0] sm:$0xff]
        %v4466 = vld [vmem:[%s1 + $0xde8] sm:$0xff]
        %v4467 = vld [vmem:[%s1 + $0xe20] sm:$0xff]
        %v4468 = vld [vmem:[%s1 + $0xe28] sm:$0xff]
        %v4469 = vld [vmem:[%s1 + $0xe60] sm:$0xff]
        %v4470 = vld [vmem:[%s1 + $0xe68] sm:$0xff]
        %v4471 = vld [vmem:[%s1 + $0xea0] sm:$0xff]
        %v4472 = vld [vmem:[%s1 + $0xea8] sm:$0xff]
        %v4473 = vld [vmem:[%s1 + $0xee0] sm:$0xff]
        %v4474 = vld [vmem:[%s1 + $0xee8] sm:$0xff]
        %v4475 = vld [vmem:[%s1 + $0xf20] sm:$0xff]
        %v4476 = vld [vmem:[%s1 + $0xf28] sm:$0xff]
        %v4477 = vld [vmem:[%s1 + $0xf60] sm:$0xff]
        %v4478 = vld [vmem:[%s1 + $0xf68] sm:$0xff]
        %v4479 = vld [vmem:[%s1 + $0xfa0] sm:$0xff]
        %v4480 = vld [vmem:[%s1 + $0xfa8] sm:$0xff]
        %v4481 = vld [vmem:[%s1 + $0xfe0] sm:$0xff]
        %v4482 = vld [vmem:[%s1 + $0xfe8] sm:$0xff]
        %v4611 = vunpack.c.l.b16 %v4355
        %v4612 = vunpack.c.h.b16 %v4355
        %v4613 = vunpack.c.l.b16 %v4356
        %v4614 = vunpack.c.h.b16 %v4356
        %v4615 = vunpack.c.l.b16 %v4357
        %v4616 = vunpack.c.h.b16 %v4357
        %v4617 = vunpack.c.l.b16 %v4358
        %v4618 = vunpack.c.h.b16 %v4358
        %v4619 = vunpack.c.l.b16 %v4359
        %v4620 = vunpack.c.h.b16 %v4359
        %v4621 = vunpack.c.l.b16 %v4360
        %v4622 = vunpack.c.h.b16 %v4360
        %v4623 = vunpack.c.l.b16 %v4361
        %v4624 = vunpack.c.h.b16 %v4361
        %v4625 = vunpack.c.l.b16 %v4362
        %v4626 = vunpack.c.h.b16 %v4362
        %v4627 = vunpack.c.l.b16 %v4363
        %v4628 = vunpack.c.h.b16 %v4363
        %v4629 = vunpack.c.l.b16 %v4364
        %v4630 = vunpack.c.h.b16 %v4364
        %v4631 = vunpack.c.l.b16 %v4365
        %v4632 = vunpack.c.h.b16 %v4365
        %v4633 = vunpack.c.l.b16 %v4366
        %v4634 = vunpack.c.h.b16 %v4366
        %v4635 = vunpack.c.l.b16 %v4367
        %v4636 = vunpack.c.h.b16 %v4367
        %v4637 = vunpack.c.l.b16 %v4368
        %v4638 = vunpack.c.h.b16 %v4368
        %v4639 = vunpack.c.l.b16 %v4369
        %v4640 = vunpack.c.h.b16 %v4369
        %v4641 = vunpack.c.l.b16 %v4370
        %v4642 = vunpack.c.h.b16 %v4370
        %v4643 = vunpack.c.l.b16 %v4371
        %v4644 = vunpack.c.h.b16 %v4371
        %v4645 = vunpack.c.l.b16 %v4372
        %v4646 = vunpack.c.h.b16 %v4372
        %v4647 = vunpack.c.l.b16 %v4373
        %v4648 = vunpack.c.h.b16 %v4373
        %v4649 = vunpack.c.l.b16 %v4374
        %v4650 = vunpack.c.h.b16 %v4374
        %v4651 = vunpack.c.l.b16 %v4375
        %v4652 = vunpack.c.h.b16 %v4375
        %v4653 = vunpack.c.l.b16 %v4376
        %v4654 = vunpack.c.h.b16 %v4376
        %v4655 = vunpack.c.l.b16 %v4377
        %v4656 = vunpack.c.h.b16 %v4377
        %v4657 = vunpack.c.l.b16 %v4378
        %v4658 = vunpack.c.h.b16 %v4378
        %v4659 = vunpack.c.l.b16 %v4379
        %v4660 = vunpack.c.h.b16 %v4379
        %v4661 = vunpack.c.l.b16 %v4380
        %v4662 = vunpack.c.h.b16 %v4380
        %v4663 = vunpack.c.l.b16 %v4381
        %v4664 = vunpack.c.h.b16 %v4381
        %v4665 = vunpack.c.l.b16 %v4382
        %v4666 = vunpack.c.h.b16 %v4382
        %v4667 = vunpack.c.l.b16 %v4383
        %v4668 = vunpack.c.h.b16 %v4383
        %v4669 = vunpack.c.l.b16 %v4384
        %v4670 = vunpack.c.h.b16 %v4384
        %v4671 = vunpack.c.l.b16 %v4385
        %v4672 = vunpack.c.h.b16 %v4385
        %v4673 = vunpack.c.l.b16 %v4386
        %v4674 = vunpack.c.h.b16 %v4386
        %v4675 = vunpack.c.l.b16 %v4387
        %v4676 = vunpack.c.h.b16 %v4387
        %v4677 = vunpack.c.l.b16 %v4388
        %v4678 = vunpack.c.h.b16 %v4388
        %v4679 = vunpack.c.l.b16 %v4389
        %v4680 = vunpack.c.h.b16 %v4389
        %v4681 = vunpack.c.l.b16 %v4390
        %v4682 = vunpack.c.h.b16 %v4390
        %v4683 = vunpack.c.l.b16 %v4391
        %v4684 = vunpack.c.h.b16 %v4391
        %v4685 = vunpack.c.l.b16 %v4392
        %v4686 = vunpack.c.h.b16 %v4392
        %v4687 = vunpack.c.l.b16 %v4393
        %v4688 = vunpack.c.h.b16 %v4393
        %v4689 = vunpack.c.l.b16 %v4394
        %v4690 = vunpack.c.h.b16 %v4394
        %v4691 = vunpack.c.l.b16 %v4395
        %v4692 = vunpack.c.h.b16 %v4395
        %v4693 = vunpack.c.l.b16 %v4396
        %v4694 = vunpack.c.h.b16 %v4396
        %v4695 = vunpack.c.l.b16 %v4397
        %v4696 = vunpack.c.h.b16 %v4397
        %v4697 = vunpack.c.l.b16 %v4398
        %v4698 = vunpack.c.h.b16 %v4398
        %v4699 = vunpack.c.l.b16 %v4399
        %v4700 = vunpack.c.h.b16 %v4399
        %v4701 = vunpack.c.l.b16 %v4400
        %v4702 = vunpack.c.h.b16 %v4400
        %v4703 = vunpack.c.l.b16 %v4401
        %v4704 = vunpack.c.h.b16 %v4401
        %v4705 = vunpack.c.l.b16 %v4402
        %v4706 = vunpack.c.h.b16 %v4402
        %v4707 = vunpack.c.l.b16 %v4403
        %v4708 = vunpack.c.h.b16 %v4403
        %v4709 = vunpack.c.l.b16 %v4404
        %v4710 = vunpack.c.h.b16 %v4404
        %v4711 = vunpack.c.l.b16 %v4405
        %v4712 = vunpack.c.h.b16 %v4405
        %v4713 = vunpack.c.l.b16 %v4406
        %v4714 = vunpack.c.h.b16 %v4406
        %v4715 = vunpack.c.l.b16 %v4407
        %v4716 = vunpack.c.h.b16 %v4407
        %v4717 = vunpack.c.l.b16 %v4408
        %v4718 = vunpack.c.h.b16 %v4408
        %v4719 = vunpack.c.l.b16 %v4409
        %v4720 = vunpack.c.h.b16 %v4409
        %v4721 = vunpack.c.l.b16 %v4410
        %v4722 = vunpack.c.h.b16 %v4410
        %v4723 = vunpack.c.l.b16 %v4411
        %v4724 = vunpack.c.h.b16 %v4411
        %v4725 = vunpack.c.l.b16 %v4412
        %v4726 = vunpack.c.h.b16 %v4412
        %v4727 = vunpack.c.l.b16 %v4413
        %v4728 = vunpack.c.h.b16 %v4413
        %v4729 = vunpack.c.l.b16 %v4414
        %v4730 = vunpack.c.h.b16 %v4414
        %v4731 = vunpack.c.l.b16 %v4415
        %v4732 = vunpack.c.h.b16 %v4415
        %v4733 = vunpack.c.l.b16 %v4416
        %v4734 = vunpack.c.h.b16 %v4416
        %v4735 = vunpack.c.l.b16 %v4417
        %v4736 = vunpack.c.h.b16 %v4417
        %v4737 = vunpack.c.l.b16 %v4418
        %v4738 = vunpack.c.h.b16 %v4418
        %v4739 = vunpack.c.l.b16 %v4419
        %v4740 = vunpack.c.h.b16 %v4419
        %v4741 = vunpack.c.l.b16 %v4420
        %v4742 = vunpack.c.h.b16 %v4420
        %v4743 = vunpack.c.l.b16 %v4421
        %v4744 = vunpack.c.h.b16 %v4421
        %v4745 = vunpack.c.l.b16 %v4422
        %v4746 = vunpack.c.h.b16 %v4422
        %v4747 = vunpack.c.l.b16 %v4423
        %v4748 = vunpack.c.h.b16 %v4423
        %v4749 = vunpack.c.l.b16 %v4424
        %v4750 = vunpack.c.h.b16 %v4424
        %v4751 = vunpack.c.l.b16 %v4425
        %v4752 = vunpack.c.h.b16 %v4425
        %v4753 = vunpack.c.l.b16 %v4426
        %v4754 = vunpack.c.h.b16 %v4426
        %v4755 = vunpack.c.l.b16 %v4427
        %v4756 = vunpack.c.h.b16 %v4427
        %v4757 = vunpack.c.l.b16 %v4428
        %v4758 = vunpack.c.h.b16 %v4428
        %v4759 = vunpack.c.l.b16 %v4429
        %v4760 = vunpack.c.h.b16 %v4429
        %v4761 = vunpack.c.l.b16 %v4430
        %v4762 = vunpack.c.h.b16 %v4430
        %v4763 = vunpack.c.l.b16 %v4431
        %v4764 = vunpack.c.h.b16 %v4431
        %v4765 = vunpack.c.l.b16 %v4432
        %v4766 = vunpack.c.h.b16 %v4432
        %v4767 = vunpack.c.l.b16 %v4433
        %v4768 = vunpack.c.h.b16 %v4433
        %v4769 = vunpack.c.l.b16 %v4434
        %v4770 = vunpack.c.h.b16 %v4434
        %v4771 = vunpack.c.l.b16 %v4435
        %v4772 = vunpack.c.h.b16 %v4435
        %v4773 = vunpack.c.l.b16 %v4436
        %v4774 = vunpack.c.h.b16 %v4436
        %v4775 = vunpack.c.l.b16 %v4437
        %v4776 = vunpack.c.h.b16 %v4437
        %v4777 = vunpack.c.l.b16 %v4438
        %v4778 = vunpack.c.h.b16 %v4438
        %v4779 = vunpack.c.l.b16 %v4439
        %v4780 = vunpack.c.h.b16 %v4439
        %v4781 = vunpack.c.l.b16 %v4440
        %v4782 = vunpack.c.h.b16 %v4440
        %v4783 = vunpack.c.l.b16 %v4441
        %v4784 = vunpack.c.h.b16 %v4441
        %v4785 = vunpack.c.l.b16 %v4442
        %v4786 = vunpack.c.h.b16 %v4442
        %v4787 = vunpack.c.l.b16 %v4443
        %v4788 = vunpack.c.h.b16 %v4443
        %v4789 = vunpack.c.l.b16 %v4444
        %v4790 = vunpack.c.h.b16 %v4444
        %v4791 = vunpack.c.l.b16 %v4445
        %v4792 = vunpack.c.h.b16 %v4445
        %v4793 = vunpack.c.l.b16 %v4446
        %v4794 = vunpack.c.h.b16 %v4446
        %v4795 = vunpack.c.l.b16 %v4447
        %v4796 = vunpack.c.h.b16 %v4447
        %v4797 = vunpack.c.l.b16 %v4448
        %v4798 = vunpack.c.h.b16 %v4448
        %v4799 = vunpack.c.l.b16 %v4449
        %v4800 = vunpack.c.h.b16 %v4449
        %v4801 = vunpack.c.l.b16 %v4450
        %v4802 = vunpack.c.h.b16 %v4450
        %v4803 = vunpack.c.l.b16 %v4451
        %v4804 = vunpack.c.h.b16 %v4451
        %v4805 = vunpack.c.l.b16 %v4452
        %v4806 = vunpack.c.h.b16 %v4452
        %v4807 = vunpack.c.l.b16 %v4453
        %v4808 = vunpack.c.h.b16 %v4453
        %v4809 = vunpack.c.l.b16 %v4454
        %v4810 = vunpack.c.h.b16 %v4454
        %v4811 = vunpack.c.l.b16 %v4455
        %v4812 = vunpack.c.h.b16 %v4455
        %v4813 = vunpack.c.l.b16 %v4456
        %v4814 = vunpack.c.h.b16 %v4456
        %v4815 = vunpack.c.l.b16 %v4457
        %v4816 = vunpack.c.h.b16 %v4457
        %v4817 = vunpack.c.l.b16 %v4458
        %v4818 = vunpack.c.h.b16 %v4458
        %v4819 = vunpack.c.l.b16 %v4459
        %v4820 = vunpack.c.h.b16 %v4459
        %v4821 = vunpack.c.l.b16 %v4460
        %v4822 = vunpack.c.h.b16 %v4460
        %v4823 = vunpack.c.l.b16 %v4461
        %v4824 = vunpack.c.h.b16 %v4461
        %v4825 = vunpack.c.l.b16 %v4462
        %v4826 = vunpack.c.h.b16 %v4462
        %v4827 = vunpack.c.l.b16 %v4463
        %v4828 = vunpack.c.h.b16 %v4463
        %v4829 = vunpack.c.l.b16 %v4464
        %v4830 = vunpack.c.h.b16 %v4464
        %v4831 = vunpack.c.l.b16 %v4465
        %v4832 = vunpack.c.h.b16 %v4465
        %v4833 = vunpack.c.l.b16 %v4466
        %v4834 = vunpack.c.h.b16 %v4466
        %v4835 = vunpack.c.l.b16 %v4467
        %v4836 = vunpack.c.h.b16 %v4467
        %v4837 = vunpack.c.l.b16 %v4468
        %v4838 = vunpack.c.h.b16 %v4468
        %v4839 = vunpack.c.l.b16 %v4469
        %v4840 = vunpack.c.h.b16 %v4469
        %v4841 = vunpack.c.l.b16 %v4470
        %v4842 = vunpack.c.h.b16 %v4470
        %v4843 = vunpack.c.l.b16 %v4471
        %v4844 = vunpack.c.h.b16 %v4471
        %v4845 = vunpack.c.l.b16 %v4472
        %v4846 = vunpack.c.h.b16 %v4472
        %v4847 = vunpack.c.l.b16 %v4473
        %v4848 = vunpack.c.h.b16 %v4473
        %v4849 = vunpack.c.l.b16 %v4474
        %v4850 = vunpack.c.h.b16 %v4474
        %v4851 = vunpack.c.l.b16 %v4475
        %v4852 = vunpack.c.h.b16 %v4475
        %v4853 = vunpack.c.l.b16 %v4476
        %v4854 = vunpack.c.h.b16 %v4476
        %v4855 = vunpack.c.l.b16 %v4477
        %v4856 = vunpack.c.h.b16 %v4477
        %v4857 = vunpack.c.l.b16 %v4478
        %v4858 = vunpack.c.h.b16 %v4478
        %v4859 = vunpack.c.l.b16 %v4479
        %v4860 = vunpack.c.h.b16 %v4479
        %v4861 = vunpack.c.l.b16 %v4480
        %v4862 = vunpack.c.h.b16 %v4480
        %v4863 = vunpack.c.l.b16 %v4481
        %v4864 = vunpack.c.h.b16 %v4481
        %v4865 = vunpack.c.l.b16 %v4482
        %v4866 = vunpack.c.h.b16 %v4482
        %v4867 = vpack.c.b16 %v4615, %v4611
        %v4868 = vpack.c.b16 %v4616, %v4612
        %v4869 = vpack.c.b16 %v4617, %v4613
        %v4870 = vpack.c.b16 %v4618, %v4614
        %v4871 = vpack.c.b16 %v4623, %v4619
        %v4872 = vpack.c.b16 %v4624, %v4620
        %v4873 = vpack.c.b16 %v4625, %v4621
        %v4874 = vpack.c.b16 %v4626, %v4622
        %v4875 = vpack.c.b16 %v4631, %v4627
        %v4876 = vpack.c.b16 %v4632, %v4628
        %v4877 = vpack.c.b16 %v4633, %v4629
        %v4878 = vpack.c.b16 %v4634, %v4630
        %v4879 = vpack.c.b16 %v4639, %v4635
        %v4880 = vpack.c.b16 %v4640, %v4636
        %v4881 = vpack.c.b16 %v4641, %v4637
        %v4882 = vpack.c.b16 %v4642, %v4638
        %v4883 = vpack.c.b16 %v4647, %v4643
        %v4884 = vpack.c.b16 %v4648, %v4644
        %v4885 = vpack.c.b16 %v4649, %v4645
        %v4886 = vpack.c.b16 %v4650, %v4646
        %v4887 = vpack.c.b16 %v4655, %v4651
        %v4888 = vpack.c.b16 %v4656, %v4652
        %v4889 = vpack.c.b16 %v4657, %v4653
        %v4890 = vpack.c.b16 %v4658, %v4654
        %v4891 = vpack.c.b16 %v4663, %v4659
        %v4892 = vpack.c.b16 %v4664, %v4660
        %v4893 = vpack.c.b16 %v4665, %v4661
        %v4894 = vpack.c.b16 %v4666, %v4662
        %v4895 = vpack.c.b16 %v4671, %v4667
        %v4896 = vpack.c.b16 %v4672, %v4668
        %v4897 = vpack.c.b16 %v4673, %v4669
        %v4898 = vpack.c.b16 %v4674, %v4670
        %v4899 = vpack.c.b16 %v4679, %v4675
        %v4900 = vpack.c.b16 %v4680, %v4676
        %v4901 = vpack.c.b16 %v4681, %v4677
        %v4902 = vpack.c.b16 %v4682, %v4678
        %v4903 = vpack.c.b16 %v4687, %v4683
        %v4904 = vpack.c.b16 %v4688, %v4684
        %v4905 = vpack.c.b16 %v4689, %v4685
        %v4906 = vpack.c.b16 %v4690, %v4686
        %v4907 = vpack.c.b16 %v4695, %v4691
        %v4908 = vpack.c.b16 %v4696, %v4692
        %v4909 = vpack.c.b16 %v4697, %v4693
        %v4910 = vpack.c.b16 %v4698, %v4694
        %v4911 = vpack.c.b16 %v4703, %v4699
        %v4912 = vpack.c.b16 %v4704, %v4700
        %v4913 = vpack.c.b16 %v4705, %v4701
        %v4914 = vpack.c.b16 %v4706, %v4702
        %v4915 = vpack.c.b16 %v4711, %v4707
        %v4916 = vpack.c.b16 %v4712, %v4708
        %v4917 = vpack.c.b16 %v4713, %v4709
        %v4918 = vpack.c.b16 %v4714, %v4710
        %v4919 = vpack.c.b16 %v4719, %v4715
        %v4920 = vpack.c.b16 %v4720, %v4716
        %v4921 = vpack.c.b16 %v4721, %v4717
        %v4922 = vpack.c.b16 %v4722, %v4718
        %v4923 = vpack.c.b16 %v4727, %v4723
        %v4924 = vpack.c.b16 %v4728, %v4724
        %v4925 = vpack.c.b16 %v4729, %v4725
        %v4926 = vpack.c.b16 %v4730, %v4726
        %v4927 = vpack.c.b16 %v4735, %v4731
        %v4928 = vpack.c.b16 %v4736, %v4732
        %v4929 = vpack.c.b16 %v4737, %v4733
        %v4930 = vpack.c.b16 %v4738, %v4734
        %v4931 = vpack.c.b16 %v4743, %v4739
        %v4932 = vpack.c.b16 %v4744, %v4740
        %v4933 = vpack.c.b16 %v4745, %v4741
        %v4934 = vpack.c.b16 %v4746, %v4742
        %v4935 = vpack.c.b16 %v4751, %v4747
        %v4936 = vpack.c.b16 %v4752, %v4748
        %v4937 = vpack.c.b16 %v4753, %v4749
        %v4938 = vpack.c.b16 %v4754, %v4750
        %v4939 = vpack.c.b16 %v4759, %v4755
        %v4940 = vpack.c.b16 %v4760, %v4756
        %v4941 = vpack.c.b16 %v4761, %v4757
        %v4942 = vpack.c.b16 %v4762, %v4758
        %v4943 = vpack.c.b16 %v4767, %v4763
        %v4944 = vpack.c.b16 %v4768, %v4764
        %v4945 = vpack.c.b16 %v4769, %v4765
        %v4946 = vpack.c.b16 %v4770, %v4766
        %v4947 = vpack.c.b16 %v4775, %v4771
        %v4948 = vpack.c.b16 %v4776, %v4772
        %v4949 = vpack.c.b16 %v4777, %v4773
        %v4950 = vpack.c.b16 %v4778, %v4774
        %v4951 = vpack.c.b16 %v4783, %v4779
        %v4952 = vpack.c.b16 %v4784, %v4780
        %v4953 = vpack.c.b16 %v4785, %v4781
        %v4954 = vpack.c.b16 %v4786, %v4782
        %v4955 = vpack.c.b16 %v4791, %v4787
        %v4956 = vpack.c.b16 %v4792, %v4788
        %v4957 = vpack.c.b16 %v4793, %v4789
        %v4958 = vpack.c.b16 %v4794, %v4790
        %v4959 = vpack.c.b16 %v4799, %v4795
        %v4960 = vpack.c.b16 %v4800, %v4796
        %v4961 = vpack.c.b16 %v4801, %v4797
        %v4962 = vpack.c.b16 %v4802, %v4798
        %v4963 = vpack.c.b16 %v4807, %v4803
        %v4964 = vpack.c.b16 %v4808, %v4804
        %v4965 = vpack.c.b16 %v4809, %v4805
        %v4966 = vpack.c.b16 %v4810, %v4806
        %v4967 = vpack.c.b16 %v4815, %v4811
        %v4968 = vpack.c.b16 %v4816, %v4812
        %v4969 = vpack.c.b16 %v4817, %v4813
        %v4970 = vpack.c.b16 %v4818, %v4814
        %v4971 = vpack.c.b16 %v4823, %v4819
        %v4972 = vpack.c.b16 %v4824, %v4820
        %v4973 = vpack.c.b16 %v4825, %v4821
        %v4974 = vpack.c.b16 %v4826, %v4822
        %v4975 = vpack.c.b16 %v4831, %v4827
        %v4976 = vpack.c.b16 %v4832, %v4828
        %v4977 = vpack.c.b16 %v4833, %v4829
        %v4978 = vpack.c.b16 %v4834, %v4830
        %v4979 = vpack.c.b16 %v4839, %v4835
        %v4980 = vpack.c.b16 %v4840, %v4836
        %v4981 = vpack.c.b16 %v4841, %v4837
        %v4982 = vpack.c.b16 %v4842, %v4838
        %v4983 = vpack.c.b16 %v4847, %v4843
        %v4984 = vpack.c.b16 %v4848, %v4844
        %v4985 = vpack.c.b16 %v4849, %v4845
        %v4986 = vpack.c.b16 %v4850, %v4846
        %v4987 = vpack.c.b16 %v4855, %v4851
        %v4988 = vpack.c.b16 %v4856, %v4852
        %v4989 = vpack.c.b16 %v4857, %v4853
        %v4990 = vpack.c.b16 %v4858, %v4854
        %v4991 = vpack.c.b16 %v4863, %v4859
        %v4992 = vpack.c.b16 %v4864, %v4860
        %v4993 = vpack.c.b16 %v4865, %v4861
        %v4994 = vpack.c.b16 %v4866, %v4862
        %5123 = vmatpush.bf16.msra.mxu0 %v4895
        %5124 = vmatpush.bf16.msra.mxu0 %v4891
        %5125 = vmatpush.bf16.msra.mxu0 %v4887
        %5126 = vmatpush.bf16.msra.mxu0 %v4883
        %5127 = vmatpush.bf16.msra.mxu0 %v4879
        %5128 = vmatpush.bf16.msra.mxu0 %v4875
        %5129 = vmatpush.bf16.msra.mxu0 %v4871
        %5130 = vmatpush.bf16.msra.mxu0 %v4867
        %5131 = vmatmul.bf16.gmra.mxu0 %v431
        %v5132 = vpop.f32.mrf.mxu0
        %v5133 = vadd.f32 0.0, %v5132
        %v5134 = vpop.f32.mrf.mxu0
        %5135 = vdwg.mxu0
        %5136 = vmatpush.bf16.msra.mxu0 %v4927
        %5137 = vmatpush.bf16.msra.mxu0 %v4923
        %5138 = vmatpush.bf16.msra.mxu0 %v4919
        %5139 = vmatpush.bf16.msra.mxu0 %v4915
        %5140 = vmatpush.bf16.msra.mxu0 %v4911
        %5141 = vmatpush.bf16.msra.mxu0 %v4907
        %5142 = vmatpush.bf16.msra.mxu0 %v4903
        %5143 = vmatpush.bf16.msra.mxu0 %v4899
        %5144 = vmatmul.bf16.gmra.mxu0 %v432
        %v5145 = vpop.f32.mrf.mxu0
        %v5146 = vadd.f32 %v5133, %v5145
        %v5147 = vpop.f32.mrf.mxu0
        %5148 = vdwg.mxu0
        %5149 = vmatpush.bf16.msra.mxu0 %v4959
        %5150 = vmatpush.bf16.msra.mxu0 %v4955
        %5151 = vmatpush.bf16.msra.mxu0 %v4951
        %5152 = vmatpush.bf16.msra.mxu0 %v4947
        %5153 = vmatpush.bf16.msra.mxu0 %v4943
        %5154 = vmatpush.bf16.msra.mxu0 %v4939
        %5155 = vmatpush.bf16.msra.mxu0 %v4935
        %5156 = vmatpush.bf16.msra.mxu0 %v4931
        %5157 = vmatmul.bf16.gmra.mxu0 %v433
        %v5158 = vpop.f32.mrf.mxu0
        %v5159 = vadd.f32 %v5146, %v5158
        %v5160 = vpop.f32.mrf.mxu0
        %5161 = vdwg.mxu0
        %5162 = vmatpush.bf16.msra.mxu0 %v4991
        %5163 = vmatpush.bf16.msra.mxu0 %v4987
        %5164 = vmatpush.bf16.msra.mxu0 %v4983
        %5165 = vmatpush.bf16.msra.mxu0 %v4979
        %5166 = vmatpush.bf16.msra.mxu0 %v4975
        %5167 = vmatpush.bf16.msra.mxu0 %v4971
        %5168 = vmatpush.bf16.msra.mxu0 %v4967
        %5169 = vmatpush.bf16.msra.mxu0 %v4963
        %5170 = vmatmul.bf16.gmra.mxu0 %v434
        %v5171 = vpop.f32.mrf.mxu0
        %v5172 = vadd.f32 %v5159, %v5171
        %v5173 = vpop.f32.mrf.mxu0
        %5174 = vdwg.mxu0
        %5175 = vmatpush.bf16.msra.mxu0 %v4896
        %5176 = vmatpush.bf16.msra.mxu0 %v4892
        %5177 = vmatpush.bf16.msra.mxu0 %v4888
        %5178 = vmatpush.bf16.msra.mxu0 %v4884
        %5179 = vmatpush.bf16.msra.mxu0 %v4880
        %5180 = vmatpush.bf16.msra.mxu0 %v4876
        %5181 = vmatpush.bf16.msra.mxu0 %v4872
        %5182 = vmatpush.bf16.msra.mxu0 %v4868
        %5183 = vmatmul.bf16.gmra.mxu0 %v431
        %v5184 = vpop.f32.mrf.mxu0
        %v5185 = vadd.f32 0.0, %v5184
        %v5186 = vpop.f32.mrf.mxu0
        %5187 = vdwg.mxu0
        %5188 = vmatpush.bf16.msra.mxu0 %v4928
        %5189 = vmatpush.bf16.msra.mxu0 %v4924
        %5190 = vmatpush.bf16.msra.mxu0 %v4920
        %5191 = vmatpush.bf16.msra.mxu0 %v4916
        %5192 = vmatpush.bf16.msra.mxu0 %v4912
        %5193 = vmatpush.bf16.msra.mxu0 %v4908
        %5194 = vmatpush.bf16.msra.mxu0 %v4904
        %5195 = vmatpush.bf16.msra.mxu0 %v4900
        %5196 = vmatmul.bf16.gmra.mxu0 %v432
        %v5197 = vpop.f32.mrf.mxu0
        %v5198 = vadd.f32 %v5185, %v5197
        %v5199 = vpop.f32.mrf.mxu0
        %5200 = vdwg.mxu0
        %5201 = vmatpush.bf16.msra.mxu0 %v4960
        %5202 = vmatpush.bf16.msra.mxu0 %v4956
        %5203 = vmatpush.bf16.msra.mxu0 %v4952
        %5204 = vmatpush.bf16.msra.mxu0 %v4948
        %5205 = vmatpush.bf16.msra.mxu0 %v4944
        %5206 = vmatpush.bf16.msra.mxu0 %v4940
        %5207 = vmatpush.bf16.msra.mxu0 %v4936
        %5208 = vmatpush.bf16.msra.mxu0 %v4932
        %5209 = vmatmul.bf16.gmra.mxu0 %v433
        %v5210 = vpop.f32.mrf.mxu0
        %v5211 = vadd.f32 %v5198, %v5210
        %v5212 = vpop.f32.mrf.mxu0
        %5213 = vdwg.mxu0
        %5214 = vmatpush.bf16.msra.mxu0 %v4992
        %5215 = vmatpush.bf16.msra.mxu0 %v4988
        %5216 = vmatpush.bf16.msra.mxu0 %v4984
        %5217 = vmatpush.bf16.msra.mxu0 %v4980
        %5218 = vmatpush.bf16.msra.mxu0 %v4976
        %5219 = vmatpush.bf16.msra.mxu0 %v4972
        %5220 = vmatpush.bf16.msra.mxu0 %v4968
        %5221 = vmatpush.bf16.msra.mxu0 %v4964
        %5222 = vmatmul.bf16.gmra.mxu0 %v434
        %v5223 = vpop.f32.mrf.mxu0
        %v5224 = vadd.f32 %v5211, %v5223
        %v5225 = vpop.f32.mrf.mxu0
        %5226 = vdwg.mxu0
        %5227 = vmatpush.bf16.msra.mxu0 %v4897
        %5228 = vmatpush.bf16.msra.mxu0 %v4893
        %5229 = vmatpush.bf16.msra.mxu0 %v4889
        %5230 = vmatpush.bf16.msra.mxu0 %v4885
        %5231 = vmatpush.bf16.msra.mxu0 %v4881
        %5232 = vmatpush.bf16.msra.mxu0 %v4877
        %5233 = vmatpush.bf16.msra.mxu0 %v4873
        %5234 = vmatpush.bf16.msra.mxu0 %v4869
        %5235 = vmatmul.bf16.gmra.mxu0 %v431
        %v5236 = vpop.f32.mrf.mxu0
        %v5237 = vadd.f32 0.0, %v5236
        %v5238 = vpop.f32.mrf.mxu0
        %5239 = vdwg.mxu0
        %5240 = vmatpush.bf16.msra.mxu0 %v4929
        %5241 = vmatpush.bf16.msra.mxu0 %v4925
        %5242 = vmatpush.bf16.msra.mxu0 %v4921
        %5243 = vmatpush.bf16.msra.mxu0 %v4917
        %5244 = vmatpush.bf16.msra.mxu0 %v4913
        %5245 = vmatpush.bf16.msra.mxu0 %v4909
        %5246 = vmatpush.bf16.msra.mxu0 %v4905
        %5247 = vmatpush.bf16.msra.mxu0 %v4901
        %5248 = vmatmul.bf16.gmra.mxu0 %v432
        %v5249 = vpop.f32.mrf.mxu0
        %v5250 = vadd.f32 %v5237, %v5249
        %v5251 = vpop.f32.mrf.mxu0
        %5252 = vdwg.mxu0
        %5253 = vmatpush.bf16.msra.mxu0 %v4961
        %5254 = vmatpush.bf16.msra.mxu0 %v4957
        %5255 = vmatpush.bf16.msra.mxu0 %v4953
        %5256 = vmatpush.bf16.msra.mxu0 %v4949
        %5257 = vmatpush.bf16.msra.mxu0 %v4945
        %5258 = vmatpush.bf16.msra.mxu0 %v4941
        %5259 = vmatpush.bf16.msra.mxu0 %v4937
        %5260 = vmatpush.bf16.msra.mxu0 %v4933
        %5261 = vmatmul.bf16.gmra.mxu0 %v433
        %v5262 = vpop.f32.mrf.mxu0
        %v5263 = vadd.f32 %v5250, %v5262
        %v5264 = vpop.f32.mrf.mxu0
        %5265 = vdwg.mxu0
        %5266 = vmatpush.bf16.msra.mxu0 %v4993
        %5267 = vmatpush.bf16.msra.mxu0 %v4989
        %5268 = vmatpush.bf16.msra.mxu0 %v4985
        %5269 = vmatpush.bf16.msra.mxu0 %v4981
        %5270 = vmatpush.bf16.msra.mxu0 %v4977
        %5271 = vmatpush.bf16.msra.mxu0 %v4973
        %5272 = vmatpush.bf16.msra.mxu0 %v4969
        %5273 = vmatpush.bf16.msra.mxu0 %v4965
        %5274 = vmatmul.bf16.gmra.mxu0 %v434
        %v5275 = vpop.f32.mrf.mxu0
        %v5276 = vadd.f32 %v5263, %v5275
        %v5277 = vpop.f32.mrf.mxu0
        %5278 = vdwg.mxu0
        %5279 = vmatpush.bf16.msra.mxu0 %v4898
        %5280 = vmatpush.bf16.msra.mxu0 %v4894
        %5281 = vmatpush.bf16.msra.mxu0 %v4890
        %5282 = vmatpush.bf16.msra.mxu0 %v4886
        %5283 = vmatpush.bf16.msra.mxu0 %v4882
        %5284 = vmatpush.bf16.msra.mxu0 %v4878
        %5285 = vmatpush.bf16.msra.mxu0 %v4874
        %5286 = vmatpush.bf16.msra.mxu0 %v4870
        %5287 = vmatmul.bf16.gmra.mxu0 %v431
        %v5288 = vpop.f32.mrf.mxu0
        %v5289 = vadd.f32 0.0, %v5288
        %v5290 = vpop.f32.mrf.mxu0
        %5291 = vdwg.mxu0
        %5292 = vmatpush.bf16.msra.mxu0 %v4930
        %5293 = vmatpush.bf16.msra.mxu0 %v4926
        %5294 = vmatpush.bf16.msra.mxu0 %v4922
        %5295 = vmatpush.bf16.msra.mxu0 %v4918
        %5296 = vmatpush.bf16.msra.mxu0 %v4914
        %5297 = vmatpush.bf16.msra.mxu0 %v4910
        %5298 = vmatpush.bf16.msra.mxu0 %v4906
        %5299 = vmatpush.bf16.msra.mxu0 %v4902
        %5300 = vmatmul.bf16.gmra.mxu0 %v432
        %v5301 = vpop.f32.mrf.mxu0
        %v5302 = vadd.f32 %v5289, %v5301
        %v5303 = vpop.f32.mrf.mxu0
        %5304 = vdwg.mxu0
        %5305 = vmatpush.bf16.msra.mxu0 %v4962
        %5306 = vmatpush.bf16.msra.mxu0 %v4958
        %5307 = vmatpush.bf16.msra.mxu0 %v4954
        %5308 = vmatpush.bf16.msra.mxu0 %v4950
        %5309 = vmatpush.bf16.msra.mxu0 %v4946
        %5310 = vmatpush.bf16.msra.mxu0 %v4942
        %5311 = vmatpush.bf16.msra.mxu0 %v4938
        %5312 = vmatpush.bf16.msra.mxu0 %v4934
        %5313 = vmatmul.bf16.gmra.mxu0 %v433
        %v5314 = vpop.f32.mrf.mxu0
        %v5315 = vadd.f32 %v5302, %v5314
        %v5316 = vpop.f32.mrf.mxu0
        %5317 = vdwg.mxu0
        %5318 = vmatpush.bf16.msra.mxu0 %v4994
        %5319 = vmatpush.bf16.msra.mxu0 %v4990
        %5320 = vmatpush.bf16.msra.mxu0 %v4986
        %5321 = vmatpush.bf16.msra.mxu0 %v4982
        %5322 = vmatpush.bf16.msra.mxu0 %v4978
        %5323 = vmatpush.bf16.msra.mxu0 %v4974
        %5324 = vmatpush.bf16.msra.mxu0 %v4970
        %5325 = vmatpush.bf16.msra.mxu0 %v4966
        %5326 = vmatmul.bf16.gmra.mxu0 %v434
        %v5327 = vpop.f32.mrf.mxu0
        %v5328 = vadd.f32 %v5315, %v5327
        %v5329 = vpop.f32.mrf.mxu0
        %5330 = vdwg.mxu0
        %v5331 = vpack.c.bf16 %v5224, %v5172
        %v5332 = vpack.c.bf16 %v5328, %v5276
        %v5333 = vld [vmem:[%s2 + $0x8] sm:$0xf]
        %v5335 = vperm.slane %v5333, 0
        %v5336 = vperm.slane %v5333, 1
        %v5337 = vperm.slane %v5333, 2
        %v5338 = vperm.slane %v5333, 3
        %v5343 = vpack.c.bf16 %v5336, %v5335
        %v5344 = vpack.c.bf16 %v5338, %v5337
        %v5347 = vunpack.c.l.b16 %v5343
        %v5348 = vunpack.c.h.b16 %v5343
        %v5349 = vunpack.c.l.b16 %v5344
        %v5350 = vunpack.c.h.b16 %v5344
        %v5351 = vpack.c.b16 %v5347, %v5347
        %v5352 = vpack.c.b16 %v5348, %v5348
        %v5353 = vpack.c.b16 %v5349, %v5349
        %v5354 = vpack.c.b16 %v5350, %v5350
        %v5356 = vpack.i.b16 %v5351, %v5351
        %v5358 = vperm.slane %v5356, 0
        %v5360 = vpack.i.b16 %v5352, %v5352
        %v5362 = vperm.slane %v5360, 0
        %v5364 = vpack.i.b16 %v5353, %v5353
        %v5366 = vperm.slane %v5364, 0
        %v5368 = vpack.i.b16 %v5354, %v5354
        %v5370 = vperm.slane %v5368, 0
        %v5371 = vunpack.c.l.bf16 %v5331
        %v5372 = vunpack.c.h.bf16 %v5331
        %v5373 = vunpack.c.l.bf16 %v5332
        %v5374 = vunpack.c.h.bf16 %v5332
        %v5375 = vunpack.c.l.bf16 %v5358
        %v5376 = vunpack.c.l.bf16 %v5362
        %v5377 = vunpack.c.l.bf16 %v5366
        %v5378 = vunpack.c.l.bf16 %v5370
        %v5379 = vadd.f32 %v5371, %v5375
        %v5380 = vadd.f32 %v5372, %v5376
        %v5381 = vadd.f32 %v5373, %v5377
        %v5382 = vadd.f32 %v5374, %v5378
        %v5383 = vpack.c.bf16 %v5380, %v5379
        %v5384 = vpack.c.bf16 %v5382, %v5381
        %v5385 = vunpack.c.l.bf16 %v5383
        %v5386 = vunpack.c.h.bf16 %v5383
        %v5387 = vunpack.c.l.bf16 %v5384
        %v5388 = vunpack.c.h.bf16 %v5384
        %v5389 = vmax.f32 %v5385, 0.0
        %v5390 = vmax.f32 %v5386, 0.0
        %v5391 = vmax.f32 %v5387, 0.0
        %v5392 = vmax.f32 %v5388, 0.0
        %v5393 = vpack.c.bf16 %v5389, %v5389
        %v5394 = vpack.c.bf16 %v5390, %v5390
        %v5395 = vpack.c.bf16 %v5391, %v5391
        %v5396 = vpack.c.bf16 %v5392, %v5392
        %v5397 = vld [vmem:[%s3 + $0x800] sm:$0xff]
        %v5398 = vld [vmem:[%s3 + $0x808] sm:$0xff]
        %v5399 = vld [vmem:[%s3 + $0x810] sm:$0xff]
        %v5400 = vld [vmem:[%s3 + $0x818] sm:$0xff]
        %v5401 = vld [vmem:[%s3 + $0x820] sm:$0xff]
        %v5402 = vld [vmem:[%s3 + $0x828] sm:$0xff]
        %v5403 = vld [vmem:[%s3 + $0x830] sm:$0xff]
        %v5404 = vld [vmem:[%s3 + $0x838] sm:$0xff]
        %v5405 = vld [vmem:[%s3 + $0x840] sm:$0xff]
        %v5406 = vld [vmem:[%s3 + $0x848] sm:$0xff]
        %v5407 = vld [vmem:[%s3 + $0x850] sm:$0xff]
        %v5408 = vld [vmem:[%s3 + $0x858] sm:$0xff]
        %v5409 = vld [vmem:[%s3 + $0x860] sm:$0xff]
        %v5410 = vld [vmem:[%s3 + $0x868] sm:$0xff]
        %v5411 = vld [vmem:[%s3 + $0x870] sm:$0xff]
        %v5412 = vld [vmem:[%s3 + $0x878] sm:$0xff]
        %v5413 = vld [vmem:[%s3 + $0x880] sm:$0xff]
        %v5414 = vld [vmem:[%s3 + $0x888] sm:$0xff]
        %v5415 = vld [vmem:[%s3 + $0x890] sm:$0xff]
        %v5416 = vld [vmem:[%s3 + $0x898] sm:$0xff]
        %v5417 = vld [vmem:[%s3 + $0x8a0] sm:$0xff]
        %v5418 = vld [vmem:[%s3 + $0x8a8] sm:$0xff]
        %v5419 = vld [vmem:[%s3 + $0x8b0] sm:$0xff]
        %v5420 = vld [vmem:[%s3 + $0x8b8] sm:$0xff]
        %v5421 = vld [vmem:[%s3 + $0x8c0] sm:$0xff]
        %v5422 = vld [vmem:[%s3 + $0x8c8] sm:$0xff]
        %v5423 = vld [vmem:[%s3 + $0x8d0] sm:$0xff]
        %v5424 = vld [vmem:[%s3 + $0x8d8] sm:$0xff]
        %v5425 = vld [vmem:[%s3 + $0x8e0] sm:$0xff]
        %v5426 = vld [vmem:[%s3 + $0x8e8] sm:$0xff]
        %v5427 = vld [vmem:[%s3 + $0x8f0] sm:$0xff]
        %v5428 = vld [vmem:[%s3 + $0x8f8] sm:$0xff]
        %v5429 = vld [vmem:[%s3 + $0x900] sm:$0xff]
        %v5430 = vld [vmem:[%s3 + $0x908] sm:$0xff]
        %v5431 = vld [vmem:[%s3 + $0x910] sm:$0xff]
        %v5432 = vld [vmem:[%s3 + $0x918] sm:$0xff]
        %v5433 = vld [vmem:[%s3 + $0x920] sm:$0xff]
        %v5434 = vld [vmem:[%s3 + $0x928] sm:$0xff]
        %v5435 = vld [vmem:[%s3 + $0x930] sm:$0xff]
        %v5436 = vld [vmem:[%s3 + $0x938] sm:$0xff]
        %v5437 = vld [vmem:[%s3 + $0x940] sm:$0xff]
        %v5438 = vld [vmem:[%s3 + $0x948] sm:$0xff]
        %v5439 = vld [vmem:[%s3 + $0x950] sm:$0xff]
        %v5440 = vld [vmem:[%s3 + $0x958] sm:$0xff]
        %v5441 = vld [vmem:[%s3 + $0x960] sm:$0xff]
        %v5442 = vld [vmem:[%s3 + $0x968] sm:$0xff]
        %v5443 = vld [vmem:[%s3 + $0x970] sm:$0xff]
        %v5444 = vld [vmem:[%s3 + $0x978] sm:$0xff]
        %v5445 = vld [vmem:[%s3 + $0x980] sm:$0xff]
        %v5446 = vld [vmem:[%s3 + $0x988] sm:$0xff]
        %v5447 = vld [vmem:[%s3 + $0x990] sm:$0xff]
        %v5448 = vld [vmem:[%s3 + $0x998] sm:$0xff]
        %v5449 = vld [vmem:[%s3 + $0x9a0] sm:$0xff]
        %v5450 = vld [vmem:[%s3 + $0x9a8] sm:$0xff]
        %v5451 = vld [vmem:[%s3 + $0x9b0] sm:$0xff]
        %v5452 = vld [vmem:[%s3 + $0x9b8] sm:$0xff]
        %v5453 = vld [vmem:[%s3 + $0x9c0] sm:$0xff]
        %v5454 = vld [vmem:[%s3 + $0x9c8] sm:$0xff]
        %v5455 = vld [vmem:[%s3 + $0x9d0] sm:$0xff]
        %v5456 = vld [vmem:[%s3 + $0x9d8] sm:$0xff]
        %v5457 = vld [vmem:[%s3 + $0x9e0] sm:$0xff]
        %v5458 = vld [vmem:[%s3 + $0x9e8] sm:$0xff]
        %v5459 = vld [vmem:[%s3 + $0x9f0] sm:$0xff]
        %v5460 = vld [vmem:[%s3 + $0x9f8] sm:$0xff]
        %v5461 = vld [vmem:[%s3 + $0xa00] sm:$0xff]
        %v5462 = vld [vmem:[%s3 + $0xa08] sm:$0xff]
        %v5463 = vld [vmem:[%s3 + $0xa10] sm:$0xff]
        %v5464 = vld [vmem:[%s3 + $0xa18] sm:$0xff]
        %v5465 = vld [vmem:[%s3 + $0xa20] sm:$0xff]
        %v5466 = vld [vmem:[%s3 + $0xa28] sm:$0xff]
        %v5467 = vld [vmem:[%s3 + $0xa30] sm:$0xff]
        %v5468 = vld [vmem:[%s3 + $0xa38] sm:$0xff]
        %v5469 = vld [vmem:[%s3 + $0xa40] sm:$0xff]
        %v5470 = vld [vmem:[%s3 + $0xa48] sm:$0xff]
        %v5471 = vld [vmem:[%s3 + $0xa50] sm:$0xff]
        %v5472 = vld [vmem:[%s3 + $0xa58] sm:$0xff]
        %v5473 = vld [vmem:[%s3 + $0xa60] sm:$0xff]
        %v5474 = vld [vmem:[%s3 + $0xa68] sm:$0xff]
        %v5475 = vld [vmem:[%s3 + $0xa70] sm:$0xff]
        %v5476 = vld [vmem:[%s3 + $0xa78] sm:$0xff]
        %v5477 = vld [vmem:[%s3 + $0xa80] sm:$0xff]
        %v5478 = vld [vmem:[%s3 + $0xa88] sm:$0xff]
        %v5479 = vld [vmem:[%s3 + $0xa90] sm:$0xff]
        %v5480 = vld [vmem:[%s3 + $0xa98] sm:$0xff]
        %v5481 = vld [vmem:[%s3 + $0xaa0] sm:$0xff]
        %v5482 = vld [vmem:[%s3 + $0xaa8] sm:$0xff]
        %v5483 = vld [vmem:[%s3 + $0xab0] sm:$0xff]
        %v5484 = vld [vmem:[%s3 + $0xab8] sm:$0xff]
        %v5485 = vld [vmem:[%s3 + $0xac0] sm:$0xff]
        %v5486 = vld [vmem:[%s3 + $0xac8] sm:$0xff]
        %v5487 = vld [vmem:[%s3 + $0xad0] sm:$0xff]
        %v5488 = vld [vmem:[%s3 + $0xad8] sm:$0xff]
        %v5489 = vld [vmem:[%s3 + $0xae0] sm:$0xff]
        %v5490 = vld [vmem:[%s3 + $0xae8] sm:$0xff]
        %v5491 = vld [vmem:[%s3 + $0xaf0] sm:$0xff]
        %v5492 = vld [vmem:[%s3 + $0xaf8] sm:$0xff]
        %v5493 = vld [vmem:[%s3 + $0xb00] sm:$0xff]
        %v5494 = vld [vmem:[%s3 + $0xb08] sm:$0xff]
        %v5495 = vld [vmem:[%s3 + $0xb10] sm:$0xff]
        %v5496 = vld [vmem:[%s3 + $0xb18] sm:$0xff]
        %v5497 = vld [vmem:[%s3 + $0xb20] sm:$0xff]
        %v5498 = vld [vmem:[%s3 + $0xb28] sm:$0xff]
        %v5499 = vld [vmem:[%s3 + $0xb30] sm:$0xff]
        %v5500 = vld [vmem:[%s3 + $0xb38] sm:$0xff]
        %v5501 = vld [vmem:[%s3 + $0xb40] sm:$0xff]
        %v5502 = vld [vmem:[%s3 + $0xb48] sm:$0xff]
        %v5503 = vld [vmem:[%s3 + $0xb50] sm:$0xff]
        %v5504 = vld [vmem:[%s3 + $0xb58] sm:$0xff]
        %v5505 = vld [vmem:[%s3 + $0xb60] sm:$0xff]
        %v5506 = vld [vmem:[%s3 + $0xb68] sm:$0xff]
        %v5507 = vld [vmem:[%s3 + $0xb70] sm:$0xff]
        %v5508 = vld [vmem:[%s3 + $0xb78] sm:$0xff]
        %v5509 = vld [vmem:[%s3 + $0xb80] sm:$0xff]
        %v5510 = vld [vmem:[%s3 + $0xb88] sm:$0xff]
        %v5511 = vld [vmem:[%s3 + $0xb90] sm:$0xff]
        %v5512 = vld [vmem:[%s3 + $0xb98] sm:$0xff]
        %v5513 = vld [vmem:[%s3 + $0xba0] sm:$0xff]
        %v5514 = vld [vmem:[%s3 + $0xba8] sm:$0xff]
        %v5515 = vld [vmem:[%s3 + $0xbb0] sm:$0xff]
        %v5516 = vld [vmem:[%s3 + $0xbb8] sm:$0xff]
        %v5517 = vld [vmem:[%s3 + $0xbc0] sm:$0xff]
        %v5518 = vld [vmem:[%s3 + $0xbc8] sm:$0xff]
        %v5519 = vld [vmem:[%s3 + $0xbd0] sm:$0xff]
        %v5520 = vld [vmem:[%s3 + $0xbd8] sm:$0xff]
        %v5521 = vld [vmem:[%s3 + $0xbe0] sm:$0xff]
        %v5522 = vld [vmem:[%s3 + $0xbe8] sm:$0xff]
        %v5523 = vld [vmem:[%s3 + $0xbf0] sm:$0xff]
        %v5524 = vld [vmem:[%s3 + $0xbf8] sm:$0xff]
        %v5653 = vunpack.c.l.b16 %v5397
        %v5654 = vunpack.c.h.b16 %v5397
        %v5655 = vunpack.c.l.b16 %v5398
        %v5656 = vunpack.c.h.b16 %v5398
        %v5657 = vunpack.c.l.b16 %v5399
        %v5658 = vunpack.c.h.b16 %v5399
        %v5659 = vunpack.c.l.b16 %v5400
        %v5660 = vunpack.c.h.b16 %v5400
        %v5661 = vunpack.c.l.b16 %v5401
        %v5662 = vunpack.c.h.b16 %v5401
        %v5663 = vunpack.c.l.b16 %v5402
        %v5664 = vunpack.c.h.b16 %v5402
        %v5665 = vunpack.c.l.b16 %v5403
        %v5666 = vunpack.c.h.b16 %v5403
        %v5667 = vunpack.c.l.b16 %v5404
        %v5668 = vunpack.c.h.b16 %v5404
        %v5669 = vunpack.c.l.b16 %v5405
        %v5670 = vunpack.c.h.b16 %v5405
        %v5671 = vunpack.c.l.b16 %v5406
        %v5672 = vunpack.c.h.b16 %v5406
        %v5673 = vunpack.c.l.b16 %v5407
        %v5674 = vunpack.c.h.b16 %v5407
        %v5675 = vunpack.c.l.b16 %v5408
        %v5676 = vunpack.c.h.b16 %v5408
        %v5677 = vunpack.c.l.b16 %v5409
        %v5678 = vunpack.c.h.b16 %v5409
        %v5679 = vunpack.c.l.b16 %v5410
        %v5680 = vunpack.c.h.b16 %v5410
        %v5681 = vunpack.c.l.b16 %v5411
        %v5682 = vunpack.c.h.b16 %v5411
        %v5683 = vunpack.c.l.b16 %v5412
        %v5684 = vunpack.c.h.b16 %v5412
        %v5685 = vunpack.c.l.b16 %v5413
        %v5686 = vunpack.c.h.b16 %v5413
        %v5687 = vunpack.c.l.b16 %v5414
        %v5688 = vunpack.c.h.b16 %v5414
        %v5689 = vunpack.c.l.b16 %v5415
        %v5690 = vunpack.c.h.b16 %v5415
        %v5691 = vunpack.c.l.b16 %v5416
        %v5692 = vunpack.c.h.b16 %v5416
        %v5693 = vunpack.c.l.b16 %v5417
        %v5694 = vunpack.c.h.b16 %v5417
        %v5695 = vunpack.c.l.b16 %v5418
        %v5696 = vunpack.c.h.b16 %v5418
        %v5697 = vunpack.c.l.b16 %v5419
        %v5698 = vunpack.c.h.b16 %v5419
        %v5699 = vunpack.c.l.b16 %v5420
        %v5700 = vunpack.c.h.b16 %v5420
        %v5701 = vunpack.c.l.b16 %v5421
        %v5702 = vunpack.c.h.b16 %v5421
        %v5703 = vunpack.c.l.b16 %v5422
        %v5704 = vunpack.c.h.b16 %v5422
        %v5705 = vunpack.c.l.b16 %v5423
        %v5706 = vunpack.c.h.b16 %v5423
        %v5707 = vunpack.c.l.b16 %v5424
        %v5708 = vunpack.c.h.b16 %v5424
        %v5709 = vunpack.c.l.b16 %v5425
        %v5710 = vunpack.c.h.b16 %v5425
        %v5711 = vunpack.c.l.b16 %v5426
        %v5712 = vunpack.c.h.b16 %v5426
        %v5713 = vunpack.c.l.b16 %v5427
        %v5714 = vunpack.c.h.b16 %v5427
        %v5715 = vunpack.c.l.b16 %v5428
        %v5716 = vunpack.c.h.b16 %v5428
        %v5717 = vunpack.c.l.b16 %v5429
        %v5718 = vunpack.c.h.b16 %v5429
        %v5719 = vunpack.c.l.b16 %v5430
        %v5720 = vunpack.c.h.b16 %v5430
        %v5721 = vunpack.c.l.b16 %v5431
        %v5722 = vunpack.c.h.b16 %v5431
        %v5723 = vunpack.c.l.b16 %v5432
        %v5724 = vunpack.c.h.b16 %v5432
        %v5725 = vunpack.c.l.b16 %v5433
        %v5726 = vunpack.c.h.b16 %v5433
        %v5727 = vunpack.c.l.b16 %v5434
        %v5728 = vunpack.c.h.b16 %v5434
        %v5729 = vunpack.c.l.b16 %v5435
        %v5730 = vunpack.c.h.b16 %v5435
        %v5731 = vunpack.c.l.b16 %v5436
        %v5732 = vunpack.c.h.b16 %v5436
        %v5733 = vunpack.c.l.b16 %v5437
        %v5734 = vunpack.c.h.b16 %v5437
        %v5735 = vunpack.c.l.b16 %v5438
        %v5736 = vunpack.c.h.b16 %v5438
        %v5737 = vunpack.c.l.b16 %v5439
        %v5738 = vunpack.c.h.b16 %v5439
        %v5739 = vunpack.c.l.b16 %v5440
        %v5740 = vunpack.c.h.b16 %v5440
        %v5741 = vunpack.c.l.b16 %v5441
        %v5742 = vunpack.c.h.b16 %v5441
        %v5743 = vunpack.c.l.b16 %v5442
        %v5744 = vunpack.c.h.b16 %v5442
        %v5745 = vunpack.c.l.b16 %v5443
        %v5746 = vunpack.c.h.b16 %v5443
        %v5747 = vunpack.c.l.b16 %v5444
        %v5748 = vunpack.c.h.b16 %v5444
        %v5749 = vunpack.c.l.b16 %v5445
        %v5750 = vunpack.c.h.b16 %v5445
        %v5751 = vunpack.c.l.b16 %v5446
        %v5752 = vunpack.c.h.b16 %v5446
        %v5753 = vunpack.c.l.b16 %v5447
        %v5754 = vunpack.c.h.b16 %v5447
        %v5755 = vunpack.c.l.b16 %v5448
        %v5756 = vunpack.c.h.b16 %v5448
        %v5757 = vunpack.c.l.b16 %v5449
        %v5758 = vunpack.c.h.b16 %v5449
        %v5759 = vunpack.c.l.b16 %v5450
        %v5760 = vunpack.c.h.b16 %v5450
        %v5761 = vunpack.c.l.b16 %v5451
        %v5762 = vunpack.c.h.b16 %v5451
        %v5763 = vunpack.c.l.b16 %v5452
        %v5764 = vunpack.c.h.b16 %v5452
        %v5765 = vunpack.c.l.b16 %v5453
        %v5766 = vunpack.c.h.b16 %v5453
        %v5767 = vunpack.c.l.b16 %v5454
        %v5768 = vunpack.c.h.b16 %v5454
        %v5769 = vunpack.c.l.b16 %v5455
        %v5770 = vunpack.c.h.b16 %v5455
        %v5771 = vunpack.c.l.b16 %v5456
        %v5772 = vunpack.c.h.b16 %v5456
        %v5773 = vunpack.c.l.b16 %v5457
        %v5774 = vunpack.c.h.b16 %v5457
        %v5775 = vunpack.c.l.b16 %v5458
        %v5776 = vunpack.c.h.b16 %v5458
        %v5777 = vunpack.c.l.b16 %v5459
        %v5778 = vunpack.c.h.b16 %v5459
        %v5779 = vunpack.c.l.b16 %v5460
        %v5780 = vunpack.c.h.b16 %v5460
        %v5781 = vunpack.c.l.b16 %v5461
        %v5782 = vunpack.c.h.b16 %v5461
        %v5783 = vunpack.c.l.b16 %v5462
        %v5784 = vunpack.c.h.b16 %v5462
        %v5785 = vunpack.c.l.b16 %v5463
        %v5786 = vunpack.c.h.b16 %v5463
        %v5787 = vunpack.c.l.b16 %v5464
        %v5788 = vunpack.c.h.b16 %v5464
        %v5789 = vunpack.c.l.b16 %v5465
        %v5790 = vunpack.c.h.b16 %v5465
        %v5791 = vunpack.c.l.b16 %v5466
        %v5792 = vunpack.c.h.b16 %v5466
        %v5793 = vunpack.c.l.b16 %v5467
        %v5794 = vunpack.c.h.b16 %v5467
        %v5795 = vunpack.c.l.b16 %v5468
        %v5796 = vunpack.c.h.b16 %v5468
        %v5797 = vunpack.c.l.b16 %v5469
        %v5798 = vunpack.c.h.b16 %v5469
        %v5799 = vunpack.c.l.b16 %v5470
        %v5800 = vunpack.c.h.b16 %v5470
        %v5801 = vunpack.c.l.b16 %v5471
        %v5802 = vunpack.c.h.b16 %v5471
        %v5803 = vunpack.c.l.b16 %v5472
        %v5804 = vunpack.c.h.b16 %v5472
        %v5805 = vunpack.c.l.b16 %v5473
        %v5806 = vunpack.c.h.b16 %v5473
        %v5807 = vunpack.c.l.b16 %v5474
        %v5808 = vunpack.c.h.b16 %v5474
        %v5809 = vunpack.c.l.b16 %v5475
        %v5810 = vunpack.c.h.b16 %v5475
        %v5811 = vunpack.c.l.b16 %v5476
        %v5812 = vunpack.c.h.b16 %v5476
        %v5813 = vunpack.c.l.b16 %v5477
        %v5814 = vunpack.c.h.b16 %v5477
        %v5815 = vunpack.c.l.b16 %v5478
        %v5816 = vunpack.c.h.b16 %v5478
        %v5817 = vunpack.c.l.b16 %v5479
        %v5818 = vunpack.c.h.b16 %v5479
        %v5819 = vunpack.c.l.b16 %v5480
        %v5820 = vunpack.c.h.b16 %v5480
        %v5821 = vunpack.c.l.b16 %v5481
        %v5822 = vunpack.c.h.b16 %v5481
        %v5823 = vunpack.c.l.b16 %v5482
        %v5824 = vunpack.c.h.b16 %v5482
        %v5825 = vunpack.c.l.b16 %v5483
        %v5826 = vunpack.c.h.b16 %v5483
        %v5827 = vunpack.c.l.b16 %v5484
        %v5828 = vunpack.c.h.b16 %v5484
        %v5829 = vunpack.c.l.b16 %v5485
        %v5830 = vunpack.c.h.b16 %v5485
        %v5831 = vunpack.c.l.b16 %v5486
        %v5832 = vunpack.c.h.b16 %v5486
        %v5833 = vunpack.c.l.b16 %v5487
        %v5834 = vunpack.c.h.b16 %v5487
        %v5835 = vunpack.c.l.b16 %v5488
        %v5836 = vunpack.c.h.b16 %v5488
        %v5837 = vunpack.c.l.b16 %v5489
        %v5838 = vunpack.c.h.b16 %v5489
        %v5839 = vunpack.c.l.b16 %v5490
        %v5840 = vunpack.c.h.b16 %v5490
        %v5841 = vunpack.c.l.b16 %v5491
        %v5842 = vunpack.c.h.b16 %v5491
        %v5843 = vunpack.c.l.b16 %v5492
        %v5844 = vunpack.c.h.b16 %v5492
        %v5845 = vunpack.c.l.b16 %v5493
        %v5846 = vunpack.c.h.b16 %v5493
        %v5847 = vunpack.c.l.b16 %v5494
        %v5848 = vunpack.c.h.b16 %v5494
        %v5849 = vunpack.c.l.b16 %v5495
        %v5850 = vunpack.c.h.b16 %v5495
        %v5851 = vunpack.c.l.b16 %v5496
        %v5852 = vunpack.c.h.b16 %v5496
        %v5853 = vunpack.c.l.b16 %v5497
        %v5854 = vunpack.c.h.b16 %v5497
        %v5855 = vunpack.c.l.b16 %v5498
        %v5856 = vunpack.c.h.b16 %v5498
        %v5857 = vunpack.c.l.b16 %v5499
        %v5858 = vunpack.c.h.b16 %v5499
        %v5859 = vunpack.c.l.b16 %v5500
        %v5860 = vunpack.c.h.b16 %v5500
        %v5861 = vunpack.c.l.b16 %v5501
        %v5862 = vunpack.c.h.b16 %v5501
        %v5863 = vunpack.c.l.b16 %v5502
        %v5864 = vunpack.c.h.b16 %v5502
        %v5865 = vunpack.c.l.b16 %v5503
        %v5866 = vunpack.c.h.b16 %v5503
        %v5867 = vunpack.c.l.b16 %v5504
        %v5868 = vunpack.c.h.b16 %v5504
        %v5869 = vunpack.c.l.b16 %v5505
        %v5870 = vunpack.c.h.b16 %v5505
        %v5871 = vunpack.c.l.b16 %v5506
        %v5872 = vunpack.c.h.b16 %v5506
        %v5873 = vunpack.c.l.b16 %v5507
        %v5874 = vunpack.c.h.b16 %v5507
        %v5875 = vunpack.c.l.b16 %v5508
        %v5876 = vunpack.c.h.b16 %v5508
        %v5877 = vunpack.c.l.b16 %v5509
        %v5878 = vunpack.c.h.b16 %v5509
        %v5879 = vunpack.c.l.b16 %v5510
        %v5880 = vunpack.c.h.b16 %v5510
        %v5881 = vunpack.c.l.b16 %v5511
        %v5882 = vunpack.c.h.b16 %v5511
        %v5883 = vunpack.c.l.b16 %v5512
        %v5884 = vunpack.c.h.b16 %v5512
        %v5885 = vunpack.c.l.b16 %v5513
        %v5886 = vunpack.c.h.b16 %v5513
        %v5887 = vunpack.c.l.b16 %v5514
        %v5888 = vunpack.c.h.b16 %v5514
        %v5889 = vunpack.c.l.b16 %v5515
        %v5890 = vunpack.c.h.b16 %v5515
        %v5891 = vunpack.c.l.b16 %v5516
        %v5892 = vunpack.c.h.b16 %v5516
        %v5893 = vunpack.c.l.b16 %v5517
        %v5894 = vunpack.c.h.b16 %v5517
        %v5895 = vunpack.c.l.b16 %v5518
        %v5896 = vunpack.c.h.b16 %v5518
        %v5897 = vunpack.c.l.b16 %v5519
        %v5898 = vunpack.c.h.b16 %v5519
        %v5899 = vunpack.c.l.b16 %v5520
        %v5900 = vunpack.c.h.b16 %v5520
        %v5901 = vunpack.c.l.b16 %v5521
        %v5902 = vunpack.c.h.b16 %v5521
        %v5903 = vunpack.c.l.b16 %v5522
        %v5904 = vunpack.c.h.b16 %v5522
        %v5905 = vunpack.c.l.b16 %v5523
        %v5906 = vunpack.c.h.b16 %v5523
        %v5907 = vunpack.c.l.b16 %v5524
        %v5908 = vunpack.c.h.b16 %v5524
        %v5909 = vpack.c.b16 %v5657, %v5653
        %v5910 = vpack.c.b16 %v5658, %v5654
        %v5911 = vpack.c.b16 %v5659, %v5655
        %v5912 = vpack.c.b16 %v5660, %v5656
        %v5913 = vpack.c.b16 %v5665, %v5661
        %v5914 = vpack.c.b16 %v5666, %v5662
        %v5915 = vpack.c.b16 %v5667, %v5663
        %v5916 = vpack.c.b16 %v5668, %v5664
        %v5917 = vpack.c.b16 %v5673, %v5669
        %v5918 = vpack.c.b16 %v5674, %v5670
        %v5919 = vpack.c.b16 %v5675, %v5671
        %v5920 = vpack.c.b16 %v5676, %v5672
        %v5921 = vpack.c.b16 %v5681, %v5677
        %v5922 = vpack.c.b16 %v5682, %v5678
        %v5923 = vpack.c.b16 %v5683, %v5679
        %v5924 = vpack.c.b16 %v5684, %v5680
        %v5925 = vpack.c.b16 %v5689, %v5685
        %v5926 = vpack.c.b16 %v5690, %v5686
        %v5927 = vpack.c.b16 %v5691, %v5687
        %v5928 = vpack.c.b16 %v5692, %v5688
        %v5929 = vpack.c.b16 %v5697, %v5693
        %v5930 = vpack.c.b16 %v5698, %v5694
        %v5931 = vpack.c.b16 %v5699, %v5695
        %v5932 = vpack.c.b16 %v5700, %v5696
        %v5933 = vpack.c.b16 %v5705, %v5701
        %v5934 = vpack.c.b16 %v5706, %v5702
        %v5935 = vpack.c.b16 %v5707, %v5703
        %v5936 = vpack.c.b16 %v5708, %v5704
        %v5937 = vpack.c.b16 %v5713, %v5709
        %v5938 = vpack.c.b16 %v5714, %v5710
        %v5939 = vpack.c.b16 %v5715, %v5711
        %v5940 = vpack.c.b16 %v5716, %v5712
        %v5941 = vpack.c.b16 %v5721, %v5717
        %v5942 = vpack.c.b16 %v5722, %v5718
        %v5943 = vpack.c.b16 %v5723, %v5719
        %v5944 = vpack.c.b16 %v5724, %v5720
        %v5945 = vpack.c.b16 %v5729, %v5725
        %v5946 = vpack.c.b16 %v5730, %v5726
        %v5947 = vpack.c.b16 %v5731, %v5727
        %v5948 = vpack.c.b16 %v5732, %v5728
        %v5949 = vpack.c.b16 %v5737, %v5733
        %v5950 = vpack.c.b16 %v5738, %v5734
        %v5951 = vpack.c.b16 %v5739, %v5735
        %v5952 = vpack.c.b16 %v5740, %v5736
        %v5953 = vpack.c.b16 %v5745, %v5741
        %v5954 = vpack.c.b16 %v5746, %v5742
        %v5955 = vpack.c.b16 %v5747, %v5743
        %v5956 = vpack.c.b16 %v5748, %v5744
        %v5957 = vpack.c.b16 %v5753, %v5749
        %v5958 = vpack.c.b16 %v5754, %v5750
        %v5959 = vpack.c.b16 %v5755, %v5751
        %v5960 = vpack.c.b16 %v5756, %v5752
        %v5961 = vpack.c.b16 %v5761, %v5757
        %v5962 = vpack.c.b16 %v5762, %v5758
        %v5963 = vpack.c.b16 %v5763, %v5759
        %v5964 = vpack.c.b16 %v5764, %v5760
        %v5965 = vpack.c.b16 %v5769, %v5765
        %v5966 = vpack.c.b16 %v5770, %v5766
        %v5967 = vpack.c.b16 %v5771, %v5767
        %v5968 = vpack.c.b16 %v5772, %v5768
        %v5969 = vpack.c.b16 %v5777, %v5773
        %v5970 = vpack.c.b16 %v5778, %v5774
        %v5971 = vpack.c.b16 %v5779, %v5775
        %v5972 = vpack.c.b16 %v5780, %v5776
        %v5973 = vpack.c.b16 %v5785, %v5781
        %v5974 = vpack.c.b16 %v5786, %v5782
        %v5975 = vpack.c.b16 %v5787, %v5783
        %v5976 = vpack.c.b16 %v5788, %v5784
        %v5977 = vpack.c.b16 %v5793, %v5789
        %v5978 = vpack.c.b16 %v5794, %v5790
        %v5979 = vpack.c.b16 %v5795, %v5791
        %v5980 = vpack.c.b16 %v5796, %v5792
        %v5981 = vpack.c.b16 %v5801, %v5797
        %v5982 = vpack.c.b16 %v5802, %v5798
        %v5983 = vpack.c.b16 %v5803, %v5799
        %v5984 = vpack.c.b16 %v5804, %v5800
        %v5985 = vpack.c.b16 %v5809, %v5805
        %v5986 = vpack.c.b16 %v5810, %v5806
        %v5987 = vpack.c.b16 %v5811, %v5807
        %v5988 = vpack.c.b16 %v5812, %v5808
        %v5989 = vpack.c.b16 %v5817, %v5813
        %v5990 = vpack.c.b16 %v5818, %v5814
        %v5991 = vpack.c.b16 %v5819, %v5815
        %v5992 = vpack.c.b16 %v5820, %v5816
        %v5993 = vpack.c.b16 %v5825, %v5821
        %v5994 = vpack.c.b16 %v5826, %v5822
        %v5995 = vpack.c.b16 %v5827, %v5823
        %v5996 = vpack.c.b16 %v5828, %v5824
        %v5997 = vpack.c.b16 %v5833, %v5829
        %v5998 = vpack.c.b16 %v5834, %v5830
        %v5999 = vpack.c.b16 %v5835, %v5831
        %v6000 = vpack.c.b16 %v5836, %v5832
        %v6001 = vpack.c.b16 %v5841, %v5837
        %v6002 = vpack.c.b16 %v5842, %v5838
        %v6003 = vpack.c.b16 %v5843, %v5839
        %v6004 = vpack.c.b16 %v5844, %v5840
        %v6005 = vpack.c.b16 %v5849, %v5845
        %v6006 = vpack.c.b16 %v5850, %v5846
        %v6007 = vpack.c.b16 %v5851, %v5847
        %v6008 = vpack.c.b16 %v5852, %v5848
        %v6009 = vpack.c.b16 %v5857, %v5853
        %v6010 = vpack.c.b16 %v5858, %v5854
        %v6011 = vpack.c.b16 %v5859, %v5855
        %v6012 = vpack.c.b16 %v5860, %v5856
        %v6013 = vpack.c.b16 %v5865, %v5861
        %v6014 = vpack.c.b16 %v5866, %v5862
        %v6015 = vpack.c.b16 %v5867, %v5863
        %v6016 = vpack.c.b16 %v5868, %v5864
        %v6017 = vpack.c.b16 %v5873, %v5869
        %v6018 = vpack.c.b16 %v5874, %v5870
        %v6019 = vpack.c.b16 %v5875, %v5871
        %v6020 = vpack.c.b16 %v5876, %v5872
        %v6021 = vpack.c.b16 %v5881, %v5877
        %v6022 = vpack.c.b16 %v5882, %v5878
        %v6023 = vpack.c.b16 %v5883, %v5879
        %v6024 = vpack.c.b16 %v5884, %v5880
        %v6025 = vpack.c.b16 %v5889, %v5885
        %v6026 = vpack.c.b16 %v5890, %v5886
        %v6027 = vpack.c.b16 %v5891, %v5887
        %v6028 = vpack.c.b16 %v5892, %v5888
        %v6029 = vpack.c.b16 %v5897, %v5893
        %v6030 = vpack.c.b16 %v5898, %v5894
        %v6031 = vpack.c.b16 %v5899, %v5895
        %v6032 = vpack.c.b16 %v5900, %v5896
        %v6033 = vpack.c.b16 %v5905, %v5901
        %v6034 = vpack.c.b16 %v5906, %v5902
        %v6035 = vpack.c.b16 %v5907, %v5903
        %v6036 = vpack.c.b16 %v5908, %v5904
        %6165 = vmatpush.bf16.msra.mxu0 %v5937
        %6166 = vmatpush.bf16.msra.mxu0 %v5933
        %6167 = vmatpush.bf16.msra.mxu0 %v5929
        %6168 = vmatpush.bf16.msra.mxu0 %v5925
        %6169 = vmatpush.bf16.msra.mxu0 %v5921
        %6170 = vmatpush.bf16.msra.mxu0 %v5917
        %6171 = vmatpush.bf16.msra.mxu0 %v5913
        %6172 = vmatpush.bf16.msra.mxu0 %v5909
        %6173 = vmatmul.bf16.gmra.mxu0 %v5393
        %v6174 = vpop.f32.mrf.mxu0
        %v6175 = vadd.f32 0.0, %v6174
        %v6176 = vpop.f32.mrf.mxu0
        %6177 = vdwg.mxu0
        %6178 = vmatpush.bf16.msra.mxu0 %v5969
        %6179 = vmatpush.bf16.msra.mxu0 %v5965
        %6180 = vmatpush.bf16.msra.mxu0 %v5961
        %6181 = vmatpush.bf16.msra.mxu0 %v5957
        %6182 = vmatpush.bf16.msra.mxu0 %v5953
        %6183 = vmatpush.bf16.msra.mxu0 %v5949
        %6184 = vmatpush.bf16.msra.mxu0 %v5945
        %6185 = vmatpush.bf16.msra.mxu0 %v5941
        %6186 = vmatmul.bf16.gmra.mxu0 %v5394
        %v6187 = vpop.f32.mrf.mxu0
        %v6188 = vadd.f32 %v6175, %v6187
        %v6189 = vpop.f32.mrf.mxu0
        %6190 = vdwg.mxu0
        %6191 = vmatpush.bf16.msra.mxu0 %v6001
        %6192 = vmatpush.bf16.msra.mxu0 %v5997
        %6193 = vmatpush.bf16.msra.mxu0 %v5993
        %6194 = vmatpush.bf16.msra.mxu0 %v5989
        %6195 = vmatpush.bf16.msra.mxu0 %v5985
        %6196 = vmatpush.bf16.msra.mxu0 %v5981
        %6197 = vmatpush.bf16.msra.mxu0 %v5977
        %6198 = vmatpush.bf16.msra.mxu0 %v5973
        %6199 = vmatmul.bf16.gmra.mxu0 %v5395
        %v6200 = vpop.f32.mrf.mxu0
        %v6201 = vadd.f32 %v6188, %v6200
        %v6202 = vpop.f32.mrf.mxu0
        %6203 = vdwg.mxu0
        %6204 = vmatpush.bf16.msra.mxu0 %v6033
        %6205 = vmatpush.bf16.msra.mxu0 %v6029
        %6206 = vmatpush.bf16.msra.mxu0 %v6025
        %6207 = vmatpush.bf16.msra.mxu0 %v6021
        %6208 = vmatpush.bf16.msra.mxu0 %v6017
        %6209 = vmatpush.bf16.msra.mxu0 %v6013
        %6210 = vmatpush.bf16.msra.mxu0 %v6009
        %6211 = vmatpush.bf16.msra.mxu0 %v6005
        %6212 = vmatmul.bf16.gmra.mxu0 %v5396
        %v6213 = vpop.f32.mrf.mxu0
        %v6214 = vadd.f32 %v6201, %v6213
        %v6215 = vpop.f32.mrf.mxu0
        %6216 = vdwg.mxu0
        %6217 = vmatpush.bf16.msra.mxu0 %v5938
        %6218 = vmatpush.bf16.msra.mxu0 %v5934
        %6219 = vmatpush.bf16.msra.mxu0 %v5930
        %6220 = vmatpush.bf16.msra.mxu0 %v5926
        %6221 = vmatpush.bf16.msra.mxu0 %v5922
        %6222 = vmatpush.bf16.msra.mxu0 %v5918
        %6223 = vmatpush.bf16.msra.mxu0 %v5914
        %6224 = vmatpush.bf16.msra.mxu0 %v5910
        %6225 = vmatmul.bf16.gmra.mxu0 %v5393
        %v6226 = vpop.f32.mrf.mxu0
        %v6227 = vadd.f32 0.0, %v6226
        %v6228 = vpop.f32.mrf.mxu0
        %6229 = vdwg.mxu0
        %6230 = vmatpush.bf16.msra.mxu0 %v5970
        %6231 = vmatpush.bf16.msra.mxu0 %v5966
        %6232 = vmatpush.bf16.msra.mxu0 %v5962
        %6233 = vmatpush.bf16.msra.mxu0 %v5958
        %6234 = vmatpush.bf16.msra.mxu0 %v5954
        %6235 = vmatpush.bf16.msra.mxu0 %v5950
        %6236 = vmatpush.bf16.msra.mxu0 %v5946
        %6237 = vmatpush.bf16.msra.mxu0 %v5942
        %6238 = vmatmul.bf16.gmra.mxu0 %v5394
        %v6239 = vpop.f32.mrf.mxu0
        %v6240 = vadd.f32 %v6227, %v6239
        %v6241 = vpop.f32.mrf.mxu0
        %6242 = vdwg.mxu0
        %6243 = vmatpush.bf16.msra.mxu0 %v6002
        %6244 = vmatpush.bf16.msra.mxu0 %v5998
        %6245 = vmatpush.bf16.msra.mxu0 %v5994
        %6246 = vmatpush.bf16.msra.mxu0 %v5990
        %6247 = vmatpush.bf16.msra.mxu0 %v5986
        %6248 = vmatpush.bf16.msra.mxu0 %v5982
        %6249 = vmatpush.bf16.msra.mxu0 %v5978
        %6250 = vmatpush.bf16.msra.mxu0 %v5974
        %6251 = vmatmul.bf16.gmra.mxu0 %v5395
        %v6252 = vpop.f32.mrf.mxu0
        %v6253 = vadd.f32 %v6240, %v6252
        %v6254 = vpop.f32.mrf.mxu0
        %6255 = vdwg.mxu0
        %6256 = vmatpush.bf16.msra.mxu0 %v6034
        %6257 = vmatpush.bf16.msra.mxu0 %v6030
        %6258 = vmatpush.bf16.msra.mxu0 %v6026
        %6259 = vmatpush.bf16.msra.mxu0 %v6022
        %6260 = vmatpush.bf16.msra.mxu0 %v6018
        %6261 = vmatpush.bf16.msra.mxu0 %v6014
        %6262 = vmatpush.bf16.msra.mxu0 %v6010
        %6263 = vmatpush.bf16.msra.mxu0 %v6006
        %6264 = vmatmul.bf16.gmra.mxu0 %v5396
        %v6265 = vpop.f32.mrf.mxu0
        %v6266 = vadd.f32 %v6253, %v6265
        %v6267 = vpop.f32.mrf.mxu0
        %6268 = vdwg.mxu0
        %6269 = vmatpush.bf16.msra.mxu0 %v5939
        %6270 = vmatpush.bf16.msra.mxu0 %v5935
        %6271 = vmatpush.bf16.msra.mxu0 %v5931
        %6272 = vmatpush.bf16.msra.mxu0 %v5927
        %6273 = vmatpush.bf16.msra.mxu0 %v5923
        %6274 = vmatpush.bf16.msra.mxu0 %v5919
        %6275 = vmatpush.bf16.msra.mxu0 %v5915
        %6276 = vmatpush.bf16.msra.mxu0 %v5911
        %6277 = vmatmul.bf16.gmra.mxu0 %v5393
        %v6278 = vpop.f32.mrf.mxu0
        %v6279 = vadd.f32 0.0, %v6278
        %v6280 = vpop.f32.mrf.mxu0
        %6281 = vdwg.mxu0
        %6282 = vmatpush.bf16.msra.mxu0 %v5971
        %6283 = vmatpush.bf16.msra.mxu0 %v5967
        %6284 = vmatpush.bf16.msra.mxu0 %v5963
        %6285 = vmatpush.bf16.msra.mxu0 %v5959
        %6286 = vmatpush.bf16.msra.mxu0 %v5955
        %6287 = vmatpush.bf16.msra.mxu0 %v5951
        %6288 = vmatpush.bf16.msra.mxu0 %v5947
        %6289 = vmatpush.bf16.msra.mxu0 %v5943
        %6290 = vmatmul.bf16.gmra.mxu0 %v5394
        %v6291 = vpop.f32.mrf.mxu0
        %v6292 = vadd.f32 %v6279, %v6291
        %v6293 = vpop.f32.mrf.mxu0
        %6294 = vdwg.mxu0
        %6295 = vmatpush.bf16.msra.mxu0 %v6003
        %6296 = vmatpush.bf16.msra.mxu0 %v5999
        %6297 = vmatpush.bf16.msra.mxu0 %v5995
        %6298 = vmatpush.bf16.msra.mxu0 %v5991
        %6299 = vmatpush.bf16.msra.mxu0 %v5987
        %6300 = vmatpush.bf16.msra.mxu0 %v5983
        %6301 = vmatpush.bf16.msra.mxu0 %v5979
        %6302 = vmatpush.bf16.msra.mxu0 %v5975
        %6303 = vmatmul.bf16.gmra.mxu0 %v5395
        %v6304 = vpop.f32.mrf.mxu0
        %v6305 = vadd.f32 %v6292, %v6304
        %v6306 = vpop.f32.mrf.mxu0
        %6307 = vdwg.mxu0
        %6308 = vmatpush.bf16.msra.mxu0 %v6035
        %6309 = vmatpush.bf16.msra.mxu0 %v6031
        %6310 = vmatpush.bf16.msra.mxu0 %v6027
        %6311 = vmatpush.bf16.msra.mxu0 %v6023
        %6312 = vmatpush.bf16.msra.mxu0 %v6019
        %6313 = vmatpush.bf16.msra.mxu0 %v6015
        %6314 = vmatpush.bf16.msra.mxu0 %v6011
        %6315 = vmatpush.bf16.msra.mxu0 %v6007
        %6316 = vmatmul.bf16.gmra.mxu0 %v5396
        %v6317 = vpop.f32.mrf.mxu0
        %v6318 = vadd.f32 %v6305, %v6317
        %v6319 = vpop.f32.mrf.mxu0
        %6320 = vdwg.mxu0
        %6321 = vmatpush.bf16.msra.mxu0 %v5940
        %6322 = vmatpush.bf16.msra.mxu0 %v5936
        %6323 = vmatpush.bf16.msra.mxu0 %v5932
        %6324 = vmatpush.bf16.msra.mxu0 %v5928
        %6325 = vmatpush.bf16.msra.mxu0 %v5924
        %6326 = vmatpush.bf16.msra.mxu0 %v5920
        %6327 = vmatpush.bf16.msra.mxu0 %v5916
        %6328 = vmatpush.bf16.msra.mxu0 %v5912
        %6329 = vmatmul.bf16.gmra.mxu0 %v5393
        %v6330 = vpop.f32.mrf.mxu0
        %v6331 = vadd.f32 0.0, %v6330
        %v6332 = vpop.f32.mrf.mxu0
        %6333 = vdwg.mxu0
        %6334 = vmatpush.bf16.msra.mxu0 %v5972
        %6335 = vmatpush.bf16.msra.mxu0 %v5968
        %6336 = vmatpush.bf16.msra.mxu0 %v5964
        %6337 = vmatpush.bf16.msra.mxu0 %v5960
        %6338 = vmatpush.bf16.msra.mxu0 %v5956
        %6339 = vmatpush.bf16.msra.mxu0 %v5952
        %6340 = vmatpush.bf16.msra.mxu0 %v5948
        %6341 = vmatpush.bf16.msra.mxu0 %v5944
        %6342 = vmatmul.bf16.gmra.mxu0 %v5394
        %v6343 = vpop.f32.mrf.mxu0
        %v6344 = vadd.f32 %v6331, %v6343
        %v6345 = vpop.f32.mrf.mxu0
        %6346 = vdwg.mxu0
        %6347 = vmatpush.bf16.msra.mxu0 %v6004
        %6348 = vmatpush.bf16.msra.mxu0 %v6000
        %6349 = vmatpush.bf16.msra.mxu0 %v5996
        %6350 = vmatpush.bf16.msra.mxu0 %v5992
        %6351 = vmatpush.bf16.msra.mxu0 %v5988
        %6352 = vmatpush.bf16.msra.mxu0 %v5984
        %6353 = vmatpush.bf16.msra.mxu0 %v5980
        %6354 = vmatpush.bf16.msra.mxu0 %v5976
        %6355 = vmatmul.bf16.gmra.mxu0 %v5395
        %v6356 = vpop.f32.mrf.mxu0
        %v6357 = vadd.f32 %v6344, %v6356
        %v6358 = vpop.f32.mrf.mxu0
        %6359 = vdwg.mxu0
        %6360 = vmatpush.bf16.msra.mxu0 %v6036
        %6361 = vmatpush.bf16.msra.mxu0 %v6032
        %6362 = vmatpush.bf16.msra.mxu0 %v6028
        %6363 = vmatpush.bf16.msra.mxu0 %v6024
        %6364 = vmatpush.bf16.msra.mxu0 %v6020
        %6365 = vmatpush.bf16.msra.mxu0 %v6016
        %6366 = vmatpush.bf16.msra.mxu0 %v6012
        %6367 = vmatpush.bf16.msra.mxu0 %v6008
        %6368 = vmatmul.bf16.gmra.mxu0 %v5396
        %v6369 = vpop.f32.mrf.mxu0
        %v6370 = vadd.f32 %v6357, %v6369
        %v6371 = vpop.f32.mrf.mxu0
        %6372 = vdwg.mxu0
        %v6373 = vadd.f32 %v4351, %v6214
        %v6374 = vadd.f32 %v4352, %v6266
        %v6375 = vadd.f32 %v4353, %v6318
        %v6376 = vadd.f32 %v4354, %v6370
        %v6377 = vld [vmem:[%s1 + $0x30] sm:$0xff]
        %v6378 = vld [vmem:[%s1 + $0x38] sm:$0xff]
        %v6379 = vld [vmem:[%s1 + $0x70] sm:$0xff]
        %v6380 = vld [vmem:[%s1 + $0x78] sm:$0xff]
        %v6381 = vld [vmem:[%s1 + $0xb0] sm:$0xff]
        %v6382 = vld [vmem:[%s1 + $0xb8] sm:$0xff]
        %v6383 = vld [vmem:[%s1 + $0xf0] sm:$0xff]
        %v6384 = vld [vmem:[%s1 + $0xf8] sm:$0xff]
        %v6385 = vld [vmem:[%s1 + $0x130] sm:$0xff]
        %v6386 = vld [vmem:[%s1 + $0x138] sm:$0xff]
        %v6387 = vld [vmem:[%s1 + $0x170] sm:$0xff]
        %v6388 = vld [vmem:[%s1 + $0x178] sm:$0xff]
        %v6389 = vld [vmem:[%s1 + $0x1b0] sm:$0xff]
        %v6390 = vld [vmem:[%s1 + $0x1b8] sm:$0xff]
        %v6391 = vld [vmem:[%s1 + $0x1f0] sm:$0xff]
        %v6392 = vld [vmem:[%s1 + $0x1f8] sm:$0xff]
        %v6393 = vld [vmem:[%s1 + $0x230] sm:$0xff]
        %v6394 = vld [vmem:[%s1 + $0x238] sm:$0xff]
        %v6395 = vld [vmem:[%s1 + $0x270] sm:$0xff]
        %v6396 = vld [vmem:[%s1 + $0x278] sm:$0xff]
        %v6397 = vld [vmem:[%s1 + $0x2b0] sm:$0xff]
        %v6398 = vld [vmem:[%s1 + $0x2b8] sm:$0xff]
        %v6399 = vld [vmem:[%s1 + $0x2f0] sm:$0xff]
        %v6400 = vld [vmem:[%s1 + $0x2f8] sm:$0xff]
        %v6401 = vld [vmem:[%s1 + $0x330] sm:$0xff]
        %v6402 = vld [vmem:[%s1 + $0x338] sm:$0xff]
        %v6403 = vld [vmem:[%s1 + $0x370] sm:$0xff]
        %v6404 = vld [vmem:[%s1 + $0x378] sm:$0xff]
        %v6405 = vld [vmem:[%s1 + $0x3b0] sm:$0xff]
        %v6406 = vld [vmem:[%s1 + $0x3b8] sm:$0xff]
        %v6407 = vld [vmem:[%s1 + $0x3f0] sm:$0xff]
        %v6408 = vld [vmem:[%s1 + $0x3f8] sm:$0xff]
        %v6409 = vld [vmem:[%s1 + $0x430] sm:$0xff]
        %v6410 = vld [vmem:[%s1 + $0x438] sm:$0xff]
        %v6411 = vld [vmem:[%s1 + $0x470] sm:$0xff]
        %v6412 = vld [vmem:[%s1 + $0x478] sm:$0xff]
        %v6413 = vld [vmem:[%s1 + $0x4b0] sm:$0xff]
        %v6414 = vld [vmem:[%s1 + $0x4b8] sm:$0xff]
        %v6415 = vld [vmem:[%s1 + $0x4f0] sm:$0xff]
        %v6416 = vld [vmem:[%s1 + $0x4f8] sm:$0xff]
        %v6417 = vld [vmem:[%s1 + $0x530] sm:$0xff]
        %v6418 = vld [vmem:[%s1 + $0x538] sm:$0xff]
        %v6419 = vld [vmem:[%s1 + $0x570] sm:$0xff]
        %v6420 = vld [vmem:[%s1 + $0x578] sm:$0xff]
        %v6421 = vld [vmem:[%s1 + $0x5b0] sm:$0xff]
        %v6422 = vld [vmem:[%s1 + $0x5b8] sm:$0xff]
        %v6423 = vld [vmem:[%s1 + $0x5f0] sm:$0xff]
        %v6424 = vld [vmem:[%s1 + $0x5f8] sm:$0xff]
        %v6425 = vld [vmem:[%s1 + $0x630] sm:$0xff]
        %v6426 = vld [vmem:[%s1 + $0x638] sm:$0xff]
        %v6427 = vld [vmem:[%s1 + $0x670] sm:$0xff]
        %v6428 = vld [vmem:[%s1 + $0x678] sm:$0xff]
        %v6429 = vld [vmem:[%s1 + $0x6b0] sm:$0xff]
        %v6430 = vld [vmem:[%s1 + $0x6b8] sm:$0xff]
        %v6431 = vld [vmem:[%s1 + $0x6f0] sm:$0xff]
        %v6432 = vld [vmem:[%s1 + $0x6f8] sm:$0xff]
        %v6433 = vld [vmem:[%s1 + $0x730] sm:$0xff]
        %v6434 = vld [vmem:[%s1 + $0x738] sm:$0xff]
        %v6435 = vld [vmem:[%s1 + $0x770] sm:$0xff]
        %v6436 = vld [vmem:[%s1 + $0x778] sm:$0xff]
        %v6437 = vld [vmem:[%s1 + $0x7b0] sm:$0xff]
        %v6438 = vld [vmem:[%s1 + $0x7b8] sm:$0xff]
        %v6439 = vld [vmem:[%s1 + $0x7f0] sm:$0xff]
        %v6440 = vld [vmem:[%s1 + $0x7f8] sm:$0xff]
        %v6441 = vld [vmem:[%s1 + $0x830] sm:$0xff]
        %v6442 = vld [vmem:[%s1 + $0x838] sm:$0xff]
        %v6443 = vld [vmem:[%s1 + $0x870] sm:$0xff]
        %v6444 = vld [vmem:[%s1 + $0x878] sm:$0xff]
        %v6445 = vld [vmem:[%s1 + $0x8b0] sm:$0xff]
        %v6446 = vld [vmem:[%s1 + $0x8b8] sm:$0xff]
        %v6447 = vld [vmem:[%s1 + $0x8f0] sm:$0xff]
        %v6448 = vld [vmem:[%s1 + $0x8f8] sm:$0xff]
        %v6449 = vld [vmem:[%s1 + $0x930] sm:$0xff]
        %v6450 = vld [vmem:[%s1 + $0x938] sm:$0xff]
        %v6451 = vld [vmem:[%s1 + $0x970] sm:$0xff]
        %v6452 = vld [vmem:[%s1 + $0x978] sm:$0xff]
        %v6453 = vld [vmem:[%s1 + $0x9b0] sm:$0xff]
        %v6454 = vld [vmem:[%s1 + $0x9b8] sm:$0xff]
        %v6455 = vld [vmem:[%s1 + $0x9f0] sm:$0xff]
        %v6456 = vld [vmem:[%s1 + $0x9f8] sm:$0xff]
        %v6457 = vld [vmem:[%s1 + $0xa30] sm:$0xff]
        %v6458 = vld [vmem:[%s1 + $0xa38] sm:$0xff]
        %v6459 = vld [vmem:[%s1 + $0xa70] sm:$0xff]
        %v6460 = vld [vmem:[%s1 + $0xa78] sm:$0xff]
        %v6461 = vld [vmem:[%s1 + $0xab0] sm:$0xff]
        %v6462 = vld [vmem:[%s1 + $0xab8] sm:$0xff]
        %v6463 = vld [vmem:[%s1 + $0xaf0] sm:$0xff]
        %v6464 = vld [vmem:[%s1 + $0xaf8] sm:$0xff]
        %v6465 = vld [vmem:[%s1 + $0xb30] sm:$0xff]
        %v6466 = vld [vmem:[%s1 + $0xb38] sm:$0xff]
        %v6467 = vld [vmem:[%s1 + $0xb70] sm:$0xff]
        %v6468 = vld [vmem:[%s1 + $0xb78] sm:$0xff]
        %v6469 = vld [vmem:[%s1 + $0xbb0] sm:$0xff]
        %v6470 = vld [vmem:[%s1 + $0xbb8] sm:$0xff]
        %v6471 = vld [vmem:[%s1 + $0xbf0] sm:$0xff]
        %v6472 = vld [vmem:[%s1 + $0xbf8] sm:$0xff]
        %v6473 = vld [vmem:[%s1 + $0xc30] sm:$0xff]
        %v6474 = vld [vmem:[%s1 + $0xc38] sm:$0xff]
        %v6475 = vld [vmem:[%s1 + $0xc70] sm:$0xff]
        %v6476 = vld [vmem:[%s1 + $0xc78] sm:$0xff]
        %v6477 = vld [vmem:[%s1 + $0xcb0] sm:$0xff]
        %v6478 = vld [vmem:[%s1 + $0xcb8] sm:$0xff]
        %v6479 = vld [vmem:[%s1 + $0xcf0] sm:$0xff]
        %v6480 = vld [vmem:[%s1 + $0xcf8] sm:$0xff]
        %v6481 = vld [vmem:[%s1 + $0xd30] sm:$0xff]
        %v6482 = vld [vmem:[%s1 + $0xd38] sm:$0xff]
        %v6483 = vld [vmem:[%s1 + $0xd70] sm:$0xff]
        %v6484 = vld [vmem:[%s1 + $0xd78] sm:$0xff]
        %v6485 = vld [vmem:[%s1 + $0xdb0] sm:$0xff]
        %v6486 = vld [vmem:[%s1 + $0xdb8] sm:$0xff]
        %v6487 = vld [vmem:[%s1 + $0xdf0] sm:$0xff]
        %v6488 = vld [vmem:[%s1 + $0xdf8] sm:$0xff]
        %v6489 = vld [vmem:[%s1 + $0xe30] sm:$0xff]
        %v6490 = vld [vmem:[%s1 + $0xe38] sm:$0xff]
        %v6491 = vld [vmem:[%s1 + $0xe70] sm:$0xff]
        %v6492 = vld [vmem:[%s1 + $0xe78] sm:$0xff]
        %v6493 = vld [vmem:[%s1 + $0xeb0] sm:$0xff]
        %v6494 = vld [vmem:[%s1 + $0xeb8] sm:$0xff]
        %v6495 = vld [vmem:[%s1 + $0xef0] sm:$0xff]
        %v6496 = vld [vmem:[%s1 + $0xef8] sm:$0xff]
        %v6497 = vld [vmem:[%s1 + $0xf30] sm:$0xff]
        %v6498 = vld [vmem:[%s1 + $0xf38] sm:$0xff]
        %v6499 = vld [vmem:[%s1 + $0xf70] sm:$0xff]
        %v6500 = vld [vmem:[%s1 + $0xf78] sm:$0xff]
        %v6501 = vld [vmem:[%s1 + $0xfb0] sm:$0xff]
        %v6502 = vld [vmem:[%s1 + $0xfb8] sm:$0xff]
        %v6503 = vld [vmem:[%s1 + $0xff0] sm:$0xff]
        %v6504 = vld [vmem:[%s1 + $0xff8] sm:$0xff]
        %v6633 = vunpack.c.l.b16 %v6377
        %v6634 = vunpack.c.h.b16 %v6377
        %v6635 = vunpack.c.l.b16 %v6378
        %v6636 = vunpack.c.h.b16 %v6378
        %v6637 = vunpack.c.l.b16 %v6379
        %v6638 = vunpack.c.h.b16 %v6379
        %v6639 = vunpack.c.l.b16 %v6380
        %v6640 = vunpack.c.h.b16 %v6380
        %v6641 = vunpack.c.l.b16 %v6381
        %v6642 = vunpack.c.h.b16 %v6381
        %v6643 = vunpack.c.l.b16 %v6382
        %v6644 = vunpack.c.h.b16 %v6382
        %v6645 = vunpack.c.l.b16 %v6383
        %v6646 = vunpack.c.h.b16 %v6383
        %v6647 = vunpack.c.l.b16 %v6384
        %v6648 = vunpack.c.h.b16 %v6384
        %v6649 = vunpack.c.l.b16 %v6385
        %v6650 = vunpack.c.h.b16 %v6385
        %v6651 = vunpack.c.l.b16 %v6386
        %v6652 = vunpack.c.h.b16 %v6386
        %v6653 = vunpack.c.l.b16 %v6387
        %v6654 = vunpack.c.h.b16 %v6387
        %v6655 = vunpack.c.l.b16 %v6388
        %v6656 = vunpack.c.h.b16 %v6388
        %v6657 = vunpack.c.l.b16 %v6389
        %v6658 = vunpack.c.h.b16 %v6389
        %v6659 = vunpack.c.l.b16 %v6390
        %v6660 = vunpack.c.h.b16 %v6390
        %v6661 = vunpack.c.l.b16 %v6391
        %v6662 = vunpack.c.h.b16 %v6391
        %v6663 = vunpack.c.l.b16 %v6392
        %v6664 = vunpack.c.h.b16 %v6392
        %v6665 = vunpack.c.l.b16 %v6393
        %v6666 = vunpack.c.h.b16 %v6393
        %v6667 = vunpack.c.l.b16 %v6394
        %v6668 = vunpack.c.h.b16 %v6394
        %v6669 = vunpack.c.l.b16 %v6395
        %v6670 = vunpack.c.h.b16 %v6395
        %v6671 = vunpack.c.l.b16 %v6396
        %v6672 = vunpack.c.h.b16 %v6396
        %v6673 = vunpack.c.l.b16 %v6397
        %v6674 = vunpack.c.h.b16 %v6397
        %v6675 = vunpack.c.l.b16 %v6398
        %v6676 = vunpack.c.h.b16 %v6398
        %v6677 = vunpack.c.l.b16 %v6399
        %v6678 = vunpack.c.h.b16 %v6399
        %v6679 = vunpack.c.l.b16 %v6400
        %v6680 = vunpack.c.h.b16 %v6400
        %v6681 = vunpack.c.l.b16 %v6401
        %v6682 = vunpack.c.h.b16 %v6401
        %v6683 = vunpack.c.l.b16 %v6402
        %v6684 = vunpack.c.h.b16 %v6402
        %v6685 = vunpack.c.l.b16 %v6403
        %v6686 = vunpack.c.h.b16 %v6403
        %v6687 = vunpack.c.l.b16 %v6404
        %v6688 = vunpack.c.h.b16 %v6404
        %v6689 = vunpack.c.l.b16 %v6405
        %v6690 = vunpack.c.h.b16 %v6405
        %v6691 = vunpack.c.l.b16 %v6406
        %v6692 = vunpack.c.h.b16 %v6406
        %v6693 = vunpack.c.l.b16 %v6407
        %v6694 = vunpack.c.h.b16 %v6407
        %v6695 = vunpack.c.l.b16 %v6408
        %v6696 = vunpack.c.h.b16 %v6408
        %v6697 = vunpack.c.l.b16 %v6409
        %v6698 = vunpack.c.h.b16 %v6409
        %v6699 = vunpack.c.l.b16 %v6410
        %v6700 = vunpack.c.h.b16 %v6410
        %v6701 = vunpack.c.l.b16 %v6411
        %v6702 = vunpack.c.h.b16 %v6411
        %v6703 = vunpack.c.l.b16 %v6412
        %v6704 = vunpack.c.h.b16 %v6412
        %v6705 = vunpack.c.l.b16 %v6413
        %v6706 = vunpack.c.h.b16 %v6413
        %v6707 = vunpack.c.l.b16 %v6414
        %v6708 = vunpack.c.h.b16 %v6414
        %v6709 = vunpack.c.l.b16 %v6415
        %v6710 = vunpack.c.h.b16 %v6415
        %v6711 = vunpack.c.l.b16 %v6416
        %v6712 = vunpack.c.h.b16 %v6416
        %v6713 = vunpack.c.l.b16 %v6417
        %v6714 = vunpack.c.h.b16 %v6417
        %v6715 = vunpack.c.l.b16 %v6418
        %v6716 = vunpack.c.h.b16 %v6418
        %v6717 = vunpack.c.l.b16 %v6419
        %v6718 = vunpack.c.h.b16 %v6419
        %v6719 = vunpack.c.l.b16 %v6420
        %v6720 = vunpack.c.h.b16 %v6420
        %v6721 = vunpack.c.l.b16 %v6421
        %v6722 = vunpack.c.h.b16 %v6421
        %v6723 = vunpack.c.l.b16 %v6422
        %v6724 = vunpack.c.h.b16 %v6422
        %v6725 = vunpack.c.l.b16 %v6423
        %v6726 = vunpack.c.h.b16 %v6423
        %v6727 = vunpack.c.l.b16 %v6424
        %v6728 = vunpack.c.h.b16 %v6424
        %v6729 = vunpack.c.l.b16 %v6425
        %v6730 = vunpack.c.h.b16 %v6425
        %v6731 = vunpack.c.l.b16 %v6426
        %v6732 = vunpack.c.h.b16 %v6426
        %v6733 = vunpack.c.l.b16 %v6427
        %v6734 = vunpack.c.h.b16 %v6427
        %v6735 = vunpack.c.l.b16 %v6428
        %v6736 = vunpack.c.h.b16 %v6428
        %v6737 = vunpack.c.l.b16 %v6429
        %v6738 = vunpack.c.h.b16 %v6429
        %v6739 = vunpack.c.l.b16 %v6430
        %v6740 = vunpack.c.h.b16 %v6430
        %v6741 = vunpack.c.l.b16 %v6431
        %v6742 = vunpack.c.h.b16 %v6431
        %v6743 = vunpack.c.l.b16 %v6432
        %v6744 = vunpack.c.h.b16 %v6432
        %v6745 = vunpack.c.l.b16 %v6433
        %v6746 = vunpack.c.h.b16 %v6433
        %v6747 = vunpack.c.l.b16 %v6434
        %v6748 = vunpack.c.h.b16 %v6434
        %v6749 = vunpack.c.l.b16 %v6435
        %v6750 = vunpack.c.h.b16 %v6435
        %v6751 = vunpack.c.l.b16 %v6436
        %v6752 = vunpack.c.h.b16 %v6436
        %v6753 = vunpack.c.l.b16 %v6437
        %v6754 = vunpack.c.h.b16 %v6437
        %v6755 = vunpack.c.l.b16 %v6438
        %v6756 = vunpack.c.h.b16 %v6438
        %v6757 = vunpack.c.l.b16 %v6439
        %v6758 = vunpack.c.h.b16 %v6439
        %v6759 = vunpack.c.l.b16 %v6440
        %v6760 = vunpack.c.h.b16 %v6440
        %v6761 = vunpack.c.l.b16 %v6441
        %v6762 = vunpack.c.h.b16 %v6441
        %v6763 = vunpack.c.l.b16 %v6442
        %v6764 = vunpack.c.h.b16 %v6442
        %v6765 = vunpack.c.l.b16 %v6443
        %v6766 = vunpack.c.h.b16 %v6443
        %v6767 = vunpack.c.l.b16 %v6444
        %v6768 = vunpack.c.h.b16 %v6444
        %v6769 = vunpack.c.l.b16 %v6445
        %v6770 = vunpack.c.h.b16 %v6445
        %v6771 = vunpack.c.l.b16 %v6446
        %v6772 = vunpack.c.h.b16 %v6446
        %v6773 = vunpack.c.l.b16 %v6447
        %v6774 = vunpack.c.h.b16 %v6447
        %v6775 = vunpack.c.l.b16 %v6448
        %v6776 = vunpack.c.h.b16 %v6448
        %v6777 = vunpack.c.l.b16 %v6449
        %v6778 = vunpack.c.h.b16 %v6449
        %v6779 = vunpack.c.l.b16 %v6450
        %v6780 = vunpack.c.h.b16 %v6450
        %v6781 = vunpack.c.l.b16 %v6451
        %v6782 = vunpack.c.h.b16 %v6451
        %v6783 = vunpack.c.l.b16 %v6452
        %v6784 = vunpack.c.h.b16 %v6452
        %v6785 = vunpack.c.l.b16 %v6453
        %v6786 = vunpack.c.h.b16 %v6453
        %v6787 = vunpack.c.l.b16 %v6454
        %v6788 = vunpack.c.h.b16 %v6454
        %v6789 = vunpack.c.l.b16 %v6455
        %v6790 = vunpack.c.h.b16 %v6455
        %v6791 = vunpack.c.l.b16 %v6456
        %v6792 = vunpack.c.h.b16 %v6456
        %v6793 = vunpack.c.l.b16 %v6457
        %v6794 = vunpack.c.h.b16 %v6457
        %v6795 = vunpack.c.l.b16 %v6458
        %v6796 = vunpack.c.h.b16 %v6458
        %v6797 = vunpack.c.l.b16 %v6459
        %v6798 = vunpack.c.h.b16 %v6459
        %v6799 = vunpack.c.l.b16 %v6460
        %v6800 = vunpack.c.h.b16 %v6460
        %v6801 = vunpack.c.l.b16 %v6461
        %v6802 = vunpack.c.h.b16 %v6461
        %v6803 = vunpack.c.l.b16 %v6462
        %v6804 = vunpack.c.h.b16 %v6462
        %v6805 = vunpack.c.l.b16 %v6463
        %v6806 = vunpack.c.h.b16 %v6463
        %v6807 = vunpack.c.l.b16 %v6464
        %v6808 = vunpack.c.h.b16 %v6464
        %v6809 = vunpack.c.l.b16 %v6465
        %v6810 = vunpack.c.h.b16 %v6465
        %v6811 = vunpack.c.l.b16 %v6466
        %v6812 = vunpack.c.h.b16 %v6466
        %v6813 = vunpack.c.l.b16 %v6467
        %v6814 = vunpack.c.h.b16 %v6467
        %v6815 = vunpack.c.l.b16 %v6468
        %v6816 = vunpack.c.h.b16 %v6468
        %v6817 = vunpack.c.l.b16 %v6469
        %v6818 = vunpack.c.h.b16 %v6469
        %v6819 = vunpack.c.l.b16 %v6470
        %v6820 = vunpack.c.h.b16 %v6470
        %v6821 = vunpack.c.l.b16 %v6471
        %v6822 = vunpack.c.h.b16 %v6471
        %v6823 = vunpack.c.l.b16 %v6472
        %v6824 = vunpack.c.h.b16 %v6472
        %v6825 = vunpack.c.l.b16 %v6473
        %v6826 = vunpack.c.h.b16 %v6473
        %v6827 = vunpack.c.l.b16 %v6474
        %v6828 = vunpack.c.h.b16 %v6474
        %v6829 = vunpack.c.l.b16 %v6475
        %v6830 = vunpack.c.h.b16 %v6475
        %v6831 = vunpack.c.l.b16 %v6476
        %v6832 = vunpack.c.h.b16 %v6476
        %v6833 = vunpack.c.l.b16 %v6477
        %v6834 = vunpack.c.h.b16 %v6477
        %v6835 = vunpack.c.l.b16 %v6478
        %v6836 = vunpack.c.h.b16 %v6478
        %v6837 = vunpack.c.l.b16 %v6479
        %v6838 = vunpack.c.h.b16 %v6479
        %v6839 = vunpack.c.l.b16 %v6480
        %v6840 = vunpack.c.h.b16 %v6480
        %v6841 = vunpack.c.l.b16 %v6481
        %v6842 = vunpack.c.h.b16 %v6481
        %v6843 = vunpack.c.l.b16 %v6482
        %v6844 = vunpack.c.h.b16 %v6482
        %v6845 = vunpack.c.l.b16 %v6483
        %v6846 = vunpack.c.h.b16 %v6483
        %v6847 = vunpack.c.l.b16 %v6484
        %v6848 = vunpack.c.h.b16 %v6484
        %v6849 = vunpack.c.l.b16 %v6485
        %v6850 = vunpack.c.h.b16 %v6485
        %v6851 = vunpack.c.l.b16 %v6486
        %v6852 = vunpack.c.h.b16 %v6486
        %v6853 = vunpack.c.l.b16 %v6487
        %v6854 = vunpack.c.h.b16 %v6487
        %v6855 = vunpack.c.l.b16 %v6488
        %v6856 = vunpack.c.h.b16 %v6488
        %v6857 = vunpack.c.l.b16 %v6489
        %v6858 = vunpack.c.h.b16 %v6489
        %v6859 = vunpack.c.l.b16 %v6490
        %v6860 = vunpack.c.h.b16 %v6490
        %v6861 = vunpack.c.l.b16 %v6491
        %v6862 = vunpack.c.h.b16 %v6491
        %v6863 = vunpack.c.l.b16 %v6492
        %v6864 = vunpack.c.h.b16 %v6492
        %v6865 = vunpack.c.l.b16 %v6493
        %v6866 = vunpack.c.h.b16 %v6493
        %v6867 = vunpack.c.l.b16 %v6494
        %v6868 = vunpack.c.h.b16 %v6494
        %v6869 = vunpack.c.l.b16 %v6495
        %v6870 = vunpack.c.h.b16 %v6495
        %v6871 = vunpack.c.l.b16 %v6496
        %v6872 = vunpack.c.h.b16 %v6496
        %v6873 = vunpack.c.l.b16 %v6497
        %v6874 = vunpack.c.h.b16 %v6497
        %v6875 = vunpack.c.l.b16 %v6498
        %v6876 = vunpack.c.h.b16 %v6498
        %v6877 = vunpack.c.l.b16 %v6499
        %v6878 = vunpack.c.h.b16 %v6499
        %v6879 = vunpack.c.l.b16 %v6500
        %v6880 = vunpack.c.h.b16 %v6500
        %v6881 = vunpack.c.l.b16 %v6501
        %v6882 = vunpack.c.h.b16 %v6501
        %v6883 = vunpack.c.l.b16 %v6502
        %v6884 = vunpack.c.h.b16 %v6502
        %v6885 = vunpack.c.l.b16 %v6503
        %v6886 = vunpack.c.h.b16 %v6503
        %v6887 = vunpack.c.l.b16 %v6504
        %v6888 = vunpack.c.h.b16 %v6504
        %v6889 = vpack.c.b16 %v6637, %v6633
        %v6890 = vpack.c.b16 %v6638, %v6634
        %v6891 = vpack.c.b16 %v6639, %v6635
        %v6892 = vpack.c.b16 %v6640, %v6636
        %v6893 = vpack.c.b16 %v6645, %v6641
        %v6894 = vpack.c.b16 %v6646, %v6642
        %v6895 = vpack.c.b16 %v6647, %v6643
        %v6896 = vpack.c.b16 %v6648, %v6644
        %v6897 = vpack.c.b16 %v6653, %v6649
        %v6898 = vpack.c.b16 %v6654, %v6650
        %v6899 = vpack.c.b16 %v6655, %v6651
        %v6900 = vpack.c.b16 %v6656, %v6652
        %v6901 = vpack.c.b16 %v6661, %v6657
        %v6902 = vpack.c.b16 %v6662, %v6658
        %v6903 = vpack.c.b16 %v6663, %v6659
        %v6904 = vpack.c.b16 %v6664, %v6660
        %v6905 = vpack.c.b16 %v6669, %v6665
        %v6906 = vpack.c.b16 %v6670, %v6666
        %v6907 = vpack.c.b16 %v6671, %v6667
        %v6908 = vpack.c.b16 %v6672, %v6668
        %v6909 = vpack.c.b16 %v6677, %v6673
        %v6910 = vpack.c.b16 %v6678, %v6674
        %v6911 = vpack.c.b16 %v6679, %v6675
        %v6912 = vpack.c.b16 %v6680, %v6676
        %v6913 = vpack.c.b16 %v6685, %v6681
        %v6914 = vpack.c.b16 %v6686, %v6682
        %v6915 = vpack.c.b16 %v6687, %v6683
        %v6916 = vpack.c.b16 %v6688, %v6684
        %v6917 = vpack.c.b16 %v6693, %v6689
        %v6918 = vpack.c.b16 %v6694, %v6690
        %v6919 = vpack.c.b16 %v6695, %v6691
        %v6920 = vpack.c.b16 %v6696, %v6692
        %v6921 = vpack.c.b16 %v6701, %v6697
        %v6922 = vpack.c.b16 %v6702, %v6698
        %v6923 = vpack.c.b16 %v6703, %v6699
        %v6924 = vpack.c.b16 %v6704, %v6700
        %v6925 = vpack.c.b16 %v6709, %v6705
        %v6926 = vpack.c.b16 %v6710, %v6706
        %v6927 = vpack.c.b16 %v6711, %v6707
        %v6928 = vpack.c.b16 %v6712, %v6708
        %v6929 = vpack.c.b16 %v6717, %v6713
        %v6930 = vpack.c.b16 %v6718, %v6714
        %v6931 = vpack.c.b16 %v6719, %v6715
        %v6932 = vpack.c.b16 %v6720, %v6716
        %v6933 = vpack.c.b16 %v6725, %v6721
        %v6934 = vpack.c.b16 %v6726, %v6722
        %v6935 = vpack.c.b16 %v6727, %v6723
        %v6936 = vpack.c.b16 %v6728, %v6724
        %v6937 = vpack.c.b16 %v6733, %v6729
        %v6938 = vpack.c.b16 %v6734, %v6730
        %v6939 = vpack.c.b16 %v6735, %v6731
        %v6940 = vpack.c.b16 %v6736, %v6732
        %v6941 = vpack.c.b16 %v6741, %v6737
        %v6942 = vpack.c.b16 %v6742, %v6738
        %v6943 = vpack.c.b16 %v6743, %v6739
        %v6944 = vpack.c.b16 %v6744, %v6740
        %v6945 = vpack.c.b16 %v6749, %v6745
        %v6946 = vpack.c.b16 %v6750, %v6746
        %v6947 = vpack.c.b16 %v6751, %v6747
        %v6948 = vpack.c.b16 %v6752, %v6748
        %v6949 = vpack.c.b16 %v6757, %v6753
        %v6950 = vpack.c.b16 %v6758, %v6754
        %v6951 = vpack.c.b16 %v6759, %v6755
        %v6952 = vpack.c.b16 %v6760, %v6756
        %v6953 = vpack.c.b16 %v6765, %v6761
        %v6954 = vpack.c.b16 %v6766, %v6762
        %v6955 = vpack.c.b16 %v6767, %v6763
        %v6956 = vpack.c.b16 %v6768, %v6764
        %v6957 = vpack.c.b16 %v6773, %v6769
        %v6958 = vpack.c.b16 %v6774, %v6770
        %v6959 = vpack.c.b16 %v6775, %v6771
        %v6960 = vpack.c.b16 %v6776, %v6772
        %v6961 = vpack.c.b16 %v6781, %v6777
        %v6962 = vpack.c.b16 %v6782, %v6778
        %v6963 = vpack.c.b16 %v6783, %v6779
        %v6964 = vpack.c.b16 %v6784, %v6780
        %v6965 = vpack.c.b16 %v6789, %v6785
        %v6966 = vpack.c.b16 %v6790, %v6786
        %v6967 = vpack.c.b16 %v6791, %v6787
        %v6968 = vpack.c.b16 %v6792, %v6788
        %v6969 = vpack.c.b16 %v6797, %v6793
        %v6970 = vpack.c.b16 %v6798, %v6794
        %v6971 = vpack.c.b16 %v6799, %v6795
        %v6972 = vpack.c.b16 %v6800, %v6796
        %v6973 = vpack.c.b16 %v6805, %v6801
        %v6974 = vpack.c.b16 %v6806, %v6802
        %v6975 = vpack.c.b16 %v6807, %v6803
        %v6976 = vpack.c.b16 %v6808, %v6804
        %v6977 = vpack.c.b16 %v6813, %v6809
        %v6978 = vpack.c.b16 %v6814, %v6810
        %v6979 = vpack.c.b16 %v6815, %v6811
        %v6980 = vpack.c.b16 %v6816, %v6812
        %v6981 = vpack.c.b16 %v6821, %v6817
        %v6982 = vpack.c.b16 %v6822, %v6818
        %v6983 = vpack.c.b16 %v6823, %v6819
        %v6984 = vpack.c.b16 %v6824, %v6820
        %v6985 = vpack.c.b16 %v6829, %v6825
        %v6986 = vpack.c.b16 %v6830, %v6826
        %v6987 = vpack.c.b16 %v6831, %v6827
        %v6988 = vpack.c.b16 %v6832, %v6828
        %v6989 = vpack.c.b16 %v6837, %v6833
        %v6990 = vpack.c.b16 %v6838, %v6834
        %v6991 = vpack.c.b16 %v6839, %v6835
        %v6992 = vpack.c.b16 %v6840, %v6836
        %v6993 = vpack.c.b16 %v6845, %v6841
        %v6994 = vpack.c.b16 %v6846, %v6842
        %v6995 = vpack.c.b16 %v6847, %v6843
        %v6996 = vpack.c.b16 %v6848, %v6844
        %v6997 = vpack.c.b16 %v6853, %v6849
        %v6998 = vpack.c.b16 %v6854, %v6850
        %v6999 = vpack.c.b16 %v6855, %v6851
        %v7000 = vpack.c.b16 %v6856, %v6852
        %v7001 = vpack.c.b16 %v6861, %v6857
        %v7002 = vpack.c.b16 %v6862, %v6858
        %v7003 = vpack.c.b16 %v6863, %v6859
        %v7004 = vpack.c.b16 %v6864, %v6860
        %v7005 = vpack.c.b16 %v6869, %v6865
        %v7006 = vpack.c.b16 %v6870, %v6866
        %v7007 = vpack.c.b16 %v6871, %v6867
        %v7008 = vpack.c.b16 %v6872, %v6868
        %v7009 = vpack.c.b16 %v6877, %v6873
        %v7010 = vpack.c.b16 %v6878, %v6874
        %v7011 = vpack.c.b16 %v6879, %v6875
        %v7012 = vpack.c.b16 %v6880, %v6876
        %v7013 = vpack.c.b16 %v6885, %v6881
        %v7014 = vpack.c.b16 %v6886, %v6882
        %v7015 = vpack.c.b16 %v6887, %v6883
        %v7016 = vpack.c.b16 %v6888, %v6884
        %7145 = vmatpush.bf16.msra.mxu0 %v6917
        %7146 = vmatpush.bf16.msra.mxu0 %v6913
        %7147 = vmatpush.bf16.msra.mxu0 %v6909
        %7148 = vmatpush.bf16.msra.mxu0 %v6905
        %7149 = vmatpush.bf16.msra.mxu0 %v6901
        %7150 = vmatpush.bf16.msra.mxu0 %v6897
        %7151 = vmatpush.bf16.msra.mxu0 %v6893
        %7152 = vmatpush.bf16.msra.mxu0 %v6889
        %7153 = vmatmul.bf16.gmra.mxu0 %v431
        %v7154 = vpop.f32.mrf.mxu0
        %v7155 = vadd.f32 0.0, %v7154
        %v7156 = vpop.f32.mrf.mxu0
        %7157 = vdwg.mxu0
        %7158 = vmatpush.bf16.msra.mxu0 %v6949
        %7159 = vmatpush.bf16.msra.mxu0 %v6945
        %7160 = vmatpush.bf16.msra.mxu0 %v6941
        %7161 = vmatpush.bf16.msra.mxu0 %v6937
        %7162 = vmatpush.bf16.msra.mxu0 %v6933
        %7163 = vmatpush.bf16.msra.mxu0 %v6929
        %7164 = vmatpush.bf16.msra.mxu0 %v6925
        %7165 = vmatpush.bf16.msra.mxu0 %v6921
        %7166 = vmatmul.bf16.gmra.mxu0 %v432
        %v7167 = vpop.f32.mrf.mxu0
        %v7168 = vadd.f32 %v7155, %v7167
        %v7169 = vpop.f32.mrf.mxu0
        %7170 = vdwg.mxu0
        %7171 = vmatpush.bf16.msra.mxu0 %v6981
        %7172 = vmatpush.bf16.msra.mxu0 %v6977
        %7173 = vmatpush.bf16.msra.mxu0 %v6973
        %7174 = vmatpush.bf16.msra.mxu0 %v6969
        %7175 = vmatpush.bf16.msra.mxu0 %v6965
        %7176 = vmatpush.bf16.msra.mxu0 %v6961
        %7177 = vmatpush.bf16.msra.mxu0 %v6957
        %7178 = vmatpush.bf16.msra.mxu0 %v6953
        %7179 = vmatmul.bf16.gmra.mxu0 %v433
        %v7180 = vpop.f32.mrf.mxu0
        %v7181 = vadd.f32 %v7168, %v7180
        %v7182 = vpop.f32.mrf.mxu0
        %7183 = vdwg.mxu0
        %7184 = vmatpush.bf16.msra.mxu0 %v7013
        %7185 = vmatpush.bf16.msra.mxu0 %v7009
        %7186 = vmatpush.bf16.msra.mxu0 %v7005
        %7187 = vmatpush.bf16.msra.mxu0 %v7001
        %7188 = vmatpush.bf16.msra.mxu0 %v6997
        %7189 = vmatpush.bf16.msra.mxu0 %v6993
        %7190 = vmatpush.bf16.msra.mxu0 %v6989
        %7191 = vmatpush.bf16.msra.mxu0 %v6985
        %7192 = vmatmul.bf16.gmra.mxu0 %v434
        %v7193 = vpop.f32.mrf.mxu0
        %v7194 = vadd.f32 %v7181, %v7193
        %v7195 = vpop.f32.mrf.mxu0
        %7196 = vdwg.mxu0
        %7197 = vmatpush.bf16.msra.mxu0 %v6918
        %7198 = vmatpush.bf16.msra.mxu0 %v6914
        %7199 = vmatpush.bf16.msra.mxu0 %v6910
        %7200 = vmatpush.bf16.msra.mxu0 %v6906
        %7201 = vmatpush.bf16.msra.mxu0 %v6902
        %7202 = vmatpush.bf16.msra.mxu0 %v6898
        %7203 = vmatpush.bf16.msra.mxu0 %v6894
        %7204 = vmatpush.bf16.msra.mxu0 %v6890
        %7205 = vmatmul.bf16.gmra.mxu0 %v431
        %v7206 = vpop.f32.mrf.mxu0
        %v7207 = vadd.f32 0.0, %v7206
        %v7208 = vpop.f32.mrf.mxu0
        %7209 = vdwg.mxu0
        %7210 = vmatpush.bf16.msra.mxu0 %v6950
        %7211 = vmatpush.bf16.msra.mxu0 %v6946
        %7212 = vmatpush.bf16.msra.mxu0 %v6942
        %7213 = vmatpush.bf16.msra.mxu0 %v6938
        %7214 = vmatpush.bf16.msra.mxu0 %v6934
        %7215 = vmatpush.bf16.msra.mxu0 %v6930
        %7216 = vmatpush.bf16.msra.mxu0 %v6926
        %7217 = vmatpush.bf16.msra.mxu0 %v6922
        %7218 = vmatmul.bf16.gmra.mxu0 %v432
        %v7219 = vpop.f32.mrf.mxu0
        %v7220 = vadd.f32 %v7207, %v7219
        %v7221 = vpop.f32.mrf.mxu0
        %7222 = vdwg.mxu0
        %7223 = vmatpush.bf16.msra.mxu0 %v6982
        %7224 = vmatpush.bf16.msra.mxu0 %v6978
        %7225 = vmatpush.bf16.msra.mxu0 %v6974
        %7226 = vmatpush.bf16.msra.mxu0 %v6970
        %7227 = vmatpush.bf16.msra.mxu0 %v6966
        %7228 = vmatpush.bf16.msra.mxu0 %v6962
        %7229 = vmatpush.bf16.msra.mxu0 %v6958
        %7230 = vmatpush.bf16.msra.mxu0 %v6954
        %7231 = vmatmul.bf16.gmra.mxu0 %v433
        %v7232 = vpop.f32.mrf.mxu0
        %v7233 = vadd.f32 %v7220, %v7232
        %v7234 = vpop.f32.mrf.mxu0
        %7235 = vdwg.mxu0
        %7236 = vmatpush.bf16.msra.mxu0 %v7014
        %7237 = vmatpush.bf16.msra.mxu0 %v7010
        %7238 = vmatpush.bf16.msra.mxu0 %v7006
        %7239 = vmatpush.bf16.msra.mxu0 %v7002
        %7240 = vmatpush.bf16.msra.mxu0 %v6998
        %7241 = vmatpush.bf16.msra.mxu0 %v6994
        %7242 = vmatpush.bf16.msra.mxu0 %v6990
        %7243 = vmatpush.bf16.msra.mxu0 %v6986
        %7244 = vmatmul.bf16.gmra.mxu0 %v434
        %v7245 = vpop.f32.mrf.mxu0
        %v7246 = vadd.f32 %v7233, %v7245
        %v7247 = vpop.f32.mrf.mxu0
        %7248 = vdwg.mxu0
        %7249 = vmatpush.bf16.msra.mxu0 %v6919
        %7250 = vmatpush.bf16.msra.mxu0 %v6915
        %7251 = vmatpush.bf16.msra.mxu0 %v6911
        %7252 = vmatpush.bf16.msra.mxu0 %v6907
        %7253 = vmatpush.bf16.msra.mxu0 %v6903
        %7254 = vmatpush.bf16.msra.mxu0 %v6899
        %7255 = vmatpush.bf16.msra.mxu0 %v6895
        %7256 = vmatpush.bf16.msra.mxu0 %v6891
        %7257 = vmatmul.bf16.gmra.mxu0 %v431
        %v7258 = vpop.f32.mrf.mxu0
        %v7259 = vadd.f32 0.0, %v7258
        %v7260 = vpop.f32.mrf.mxu0
        %7261 = vdwg.mxu0
        %7262 = vmatpush.bf16.msra.mxu0 %v6951
        %7263 = vmatpush.bf16.msra.mxu0 %v6947
        %7264 = vmatpush.bf16.msra.mxu0 %v6943
        %7265 = vmatpush.bf16.msra.mxu0 %v6939
        %7266 = vmatpush.bf16.msra.mxu0 %v6935
        %7267 = vmatpush.bf16.msra.mxu0 %v6931
        %7268 = vmatpush.bf16.msra.mxu0 %v6927
        %7269 = vmatpush.bf16.msra.mxu0 %v6923
        %7270 = vmatmul.bf16.gmra.mxu0 %v432
        %v7271 = vpop.f32.mrf.mxu0
        %v7272 = vadd.f32 %v7259, %v7271
        %v7273 = vpop.f32.mrf.mxu0
        %7274 = vdwg.mxu0
        %7275 = vmatpush.bf16.msra.mxu0 %v6983
        %7276 = vmatpush.bf16.msra.mxu0 %v6979
        %7277 = vmatpush.bf16.msra.mxu0 %v6975
        %7278 = vmatpush.bf16.msra.mxu0 %v6971
        %7279 = vmatpush.bf16.msra.mxu0 %v6967
        %7280 = vmatpush.bf16.msra.mxu0 %v6963
        %7281 = vmatpush.bf16.msra.mxu0 %v6959
        %7282 = vmatpush.bf16.msra.mxu0 %v6955
        %7283 = vmatmul.bf16.gmra.mxu0 %v433
        %v7284 = vpop.f32.mrf.mxu0
        %v7285 = vadd.f32 %v7272, %v7284
        %v7286 = vpop.f32.mrf.mxu0
        %7287 = vdwg.mxu0
        %7288 = vmatpush.bf16.msra.mxu0 %v7015
        %7289 = vmatpush.bf16.msra.mxu0 %v7011
        %7290 = vmatpush.bf16.msra.mxu0 %v7007
        %7291 = vmatpush.bf16.msra.mxu0 %v7003
        %7292 = vmatpush.bf16.msra.mxu0 %v6999
        %7293 = vmatpush.bf16.msra.mxu0 %v6995
        %7294 = vmatpush.bf16.msra.mxu0 %v6991
        %7295 = vmatpush.bf16.msra.mxu0 %v6987
        %7296 = vmatmul.bf16.gmra.mxu0 %v434
        %v7297 = vpop.f32.mrf.mxu0
        %v7298 = vadd.f32 %v7285, %v7297
        %v7299 = vpop.f32.mrf.mxu0
        %7300 = vdwg.mxu0
        %7301 = vmatpush.bf16.msra.mxu0 %v6920
        %7302 = vmatpush.bf16.msra.mxu0 %v6916
        %7303 = vmatpush.bf16.msra.mxu0 %v6912
        %7304 = vmatpush.bf16.msra.mxu0 %v6908
        %7305 = vmatpush.bf16.msra.mxu0 %v6904
        %7306 = vmatpush.bf16.msra.mxu0 %v6900
        %7307 = vmatpush.bf16.msra.mxu0 %v6896
        %7308 = vmatpush.bf16.msra.mxu0 %v6892
        %7309 = vmatmul.bf16.gmra.mxu0 %v431
        %v7310 = vpop.f32.mrf.mxu0
        %v7311 = vadd.f32 0.0, %v7310
        %v7312 = vpop.f32.mrf.mxu0
        %7313 = vdwg.mxu0
        %7314 = vmatpush.bf16.msra.mxu0 %v6952
        %7315 = vmatpush.bf16.msra.mxu0 %v6948
        %7316 = vmatpush.bf16.msra.mxu0 %v6944
        %7317 = vmatpush.bf16.msra.mxu0 %v6940
        %7318 = vmatpush.bf16.msra.mxu0 %v6936
        %7319 = vmatpush.bf16.msra.mxu0 %v6932
        %7320 = vmatpush.bf16.msra.mxu0 %v6928
        %7321 = vmatpush.bf16.msra.mxu0 %v6924
        %7322 = vmatmul.bf16.gmra.mxu0 %v432
        %v7323 = vpop.f32.mrf.mxu0
        %v7324 = vadd.f32 %v7311, %v7323
        %v7325 = vpop.f32.mrf.mxu0
        %7326 = vdwg.mxu0
        %7327 = vmatpush.bf16.msra.mxu0 %v6984
        %7328 = vmatpush.bf16.msra.mxu0 %v6980
        %7329 = vmatpush.bf16.msra.mxu0 %v6976
        %7330 = vmatpush.bf16.msra.mxu0 %v6972
        %7331 = vmatpush.bf16.msra.mxu0 %v6968
        %7332 = vmatpush.bf16.msra.mxu0 %v6964
        %7333 = vmatpush.bf16.msra.mxu0 %v6960
        %7334 = vmatpush.bf16.msra.mxu0 %v6956
        %7335 = vmatmul.bf16.gmra.mxu0 %v433
        %v7336 = vpop.f32.mrf.mxu0
        %v7337 = vadd.f32 %v7324, %v7336
        %v7338 = vpop.f32.mrf.mxu0
        %7339 = vdwg.mxu0
        %7340 = vmatpush.bf16.msra.mxu0 %v7016
        %7341 = vmatpush.bf16.msra.mxu0 %v7012
        %7342 = vmatpush.bf16.msra.mxu0 %v7008
        %7343 = vmatpush.bf16.msra.mxu0 %v7004
        %7344 = vmatpush.bf16.msra.mxu0 %v7000
        %7345 = vmatpush.bf16.msra.mxu0 %v6996
        %7346 = vmatpush.bf16.msra.mxu0 %v6992
        %7347 = vmatpush.bf16.msra.mxu0 %v6988
        %7348 = vmatmul.bf16.gmra.mxu0 %v434
        %v7349 = vpop.f32.mrf.mxu0
        %v7350 = vadd.f32 %v7337, %v7349
        %v7351 = vpop.f32.mrf.mxu0
        %7352 = vdwg.mxu0
        %v7353 = vpack.c.bf16 %v7246, %v7194
        %v7354 = vpack.c.bf16 %v7350, %v7298
        %v7355 = vld [vmem:[%s2 + $0xc] sm:$0xf]
        %v7357 = vperm.slane %v7355, 0
        %v7358 = vperm.slane %v7355, 1
        %v7359 = vperm.slane %v7355, 2
        %v7360 = vperm.slane %v7355, 3
        %v7365 = vpack.c.bf16 %v7358, %v7357
        %v7366 = vpack.c.bf16 %v7360, %v7359
        %v7369 = vunpack.c.l.b16 %v7365
        %v7370 = vunpack.c.h.b16 %v7365
        %v7371 = vunpack.c.l.b16 %v7366
        %v7372 = vunpack.c.h.b16 %v7366
        %v7373 = vpack.c.b16 %v7369, %v7369
        %v7374 = vpack.c.b16 %v7370, %v7370
        %v7375 = vpack.c.b16 %v7371, %v7371
        %v7376 = vpack.c.b16 %v7372, %v7372
        %v7378 = vpack.i.b16 %v7373, %v7373
        %v7380 = vperm.slane %v7378, 0
        %v7382 = vpack.i.b16 %v7374, %v7374
        %v7384 = vperm.slane %v7382, 0
        %v7386 = vpack.i.b16 %v7375, %v7375
        %v7388 = vperm.slane %v7386, 0
        %v7390 = vpack.i.b16 %v7376, %v7376
        %v7392 = vperm.slane %v7390, 0
        %v7393 = vunpack.c.l.bf16 %v7353
        %v7394 = vunpack.c.h.bf16 %v7353
        %v7395 = vunpack.c.l.bf16 %v7354
        %v7396 = vunpack.c.h.bf16 %v7354
        %v7397 = vunpack.c.l.bf16 %v7380
        %v7398 = vunpack.c.l.bf16 %v7384
        %v7399 = vunpack.c.l.bf16 %v7388
        %v7400 = vunpack.c.l.bf16 %v7392
        %v7401 = vadd.f32 %v7393, %v7397
        %v7402 = vadd.f32 %v7394, %v7398
        %v7403 = vadd.f32 %v7395, %v7399
        %v7404 = vadd.f32 %v7396, %v7400
        %v7405 = vpack.c.bf16 %v7402, %v7401
        %v7406 = vpack.c.bf16 %v7404, %v7403
        %v7407 = vunpack.c.l.bf16 %v7405
        %v7408 = vunpack.c.h.bf16 %v7405
        %v7409 = vunpack.c.l.bf16 %v7406
        %v7410 = vunpack.c.h.bf16 %v7406
        %v7411 = vmax.f32 %v7407, 0.0
        %v7412 = vmax.f32 %v7408, 0.0
        %v7413 = vmax.f32 %v7409, 0.0
        %v7414 = vmax.f32 %v7410, 0.0
        %v7415 = vpack.c.bf16 %v7411, %v7411
        %v7416 = vpack.c.bf16 %v7412, %v7412
        %v7417 = vpack.c.bf16 %v7413, %v7413
        %v7418 = vpack.c.bf16 %v7414, %v7414
        %v7419 = vld [vmem:[%s3 + $0xc00] sm:$0xff]
        %v7420 = vld [vmem:[%s3 + $0xc08] sm:$0xff]
        %v7421 = vld [vmem:[%s3 + $0xc10] sm:$0xff]
        %v7422 = vld [vmem:[%s3 + $0xc18] sm:$0xff]
        %v7423 = vld [vmem:[%s3 + $0xc20] sm:$0xff]
        %v7424 = vld [vmem:[%s3 + $0xc28] sm:$0xff]
        %v7425 = vld [vmem:[%s3 + $0xc30] sm:$0xff]
        %v7426 = vld [vmem:[%s3 + $0xc38] sm:$0xff]
        %v7427 = vld [vmem:[%s3 + $0xc40] sm:$0xff]
        %v7428 = vld [vmem:[%s3 + $0xc48] sm:$0xff]
        %v7429 = vld [vmem:[%s3 + $0xc50] sm:$0xff]
        %v7430 = vld [vmem:[%s3 + $0xc58] sm:$0xff]
        %v7431 = vld [vmem:[%s3 + $0xc60] sm:$0xff]
        %v7432 = vld [vmem:[%s3 + $0xc68] sm:$0xff]
        %v7433 = vld [vmem:[%s3 + $0xc70] sm:$0xff]
        %v7434 = vld [vmem:[%s3 + $0xc78] sm:$0xff]
        %v7435 = vld [vmem:[%s3 + $0xc80] sm:$0xff]
        %v7436 = vld [vmem:[%s3 + $0xc88] sm:$0xff]
        %v7437 = vld [vmem:[%s3 + $0xc90] sm:$0xff]
        %v7438 = vld [vmem:[%s3 + $0xc98] sm:$0xff]
        %v7439 = vld [vmem:[%s3 + $0xca0] sm:$0xff]
        %v7440 = vld [vmem:[%s3 + $0xca8] sm:$0xff]
        %v7441 = vld [vmem:[%s3 + $0xcb0] sm:$0xff]
        %v7442 = vld [vmem:[%s3 + $0xcb8] sm:$0xff]
        %v7443 = vld [vmem:[%s3 + $0xcc0] sm:$0xff]
        %v7444 = vld [vmem:[%s3 + $0xcc8] sm:$0xff]
        %v7445 = vld [vmem:[%s3 + $0xcd0] sm:$0xff]
        %v7446 = vld [vmem:[%s3 + $0xcd8] sm:$0xff]
        %v7447 = vld [vmem:[%s3 + $0xce0] sm:$0xff]
        %v7448 = vld [vmem:[%s3 + $0xce8] sm:$0xff]
        %v7449 = vld [vmem:[%s3 + $0xcf0] sm:$0xff]
        %v7450 = vld [vmem:[%s3 + $0xcf8] sm:$0xff]
        %v7451 = vld [vmem:[%s3 + $0xd00] sm:$0xff]
        %v7452 = vld [vmem:[%s3 + $0xd08] sm:$0xff]
        %v7453 = vld [vmem:[%s3 + $0xd10] sm:$0xff]
        %v7454 = vld [vmem:[%s3 + $0xd18] sm:$0xff]
        %v7455 = vld [vmem:[%s3 + $0xd20] sm:$0xff]
        %v7456 = vld [vmem:[%s3 + $0xd28] sm:$0xff]
        %v7457 = vld [vmem:[%s3 + $0xd30] sm:$0xff]
        %v7458 = vld [vmem:[%s3 + $0xd38] sm:$0xff]
        %v7459 = vld [vmem:[%s3 + $0xd40] sm:$0xff]
        %v7460 = vld [vmem:[%s3 + $0xd48] sm:$0xff]
        %v7461 = vld [vmem:[%s3 + $0xd50] sm:$0xff]
        %v7462 = vld [vmem:[%s3 + $0xd58] sm:$0xff]
        %v7463 = vld [vmem:[%s3 + $0xd60] sm:$0xff]
        %v7464 = vld [vmem:[%s3 + $0xd68] sm:$0xff]
        %v7465 = vld [vmem:[%s3 + $0xd70] sm:$0xff]
        %v7466 = vld [vmem:[%s3 + $0xd78] sm:$0xff]
        %v7467 = vld [vmem:[%s3 + $0xd80] sm:$0xff]
        %v7468 = vld [vmem:[%s3 + $0xd88] sm:$0xff]
        %v7469 = vld [vmem:[%s3 + $0xd90] sm:$0xff]
        %v7470 = vld [vmem:[%s3 + $0xd98] sm:$0xff]
        %v7471 = vld [vmem:[%s3 + $0xda0] sm:$0xff]
        %v7472 = vld [vmem:[%s3 + $0xda8] sm:$0xff]
        %v7473 = vld [vmem:[%s3 + $0xdb0] sm:$0xff]
        %v7474 = vld [vmem:[%s3 + $0xdb8] sm:$0xff]
        %v7475 = vld [vmem:[%s3 + $0xdc0] sm:$0xff]
        %v7476 = vld [vmem:[%s3 + $0xdc8] sm:$0xff]
        %v7477 = vld [vmem:[%s3 + $0xdd0] sm:$0xff]
        %v7478 = vld [vmem:[%s3 + $0xdd8] sm:$0xff]
        %v7479 = vld [vmem:[%s3 + $0xde0] sm:$0xff]
        %v7480 = vld [vmem:[%s3 + $0xde8] sm:$0xff]
        %v7481 = vld [vmem:[%s3 + $0xdf0] sm:$0xff]
        %v7482 = vld [vmem:[%s3 + $0xdf8] sm:$0xff]
        %v7483 = vld [vmem:[%s3 + $0xe00] sm:$0xff]
        %v7484 = vld [vmem:[%s3 + $0xe08] sm:$0xff]
        %v7485 = vld [vmem:[%s3 + $0xe10] sm:$0xff]
        %v7486 = vld [vmem:[%s3 + $0xe18] sm:$0xff]
        %v7487 = vld [vmem:[%s3 + $0xe20] sm:$0xff]
        %v7488 = vld [vmem:[%s3 + $0xe28] sm:$0xff]
        %v7489 = vld [vmem:[%s3 + $0xe30] sm:$0xff]
        %v7490 = vld [vmem:[%s3 + $0xe38] sm:$0xff]
        %v7491 = vld [vmem:[%s3 + $0xe40] sm:$0xff]
        %v7492 = vld [vmem:[%s3 + $0xe48] sm:$0xff]
        %v7493 = vld [vmem:[%s3 + $0xe50] sm:$0xff]
        %v7494 = vld [vmem:[%s3 + $0xe58] sm:$0xff]
        %v7495 = vld [vmem:[%s3 + $0xe60] sm:$0xff]
        %v7496 = vld [vmem:[%s3 + $0xe68] sm:$0xff]
        %v7497 = vld [vmem:[%s3 + $0xe70] sm:$0xff]
        %v7498 = vld [vmem:[%s3 + $0xe78] sm:$0xff]
        %v7499 = vld [vmem:[%s3 + $0xe80] sm:$0xff]
        %v7500 = vld [vmem:[%s3 + $0xe88] sm:$0xff]
        %v7501 = vld [vmem:[%s3 + $0xe90] sm:$0xff]
        %v7502 = vld [vmem:[%s3 + $0xe98] sm:$0xff]
        %v7503 = vld [vmem:[%s3 + $0xea0] sm:$0xff]
        %v7504 = vld [vmem:[%s3 + $0xea8] sm:$0xff]
        %v7505 = vld [vmem:[%s3 + $0xeb0] sm:$0xff]
        %v7506 = vld [vmem:[%s3 + $0xeb8] sm:$0xff]
        %v7507 = vld [vmem:[%s3 + $0xec0] sm:$0xff]
        %v7508 = vld [vmem:[%s3 + $0xec8] sm:$0xff]
        %v7509 = vld [vmem:[%s3 + $0xed0] sm:$0xff]
        %v7510 = vld [vmem:[%s3 + $0xed8] sm:$0xff]
        %v7511 = vld [vmem:[%s3 + $0xee0] sm:$0xff]
        %v7512 = vld [vmem:[%s3 + $0xee8] sm:$0xff]
        %v7513 = vld [vmem:[%s3 + $0xef0] sm:$0xff]
        %v7514 = vld [vmem:[%s3 + $0xef8] sm:$0xff]
        %v7515 = vld [vmem:[%s3 + $0xf00] sm:$0xff]
        %v7516 = vld [vmem:[%s3 + $0xf08] sm:$0xff]
        %v7517 = vld [vmem:[%s3 + $0xf10] sm:$0xff]
        %v7518 = vld [vmem:[%s3 + $0xf18] sm:$0xff]
        %v7519 = vld [vmem:[%s3 + $0xf20] sm:$0xff]
        %v7520 = vld [vmem:[%s3 + $0xf28] sm:$0xff]
        %v7521 = vld [vmem:[%s3 + $0xf30] sm:$0xff]
        %v7522 = vld [vmem:[%s3 + $0xf38] sm:$0xff]
        %v7523 = vld [vmem:[%s3 + $0xf40] sm:$0xff]
        %v7524 = vld [vmem:[%s3 + $0xf48] sm:$0xff]
        %v7525 = vld [vmem:[%s3 + $0xf50] sm:$0xff]
        %v7526 = vld [vmem:[%s3 + $0xf58] sm:$0xff]
        %v7527 = vld [vmem:[%s3 + $0xf60] sm:$0xff]
        %v7528 = vld [vmem:[%s3 + $0xf68] sm:$0xff]
        %v7529 = vld [vmem:[%s3 + $0xf70] sm:$0xff]
        %v7530 = vld [vmem:[%s3 + $0xf78] sm:$0xff]
        %v7531 = vld [vmem:[%s3 + $0xf80] sm:$0xff]
        %v7532 = vld [vmem:[%s3 + $0xf88] sm:$0xff]
        %v7533 = vld [vmem:[%s3 + $0xf90] sm:$0xff]
        %v7534 = vld [vmem:[%s3 + $0xf98] sm:$0xff]
        %v7535 = vld [vmem:[%s3 + $0xfa0] sm:$0xff]
        %v7536 = vld [vmem:[%s3 + $0xfa8] sm:$0xff]
        %v7537 = vld [vmem:[%s3 + $0xfb0] sm:$0xff]
        %v7538 = vld [vmem:[%s3 + $0xfb8] sm:$0xff]
        %v7539 = vld [vmem:[%s3 + $0xfc0] sm:$0xff]
        %v7540 = vld [vmem:[%s3 + $0xfc8] sm:$0xff]
        %v7541 = vld [vmem:[%s3 + $0xfd0] sm:$0xff]
        %v7542 = vld [vmem:[%s3 + $0xfd8] sm:$0xff]
        %v7543 = vld [vmem:[%s3 + $0xfe0] sm:$0xff]
        %v7544 = vld [vmem:[%s3 + $0xfe8] sm:$0xff]
        %v7545 = vld [vmem:[%s3 + $0xff0] sm:$0xff]
        %v7546 = vld [vmem:[%s3 + $0xff8] sm:$0xff]
        %v7675 = vunpack.c.l.b16 %v7419
        %v7676 = vunpack.c.h.b16 %v7419
        %v7677 = vunpack.c.l.b16 %v7420
        %v7678 = vunpack.c.h.b16 %v7420
        %v7679 = vunpack.c.l.b16 %v7421
        %v7680 = vunpack.c.h.b16 %v7421
        %v7681 = vunpack.c.l.b16 %v7422
        %v7682 = vunpack.c.h.b16 %v7422
        %v7683 = vunpack.c.l.b16 %v7423
        %v7684 = vunpack.c.h.b16 %v7423
        %v7685 = vunpack.c.l.b16 %v7424
        %v7686 = vunpack.c.h.b16 %v7424
        %v7687 = vunpack.c.l.b16 %v7425
        %v7688 = vunpack.c.h.b16 %v7425
        %v7689 = vunpack.c.l.b16 %v7426
        %v7690 = vunpack.c.h.b16 %v7426
        %v7691 = vunpack.c.l.b16 %v7427
        %v7692 = vunpack.c.h.b16 %v7427
        %v7693 = vunpack.c.l.b16 %v7428
        %v7694 = vunpack.c.h.b16 %v7428
        %v7695 = vunpack.c.l.b16 %v7429
        %v7696 = vunpack.c.h.b16 %v7429
        %v7697 = vunpack.c.l.b16 %v7430
        %v7698 = vunpack.c.h.b16 %v7430
        %v7699 = vunpack.c.l.b16 %v7431
        %v7700 = vunpack.c.h.b16 %v7431
        %v7701 = vunpack.c.l.b16 %v7432
        %v7702 = vunpack.c.h.b16 %v7432
        %v7703 = vunpack.c.l.b16 %v7433
        %v7704 = vunpack.c.h.b16 %v7433
        %v7705 = vunpack.c.l.b16 %v7434
        %v7706 = vunpack.c.h.b16 %v7434
        %v7707 = vunpack.c.l.b16 %v7435
        %v7708 = vunpack.c.h.b16 %v7435
        %v7709 = vunpack.c.l.b16 %v7436
        %v7710 = vunpack.c.h.b16 %v7436
        %v7711 = vunpack.c.l.b16 %v7437
        %v7712 = vunpack.c.h.b16 %v7437
        %v7713 = vunpack.c.l.b16 %v7438
        %v7714 = vunpack.c.h.b16 %v7438
        %v7715 = vunpack.c.l.b16 %v7439
        %v7716 = vunpack.c.h.b16 %v7439
        %v7717 = vunpack.c.l.b16 %v7440
        %v7718 = vunpack.c.h.b16 %v7440
        %v7719 = vunpack.c.l.b16 %v7441
        %v7720 = vunpack.c.h.b16 %v7441
        %v7721 = vunpack.c.l.b16 %v7442
        %v7722 = vunpack.c.h.b16 %v7442
        %v7723 = vunpack.c.l.b16 %v7443
        %v7724 = vunpack.c.h.b16 %v7443
        %v7725 = vunpack.c.l.b16 %v7444
        %v7726 = vunpack.c.h.b16 %v7444
        %v7727 = vunpack.c.l.b16 %v7445
        %v7728 = vunpack.c.h.b16 %v7445
        %v7729 = vunpack.c.l.b16 %v7446
        %v7730 = vunpack.c.h.b16 %v7446
        %v7731 = vunpack.c.l.b16 %v7447
        %v7732 = vunpack.c.h.b16 %v7447
        %v7733 = vunpack.c.l.b16 %v7448
        %v7734 = vunpack.c.h.b16 %v7448
        %v7735 = vunpack.c.l.b16 %v7449
        %v7736 = vunpack.c.h.b16 %v7449
        %v7737 = vunpack.c.l.b16 %v7450
        %v7738 = vunpack.c.h.b16 %v7450
        %v7739 = vunpack.c.l.b16 %v7451
        %v7740 = vunpack.c.h.b16 %v7451
        %v7741 = vunpack.c.l.b16 %v7452
        %v7742 = vunpack.c.h.b16 %v7452
        %v7743 = vunpack.c.l.b16 %v7453
        %v7744 = vunpack.c.h.b16 %v7453
        %v7745 = vunpack.c.l.b16 %v7454
        %v7746 = vunpack.c.h.b16 %v7454
        %v7747 = vunpack.c.l.b16 %v7455
        %v7748 = vunpack.c.h.b16 %v7455
        %v7749 = vunpack.c.l.b16 %v7456
        %v7750 = vunpack.c.h.b16 %v7456
        %v7751 = vunpack.c.l.b16 %v7457
        %v7752 = vunpack.c.h.b16 %v7457
        %v7753 = vunpack.c.l.b16 %v7458
        %v7754 = vunpack.c.h.b16 %v7458
        %v7755 = vunpack.c.l.b16 %v7459
        %v7756 = vunpack.c.h.b16 %v7459
        %v7757 = vunpack.c.l.b16 %v7460
        %v7758 = vunpack.c.h.b16 %v7460
        %v7759 = vunpack.c.l.b16 %v7461
        %v7760 = vunpack.c.h.b16 %v7461
        %v7761 = vunpack.c.l.b16 %v7462
        %v7762 = vunpack.c.h.b16 %v7462
        %v7763 = vunpack.c.l.b16 %v7463
        %v7764 = vunpack.c.h.b16 %v7463
        %v7765 = vunpack.c.l.b16 %v7464
        %v7766 = vunpack.c.h.b16 %v7464
        %v7767 = vunpack.c.l.b16 %v7465
        %v7768 = vunpack.c.h.b16 %v7465
        %v7769 = vunpack.c.l.b16 %v7466
        %v7770 = vunpack.c.h.b16 %v7466
        %v7771 = vunpack.c.l.b16 %v7467
        %v7772 = vunpack.c.h.b16 %v7467
        %v7773 = vunpack.c.l.b16 %v7468
        %v7774 = vunpack.c.h.b16 %v7468
        %v7775 = vunpack.c.l.b16 %v7469
        %v7776 = vunpack.c.h.b16 %v7469
        %v7777 = vunpack.c.l.b16 %v7470
        %v7778 = vunpack.c.h.b16 %v7470
        %v7779 = vunpack.c.l.b16 %v7471
        %v7780 = vunpack.c.h.b16 %v7471
        %v7781 = vunpack.c.l.b16 %v7472
        %v7782 = vunpack.c.h.b16 %v7472
        %v7783 = vunpack.c.l.b16 %v7473
        %v7784 = vunpack.c.h.b16 %v7473
        %v7785 = vunpack.c.l.b16 %v7474
        %v7786 = vunpack.c.h.b16 %v7474
        %v7787 = vunpack.c.l.b16 %v7475
        %v7788 = vunpack.c.h.b16 %v7475
        %v7789 = vunpack.c.l.b16 %v7476
        %v7790 = vunpack.c.h.b16 %v7476
        %v7791 = vunpack.c.l.b16 %v7477
        %v7792 = vunpack.c.h.b16 %v7477
        %v7793 = vunpack.c.l.b16 %v7478
        %v7794 = vunpack.c.h.b16 %v7478
        %v7795 = vunpack.c.l.b16 %v7479
        %v7796 = vunpack.c.h.b16 %v7479
        %v7797 = vunpack.c.l.b16 %v7480
        %v7798 = vunpack.c.h.b16 %v7480
        %v7799 = vunpack.c.l.b16 %v7481
        %v7800 = vunpack.c.h.b16 %v7481
        %v7801 = vunpack.c.l.b16 %v7482
        %v7802 = vunpack.c.h.b16 %v7482
        %v7803 = vunpack.c.l.b16 %v7483
        %v7804 = vunpack.c.h.b16 %v7483
        %v7805 = vunpack.c.l.b16 %v7484
        %v7806 = vunpack.c.h.b16 %v7484
        %v7807 = vunpack.c.l.b16 %v7485
        %v7808 = vunpack.c.h.b16 %v7485
        %v7809 = vunpack.c.l.b16 %v7486
        %v7810 = vunpack.c.h.b16 %v7486
        %v7811 = vunpack.c.l.b16 %v7487
        %v7812 = vunpack.c.h.b16 %v7487
        %v7813 = vunpack.c.l.b16 %v7488
        %v7814 = vunpack.c.h.b16 %v7488
        %v7815 = vunpack.c.l.b16 %v7489
        %v7816 = vunpack.c.h.b16 %v7489
        %v7817 = vunpack.c.l.b16 %v7490
        %v7818 = vunpack.c.h.b16 %v7490
        %v7819 = vunpack.c.l.b16 %v7491
        %v7820 = vunpack.c.h.b16 %v7491
        %v7821 = vunpack.c.l.b16 %v7492
        %v7822 = vunpack.c.h.b16 %v7492
        %v7823 = vunpack.c.l.b16 %v7493
        %v7824 = vunpack.c.h.b16 %v7493
        %v7825 = vunpack.c.l.b16 %v7494
        %v7826 = vunpack.c.h.b16 %v7494
        %v7827 = vunpack.c.l.b16 %v7495
        %v7828 = vunpack.c.h.b16 %v7495
        %v7829 = vunpack.c.l.b16 %v7496
        %v7830 = vunpack.c.h.b16 %v7496
        %v7831 = vunpack.c.l.b16 %v7497
        %v7832 = vunpack.c.h.b16 %v7497
        %v7833 = vunpack.c.l.b16 %v7498
        %v7834 = vunpack.c.h.b16 %v7498
        %v7835 = vunpack.c.l.b16 %v7499
        %v7836 = vunpack.c.h.b16 %v7499
        %v7837 = vunpack.c.l.b16 %v7500
        %v7838 = vunpack.c.h.b16 %v7500
        %v7839 = vunpack.c.l.b16 %v7501
        %v7840 = vunpack.c.h.b16 %v7501
        %v7841 = vunpack.c.l.b16 %v7502
        %v7842 = vunpack.c.h.b16 %v7502
        %v7843 = vunpack.c.l.b16 %v7503
        %v7844 = vunpack.c.h.b16 %v7503
        %v7845 = vunpack.c.l.b16 %v7504
        %v7846 = vunpack.c.h.b16 %v7504
        %v7847 = vunpack.c.l.b16 %v7505
        %v7848 = vunpack.c.h.b16 %v7505
        %v7849 = vunpack.c.l.b16 %v7506
        %v7850 = vunpack.c.h.b16 %v7506
        %v7851 = vunpack.c.l.b16 %v7507
        %v7852 = vunpack.c.h.b16 %v7507
        %v7853 = vunpack.c.l.b16 %v7508
        %v7854 = vunpack.c.h.b16 %v7508
        %v7855 = vunpack.c.l.b16 %v7509
        %v7856 = vunpack.c.h.b16 %v7509
        %v7857 = vunpack.c.l.b16 %v7510
        %v7858 = vunpack.c.h.b16 %v7510
        %v7859 = vunpack.c.l.b16 %v7511
        %v7860 = vunpack.c.h.b16 %v7511
        %v7861 = vunpack.c.l.b16 %v7512
        %v7862 = vunpack.c.h.b16 %v7512
        %v7863 = vunpack.c.l.b16 %v7513
        %v7864 = vunpack.c.h.b16 %v7513
        %v7865 = vunpack.c.l.b16 %v7514
        %v7866 = vunpack.c.h.b16 %v7514
        %v7867 = vunpack.c.l.b16 %v7515
        %v7868 = vunpack.c.h.b16 %v7515
        %v7869 = vunpack.c.l.b16 %v7516
        %v7870 = vunpack.c.h.b16 %v7516
        %v7871 = vunpack.c.l.b16 %v7517
        %v7872 = vunpack.c.h.b16 %v7517
        %v7873 = vunpack.c.l.b16 %v7518
        %v7874 = vunpack.c.h.b16 %v7518
        %v7875 = vunpack.c.l.b16 %v7519
        %v7876 = vunpack.c.h.b16 %v7519
        %v7877 = vunpack.c.l.b16 %v7520
        %v7878 = vunpack.c.h.b16 %v7520
        %v7879 = vunpack.c.l.b16 %v7521
        %v7880 = vunpack.c.h.b16 %v7521
        %v7881 = vunpack.c.l.b16 %v7522
        %v7882 = vunpack.c.h.b16 %v7522
        %v7883 = vunpack.c.l.b16 %v7523
        %v7884 = vunpack.c.h.b16 %v7523
        %v7885 = vunpack.c.l.b16 %v7524
        %v7886 = vunpack.c.h.b16 %v7524
        %v7887 = vunpack.c.l.b16 %v7525
        %v7888 = vunpack.c.h.b16 %v7525
        %v7889 = vunpack.c.l.b16 %v7526
        %v7890 = vunpack.c.h.b16 %v7526
        %v7891 = vunpack.c.l.b16 %v7527
        %v7892 = vunpack.c.h.b16 %v7527
        %v7893 = vunpack.c.l.b16 %v7528
        %v7894 = vunpack.c.h.b16 %v7528
        %v7895 = vunpack.c.l.b16 %v7529
        %v7896 = vunpack.c.h.b16 %v7529
        %v7897 = vunpack.c.l.b16 %v7530
        %v7898 = vunpack.c.h.b16 %v7530
        %v7899 = vunpack.c.l.b16 %v7531
        %v7900 = vunpack.c.h.b16 %v7531
        %v7901 = vunpack.c.l.b16 %v7532
        %v7902 = vunpack.c.h.b16 %v7532
        %v7903 = vunpack.c.l.b16 %v7533
        %v7904 = vunpack.c.h.b16 %v7533
        %v7905 = vunpack.c.l.b16 %v7534
        %v7906 = vunpack.c.h.b16 %v7534
        %v7907 = vunpack.c.l.b16 %v7535
        %v7908 = vunpack.c.h.b16 %v7535
        %v7909 = vunpack.c.l.b16 %v7536
        %v7910 = vunpack.c.h.b16 %v7536
        %v7911 = vunpack.c.l.b16 %v7537
        %v7912 = vunpack.c.h.b16 %v7537
        %v7913 = vunpack.c.l.b16 %v7538
        %v7914 = vunpack.c.h.b16 %v7538
        %v7915 = vunpack.c.l.b16 %v7539
        %v7916 = vunpack.c.h.b16 %v7539
        %v7917 = vunpack.c.l.b16 %v7540
        %v7918 = vunpack.c.h.b16 %v7540
        %v7919 = vunpack.c.l.b16 %v7541
        %v7920 = vunpack.c.h.b16 %v7541
        %v7921 = vunpack.c.l.b16 %v7542
        %v7922 = vunpack.c.h.b16 %v7542
        %v7923 = vunpack.c.l.b16 %v7543
        %v7924 = vunpack.c.h.b16 %v7543
        %v7925 = vunpack.c.l.b16 %v7544
        %v7926 = vunpack.c.h.b16 %v7544
        %v7927 = vunpack.c.l.b16 %v7545
        %v7928 = vunpack.c.h.b16 %v7545
        %v7929 = vunpack.c.l.b16 %v7546
        %v7930 = vunpack.c.h.b16 %v7546
        %v7931 = vpack.c.b16 %v7679, %v7675
        %v7932 = vpack.c.b16 %v7680, %v7676
        %v7933 = vpack.c.b16 %v7681, %v7677
        %v7934 = vpack.c.b16 %v7682, %v7678
        %v7935 = vpack.c.b16 %v7687, %v7683
        %v7936 = vpack.c.b16 %v7688, %v7684
        %v7937 = vpack.c.b16 %v7689, %v7685
        %v7938 = vpack.c.b16 %v7690, %v7686
        %v7939 = vpack.c.b16 %v7695, %v7691
        %v7940 = vpack.c.b16 %v7696, %v7692
        %v7941 = vpack.c.b16 %v7697, %v7693
        %v7942 = vpack.c.b16 %v7698, %v7694
        %v7943 = vpack.c.b16 %v7703, %v7699
        %v7944 = vpack.c.b16 %v7704, %v7700
        %v7945 = vpack.c.b16 %v7705, %v7701
        %v7946 = vpack.c.b16 %v7706, %v7702
        %v7947 = vpack.c.b16 %v7711, %v7707
        %v7948 = vpack.c.b16 %v7712, %v7708
        %v7949 = vpack.c.b16 %v7713, %v7709
        %v7950 = vpack.c.b16 %v7714, %v7710
        %v7951 = vpack.c.b16 %v7719, %v7715
        %v7952 = vpack.c.b16 %v7720, %v7716
        %v7953 = vpack.c.b16 %v7721, %v7717
        %v7954 = vpack.c.b16 %v7722, %v7718
        %v7955 = vpack.c.b16 %v7727, %v7723
        %v7956 = vpack.c.b16 %v7728, %v7724
        %v7957 = vpack.c.b16 %v7729, %v7725
        %v7958 = vpack.c.b16 %v7730, %v7726
        %v7959 = vpack.c.b16 %v7735, %v7731
        %v7960 = vpack.c.b16 %v7736, %v7732
        %v7961 = vpack.c.b16 %v7737, %v7733
        %v7962 = vpack.c.b16 %v7738, %v7734
        %v7963 = vpack.c.b16 %v7743, %v7739
        %v7964 = vpack.c.b16 %v7744, %v7740
        %v7965 = vpack.c.b16 %v7745, %v7741
        %v7966 = vpack.c.b16 %v7746, %v7742
        %v7967 = vpack.c.b16 %v7751, %v7747
        %v7968 = vpack.c.b16 %v7752, %v7748
        %v7969 = vpack.c.b16 %v7753, %v7749
        %v7970 = vpack.c.b16 %v7754, %v7750
        %v7971 = vpack.c.b16 %v7759, %v7755
        %v7972 = vpack.c.b16 %v7760, %v7756
        %v7973 = vpack.c.b16 %v7761, %v7757
        %v7974 = vpack.c.b16 %v7762, %v7758
        %v7975 = vpack.c.b16 %v7767, %v7763
        %v7976 = vpack.c.b16 %v7768, %v7764
        %v7977 = vpack.c.b16 %v7769, %v7765
        %v7978 = vpack.c.b16 %v7770, %v7766
        %v7979 = vpack.c.b16 %v7775, %v7771
        %v7980 = vpack.c.b16 %v7776, %v7772
        %v7981 = vpack.c.b16 %v7777, %v7773
        %v7982 = vpack.c.b16 %v7778, %v7774
        %v7983 = vpack.c.b16 %v7783, %v7779
        %v7984 = vpack.c.b16 %v7784, %v7780
        %v7985 = vpack.c.b16 %v7785, %v7781
        %v7986 = vpack.c.b16 %v7786, %v7782
        %v7987 = vpack.c.b16 %v7791, %v7787
        %v7988 = vpack.c.b16 %v7792, %v7788
        %v7989 = vpack.c.b16 %v7793, %v7789
        %v7990 = vpack.c.b16 %v7794, %v7790
        %v7991 = vpack.c.b16 %v7799, %v7795
        %v7992 = vpack.c.b16 %v7800, %v7796
        %v7993 = vpack.c.b16 %v7801, %v7797
        %v7994 = vpack.c.b16 %v7802, %v7798
        %v7995 = vpack.c.b16 %v7807, %v7803
        %v7996 = vpack.c.b16 %v7808, %v7804
        %v7997 = vpack.c.b16 %v7809, %v7805
        %v7998 = vpack.c.b16 %v7810, %v7806
        %v7999 = vpack.c.b16 %v7815, %v7811
        %v8000 = vpack.c.b16 %v7816, %v7812
        %v8001 = vpack.c.b16 %v7817, %v7813
        %v8002 = vpack.c.b16 %v7818, %v7814
        %v8003 = vpack.c.b16 %v7823, %v7819
        %v8004 = vpack.c.b16 %v7824, %v7820
        %v8005 = vpack.c.b16 %v7825, %v7821
        %v8006 = vpack.c.b16 %v7826, %v7822
        %v8007 = vpack.c.b16 %v7831, %v7827
        %v8008 = vpack.c.b16 %v7832, %v7828
        %v8009 = vpack.c.b16 %v7833, %v7829
        %v8010 = vpack.c.b16 %v7834, %v7830
        %v8011 = vpack.c.b16 %v7839, %v7835
        %v8012 = vpack.c.b16 %v7840, %v7836
        %v8013 = vpack.c.b16 %v7841, %v7837
        %v8014 = vpack.c.b16 %v7842, %v7838
        %v8015 = vpack.c.b16 %v7847, %v7843
        %v8016 = vpack.c.b16 %v7848, %v7844
        %v8017 = vpack.c.b16 %v7849, %v7845
        %v8018 = vpack.c.b16 %v7850, %v7846
        %v8019 = vpack.c.b16 %v7855, %v7851
        %v8020 = vpack.c.b16 %v7856, %v7852
        %v8021 = vpack.c.b16 %v7857, %v7853
        %v8022 = vpack.c.b16 %v7858, %v7854
        %v8023 = vpack.c.b16 %v7863, %v7859
        %v8024 = vpack.c.b16 %v7864, %v7860
        %v8025 = vpack.c.b16 %v7865, %v7861
        %v8026 = vpack.c.b16 %v7866, %v7862
        %v8027 = vpack.c.b16 %v7871, %v7867
        %v8028 = vpack.c.b16 %v7872, %v7868
        %v8029 = vpack.c.b16 %v7873, %v7869
        %v8030 = vpack.c.b16 %v7874, %v7870
        %v8031 = vpack.c.b16 %v7879, %v7875
        %v8032 = vpack.c.b16 %v7880, %v7876
        %v8033 = vpack.c.b16 %v7881, %v7877
        %v8034 = vpack.c.b16 %v7882, %v7878
        %v8035 = vpack.c.b16 %v7887, %v7883
        %v8036 = vpack.c.b16 %v7888, %v7884
        %v8037 = vpack.c.b16 %v7889, %v7885
        %v8038 = vpack.c.b16 %v7890, %v7886
        %v8039 = vpack.c.b16 %v7895, %v7891
        %v8040 = vpack.c.b16 %v7896, %v7892
        %v8041 = vpack.c.b16 %v7897, %v7893
        %v8042 = vpack.c.b16 %v7898, %v7894
        %v8043 = vpack.c.b16 %v7903, %v7899
        %v8044 = vpack.c.b16 %v7904, %v7900
        %v8045 = vpack.c.b16 %v7905, %v7901
        %v8046 = vpack.c.b16 %v7906, %v7902
        %v8047 = vpack.c.b16 %v7911, %v7907
        %v8048 = vpack.c.b16 %v7912, %v7908
        %v8049 = vpack.c.b16 %v7913, %v7909
        %v8050 = vpack.c.b16 %v7914, %v7910
        %v8051 = vpack.c.b16 %v7919, %v7915
        %v8052 = vpack.c.b16 %v7920, %v7916
        %v8053 = vpack.c.b16 %v7921, %v7917
        %v8054 = vpack.c.b16 %v7922, %v7918
        %v8055 = vpack.c.b16 %v7927, %v7923
        %v8056 = vpack.c.b16 %v7928, %v7924
        %v8057 = vpack.c.b16 %v7929, %v7925
        %v8058 = vpack.c.b16 %v7930, %v7926
        %8187 = vmatpush.bf16.msra.mxu0 %v7959
        %8188 = vmatpush.bf16.msra.mxu0 %v7955
        %8189 = vmatpush.bf16.msra.mxu0 %v7951
        %8190 = vmatpush.bf16.msra.mxu0 %v7947
        %8191 = vmatpush.bf16.msra.mxu0 %v7943
        %8192 = vmatpush.bf16.msra.mxu0 %v7939
        %8193 = vmatpush.bf16.msra.mxu0 %v7935
        %8194 = vmatpush.bf16.msra.mxu0 %v7931
        %8195 = vmatmul.bf16.gmra.mxu0 %v7415
        %v8196 = vpop.f32.mrf.mxu0
        %v8197 = vadd.f32 0.0, %v8196
        %v8198 = vpop.f32.mrf.mxu0
        %8199 = vdwg.mxu0
        %8200 = vmatpush.bf16.msra.mxu0 %v7991
        %8201 = vmatpush.bf16.msra.mxu0 %v7987
        %8202 = vmatpush.bf16.msra.mxu0 %v7983
        %8203 = vmatpush.bf16.msra.mxu0 %v7979
        %8204 = vmatpush.bf16.msra.mxu0 %v7975
        %8205 = vmatpush.bf16.msra.mxu0 %v7971
        %8206 = vmatpush.bf16.msra.mxu0 %v7967
        %8207 = vmatpush.bf16.msra.mxu0 %v7963
        %8208 = vmatmul.bf16.gmra.mxu0 %v7416
        %v8209 = vpop.f32.mrf.mxu0
        %v8210 = vadd.f32 %v8197, %v8209
        %v8211 = vpop.f32.mrf.mxu0
        %8212 = vdwg.mxu0
        %8213 = vmatpush.bf16.msra.mxu0 %v8023
        %8214 = vmatpush.bf16.msra.mxu0 %v8019
        %8215 = vmatpush.bf16.msra.mxu0 %v8015
        %8216 = vmatpush.bf16.msra.mxu0 %v8011
        %8217 = vmatpush.bf16.msra.mxu0 %v8007
        %8218 = vmatpush.bf16.msra.mxu0 %v8003
        %8219 = vmatpush.bf16.msra.mxu0 %v7999
        %8220 = vmatpush.bf16.msra.mxu0 %v7995
        %8221 = vmatmul.bf16.gmra.mxu0 %v7417
        %v8222 = vpop.f32.mrf.mxu0
        %v8223 = vadd.f32 %v8210, %v8222
        %v8224 = vpop.f32.mrf.mxu0
        %8225 = vdwg.mxu0
        %8226 = vmatpush.bf16.msra.mxu0 %v8055
        %8227 = vmatpush.bf16.msra.mxu0 %v8051
        %8228 = vmatpush.bf16.msra.mxu0 %v8047
        %8229 = vmatpush.bf16.msra.mxu0 %v8043
        %8230 = vmatpush.bf16.msra.mxu0 %v8039
        %8231 = vmatpush.bf16.msra.mxu0 %v8035
        %8232 = vmatpush.bf16.msra.mxu0 %v8031
        %8233 = vmatpush.bf16.msra.mxu0 %v8027
        %8234 = vmatmul.bf16.gmra.mxu0 %v7418
        %v8235 = vpop.f32.mrf.mxu0
        %v8236 = vadd.f32 %v8223, %v8235
        %v8237 = vpop.f32.mrf.mxu0
        %8238 = vdwg.mxu0
        %8239 = vmatpush.bf16.msra.mxu0 %v7960
        %8240 = vmatpush.bf16.msra.mxu0 %v7956
        %8241 = vmatpush.bf16.msra.mxu0 %v7952
        %8242 = vmatpush.bf16.msra.mxu0 %v7948
        %8243 = vmatpush.bf16.msra.mxu0 %v7944
        %8244 = vmatpush.bf16.msra.mxu0 %v7940
        %8245 = vmatpush.bf16.msra.mxu0 %v7936
        %8246 = vmatpush.bf16.msra.mxu0 %v7932
        %8247 = vmatmul.bf16.gmra.mxu0 %v7415
        %v8248 = vpop.f32.mrf.mxu0
        %v8249 = vadd.f32 0.0, %v8248
        %v8250 = vpop.f32.mrf.mxu0
        %8251 = vdwg.mxu0
        %8252 = vmatpush.bf16.msra.mxu0 %v7992
        %8253 = vmatpush.bf16.msra.mxu0 %v7988
        %8254 = vmatpush.bf16.msra.mxu0 %v7984
        %8255 = vmatpush.bf16.msra.mxu0 %v7980
        %8256 = vmatpush.bf16.msra.mxu0 %v7976
        %8257 = vmatpush.bf16.msra.mxu0 %v7972
        %8258 = vmatpush.bf16.msra.mxu0 %v7968
        %8259 = vmatpush.bf16.msra.mxu0 %v7964
        %8260 = vmatmul.bf16.gmra.mxu0 %v7416
        %v8261 = vpop.f32.mrf.mxu0
        %v8262 = vadd.f32 %v8249, %v8261
        %v8263 = vpop.f32.mrf.mxu0
        %8264 = vdwg.mxu0
        %8265 = vmatpush.bf16.msra.mxu0 %v8024
        %8266 = vmatpush.bf16.msra.mxu0 %v8020
        %8267 = vmatpush.bf16.msra.mxu0 %v8016
        %8268 = vmatpush.bf16.msra.mxu0 %v8012
        %8269 = vmatpush.bf16.msra.mxu0 %v8008
        %8270 = vmatpush.bf16.msra.mxu0 %v8004
        %8271 = vmatpush.bf16.msra.mxu0 %v8000
        %8272 = vmatpush.bf16.msra.mxu0 %v7996
        %8273 = vmatmul.bf16.gmra.mxu0 %v7417
        %v8274 = vpop.f32.mrf.mxu0
        %v8275 = vadd.f32 %v8262, %v8274
        %v8276 = vpop.f32.mrf.mxu0
        %8277 = vdwg.mxu0
        %8278 = vmatpush.bf16.msra.mxu0 %v8056
        %8279 = vmatpush.bf16.msra.mxu0 %v8052
        %8280 = vmatpush.bf16.msra.mxu0 %v8048
        %8281 = vmatpush.bf16.msra.mxu0 %v8044
        %8282 = vmatpush.bf16.msra.mxu0 %v8040
        %8283 = vmatpush.bf16.msra.mxu0 %v8036
        %8284 = vmatpush.bf16.msra.mxu0 %v8032
        %8285 = vmatpush.bf16.msra.mxu0 %v8028
        %8286 = vmatmul.bf16.gmra.mxu0 %v7418
        %v8287 = vpop.f32.mrf.mxu0
        %v8288 = vadd.f32 %v8275, %v8287
        %v8289 = vpop.f32.mrf.mxu0
        %8290 = vdwg.mxu0
        %8291 = vmatpush.bf16.msra.mxu0 %v7961
        %8292 = vmatpush.bf16.msra.mxu0 %v7957
        %8293 = vmatpush.bf16.msra.mxu0 %v7953
        %8294 = vmatpush.bf16.msra.mxu0 %v7949
        %8295 = vmatpush.bf16.msra.mxu0 %v7945
        %8296 = vmatpush.bf16.msra.mxu0 %v7941
        %8297 = vmatpush.bf16.msra.mxu0 %v7937
        %8298 = vmatpush.bf16.msra.mxu0 %v7933
        %8299 = vmatmul.bf16.gmra.mxu0 %v7415
        %v8300 = vpop.f32.mrf.mxu0
        %v8301 = vadd.f32 0.0, %v8300
        %v8302 = vpop.f32.mrf.mxu0
        %8303 = vdwg.mxu0
        %8304 = vmatpush.bf16.msra.mxu0 %v7993
        %8305 = vmatpush.bf16.msra.mxu0 %v7989
        %8306 = vmatpush.bf16.msra.mxu0 %v7985
        %8307 = vmatpush.bf16.msra.mxu0 %v7981
        %8308 = vmatpush.bf16.msra.mxu0 %v7977
        %8309 = vmatpush.bf16.msra.mxu0 %v7973
        %8310 = vmatpush.bf16.msra.mxu0 %v7969
        %8311 = vmatpush.bf16.msra.mxu0 %v7965
        %8312 = vmatmul.bf16.gmra.mxu0 %v7416
        %v8313 = vpop.f32.mrf.mxu0
        %v8314 = vadd.f32 %v8301, %v8313
        %v8315 = vpop.f32.mrf.mxu0
        %8316 = vdwg.mxu0
        %8317 = vmatpush.bf16.msra.mxu0 %v8025
        %8318 = vmatpush.bf16.msra.mxu0 %v8021
        %8319 = vmatpush.bf16.msra.mxu0 %v8017
        %8320 = vmatpush.bf16.msra.mxu0 %v8013
        %8321 = vmatpush.bf16.msra.mxu0 %v8009
        %8322 = vmatpush.bf16.msra.mxu0 %v8005
        %8323 = vmatpush.bf16.msra.mxu0 %v8001
        %8324 = vmatpush.bf16.msra.mxu0 %v7997
        %8325 = vmatmul.bf16.gmra.mxu0 %v7417
        %v8326 = vpop.f32.mrf.mxu0
        %v8327 = vadd.f32 %v8314, %v8326
        %v8328 = vpop.f32.mrf.mxu0
        %8329 = vdwg.mxu0
        %8330 = vmatpush.bf16.msra.mxu0 %v8057
        %8331 = vmatpush.bf16.msra.mxu0 %v8053
        %8332 = vmatpush.bf16.msra.mxu0 %v8049
        %8333 = vmatpush.bf16.msra.mxu0 %v8045
        %8334 = vmatpush.bf16.msra.mxu0 %v8041
        %8335 = vmatpush.bf16.msra.mxu0 %v8037
        %8336 = vmatpush.bf16.msra.mxu0 %v8033
        %8337 = vmatpush.bf16.msra.mxu0 %v8029
        %8338 = vmatmul.bf16.gmra.mxu0 %v7418
        %v8339 = vpop.f32.mrf.mxu0
        %v8340 = vadd.f32 %v8327, %v8339
        %v8341 = vpop.f32.mrf.mxu0
        %8342 = vdwg.mxu0
        %8343 = vmatpush.bf16.msra.mxu0 %v7962
        %8344 = vmatpush.bf16.msra.mxu0 %v7958
        %8345 = vmatpush.bf16.msra.mxu0 %v7954
        %8346 = vmatpush.bf16.msra.mxu0 %v7950
        %8347 = vmatpush.bf16.msra.mxu0 %v7946
        %8348 = vmatpush.bf16.msra.mxu0 %v7942
        %8349 = vmatpush.bf16.msra.mxu0 %v7938
        %8350 = vmatpush.bf16.msra.mxu0 %v7934
        %8351 = vmatmul.bf16.gmra.mxu0 %v7415
        %v8352 = vpop.f32.mrf.mxu0
        %v8353 = vadd.f32 0.0, %v8352
        %v8354 = vpop.f32.mrf.mxu0
        %8355 = vdwg.mxu0
        %8356 = vmatpush.bf16.msra.mxu0 %v7994
        %8357 = vmatpush.bf16.msra.mxu0 %v7990
        %8358 = vmatpush.bf16.msra.mxu0 %v7986
        %8359 = vmatpush.bf16.msra.mxu0 %v7982
        %8360 = vmatpush.bf16.msra.mxu0 %v7978
        %8361 = vmatpush.bf16.msra.mxu0 %v7974
        %8362 = vmatpush.bf16.msra.mxu0 %v7970
        %8363 = vmatpush.bf16.msra.mxu0 %v7966
        %8364 = vmatmul.bf16.gmra.mxu0 %v7416
        %v8365 = vpop.f32.mrf.mxu0
        %v8366 = vadd.f32 %v8353, %v8365
        %v8367 = vpop.f32.mrf.mxu0
        %8368 = vdwg.mxu0
        %8369 = vmatpush.bf16.msra.mxu0 %v8026
        %8370 = vmatpush.bf16.msra.mxu0 %v8022
        %8371 = vmatpush.bf16.msra.mxu0 %v8018
        %8372 = vmatpush.bf16.msra.mxu0 %v8014
        %8373 = vmatpush.bf16.msra.mxu0 %v8010
        %8374 = vmatpush.bf16.msra.mxu0 %v8006
        %8375 = vmatpush.bf16.msra.mxu0 %v8002
        %8376 = vmatpush.bf16.msra.mxu0 %v7998
        %8377 = vmatmul.bf16.gmra.mxu0 %v7417
        %v8378 = vpop.f32.mrf.mxu0
        %v8379 = vadd.f32 %v8366, %v8378
        %v8380 = vpop.f32.mrf.mxu0
        %8381 = vdwg.mxu0
        %8382 = vmatpush.bf16.msra.mxu0 %v8058
        %8383 = vmatpush.bf16.msra.mxu0 %v8054
        %8384 = vmatpush.bf16.msra.mxu0 %v8050
        %8385 = vmatpush.bf16.msra.mxu0 %v8046
        %8386 = vmatpush.bf16.msra.mxu0 %v8042
        %8387 = vmatpush.bf16.msra.mxu0 %v8038
        %8388 = vmatpush.bf16.msra.mxu0 %v8034
        %8389 = vmatpush.bf16.msra.mxu0 %v8030
        %8390 = vmatmul.bf16.gmra.mxu0 %v7418
        %v8391 = vpop.f32.mrf.mxu0
        %v8392 = vadd.f32 %v8379, %v8391
        %v8393 = vpop.f32.mrf.mxu0
        %8394 = vdwg.mxu0
        %v8395 = vadd.f32 %v6373, %v8236
        %v8396 = vadd.f32 %v6374, %v8288
        %v8397 = vadd.f32 %v6375, %v8340
        %v8398 = vadd.f32 %v6376, %v8392
        %v8399 = vadd.f32 %v8395, %v8396
        %v8400 = vadd.f32 %v8399, %v8397
        %v8401 = vadd.f32 %v8400, %v8398
        %8402 = vadd.xlane.f32.xlu0 %v8401
        %v8403 = vpop.xlane.xlu0 %8402
        %v8404 = vmul.f32 %v8403, 0.001953125
        %v8405 = vsub.f32 %v8395, %v8404
        %v8406 = vsub.f32 %v8396, %v8404
        %v8407 = vsub.f32 %v8397, %v8404
        %v8408 = vsub.f32 %v8398, %v8404
        %v8409 = vmul.f32 %v8405, %v8405
        %v8410 = vmul.f32 %v8406, %v8406
        %v8411 = vmul.f32 %v8407, %v8407
        %v8412 = vmul.f32 %v8408, %v8408
        %v8413 = vadd.f32 %v8409, %v8410
        %v8414 = vadd.f32 %v8413, %v8411
        %v8415 = vadd.f32 %v8414, %v8412
        %8416 = vadd.xlane.f32.xlu0 %v8415
        %v8417 = vpop.xlane.xlu0 %8416
        %v8418 = vmul.f32 %v8417, 0.001953125
        %v8419 = vadd.f32 %v8418, 1e-05
        %v8420 = vrsqrt.pop %v8419
        %v8421 = vmul.f32 %v8420, %v8419
        %v8422 = vmul.f32 %v8421, %v8420
        %v8423 = vmul.f32 0.5, %v8422
        %v8424 = vsub.f32 1.5, %v8423
        %v8425 = vmul.f32 %v8420, %v8424
        %vm8426 = vweird.f32 %v8419
        %vm8427 = vweird.f32 %v8420
        %vm8428 = vmor %vm8426, %vm8427
        %v8429 = vsel %vm8428, %v8420, %v8425
        %v8430 = vmul.f32 %v8405, %v8429
        %v8431 = vmul.f32 %v8406, %v8429
        %v8432 = vmul.f32 %v8407, %v8429
        %v8433 = vmul.f32 %v8408, %v8429
        %v8434 = vld [vmem:[%s5] sm:$0xf]
        %v8436 = vperm.slane %v8434, 0
        %v8437 = vperm.slane %v8434, 1
        %v8438 = vperm.slane %v8434, 2
        %v8439 = vperm.slane %v8434, 3
        %v8444 = vmul.f32 %v8430, %v8436
        %v8445 = vmul.f32 %v8431, %v8437
        %v8446 = vmul.f32 %v8432, %v8438
        %v8447 = vmul.f32 %v8433, %v8439
        %v8448 = vld [vmem:[%s6] sm:$0xf]
        %v8450 = vperm.slane %v8448, 0
        %v8451 = vperm.slane %v8448, 1
        %v8452 = vperm.slane %v8448, 2
        %v8453 = vperm.slane %v8448, 3
        %v8458 = vadd.f32 %v8444, %v8450
        %v8459 = vadd.f32 %v8445, %v8451
        %v8460 = vadd.f32 %v8446, %v8452
        %v8461 = vadd.f32 %v8447, %v8453
        %8462 = vst [vmem:[%s271] sm:$0xff] %v8458
        %8463 = vst [vmem:[%s271 + $0x8] sm:$0xff] %v8459
        %8464 = vst [vmem:[%s271 + $0x10] sm:$0xff] %v8460
        %8465 = vst [vmem:[%s271 + $0x18] sm:$0xff] %v8461
        %s8466 = sand.u32 %s181, 1
        %s8467 = scalar_lea.sflag [#allocation3], %s8466
        %s8468 = sand.u32 %s181, 1
        %s8469 = smul.addr %s8468, 32
        %s8470 = scalar_lea.vmem [#allocation2], %s8469
        // Predicated region
        $region49: #{poswise_ffn.1} parent=47 // pred_check
          %p8471 = pneg %p191
        $region50: #{poswise_ffn.1} parent=47 // pred_check_branch
          %8473 = sbr.rel (%p8471) target = $region52
        $region51: #{poswise_ffn.1} parent=47 // pred_region
          %8475 = vsyncadd %s8467, 0
          %s8476 = smul.addr %s21, 4
          %s8477 = smul.addr %s8476, 8
          %s8478 = scalar_lea.hbm %s7, %s8477
          %s8480 = sshll.u32 %s8470, 4
          %s8481 = int_to_ptr.vmem [resolvable:$true] %s8480
          %s8482 = sshll.u32 %s8478, 4
          %s8483 = int_to_ptr.hbm [resolvable:$true] %s8482
          %8485 = dma.vmem_to_hbm [thread:$0]  %s8481, 512, %s8483, %s8467
        $region52: #{poswise_ffn.1} parent=47 // pred_fallthru
          _
      $region48: #{poswise_ffn.1} parent=5 // pred_fallthru
        _
      %p8486 = scmp.le.s32.totalorder 2, %s16
      // Predicated region
      $region53: #{poswise_ffn.1} parent=5 // pred_check
        %p8487 = pneg %p8486
      $region54: #{poswise_ffn.1} parent=5 // pred_check_branch
        %8489 = sbr.rel (%p8487) target = $region56
      $region55: #{poswise_ffn.1} parent=5 // pred_region
        %s8490 = ssub.s32 %s16, 2
        // Predicated region
        $region57: #{poswise_ffn.1} parent=55 // pred_check
          %p8491 = pneg %p197
        $region58: #{poswise_ffn.1} parent=55 // pred_check_branch
          %8493 = sbr.rel (%p8491) target = $region60
        $region59: #{poswise_ffn.1} parent=55 // pred_region
          %s8494 = sand.u32 %s182, 1
          %s8495 = scalar_lea.sflag [#allocation3], %s8494
          %s8496 = sand.u32 %s182, 1
          %s8497 = smul.addr %s8496, 32
          %s8498 = scalar_lea.vmem [#allocation2], %s8497
          %8500 = dma.done %s8495, 512
        $region60: #{poswise_ffn.1} parent=55 // pred_fallthru
          _
      $region56: #{poswise_ffn.1} parent=5 // pred_fallthru
        _
    $region6: #{poswise_ffn.1} parent=1 // loop_footer
      %s20 = sadd.s32 1, %s16
    $region7: #{poswise_ffn.1} parent=1 // loop_footer_branch
      %15 = sbr.rel target = $region3
    $region8: #{poswise_ffn.1} parent=1 // loop_exit
      _
    %8501 = vsyncpa [#allocation3], 1
    %s8502 = scalar_lea.sflag [#allocation3], 1
    %8503 = vsyncpa %s8502, 1

</llo_original>
